<compile_context>
chip_gen: v5e
topology: v5e:2x2
jax: 0.10.0
libtpu: 0.0.40
codegen_flags: <defaults>
</compile_context>

<pallas_src>
import functools

import jax
import jax.numpy as jnp
from jax.experimental import pallas as pl
from jax.experimental.pallas import tpu as pltpu


# ------------------------------ tiling helpers ------------------------------

def _round_up_128(c):
    return (c + 127) // 128 * 128


def _pick_tm(m, cap=256):
    """Largest sublane tile (multiple of 8) <= cap that divides m, else full m."""
    if m <= cap:
        return m
    for t in range(cap - cap % 8, 7, -8):
        if m % t == 0:
            return t
    return m


def _pick_lane_tile(n, cap=256):
    """Largest lane tile (multiple of 128) <= cap that divides n, else full n."""
    if n <= 128:
        return n
    start = min(cap, n)
    start -= start % 128
    for t in range(start, 127, -128):
        if n % t == 0:
            return t
    return n


# ------------------------------ Pallas kernels ------------------------------

def _convmm_kernel(a_ref, b_ref, o_ref, stats_ref, acc_ref, *, act):
    """Batched matmul tile with f32 accumulator, optional tanh epilogue and fused
    per-(parity, row-tile) column sum / sum-of-squares side output (BN stats)."""
    k = pl.program_id(3)

    @pl.when(k == 0)
    def _():
        acc_ref[...] = jnp.zeros_like(acc_ref)

    acc_ref[...] += jnp.dot(a_ref[0], b_ref[0],
                            preferred_element_type=jnp.float32)

    @pl.when(k == pl.num_programs(3) - 1)
    def _():
        acc = acc_ref[...]
        y = jnp.tanh(acc) if act == "tanh" else acc
        o_ref[0] = y.astype(o_ref.dtype)
        # BN statistics from the f32 accumulator (once per output tile, not per step).
        s = jnp.sum(acc, axis=0, keepdims=True)
        ss = jnp.sum(acc * acc, axis=0, keepdims=True)
        stats_ref[0, 0] = jnp.concatenate(
            [s, ss, jnp.zeros((6, s.shape[1]), jnp.float32)], axis=0)


def _affine_act_kernel(x_ref, scale_ref, shift_ref, o_ref, *, act):
    y = x_ref[...].astype(jnp.float32) * scale_ref[...] + shift_ref[...]
    if act == "relu":
        y = jnp.maximum(y, 0.0)
    elif act == "tanh":
        y = jnp.tanh(y)
    o_ref[...] = y.astype(o_ref.dtype)


# ------------------------------ kernel wrappers ------------------------------

def conv_matmul(a, b, *, act=None, out_dtype=jnp.bfloat16,
                tm_cap=256, tn_cap=256, tk_cap=512):
    """(P, M, K) @ (P, K, N) -> (P, M, N) bf16 MXU matmul.
    Returns (out, stats) with stats[p, i, 0, :] / stats[p, i, 1, :] the per-column
    sum / sum-of-squares over the rows of tile i of parity p."""
    P, M, K = a.shape
    P2, K2, N = b.shape
    assert P == P2 and K == K2
    tm = _pick_tm(M, tm_cap)
    tn = _pick_lane_tile(N, tn_cap)
    tk = _pick_lane_tile(K, tk_cap)
    gm, gn, gk = M // tm, N // tn, K // tk

    out, stats = pl.pallas_call(
        functools.partial(_convmm_kernel, act=act),
        out_shape=(jax.ShapeDtypeStruct((P, M, N), out_dtype),
                   jax.ShapeDtypeStruct((P, gm, 8, N), jnp.float32)),
        grid=(P, gm, gn, gk),
        in_specs=[pl.BlockSpec((1, tm, tk), lambda p, i, j, k: (p, i, k)),
                  pl.BlockSpec((1, tk, tn), lambda p, i, j, k: (p, k, j))],
        out_specs=(pl.BlockSpec((1, tm, tn), lambda p, i, j, k: (p, i, j)),
                   pl.BlockSpec((1, 1, 8, tn), lambda p, i, j, k: (p, i, 0, j))),
        scratch_shapes=[pltpu.VMEM((tm, tn), jnp.float32)],
        compiler_params=pltpu.CompilerParams(
            dimension_semantics=("parallel", "parallel", "parallel", "arbitrary")),
    )(a.astype(jnp.bfloat16), b.astype(jnp.bfloat16))
    return out, stats


def pallas_affine_act(x2d, scale, shift, act, *, out_dtype=jnp.bfloat16, tm_cap=512):
    """Per-channel y = act(x * scale + shift) over a (M, C) view; bf16 in/out."""
    M, C = x2d.shape
    tm = _pick_tm(M, tm_cap)
    return pl.pallas_call(
        functools.partial(_affine_act_kernel, act=act),
        out_shape=jax.ShapeDtypeStruct((M, C), out_dtype),
        grid=(M // tm,),
        in_specs=[pl.BlockSpec((tm, C), lambda i: (i, 0)),
                  pl.BlockSpec((1, C), lambda i: (0, 0)),
                  pl.BlockSpec((1, C), lambda i: (0, 0))],
        out_specs=pl.BlockSpec((tm, C), lambda i: (i, 0)),
        compiler_params=pltpu.CompilerParams(dimension_semantics=("parallel",)),
    )(x2d, scale.reshape(1, C).astype(jnp.float32),
      shift.reshape(1, C).astype(jnp.float32))


# ------------------------------ BatchNorm glue ------------------------------

def bn_scale_shift(stats, n_rows, gamma, beta, eps=1e-5, taps=1):
    """Fold fused matmul stats into per-channel BN scale/shift (train-mode, biased var)."""
    sums = stats[:, :, 0, :].sum(axis=(0, 1))
    sumsq = stats[:, :, 1, :].sum(axis=(0, 1))
    if taps > 1:  # layer-1 column layout is (tap, channel)
        c = sums.shape[0] // taps
        sums = sums.reshape(taps, c).sum(0)
        sumsq = sumsq.reshape(taps, c).sum(0)
    mean = sums / n_rows
    var = jnp.maximum(sumsq / n_rows - mean * mean, 0.0)
    scale = gamma * jax.lax.rsqrt(var + eps)
    shift = beta - mean * scale
    return scale, shift


# ------------------------- transposed-conv lowering --------------------------

# For ConvTranspose2d(k=4, stride=2, pad=1), output pixel (2m+ph, 2n+pw) only sees 4
# input taps; one entry per parity: (((dh, dw), (kh, kw)), ...) with x[m+dh, n+dw]
# weighted by w[:, :, kh, kw].  Parity order: (ee, eo, oe, oo).
_PARITY_TAPS = (
    (((0, 0), (1, 1)), ((-1, 0), (3, 1)), ((0, -1), (1, 3)), ((-1, -1), (3, 3))),
    (((0, 1), (1, 0)), ((0, 0), (1, 2)), ((-1, 1), (3, 0)), ((-1, 0), (3, 2))),
    (((1, 0), (0, 1)), ((0, 0), (2, 1)), ((1, -1), (0, 3)), ((0, -1), (2, 3))),
    (((1, 1), (0, 0)), ((1, 0), (0, 2)), ((0, 1), (2, 0)), ((0, 0), (2, 2))),
)


def conv_transpose_s2_p1(x_nhwc, w, *, act=None):
    """ConvTranspose2d(k=4, s=2, p=1, bias=False) as 4 parity sub-conv matmuls.
    x: (N, H, W, Ci) bf16, w: (Ci, Co, 4, 4).  Returns ((4, N*H*W, Co), stats)."""
    n, h, wd, ci = x_nhwc.shape
    assert w.shape[0] == ci and w.shape[2:] == (4, 4)
    xp = jnp.pad(x_nhwc, ((0, 0), (1, 1), (1, 1), (0, 0)))
    a_par, b_par = [], []
    # TODO(synk): gather the 4 taps per parity inside the matmul kernel (manual DMA /
    # tap grid axis) instead of materializing the (M, 4*Ci) patch matrices in XLA glue.
    for taps in _PARITY_TAPS:
        views = [xp[:, 1 + dh:1 + dh + h, 1 + dw:1 + dw + wd, :]
                 for (dh, dw), _ in taps]
        a_par.append(jnp.concatenate(views, axis=-1).reshape(n * h * wd, 4 * ci))
        b_par.append(jnp.concatenate([w[:, :, kh, kw] for _, (kh, kw) in taps], axis=0))
    a = jnp.stack(a_par, axis=0)          # (4, M, 4*Ci)
    b = jnp.stack(b_par, axis=0)          # (4, 4*Ci, Co)
    return conv_matmul(a, b, act=act)


def interleave_parities(out_pmc, n, h, w, co):
    """(4, N*H*W, Co) parity-stacked -> (N, 2H, 2W, Co) NHWC."""
    y = out_pmc.reshape(2, 2, n, h, w, co)
    y = jnp.transpose(y, (2, 3, 0, 4, 1, 5))
    return y.reshape(n, 2 * h, 2 * w, co)


# ------------------------------ parameters ------------------------------

def init_params(key, nz, nc, ngf=64):
    ks = jax.random.split(key, 5)
    std = 0.02  # DCGAN-style synthetic init
    p = {
        "w1": std * jax.random.normal(ks[0], (nz, ngf * 8, 4, 4), jnp.float32),
        "w2": std * jax.random.normal(ks[1], (ngf * 8, ngf * 4, 4, 4), jnp.float32),
        "w3": std * jax.random.normal(ks[2], (ngf * 4, ngf * 2, 4, 4), jnp.float32),
        "w4": std * jax.random.normal(ks[3], (ngf * 2, ngf, 4, 4), jnp.float32),
        "w5": std * jax.random.normal(ks[4], (ngf, nc, 4, 4), jnp.float32),
    }
    # BatchNorm affine params (PyTorch default init: gamma=1, beta=0)
    for i, c in zip((1, 2, 3, 4), (ngf * 8, ngf * 4, ngf * 2, ngf)):
        p[f"gamma{i}"] = jnp.ones((c,), jnp.float32)
        p[f"beta{i}"] = jnp.zeros((c,), jnp.float32)
    return p


def prepare_weights(params):
    """Pad channel dims up to multiples of 128 so every kernel store is lane-dense.
    Padded filters / gamma / beta are zero -> padded channels stay identically zero
    through conv, BN and ReLU, so results for real channels are unchanged."""
    p = dict(params)
    co4 = p["w4"].shape[1]
    co4p = _round_up_128(co4)
    if co4p != co4:
        d = co4p - co4
        p["w4"] = jnp.pad(p["w4"], ((0, 0), (0, d), (0, 0), (0, 0)))
        p["gamma4"] = jnp.pad(p["gamma4"], (0, d))
        p["beta4"] = jnp.pad(p["beta4"], (0, d))
        p["w5"] = jnp.pad(p["w5"], ((0, d), (0, 0), (0, 0), (0, 0)))
    co5 = p["w5"].shape[1]
    co5p = _round_up_128(co5)
    if co5p != co5:
        p["w5"] = jnp.pad(p["w5"], ((0, 0), (0, co5p - co5), (0, 0), (0, 0)))
    return p


# ------------------------------ generator forward ------------------------------

def dcgan_generator_forward(params, x_nchw, nc):
    eps = 1e-5
    p = prepare_weights(params)
    n, nz = x_nchw.shape[0], x_nchw.shape[1]

    # ---- layer 1: ConvTranspose2d(nz, 8*ngf, 4, 1, 0) on a 1x1 input == matmul.
    z = x_nchw.reshape(n, nz)
    w1 = p["w1"]
    co1 = w1.shape[1]
    b1 = w1.transpose(0, 2, 3, 1).reshape(nz, 16 * co1)     # columns = (kh, kw, co)
    out1, stats1 = conv_matmul(z[None], b1[None])            # (1, n, 16*co1), bf16
    scale, shift = bn_scale_shift(stats1, n * 16, p["gamma1"], p["beta1"], eps, taps=16)
    h1 = pallas_affine_act(out1.reshape(n * 16, co1), scale, shift, "relu")
    h = h1.reshape(n, 4, 4, co1)                              # NHWC bf16

    # ---- layers 2-4: ConvTranspose(4, s=2, p=1) + BatchNorm + ReLU.
    for idx in (2, 3, 4):
        w = p[f"w{idx}"]
        nb, hh, ww, _ = h.shape
        co = w.shape[1]
        out, stats = conv_transpose_s2_p1(h, w)               # (4, M, Co), stats
        m = nb * hh * ww
        scale, shift = bn_scale_shift(stats, 4 * m, p[f"gamma{idx}"], p[f"beta{idx}"], eps)
        act = pallas_affine_act(out.reshape(4 * m, co), scale, shift, "relu")
        h = interleave_parities(act.reshape(4, m, co), nb, hh, ww, co)

    # ---- layer 5: ConvTranspose(4, s=2, p=1) with Tanh fused in the matmul epilogue.
    w5 = p["w5"]
    nb, hh, ww, _ = h.shape
    co5 = w5.shape[1]
    out, _ = conv_transpose_s2_p1(h, w5, act="tanh")          # (4, M, co5) bf16
    y = interleave_parities(out, nb, hh, ww, co5)             # (N, 64, 64, co5)
    y = y[..., :nc]                                           # drop padded channels
    return {"generated": jnp.transpose(y, (0, 3, 1, 2)).astype(jnp.float32)}


# ------------------------------ demo ------------------------------

if __name__ == "__main__":
    batch, nz, nc, ngf = 2, 8, 3, 64   # shape_originals=(8,1,1), shape_targets=(3,64,64)
    key = jax.random.PRNGKey(0)
    k_x, k_p = jax.random.split(key)
    x = jax.random.normal(k_x, (batch, nz, 1, 1), jnp.float32)
    params = init_params(k_p, nz, nc, ngf)

    fwd = jax.jit(functools.partial(dcgan_generator_forward, nc=nc))
    out = fwd(params, x)
    gen = jax.block_until_ready(out["generated"])

    assert gen.shape == (batch, nc, 64, 64), gen.shape
    assert bool(jnp.all(jnp.isfinite(gen)))
    assert bool(jnp.all(jnp.abs(gen) <= 1.0))  # tanh range
    print("KERNEL_OK")
</pallas_src>

<mosaic_0001>
module attributes {stable_mosaic.version = 11 : i64} {
  func.func @_convmm_kernel(%arg0: i32, %arg1: i32, %arg2: i32, %arg3: i32, %arg4: memref<1x2x8xbf16, #tpu.memory_space<vmem>>, %arg5: memref<1x8x256xbf16, #tpu.memory_space<vmem>>, %arg6: memref<1x2x256xbf16, #tpu.memory_space<vmem>>, %arg7: memref<1x1x8x256xf32, #tpu.memory_space<vmem>>, %arg8: memref<2x256xf32, #tpu.memory_space<vmem>>) attributes {dimension_semantics = [#tpu.dimension_semantics<parallel>, #tpu.dimension_semantics<parallel>, #tpu.dimension_semantics<parallel>, #tpu.dimension_semantics<arbitrary>], iteration_bounds = array<i64: 1, 1, 32, 1>, scalar_prefetch = 0 : i64, scratch_operands = 1 : i64, tpu.core_type = #tpu.core_type<tc>, window_params = [{transform_indices = @transform_0, window_bounds = array<i64: 1, 2, 8>}, {transform_indices = @transform_1, window_bounds = array<i64: 1, 8, 256>}, {transform_indices = @transform_2, window_bounds = array<i64: 1, 2, 256>}, {transform_indices = @transform_3, window_bounds = array<i64: 1, 1, 8, 256>}]} {
    %c0_i32 = arith.constant 0 : i32
    %0 = arith.cmpi eq, %arg3, %c0_i32 : i32
    %1 = arith.extui %0 : i1 to i32
    %c0_i32_0 = arith.constant 0 : i32
    %2 = arith.cmpi ne, %1, %c0_i32_0 : i32
    scf.if %2 {
      %cst_12 = arith.constant 0.000000e+00 : f32
      %14 = vector.broadcast %cst_12 : f32 to vector<2x256xf32>
      %c0_13 = arith.constant 0 : index
      %c0_14 = arith.constant 0 : index
      %15 = vector.load %arg8[%c0_13, %c0_14] : memref<2x256xf32, #tpu.memory_space<vmem>>, vector<2x256xf32>
      tpu.vector_store %arg8[%c0_13, %c0_14], %14 {strides = array<i32>} : memref<2x256xf32, #tpu.memory_space<vmem>>, vector<2x256xf32>,
    } else {
    }
    %c0 = arith.constant 0 : index
    %c0_1 = arith.constant 0 : index
    %3 = vector.load %arg8[%c0, %c0_1] : memref<2x256xf32, #tpu.memory_space<vmem>>, vector<2x256xf32>
    %c0_2 = arith.constant 0 : index
    %c0_3 = arith.constant 0 : index
    %c0_4 = arith.constant 0 : index
    %4 = vector.load %arg4[%c0_2, %c0_3, %c0_4] : memref<1x2x8xbf16, #tpu.memory_space<vmem>>, vector<1x2x8xbf16>
    %5 = vector.shape_cast %4 : vector<1x2x8xbf16> to vector<2x8xbf16>
    %c0_5 = arith.constant 0 : index
    %c0_6 = arith.constant 0 : index
    %c0_7 = arith.constant 0 : index
    %6 = vector.load %arg5[%c0_5, %c0_6, %c0_7] : memref<1x8x256xbf16, #tpu.memory_space<vmem>>, vector<1x8x256xbf16>
    %7 = vector.shape_cast %6 : vector<1x8x256xbf16> to vector<8x256xbf16>
    %cst = arith.constant dense<0.000000e+00> : vector<2x256xf32>
    %8 = tpu.matmul %5, %7, %cst {dimension_numbers = #tpu.dot_dimension_numbers<[1], [0], [0], [1], [0, 0, 1, 1], [], []>} : vector<2x8xbf16>, vector<8x256xbf16>, vector<2x256xf32> -> vector<2x256xf32>
    %9 = arith.addf %3, %8 : vector<2x256xf32>
    %c0_8 = arith.constant 0 : index
    %c0_9 = arith.constant 0 : index
    %10 = vector.load %arg8[%c0_8, %c0_9] : memref<2x256xf32, #tpu.memory_space<vmem>>, vector<2x256xf32>
    tpu.vector_store %arg8[%c0_8, %c0_9], %9 {strides = array<i32>} : memref<2x256xf32, #tpu.memory_space<vmem>>, vector<2x256xf32>,
    %c0_i32_10 = arith.constant 0 : i32
    %11 = arith.cmpi eq, %arg3, %c0_i32_10 : i32
    %12 = arith.extui %11 : i1 to i32
    %c0_i32_11 = arith.constant 0 : i32
    %13 = arith.cmpi ne, %12, %c0_i32_11 : i32
    scf.if %13 {
      %c0_12 = arith.constant 0 : index
      %c0_13 = arith.constant 0 : index
      %14 = vector.load %arg8[%c0_12, %c0_13] : memref<2x256xf32, #tpu.memory_space<vmem>>, vector<2x256xf32>
      %15 = arith.truncf %14 : vector<2x256xf32> to vector<2x256xbf16>
      %c0_14 = arith.constant 0 : index
      %c0_15 = arith.constant 0 : index
      %c0_16 = arith.constant 0 : index
      %16 = vector.load %arg6[%c0_14, %c0_15, %c0_16] : memref<1x2x256xbf16, #tpu.memory_space<vmem>>, vector<1x2x256xbf16>
      %17 = vector.shape_cast %16 : vector<1x2x256xbf16> to vector<2x256xbf16>
      %18 = vector.shape_cast %15 : vector<2x256xbf16> to vector<1x2x256xbf16>
      tpu.vector_store %arg6[%c0_14, %c0_15, %c0_16], %18 {strides = array<i32>} : memref<1x2x256xbf16, #tpu.memory_space<vmem>>, vector<1x2x256xbf16>,
      %cst_17 = arith.constant dense<0.000000e+00> : vector<256xf32>
      %19 = vector.multi_reduction <add>, %14, %cst_17 [0] : vector<2x256xf32> to vector<256xf32>
      %20 = vector.shape_cast %19 : vector<256xf32> to vector<1x256xf32>
      %21 = arith.mulf %14, %14 : vector<2x256xf32>
      %cst_18 = arith.constant dense<0.000000e+00> : vector<256xf32>
      %22 = vector.multi_reduction <add>, %21, %cst_18 [0] : vector<2x256xf32> to vector<256xf32>
      %23 = vector.shape_cast %22 : vector<256xf32> to vector<1x256xf32>
      %cst_19 = arith.constant 0.000000e+00 : f32
      %24 = vector.broadcast %cst_19 : f32 to vector<6x256xf32>
      %25 = tpu.concatenate %20, %23, %24 in 0 : vector<1x256xf32>, vector<1x256xf32>, vector<6x256xf32> -> vector<8x256xf32>
      %c0_20 = arith.constant 0 : index
      %c0_21 = arith.constant 0 : index
      %c0_22 = arith.constant 0 : index
      %c0_23 = arith.constant 0 : index
      %26 = vector.load %arg7[%c0_20, %c0_21, %c0_22, %c0_23] : memref<1x1x8x256xf32, #tpu.memory_space<vmem>>, vector<1x1x8x256xf32>
      %27 = vector.shape_cast %26 : vector<1x1x8x256xf32> to vector<8x256xf32>
      %28 = vector.shape_cast %25 : vector<8x256xf32> to vector<1x1x8x256xf32>
      tpu.vector_store %arg7[%c0_20, %c0_21, %c0_22, %c0_23], %28 {strides = array<i32>} : memref<1x1x8x256xf32, #tpu.memory_space<vmem>>, vector<1x1x8x256xf32>,
    } else {
    }
    return
  }
  func.func @transform_0(%arg0: i32, %arg1: i32, %arg2: i32, %arg3: i32) -> (i32, i32, i32) {
    %c0_i32 = arith.constant 0 : i32
    return %arg0, %arg1, %arg3 : i32, i32, i32
  }
  func.func @transform_1(%arg0: i32, %arg1: i32, %arg2: i32, %arg3: i32) -> (i32, i32, i32) {
    %c0_i32 = arith.constant 0 : i32
    return %arg0, %arg3, %arg2 : i32, i32, i32
  }
  func.func @transform_2(%arg0: i32, %arg1: i32, %arg2: i32, %arg3: i32) -> (i32, i32, i32) {
    %c0_i32 = arith.constant 0 : i32
    return %arg0, %arg1, %arg2 : i32, i32, i32
  }
  func.func @transform_3(%arg0: i32, %arg1: i32, %arg2: i32, %arg3: i32) -> (i32, i32, i32, i32) {
    %c0_i32 = arith.constant 0 : i32
    %c0_i32_0 = arith.constant 0 : i32
    return %arg0, %arg1, %c0_i32, %arg2 : i32, i32, i32, i32
  }
}

module attributes {stable_mosaic.version = 11 : i64} {
  func.func @_affine_act_kernel(%arg0: i32, %arg1: memref<32x512xbf16, #tpu.memory_space<vmem>>, %arg2: memref<1x512xf32, #tpu.memory_space<vmem>>, %arg3: memref<1x512xf32, #tpu.memory_space<vmem>>, %arg4: memref<32x512xbf16, #tpu.memory_space<vmem>>) attributes {dimension_semantics = [#tpu.dimension_semantics<parallel>], iteration_bounds = array<i64: 1>, scalar_prefetch = 0 : i64, scratch_operands = 0 : i64, tpu.core_type = #tpu.core_type<tc>, window_params = [{transform_indices = @transform_0, window_bounds = array<i64: 32, 512>}, {pipeline_mode = #tpu.pipeline_mode<synchronous>, transform_indices = @transform_1, window_bounds = array<i64: 1, 512>}, {pipeline_mode = #tpu.pipeline_mode<synchronous>, transform_indices = @transform_2, window_bounds = array<i64: 1, 512>}, {transform_indices = @transform_3, window_bounds = array<i64: 32, 512>}]} {
    %c0 = arith.constant 0 : index
    %c0_0 = arith.constant 0 : index
    %0 = vector.load %arg1[%c0, %c0_0] : memref<32x512xbf16, #tpu.memory_space<vmem>>, vector<32x512xbf16>
    %1 = arith.extf %0 : vector<32x512xbf16> to vector<32x512xf32>
    %c0_1 = arith.constant 0 : index
    %c0_2 = arith.constant 0 : index
    %2 = vector.load %arg2[%c0_1, %c0_2] : memref<1x512xf32, #tpu.memory_space<vmem>>, vector<1x512xf32>
    %3 = vector.broadcast %2 : vector<1x512xf32> to vector<32x512xf32>
    %4 = arith.mulf %1, %3 : vector<32x512xf32>
    %c0_3 = arith.constant 0 : index
    %c0_4 = arith.constant 0 : index
    %5 = vector.load %arg3[%c0_3, %c0_4] : memref<1x512xf32, #tpu.memory_space<vmem>>, vector<1x512xf32>
    %6 = vector.broadcast %5 : vector<1x512xf32> to vector<32x512xf32>
    %7 = arith.addf %4, %6 : vector<32x512xf32>
    %cst = arith.constant 0.000000e+00 : f32
    %8 = vector.broadcast %cst : f32 to vector<32x512xf32>
    %9 = arith.maximumf %7, %8 : vector<32x512xf32>
    %10 = arith.truncf %9 : vector<32x512xf32> to vector<32x512xbf16>
    %c0_5 = arith.constant 0 : index
    %c0_6 = arith.constant 0 : index
    %11 = vector.load %arg4[%c0_5, %c0_6] : memref<32x512xbf16, #tpu.memory_space<vmem>>, vector<32x512xbf16>
    tpu.vector_store %arg4[%c0_5, %c0_6], %10 {strides = array<i32>} : memref<32x512xbf16, #tpu.memory_space<vmem>>, vector<32x512xbf16>,
    return
  }
  func.func @transform_0(%arg0: i32) -> (i32, i32) {
    %c0_i32 = arith.constant 0 : i32
    %c0_i32_0 = arith.constant 0 : i32
    return %arg0, %c0_i32 : i32, i32
  }
  func.func @transform_1(%arg0: i32) -> (i32, i32) {
    %c0_i32 = arith.constant 0 : i32
    %c0_i32_0 = arith.constant 0 : i32
    %c0_i32_1 = arith.constant 0 : i32
    return %c0_i32, %c0_i32_0 : i32, i32
  }
  func.func @transform_2(%arg0: i32) -> (i32, i32) {
    %c0_i32 = arith.constant 0 : i32
    %c0_i32_0 = arith.constant 0 : i32
    %c0_i32_1 = arith.constant 0 : i32
    return %c0_i32, %c0_i32_0 : i32, i32
  }
  func.func @transform_3(%arg0: i32) -> (i32, i32) {
    %c0_i32 = arith.constant 0 : i32
    %c0_i32_0 = arith.constant 0 : i32
    return %arg0, %c0_i32 : i32, i32
  }
}

module attributes {stable_mosaic.version = 11 : i64} {
  func.func @_convmm_kernel(%arg0: i32, %arg1: i32, %arg2: i32, %arg3: i32, %arg4: memref<1x32x512xbf16, #tpu.memory_space<vmem>>, %arg5: memref<1x512x256xbf16, #tpu.memory_space<vmem>>, %arg6: memref<1x32x256xbf16, #tpu.memory_space<vmem>>, %arg7: memref<1x1x8x256xf32, #tpu.memory_space<vmem>>, %arg8: memref<32x256xf32, #tpu.memory_space<vmem>>) attributes {dimension_semantics = [#tpu.dimension_semantics<parallel>, #tpu.dimension_semantics<parallel>, #tpu.dimension_semantics<parallel>, #tpu.dimension_semantics<arbitrary>], iteration_bounds = array<i64: 4, 1, 1, 4>, scalar_prefetch = 0 : i64, scratch_operands = 1 : i64, tpu.core_type = #tpu.core_type<tc>, window_params = [{transform_indices = @transform_0, window_bounds = array<i64: 1, 32, 512>}, {transform_indices = @transform_1, window_bounds = array<i64: 1, 512, 256>}, {transform_indices = @transform_2, window_bounds = array<i64: 1, 32, 256>}, {transform_indices = @transform_3, window_bounds = array<i64: 1, 1, 8, 256>}]} {
    %c0_i32 = arith.constant 0 : i32
    %0 = arith.cmpi eq, %arg3, %c0_i32 : i32
    %1 = arith.extui %0 : i1 to i32
    %c0_i32_0 = arith.constant 0 : i32
    %2 = arith.cmpi ne, %1, %c0_i32_0 : i32
    scf.if %2 {
      %cst_11 = arith.constant 0.000000e+00 : f32
      %14 = vector.broadcast %cst_11 : f32 to vector<32x256xf32>
      %c0_12 = arith.constant 0 : index
      %c0_13 = arith.constant 0 : index
      %15 = vector.load %arg8[%c0_12, %c0_13] : memref<32x256xf32, #tpu.memory_space<vmem>>, vector<32x256xf32>
      tpu.vector_store %arg8[%c0_12, %c0_13], %14 {strides = array<i32>} : memref<32x256xf32, #tpu.memory_space<vmem>>, vector<32x256xf32>,
    } else {
    }
    %c0 = arith.constant 0 : index
    %c0_1 = arith.constant 0 : index
    %3 = vector.load %arg8[%c0, %c0_1] : memref<32x256xf32, #tpu.memory_space<vmem>>, vector<32x256xf32>
    %c0_2 = arith.constant 0 : index
    %c0_3 = arith.constant 0 : index
    %c0_4 = arith.constant 0 : index
    %4 = vector.load %arg4[%c0_2, %c0_3, %c0_4] : memref<1x32x512xbf16, #tpu.memory_space<vmem>>, vector<1x32x512xbf16>
    %5 = vector.shape_cast %4 : vector<1x32x512xbf16> to vector<32x512xbf16>
    %c0_5 = arith.constant 0 : index
    %c0_6 = arith.constant 0 : index
    %c0_7 = arith.constant 0 : index
    %6 = vector.load %arg5[%c0_5, %c0_6, %c0_7] : memref<1x512x256xbf16, #tpu.memory_space<vmem>>, vector<1x512x256xbf16>
    %7 = vector.shape_cast %6 : vector<1x512x256xbf16> to vector<512x256xbf16>
    %cst = arith.constant dense<0.000000e+00> : vector<32x256xf32>
    %8 = tpu.matmul %5, %7, %cst {dimension_numbers = #tpu.dot_dimension_numbers<[1], [0], [0], [1], [0, 0, 1, 1], [], []>} : vector<32x512xbf16>, vector<512x256xbf16>, vector<32x256xf32> -> vector<32x256xf32>
    %9 = arith.addf %3, %8 : vector<32x256xf32>
    %c0_8 = arith.constant 0 : index
    %c0_9 = arith.constant 0 : index
    %10 = vector.load %arg8[%c0_8, %c0_9] : memref<32x256xf32, #tpu.memory_space<vmem>>, vector<32x256xf32>
    tpu.vector_store %arg8[%c0_8, %c0_9], %9 {strides = array<i32>} : memref<32x256xf32, #tpu.memory_space<vmem>>, vector<32x256xf32>,
    %c3_i32 = arith.constant 3 : i32
    %11 = arith.cmpi eq, %arg3, %c3_i32 : i32
    %12 = arith.extui %11 : i1 to i32
    %c0_i32_10 = arith.constant 0 : i32
    %13 = arith.cmpi ne, %12, %c0_i32_10 : i32
    scf.if %13 {
      %c0_11 = arith.constant 0 : index
      %c0_12 = arith.constant 0 : index
      %14 = vector.load %arg8[%c0_11, %c0_12] : memref<32x256xf32, #tpu.memory_space<vmem>>, vector<32x256xf32>
      %15 = arith.truncf %14 : vector<32x256xf32> to vector<32x256xbf16>
      %c0_13 = arith.constant 0 : index
      %c0_14 = arith.constant 0 : index
      %c0_15 = arith.constant 0 : index
      %16 = vector.load %arg6[%c0_13, %c0_14, %c0_15] : memref<1x32x256xbf16, #tpu.memory_space<vmem>>, vector<1x32x256xbf16>
      %17 = vector.shape_cast %16 : vector<1x32x256xbf16> to vector<32x256xbf16>
      %18 = vector.shape_cast %15 : vector<32x256xbf16> to vector<1x32x256xbf16>
      tpu.vector_store %arg6[%c0_13, %c0_14, %c0_15], %18 {strides = array<i32>} : memref<1x32x256xbf16, #tpu.memory_space<vmem>>, vector<1x32x256xbf16>,
      %cst_16 = arith.constant dense<0.000000e+00> : vector<256xf32>
      %19 = vector.multi_reduction <add>, %14, %cst_16 [0] : vector<32x256xf32> to vector<256xf32>
      %20 = vector.shape_cast %19 : vector<256xf32> to vector<1x256xf32>
      %21 = arith.mulf %14, %14 : vector<32x256xf32>
      %cst_17 = arith.constant dense<0.000000e+00> : vector<256xf32>
      %22 = vector.multi_reduction <add>, %21, %cst_17 [0] : vector<32x256xf32> to vector<256xf32>
      %23 = vector.shape_cast %22 : vector<256xf32> to vector<1x256xf32>
      %cst_18 = arith.constant 0.000000e+00 : f32
      %24 = vector.broadcast %cst_18 : f32 to vector<6x256xf32>
      %25 = tpu.concatenate %20, %23, %24 in 0 : vector<1x256xf32>, vector<1x256xf32>, vector<6x256xf32> -> vector<8x256xf32>
      %c0_19 = arith.constant 0 : index
      %c0_20 = arith.constant 0 : index
      %c0_21 = arith.constant 0 : index
      %c0_22 = arith.constant 0 : index
      %26 = vector.load %arg7[%c0_19, %c0_20, %c0_21, %c0_22] : memref<1x1x8x256xf32, #tpu.memory_space<vmem>>, vector<1x1x8x256xf32>
      %27 = vector.shape_cast %26 : vector<1x1x8x256xf32> to vector<8x256xf32>
      %28 = vector.shape_cast %25 : vector<8x256xf32> to vector<1x1x8x256xf32>
      tpu.vector_store %arg7[%c0_19, %c0_20, %c0_21, %c0_22], %28 {strides = array<i32>} : memref<1x1x8x256xf32, #tpu.memory_space<vmem>>, vector<1x1x8x256xf32>,
    } else {
    }
    return
  }
  func.func @transform_0(%arg0: i32, %arg1: i32, %arg2: i32, %arg3: i32) -> (i32, i32, i32) {
    %c0_i32 = arith.constant 0 : i32
    return %arg0, %arg1, %arg3 : i32, i32, i32
  }
  func.func @transform_1(%arg0: i32, %arg1: i32, %arg2: i32, %arg3: i32) -> (i32, i32, i32) {
    %c0_i32 = arith.constant 0 : i32
    return %arg0, %arg3, %arg2 : i32, i32, i32
  }
  func.func @transform_2(%arg0: i32, %arg1: i32, %arg2: i32, %arg3: i32) -> (i32, i32, i32) {
    %c0_i32 = arith.constant 0 : i32
    return %arg0, %arg1, %arg2 : i32, i32, i32
  }
  func.func @transform_3(%arg0: i32, %arg1: i32, %arg2: i32, %arg3: i32) -> (i32, i32, i32, i32) {
    %c0_i32 = arith.constant 0 : i32
    %c0_i32_0 = arith.constant 0 : i32
    return %arg0, %arg1, %c0_i32, %arg2 : i32, i32, i32, i32
  }
}

module attributes {stable_mosaic.version = 11 : i64} {
  func.func @_affine_act_kernel(%arg0: i32, %arg1: memref<128x256xbf16, #tpu.memory_space<vmem>>, %arg2: memref<1x256xf32, #tpu.memory_space<vmem>>, %arg3: memref<1x256xf32, #tpu.memory_space<vmem>>, %arg4: memref<128x256xbf16, #tpu.memory_space<vmem>>) attributes {dimension_semantics = [#tpu.dimension_semantics<parallel>], iteration_bounds = array<i64: 1>, scalar_prefetch = 0 : i64, scratch_operands = 0 : i64, tpu.core_type = #tpu.core_type<tc>, window_params = [{transform_indices = @transform_0, window_bounds = array<i64: 128, 256>}, {pipeline_mode = #tpu.pipeline_mode<synchronous>, transform_indices = @transform_1, window_bounds = array<i64: 1, 256>}, {pipeline_mode = #tpu.pipeline_mode<synchronous>, transform_indices = @transform_2, window_bounds = array<i64: 1, 256>}, {transform_indices = @transform_3, window_bounds = array<i64: 128, 256>}]} {
    %c0 = arith.constant 0 : index
    %c0_0 = arith.constant 0 : index
    %0 = vector.load %arg1[%c0, %c0_0] : memref<128x256xbf16, #tpu.memory_space<vmem>>, vector<128x256xbf16>
    %1 = arith.extf %0 : vector<128x256xbf16> to vector<128x256xf32>
    %c0_1 = arith.constant 0 : index
    %c0_2 = arith.constant 0 : index
    %2 = vector.load %arg2[%c0_1, %c0_2] : memref<1x256xf32, #tpu.memory_space<vmem>>, vector<1x256xf32>
    %3 = vector.broadcast %2 : vector<1x256xf32> to vector<128x256xf32>
    %4 = arith.mulf %1, %3 : vector<128x256xf32>
    %c0_3 = arith.constant 0 : index
    %c0_4 = arith.constant 0 : index
    %5 = vector.load %arg3[%c0_3, %c0_4] : memref<1x256xf32, #tpu.memory_space<vmem>>, vector<1x256xf32>
    %6 = vector.broadcast %5 : vector<1x256xf32> to vector<128x256xf32>
    %7 = arith.addf %4, %6 : vector<128x256xf32>
    %cst = arith.constant 0.000000e+00 : f32
    %8 = vector.broadcast %cst : f32 to vector<128x256xf32>
    %9 = arith.maximumf %7, %8 : vector<128x256xf32>
    %10 = arith.truncf %9 : vector<128x256xf32> to vector<128x256xbf16>
    %c0_5 = arith.constant 0 : index
    %c0_6 = arith.constant 0 : index
    %11 = vector.load %arg4[%c0_5, %c0_6] : memref<128x256xbf16, #tpu.memory_space<vmem>>, vector<128x256xbf16>
    tpu.vector_store %arg4[%c0_5, %c0_6], %10 {strides = array<i32>} : memref<128x256xbf16, #tpu.memory_space<vmem>>, vector<128x256xbf16>,
    return
  }
  func.func @transform_0(%arg0: i32) -> (i32, i32) {
    %c0_i32 = arith.constant 0 : i32
    %c0_i32_0 = arith.constant 0 : i32
    return %arg0, %c0_i32 : i32, i32
  }
  func.func @transform_1(%arg0: i32) -> (i32, i32) {
    %c0_i32 = arith.constant 0 : i32
    %c0_i32_0 = arith.constant 0 : i32
    %c0_i32_1 = arith.constant 0 : i32
    return %c0_i32, %c0_i32_0 : i32, i32
  }
  func.func @transform_2(%arg0: i32) -> (i32, i32) {
    %c0_i32 = arith.constant 0 : i32
    %c0_i32_0 = arith.constant 0 : i32
    %c0_i32_1 = arith.constant 0 : i32
    return %c0_i32, %c0_i32_0 : i32, i32
  }
  func.func @transform_3(%arg0: i32) -> (i32, i32) {
    %c0_i32 = arith.constant 0 : i32
    %c0_i32_0 = arith.constant 0 : i32
    return %arg0, %c0_i32 : i32, i32
  }
}

module attributes {stable_mosaic.version = 11 : i64} {
  func.func @_convmm_kernel(%arg0: i32, %arg1: i32, %arg2: i32, %arg3: i32, %arg4: memref<1x128x512xbf16, #tpu.memory_space<vmem>>, %arg5: memref<1x512x128xbf16, #tpu.memory_space<vmem>>, %arg6: memref<1x128x128xbf16, #tpu.memory_space<vmem>>, %arg7: memref<1x1x8x128xf32, #tpu.memory_space<vmem>>, %arg8: memref<128x128xf32, #tpu.memory_space<vmem>>) attributes {dimension_semantics = [#tpu.dimension_semantics<parallel>, #tpu.dimension_semantics<parallel>, #tpu.dimension_semantics<parallel>, #tpu.dimension_semantics<arbitrary>], iteration_bounds = array<i64: 4, 1, 1, 2>, scalar_prefetch = 0 : i64, scratch_operands = 1 : i64, tpu.core_type = #tpu.core_type<tc>, window_params = [{transform_indices = @transform_0, window_bounds = array<i64: 1, 128, 512>}, {transform_indices = @transform_1, window_bounds = array<i64: 1, 512, 128>}, {transform_indices = @transform_2, window_bounds = array<i64: 1, 128, 128>}, {transform_indices = @transform_3, window_bounds = array<i64: 1, 1, 8, 128>}]} {
    %c0_i32 = arith.constant 0 : i32
    %0 = arith.cmpi eq, %arg3, %c0_i32 : i32
    %1 = arith.extui %0 : i1 to i32
    %c0_i32_0 = arith.constant 0 : i32
    %2 = arith.cmpi ne, %1, %c0_i32_0 : i32
    scf.if %2 {
      %cst_11 = arith.constant 0.000000e+00 : f32
      %14 = vector.broadcast %cst_11 : f32 to vector<128x128xf32>
      %c0_12 = arith.constant 0 : index
      %c0_13 = arith.constant 0 : index
      %15 = vector.load %arg8[%c0_12, %c0_13] : memref<128x128xf32, #tpu.memory_space<vmem>>, vector<128x128xf32>
      tpu.vector_store %arg8[%c0_12, %c0_13], %14 {strides = array<i32>} : memref<128x128xf32, #tpu.memory_space<vmem>>, vector<128x128xf32>,
    } else {
    }
    %c0 = arith.constant 0 : index
    %c0_1 = arith.constant 0 : index
    %3 = vector.load %arg8[%c0, %c0_1] : memref<128x128xf32, #tpu.memory_space<vmem>>, vector<128x128xf32>
    %c0_2 = arith.constant 0 : index
    %c0_3 = arith.constant 0 : index
    %c0_4 = arith.constant 0 : index
    %4 = vector.load %arg4[%c0_2, %c0_3, %c0_4] : memref<1x128x512xbf16, #tpu.memory_space<vmem>>, vector<1x128x512xbf16>
    %5 = vector.shape_cast %4 : vector<1x128x512xbf16> to vector<128x512xbf16>
    %c0_5 = arith.constant 0 : index
    %c0_6 = arith.constant 0 : index
    %c0_7 = arith.constant 0 : index
    %6 = vector.load %arg5[%c0_5, %c0_6, %c0_7] : memref<1x512x128xbf16, #tpu.memory_space<vmem>>, vector<1x512x128xbf16>
    %7 = vector.shape_cast %6 : vector<1x512x128xbf16> to vector<512x128xbf16>
    %cst = arith.constant dense<0.000000e+00> : vector<128x128xf32>
    %8 = tpu.matmul %5, %7, %cst {dimension_numbers = #tpu.dot_dimension_numbers<[1], [0], [0], [1], [0, 0, 1, 1], [], []>} : vector<128x512xbf16>, vector<512x128xbf16>, vector<128x128xf32> -> vector<128x128xf32>
    %9 = arith.addf %3, %8 : vector<128x128xf32>
    %c0_8 = arith.constant 0 : index
    %c0_9 = arith.constant 0 : index
    %10 = vector.load %arg8[%c0_8, %c0_9] : memref<128x128xf32, #tpu.memory_space<vmem>>, vector<128x128xf32>
    tpu.vector_store %arg8[%c0_8, %c0_9], %9 {strides = array<i32>} : memref<128x128xf32, #tpu.memory_space<vmem>>, vector<128x128xf32>,
    %c1_i32 = arith.constant 1 : i32
    %11 = arith.cmpi eq, %arg3, %c1_i32 : i32
    %12 = arith.extui %11 : i1 to i32
    %c0_i32_10 = arith.constant 0 : i32
    %13 = arith.cmpi ne, %12, %c0_i32_10 : i32
    scf.if %13 {
      %c0_11 = arith.constant 0 : index
      %c0_12 = arith.constant 0 : index
      %14 = vector.load %arg8[%c0_11, %c0_12] : memref<128x128xf32, #tpu.memory_space<vmem>>, vector<128x128xf32>
      %15 = arith.truncf %14 : vector<128x128xf32> to vector<128x128xbf16>
      %c0_13 = arith.constant 0 : index
      %c0_14 = arith.constant 0 : index
      %c0_15 = arith.constant 0 : index
      %16 = vector.load %arg6[%c0_13, %c0_14, %c0_15] : memref<1x128x128xbf16, #tpu.memory_space<vmem>>, vector<1x128x128xbf16>
      %17 = vector.shape_cast %16 : vector<1x128x128xbf16> to vector<128x128xbf16>
      %18 = vector.shape_cast %15 : vector<128x128xbf16> to vector<1x128x128xbf16>
      tpu.vector_store %arg6[%c0_13, %c0_14, %c0_15], %18 {strides = array<i32>} : memref<1x128x128xbf16, #tpu.memory_space<vmem>>, vector<1x128x128xbf16>,
      %cst_16 = arith.constant dense<0.000000e+00> : vector<128xf32>
      %19 = vector.multi_reduction <add>, %14, %cst_16 [0] : vector<128x128xf32> to vector<128xf32>
      %20 = vector.shape_cast %19 : vector<128xf32> to vector<1x128xf32>
      %21 = arith.mulf %14, %14 : vector<128x128xf32>
      %cst_17 = arith.constant dense<0.000000e+00> : vector<128xf32>
      %22 = vector.multi_reduction <add>, %21, %cst_17 [0] : vector<128x128xf32> to vector<128xf32>
      %23 = vector.shape_cast %22 : vector<128xf32> to vector<1x128xf32>
      %cst_18 = arith.constant 0.000000e+00 : f32
      %24 = vector.broadcast %cst_18 : f32 to vector<6x128xf32>
      %25 = tpu.concatenate %20, %23, %24 in 0 : vector<1x128xf32>, vector<1x128xf32>, vector<6x128xf32> -> vector<8x128xf32>
      %c0_19 = arith.constant 0 : index
      %c0_20 = arith.constant 0 : index
      %c0_21 = arith.constant 0 : index
      %c0_22 = arith.constant 0 : index
      %26 = vector.load %arg7[%c0_19, %c0_20, %c0_21, %c0_22] : memref<1x1x8x128xf32, #tpu.memory_space<vmem>>, vector<1x1x8x128xf32>
      %27 = vector.shape_cast %26 : vector<1x1x8x128xf32> to vector<8x128xf32>
      %28 = vector.shape_cast %25 : vector<8x128xf32> to vector<1x1x8x128xf32>
      tpu.vector_store %arg7[%c0_19, %c0_20, %c0_21, %c0_22], %28 {strides = array<i32>} : memref<1x1x8x128xf32, #tpu.memory_space<vmem>>, vector<1x1x8x128xf32>,
    } else {
    }
    return
  }
  func.func @transform_0(%arg0: i32, %arg1: i32, %arg2: i32, %arg3: i32) -> (i32, i32, i32) {
    %c0_i32 = arith.constant 0 : i32
    return %arg0, %arg1, %arg3 : i32, i32, i32
  }
  func.func @transform_1(%arg0: i32, %arg1: i32, %arg2: i32, %arg3: i32) -> (i32, i32, i32) {
    %c0_i32 = arith.constant 0 : i32
    return %arg0, %arg3, %arg2 : i32, i32, i32
  }
  func.func @transform_2(%arg0: i32, %arg1: i32, %arg2: i32, %arg3: i32) -> (i32, i32, i32) {
    %c0_i32 = arith.constant 0 : i32
    return %arg0, %arg1, %arg2 : i32, i32, i32
  }
  func.func @transform_3(%arg0: i32, %arg1: i32, %arg2: i32, %arg3: i32) -> (i32, i32, i32, i32) {
    %c0_i32 = arith.constant 0 : i32
    %c0_i32_0 = arith.constant 0 : i32
    return %arg0, %arg1, %c0_i32, %arg2 : i32, i32, i32, i32
  }
}

module attributes {stable_mosaic.version = 11 : i64} {
  func.func @_affine_act_kernel(%arg0: i32, %arg1: memref<512x128xbf16, #tpu.memory_space<vmem>>, %arg2: memref<1x128xf32, #tpu.memory_space<vmem>>, %arg3: memref<1x128xf32, #tpu.memory_space<vmem>>, %arg4: memref<512x128xbf16, #tpu.memory_space<vmem>>) attributes {dimension_semantics = [#tpu.dimension_semantics<parallel>], iteration_bounds = array<i64: 1>, scalar_prefetch = 0 : i64, scratch_operands = 0 : i64, tpu.core_type = #tpu.core_type<tc>, window_params = [{transform_indices = @transform_0, window_bounds = array<i64: 512, 128>}, {pipeline_mode = #tpu.pipeline_mode<synchronous>, transform_indices = @transform_1, window_bounds = array<i64: 1, 128>}, {pipeline_mode = #tpu.pipeline_mode<synchronous>, transform_indices = @transform_2, window_bounds = array<i64: 1, 128>}, {transform_indices = @transform_3, window_bounds = array<i64: 512, 128>}]} {
    %c0 = arith.constant 0 : index
    %c0_0 = arith.constant 0 : index
    %0 = vector.load %arg1[%c0, %c0_0] : memref<512x128xbf16, #tpu.memory_space<vmem>>, vector<512x128xbf16>
    %1 = arith.extf %0 : vector<512x128xbf16> to vector<512x128xf32>
    %c0_1 = arith.constant 0 : index
    %c0_2 = arith.constant 0 : index
    %2 = vector.load %arg2[%c0_1, %c0_2] : memref<1x128xf32, #tpu.memory_space<vmem>>, vector<1x128xf32>
    %3 = vector.broadcast %2 : vector<1x128xf32> to vector<512x128xf32>
    %4 = arith.mulf %1, %3 : vector<512x128xf32>
    %c0_3 = arith.constant 0 : index
    %c0_4 = arith.constant 0 : index
    %5 = vector.load %arg3[%c0_3, %c0_4] : memref<1x128xf32, #tpu.memory_space<vmem>>, vector<1x128xf32>
    %6 = vector.broadcast %5 : vector<1x128xf32> to vector<512x128xf32>
    %7 = arith.addf %4, %6 : vector<512x128xf32>
    %cst = arith.constant 0.000000e+00 : f32
    %8 = vector.broadcast %cst : f32 to vector<512x128xf32>
    %9 = arith.maximumf %7, %8 : vector<512x128xf32>
    %10 = arith.truncf %9 : vector<512x128xf32> to vector<512x128xbf16>
    %c0_5 = arith.constant 0 : index
    %c0_6 = arith.constant 0 : index
    %11 = vector.load %arg4[%c0_5, %c0_6] : memref<512x128xbf16, #tpu.memory_space<vmem>>, vector<512x128xbf16>
    tpu.vector_store %arg4[%c0_5, %c0_6], %10 {strides = array<i32>} : memref<512x128xbf16, #tpu.memory_space<vmem>>, vector<512x128xbf16>,
    return
  }
  func.func @transform_0(%arg0: i32) -> (i32, i32) {
    %c0_i32 = arith.constant 0 : i32
    %c0_i32_0 = arith.constant 0 : i32
    return %arg0, %c0_i32 : i32, i32
  }
  func.func @transform_1(%arg0: i32) -> (i32, i32) {
    %c0_i32 = arith.constant 0 : i32
    %c0_i32_0 = arith.constant 0 : i32
    %c0_i32_1 = arith.constant 0 : i32
    return %c0_i32, %c0_i32_0 : i32, i32
  }
  func.func @transform_2(%arg0: i32) -> (i32, i32) {
    %c0_i32 = arith.constant 0 : i32
    %c0_i32_0 = arith.constant 0 : i32
    %c0_i32_1 = arith.constant 0 : i32
    return %c0_i32, %c0_i32_0 : i32, i32
  }
  func.func @transform_3(%arg0: i32) -> (i32, i32) {
    %c0_i32 = arith.constant 0 : i32
    %c0_i32_0 = arith.constant 0 : i32
    return %arg0, %c0_i32 : i32, i32
  }
}

module attributes {stable_mosaic.version = 11 : i64} {
  func.func @_convmm_kernel(%arg0: i32, %arg1: i32, %arg2: i32, %arg3: i32, %arg4: memref<1x256x512xbf16, #tpu.memory_space<vmem>>, %arg5: memref<1x512x128xbf16, #tpu.memory_space<vmem>>, %arg6: memref<1x256x128xbf16, #tpu.memory_space<vmem>>, %arg7: memref<1x1x8x128xf32, #tpu.memory_space<vmem>>, %arg8: memref<256x128xf32, #tpu.memory_space<vmem>>) attributes {dimension_semantics = [#tpu.dimension_semantics<parallel>, #tpu.dimension_semantics<parallel>, #tpu.dimension_semantics<parallel>, #tpu.dimension_semantics<arbitrary>], iteration_bounds = array<i64: 4, 2, 1, 1>, scalar_prefetch = 0 : i64, scratch_operands = 1 : i64, tpu.core_type = #tpu.core_type<tc>, window_params = [{transform_indices = @transform_0, window_bounds = array<i64: 1, 256, 512>}, {transform_indices = @transform_1, window_bounds = array<i64: 1, 512, 128>}, {transform_indices = @transform_2, window_bounds = array<i64: 1, 256, 128>}, {transform_indices = @transform_3, window_bounds = array<i64: 1, 1, 8, 128>}]} {
    %c0_i32 = arith.constant 0 : i32
    %0 = arith.cmpi eq, %arg3, %c0_i32 : i32
    %1 = arith.extui %0 : i1 to i32
    %c0_i32_0 = arith.constant 0 : i32
    %2 = arith.cmpi ne, %1, %c0_i32_0 : i32
    scf.if %2 {
      %cst_12 = arith.constant 0.000000e+00 : f32
      %14 = vector.broadcast %cst_12 : f32 to vector<256x128xf32>
      %c0_13 = arith.constant 0 : index
      %c0_14 = arith.constant 0 : index
      %15 = vector.load %arg8[%c0_13, %c0_14] : memref<256x128xf32, #tpu.memory_space<vmem>>, vector<256x128xf32>
      tpu.vector_store %arg8[%c0_13, %c0_14], %14 {strides = array<i32>} : memref<256x128xf32, #tpu.memory_space<vmem>>, vector<256x128xf32>,
    } else {
    }
    %c0 = arith.constant 0 : index
    %c0_1 = arith.constant 0 : index
    %3 = vector.load %arg8[%c0, %c0_1] : memref<256x128xf32, #tpu.memory_space<vmem>>, vector<256x128xf32>
    %c0_2 = arith.constant 0 : index
    %c0_3 = arith.constant 0 : index
    %c0_4 = arith.constant 0 : index
    %4 = vector.load %arg4[%c0_2, %c0_3, %c0_4] : memref<1x256x512xbf16, #tpu.memory_space<vmem>>, vector<1x256x512xbf16>
    %5 = vector.shape_cast %4 : vector<1x256x512xbf16> to vector<256x512xbf16>
    %c0_5 = arith.constant 0 : index
    %c0_6 = arith.constant 0 : index
    %c0_7 = arith.constant 0 : index
    %6 = vector.load %arg5[%c0_5, %c0_6, %c0_7] : memref<1x512x128xbf16, #tpu.memory_space<vmem>>, vector<1x512x128xbf16>
    %7 = vector.shape_cast %6 : vector<1x512x128xbf16> to vector<512x128xbf16>
    %cst = arith.constant dense<0.000000e+00> : vector<256x128xf32>
    %8 = tpu.matmul %5, %7, %cst {dimension_numbers = #tpu.dot_dimension_numbers<[1], [0], [0], [1], [0, 0, 1, 1], [], []>} : vector<256x512xbf16>, vector<512x128xbf16>, vector<256x128xf32> -> vector<256x128xf32>
    %9 = arith.addf %3, %8 : vector<256x128xf32>
    %c0_8 = arith.constant 0 : index
    %c0_9 = arith.constant 0 : index
    %10 = vector.load %arg8[%c0_8, %c0_9] : memref<256x128xf32, #tpu.memory_space<vmem>>, vector<256x128xf32>
    tpu.vector_store %arg8[%c0_8, %c0_9], %9 {strides = array<i32>} : memref<256x128xf32, #tpu.memory_space<vmem>>, vector<256x128xf32>,
    %c0_i32_10 = arith.constant 0 : i32
    %11 = arith.cmpi eq, %arg3, %c0_i32_10 : i32
    %12 = arith.extui %11 : i1 to i32
    %c0_i32_11 = arith.constant 0 : i32
    %13 = arith.cmpi ne, %12, %c0_i32_11 : i32
    scf.if %13 {
      %c0_12 = arith.constant 0 : index
      %c0_13 = arith.constant 0 : index
      %14 = vector.load %arg8[%c0_12, %c0_13] : memref<256x128xf32, #tpu.memory_space<vmem>>, vector<256x128xf32>
      %15 = arith.truncf %14 : vector<256x128xf32> to vector<256x128xbf16>
      %c0_14 = arith.constant 0 : index
      %c0_15 = arith.constant 0 : index
      %c0_16 = arith.constant 0 : index
      %16 = vector.load %arg6[%c0_14, %c0_15, %c0_16] : memref<1x256x128xbf16, #tpu.memory_space<vmem>>, vector<1x256x128xbf16>
      %17 = vector.shape_cast %16 : vector<1x256x128xbf16> to vector<256x128xbf16>
      %18 = vector.shape_cast %15 : vector<256x128xbf16> to vector<1x256x128xbf16>
      tpu.vector_store %arg6[%c0_14, %c0_15, %c0_16], %18 {strides = array<i32>} : memref<1x256x128xbf16, #tpu.memory_space<vmem>>, vector<1x256x128xbf16>,
      %cst_17 = arith.constant dense<0.000000e+00> : vector<128xf32>
      %19 = vector.multi_reduction <add>, %14, %cst_17 [0] : vector<256x128xf32> to vector<128xf32>
      %20 = vector.shape_cast %19 : vector<128xf32> to vector<1x128xf32>
      %21 = arith.mulf %14, %14 : vector<256x128xf32>
      %cst_18 = arith.constant dense<0.000000e+00> : vector<128xf32>
      %22 = vector.multi_reduction <add>, %21, %cst_18 [0] : vector<256x128xf32> to vector<128xf32>
      %23 = vector.shape_cast %22 : vector<128xf32> to vector<1x128xf32>
      %cst_19 = arith.constant 0.000000e+00 : f32
      %24 = vector.broadcast %cst_19 : f32 to vector<6x128xf32>
      %25 = tpu.concatenate %20, %23, %24 in 0 : vector<1x128xf32>, vector<1x128xf32>, vector<6x128xf32> -> vector<8x128xf32>
      %c0_20 = arith.constant 0 : index
      %c0_21 = arith.constant 0 : index
      %c0_22 = arith.constant 0 : index
      %c0_23 = arith.constant 0 : index
      %26 = vector.load %arg7[%c0_20, %c0_21, %c0_22, %c0_23] : memref<1x1x8x128xf32, #tpu.memory_space<vmem>>, vector<1x1x8x128xf32>
      %27 = vector.shape_cast %26 : vector<1x1x8x128xf32> to vector<8x128xf32>
      %28 = vector.shape_cast %25 : vector<8x128xf32> to vector<1x1x8x128xf32>
      tpu.vector_store %arg7[%c0_20, %c0_21, %c0_22, %c0_23], %28 {strides = array<i32>} : memref<1x1x8x128xf32, #tpu.memory_space<vmem>>, vector<1x1x8x128xf32>,
    } else {
    }
    return
  }
  func.func @transform_0(%arg0: i32, %arg1: i32, %arg2: i32, %arg3: i32) -> (i32, i32, i32) {
    %c0_i32 = arith.constant 0 : i32
    return %arg0, %arg1, %arg3 : i32, i32, i32
  }
  func.func @transform_1(%arg0: i32, %arg1: i32, %arg2: i32, %arg3: i32) -> (i32, i32, i32) {
    %c0_i32 = arith.constant 0 : i32
    return %arg0, %arg3, %arg2 : i32, i32, i32
  }
  func.func @transform_2(%arg0: i32, %arg1: i32, %arg2: i32, %arg3: i32) -> (i32, i32, i32) {
    %c0_i32 = arith.constant 0 : i32
    return %arg0, %arg1, %arg2 : i32, i32, i32
  }
  func.func @transform_3(%arg0: i32, %arg1: i32, %arg2: i32, %arg3: i32) -> (i32, i32, i32, i32) {
    %c0_i32 = arith.constant 0 : i32
    %c0_i32_0 = arith.constant 0 : i32
    return %arg0, %arg1, %c0_i32, %arg2 : i32, i32, i32, i32
  }
}

module attributes {stable_mosaic.version = 11 : i64} {
  func.func @_affine_act_kernel(%arg0: i32, %arg1: memref<512x128xbf16, #tpu.memory_space<vmem>>, %arg2: memref<1x128xf32, #tpu.memory_space<vmem>>, %arg3: memref<1x128xf32, #tpu.memory_space<vmem>>, %arg4: memref<512x128xbf16, #tpu.memory_space<vmem>>) attributes {dimension_semantics = [#tpu.dimension_semantics<parallel>], iteration_bounds = array<i64: 4>, scalar_prefetch = 0 : i64, scratch_operands = 0 : i64, tpu.core_type = #tpu.core_type<tc>, window_params = [{transform_indices = @transform_0, window_bounds = array<i64: 512, 128>}, {pipeline_mode = #tpu.pipeline_mode<synchronous>, transform_indices = @transform_1, window_bounds = array<i64: 1, 128>}, {pipeline_mode = #tpu.pipeline_mode<synchronous>, transform_indices = @transform_2, window_bounds = array<i64: 1, 128>}, {transform_indices = @transform_3, window_bounds = array<i64: 512, 128>}]} {
    %c0 = arith.constant 0 : index
    %c0_0 = arith.constant 0 : index
    %0 = vector.load %arg1[%c0, %c0_0] : memref<512x128xbf16, #tpu.memory_space<vmem>>, vector<512x128xbf16>
    %1 = arith.extf %0 : vector<512x128xbf16> to vector<512x128xf32>
    %c0_1 = arith.constant 0 : index
    %c0_2 = arith.constant 0 : index
    %2 = vector.load %arg2[%c0_1, %c0_2] : memref<1x128xf32, #tpu.memory_space<vmem>>, vector<1x128xf32>
    %3 = vector.broadcast %2 : vector<1x128xf32> to vector<512x128xf32>
    %4 = arith.mulf %1, %3 : vector<512x128xf32>
    %c0_3 = arith.constant 0 : index
    %c0_4 = arith.constant 0 : index
    %5 = vector.load %arg3[%c0_3, %c0_4] : memref<1x128xf32, #tpu.memory_space<vmem>>, vector<1x128xf32>
    %6 = vector.broadcast %5 : vector<1x128xf32> to vector<512x128xf32>
    %7 = arith.addf %4, %6 : vector<512x128xf32>
    %cst = arith.constant 0.000000e+00 : f32
    %8 = vector.broadcast %cst : f32 to vector<512x128xf32>
    %9 = arith.maximumf %7, %8 : vector<512x128xf32>
    %10 = arith.truncf %9 : vector<512x128xf32> to vector<512x128xbf16>
    %c0_5 = arith.constant 0 : index
    %c0_6 = arith.constant 0 : index
    %11 = vector.load %arg4[%c0_5, %c0_6] : memref<512x128xbf16, #tpu.memory_space<vmem>>, vector<512x128xbf16>
    tpu.vector_store %arg4[%c0_5, %c0_6], %10 {strides = array<i32>} : memref<512x128xbf16, #tpu.memory_space<vmem>>, vector<512x128xbf16>,
    return
  }
  func.func @transform_0(%arg0: i32) -> (i32, i32) {
    %c0_i32 = arith.constant 0 : i32
    %c0_i32_0 = arith.constant 0 : i32
    return %arg0, %c0_i32 : i32, i32
  }
  func.func @transform_1(%arg0: i32) -> (i32, i32) {
    %c0_i32 = arith.constant 0 : i32
    %c0_i32_0 = arith.constant 0 : i32
    %c0_i32_1 = arith.constant 0 : i32
    return %c0_i32, %c0_i32_0 : i32, i32
  }
  func.func @transform_2(%arg0: i32) -> (i32, i32) {
    %c0_i32 = arith.constant 0 : i32
    %c0_i32_0 = arith.constant 0 : i32
    %c0_i32_1 = arith.constant 0 : i32
    return %c0_i32, %c0_i32_0 : i32, i32
  }
  func.func @transform_3(%arg0: i32) -> (i32, i32) {
    %c0_i32 = arith.constant 0 : i32
    %c0_i32_0 = arith.constant 0 : i32
    return %arg0, %c0_i32 : i32, i32
  }
}

module attributes {stable_mosaic.version = 11 : i64} {
  func.func @_convmm_kernel(%arg0: i32, %arg1: i32, %arg2: i32, %arg3: i32, %arg4: memref<1x256x512xbf16, #tpu.memory_space<vmem>>, %arg5: memref<1x512x128xbf16, #tpu.memory_space<vmem>>, %arg6: memref<1x256x128xbf16, #tpu.memory_space<vmem>>, %arg7: memref<1x1x8x128xf32, #tpu.memory_space<vmem>>, %arg8: memref<256x128xf32, #tpu.memory_space<vmem>>) attributes {dimension_semantics = [#tpu.dimension_semantics<parallel>, #tpu.dimension_semantics<parallel>, #tpu.dimension_semantics<parallel>, #tpu.dimension_semantics<arbitrary>], iteration_bounds = array<i64: 4, 8, 1, 1>, scalar_prefetch = 0 : i64, scratch_operands = 1 : i64, tpu.core_type = #tpu.core_type<tc>, window_params = [{transform_indices = @transform_0, window_bounds = array<i64: 1, 256, 512>}, {transform_indices = @transform_1, window_bounds = array<i64: 1, 512, 128>}, {transform_indices = @transform_2, window_bounds = array<i64: 1, 256, 128>}, {transform_indices = @transform_3, window_bounds = array<i64: 1, 1, 8, 128>}]} {
    %c0_i32 = arith.constant 0 : i32
    %0 = arith.cmpi eq, %arg3, %c0_i32 : i32
    %1 = arith.extui %0 : i1 to i32
    %c0_i32_0 = arith.constant 0 : i32
    %2 = arith.cmpi ne, %1, %c0_i32_0 : i32
    scf.if %2 {
      %cst_12 = arith.constant 0.000000e+00 : f32
      %14 = vector.broadcast %cst_12 : f32 to vector<256x128xf32>
      %c0_13 = arith.constant 0 : index
      %c0_14 = arith.constant 0 : index
      %15 = vector.load %arg8[%c0_13, %c0_14] : memref<256x128xf32, #tpu.memory_space<vmem>>, vector<256x128xf32>
      tpu.vector_store %arg8[%c0_13, %c0_14], %14 {strides = array<i32>} : memref<256x128xf32, #tpu.memory_space<vmem>>, vector<256x128xf32>,
    } else {
    }
    %c0 = arith.constant 0 : index
    %c0_1 = arith.constant 0 : index
    %3 = vector.load %arg8[%c0, %c0_1] : memref<256x128xf32, #tpu.memory_space<vmem>>, vector<256x128xf32>
    %c0_2 = arith.constant 0 : index
    %c0_3 = arith.constant 0 : index
    %c0_4 = arith.constant 0 : index
    %4 = vector.load %arg4[%c0_2, %c0_3, %c0_4] : memref<1x256x512xbf16, #tpu.memory_space<vmem>>, vector<1x256x512xbf16>
    %5 = vector.shape_cast %4 : vector<1x256x512xbf16> to vector<256x512xbf16>
    %c0_5 = arith.constant 0 : index
    %c0_6 = arith.constant 0 : index
    %c0_7 = arith.constant 0 : index
    %6 = vector.load %arg5[%c0_5, %c0_6, %c0_7] : memref<1x512x128xbf16, #tpu.memory_space<vmem>>, vector<1x512x128xbf16>
    %7 = vector.shape_cast %6 : vector<1x512x128xbf16> to vector<512x128xbf16>
    %cst = arith.constant dense<0.000000e+00> : vector<256x128xf32>
    %8 = tpu.matmul %5, %7, %cst {dimension_numbers = #tpu.dot_dimension_numbers<[1], [0], [0], [1], [0, 0, 1, 1], [], []>} : vector<256x512xbf16>, vector<512x128xbf16>, vector<256x128xf32> -> vector<256x128xf32>
    %9 = arith.addf %3, %8 : vector<256x128xf32>
    %c0_8 = arith.constant 0 : index
    %c0_9 = arith.constant 0 : index
    %10 = vector.load %arg8[%c0_8, %c0_9] : memref<256x128xf32, #tpu.memory_space<vmem>>, vector<256x128xf32>
    tpu.vector_store %arg8[%c0_8, %c0_9], %9 {strides = array<i32>} : memref<256x128xf32, #tpu.memory_space<vmem>>, vector<256x128xf32>,
    %c0_i32_10 = arith.constant 0 : i32
    %11 = arith.cmpi eq, %arg3, %c0_i32_10 : i32
    %12 = arith.extui %11 : i1 to i32
    %c0_i32_11 = arith.constant 0 : i32
    %13 = arith.cmpi ne, %12, %c0_i32_11 : i32
    scf.if %13 {
      %c0_12 = arith.constant 0 : index
      %c0_13 = arith.constant 0 : index
      %14 = vector.load %arg8[%c0_12, %c0_13] : memref<256x128xf32, #tpu.memory_space<vmem>>, vector<256x128xf32>
      %15 = math.tanh %14 : vector<256x128xf32>
      %16 = arith.truncf %15 : vector<256x128xf32> to vector<256x128xbf16>
      %c0_14 = arith.constant 0 : index
      %c0_15 = arith.constant 0 : index
      %c0_16 = arith.constant 0 : index
      %17 = vector.load %arg6[%c0_14, %c0_15, %c0_16] : memref<1x256x128xbf16, #tpu.memory_space<vmem>>, vector<1x256x128xbf16>
      %18 = vector.shape_cast %17 : vector<1x256x128xbf16> to vector<256x128xbf16>
      %19 = vector.shape_cast %16 : vector<256x128xbf16> to vector<1x256x128xbf16>
      tpu.vector_store %arg6[%c0_14, %c0_15, %c0_16], %19 {strides = array<i32>} : memref<1x256x128xbf16, #tpu.memory_space<vmem>>, vector<1x256x128xbf16>,
      %cst_17 = arith.constant dense<0.000000e+00> : vector<128xf32>
      %20 = vector.multi_reduction <add>, %14, %cst_17 [0] : vector<256x128xf32> to vector<128xf32>
      %21 = vector.shape_cast %20 : vector<128xf32> to vector<1x128xf32>
      %22 = arith.mulf %14, %14 : vector<256x128xf32>
      %cst_18 = arith.constant dense<0.000000e+00> : vector<128xf32>
      %23 = vector.multi_reduction <add>, %22, %cst_18 [0] : vector<256x128xf32> to vector<128xf32>
      %24 = vector.shape_cast %23 : vector<128xf32> to vector<1x128xf32>
      %cst_19 = arith.constant 0.000000e+00 : f32
      %25 = vector.broadcast %cst_19 : f32 to vector<6x128xf32>
      %26 = tpu.concatenate %21, %24, %25 in 0 : vector<1x128xf32>, vector<1x128xf32>, vector<6x128xf32> -> vector<8x128xf32>
      %c0_20 = arith.constant 0 : index
      %c0_21 = arith.constant 0 : index
      %c0_22 = arith.constant 0 : index
      %c0_23 = arith.constant 0 : index
      %27 = vector.load %arg7[%c0_20, %c0_21, %c0_22, %c0_23] : memref<1x1x8x128xf32, #tpu.memory_space<vmem>>, vector<1x1x8x128xf32>
      %28 = vector.shape_cast %27 : vector<1x1x8x128xf32> to vector<8x128xf32>
      %29 = vector.shape_cast %26 : vector<8x128xf32> to vector<1x1x8x128xf32>
      tpu.vector_store %arg7[%c0_20, %c0_21, %c0_22, %c0_23], %29 {strides = array<i32>} : memref<1x1x8x128xf32, #tpu.memory_space<vmem>>, vector<1x1x8x128xf32>,
    } else {
    }
    return
  }
  func.func @transform_0(%arg0: i32, %arg1: i32, %arg2: i32, %arg3: i32) -> (i32, i32, i32) {
    %c0_i32 = arith.constant 0 : i32
    return %arg0, %arg1, %arg3 : i32, i32, i32
  }
  func.func @transform_1(%arg0: i32, %arg1: i32, %arg2: i32, %arg3: i32) -> (i32, i32, i32) {
    %c0_i32 = arith.constant 0 : i32
    return %arg0, %arg3, %arg2 : i32, i32, i32
  }
  func.func @transform_2(%arg0: i32, %arg1: i32, %arg2: i32, %arg3: i32) -> (i32, i32, i32) {
    %c0_i32 = arith.constant 0 : i32
    return %arg0, %arg1, %arg2 : i32, i32, i32
  }
  func.func @transform_3(%arg0: i32, %arg1: i32, %arg2: i32, %arg3: i32) -> (i32, i32, i32, i32) {
    %c0_i32 = arith.constant 0 : i32
    %c0_i32_0 = arith.constant 0 : i32
    return %arg0, %arg1, %c0_i32, %arg2 : i32, i32, i32, i32
  }
}

</mosaic_0001>

<llo_original>
// kernel: dcgan_generator_forward.9
$region0: #{dcgan_generator_forward.9}
  #allocation0 [shape = 'u32[]', space=smem, size = 0x4, offset = 0x4, fixed_abs, tag = 'smem constant byte address 0x4 - core index']
  #allocation1 [shape = 'u32[72,128]{1,0:T(1,128)}', space=vmem, size = 0x9000, scoped, tag = 'internal scratch']
  #allocation2 [shape = 'f32[2,256]{1,0:T(2,128)}', space=vmem, size = 0x800, scoped, tag = 'scratch operand']
  %s0 = inlined_call_operand.vmem [shape: bf16[1,2,8], index: 0, kind: input, shape index: {}]
  %s1 = inlined_call_operand.vmem [shape: bf16[1,8,8192], index: 1, kind: input, shape index: {}]
  %s2 = inlined_call_operand.vmem [shape: bf16[1,2,8192], index: 2, kind: output, shape index: {0}]
  %s3 = inlined_call_operand.vmem [shape: f32[1,1,8,8192], index: 3, kind: output, shape index: {1}]
  %4 = xla_tuple %s2, %s3
  %s5 = sld [smem:[#allocation0]]
  $region57: #{dcgan_generator_forward.9} parent=0
    _
  %s7 = ssub.s32 1, %s5
  %s8 = scalar_select 0, %s7, %s5
  loop: start=0, step=1, limit=34
  $region2: #{dcgan_generator_forward.9} parent=0 // loop_pre_header
    _
  $region3: #{dcgan_generator_forward.9} parent=0 // loop_header
    %s10 = sphi 0, %s14
    %p11 = scmp.ge.s32.totalorder %s10, 34
    %s17 = sphi 0, %s43
    %s18 = sphi 0, %s39
    %s19 = sphi 0, %s35
    %s20 = sphi 0, %s31
    %s21 = sphi 0, %s17
    %s22 = sphi 0, %s18
    %s23 = sphi 0, %s19
    %s24 = sphi 0, %s20
    %s25 = sphi 0, %s21
    %s26 = sphi 0, %s22
    %s27 = sphi 0, %s23
    %s28 = sphi 0, %s24
    %s50 = sphi 0, %s52
    %s53 = sphi 0, %s50
    %s54 = sphi 0, %s53
    %s70 = sphi 0, %s54
    %s80 = sphi 0, %s82
    %s83 = sphi 0, %s80
    %s84 = sphi 0, %s83
    %s100 = sphi 0, %s84
    %s110 = sphi 0, %s112
    %s113 = sphi 0, %s110
    %s114 = sphi 0, %s113
    %s130 = sphi 0, %s114
    %s140 = sphi 0, %s142
    %s143 = sphi 0, %s140
    %s144 = sphi 0, %s143
    %s160 = sphi 0, %s144
  $region4: #{dcgan_generator_forward.9} parent=0 // loop_header_branch
    %13 = sbr.rel (%p11) target = $region8
  $region5: #{dcgan_generator_forward.9} parent=0 // loop_body
    %s15 = ssub.s32 %s10, 1
    %s16 = ssub.s32 %s10, 2
    %s29 = sadd.s32 1, %s20
    %p30 = scmp.ge.s32.totalorder %s29, 1
    %s31 = scalar_select %p30, 0, %s29
    %s32 = sadd.s32 1, %s19
    %s33 = scalar_select %p30, %s32, %s19
    %p34 = scmp.ge.s32.totalorder %s33, 32
    %s35 = scalar_select %p34, 0, %s33
    %s36 = sadd.s32 1, %s18
    %s37 = scalar_select %p34, %s36, %s18
    %p38 = scmp.ge.s32.totalorder %s37, 1
    %s39 = scalar_select %p38, 0, %s37
    %s40 = sadd.s32 1, %s17
    %s41 = scalar_select %p38, %s40, %s17
    %p42 = scmp.ge.s32.totalorder %s41, 1
    %s43 = scalar_select %p42, 0, %s41
    %s44 = ssub.s32 %s17, %s43
    %s45 = ssub.s32 %s18, %s39
    %s46 = sor.u32 %s44, %s45
    %s47 = ssub.s32 %s20, %s31
    %s48 = sor.u32 %s46, %s47
    %p49 = scmp.eq.s32.totalorder %s48, 0
    %s51 = sadd.s32 %s50, 1
    %s52 = scalar_select %p49, %s50, %s51
    %p55 = pneg %p49
    %p56 = scmp.eq.s32.totalorder %s10, 31
    %p57 = por %p55, %p56
    %p58 = scmp.ne.s32.totalorder %s50, %s53
    %p59 = scmp.eq.s32.totalorder %s10, 0
    %p60 = por %p58, %p59
    %p61 = scmp.ne.s32.totalorder %s50, %s53
    %p62 = scmp.eq.s32.totalorder %s15, 31
    %p63 = por %p61, %p62
    %p64 = scmp.ne.s32.totalorder %s53, %s54
    %p65 = scmp.eq.s32.totalorder %s15, 0
    %p66 = por %p64, %p65
    %p67 = scmp.ne.s32.totalorder %s53, %s54
    %p68 = scmp.eq.s32.totalorder %s16, 31
    %p69 = por %p67, %p68
    %p71 = scmp.ne.s32.totalorder %s54, %s70
    %p72 = scmp.eq.s32.totalorder %s16, 0
    %p73 = por %p71, %p72
    %s74 = ssub.s32 %s17, %s43
    %s75 = ssub.s32 %s20, %s31
    %s76 = sor.u32 %s74, %s75
    %s77 = ssub.s32 %s19, %s35
    %s78 = sor.u32 %s76, %s77
    %p79 = scmp.eq.s32.totalorder %s78, 0
    %s81 = sadd.s32 %s80, 1
    %s82 = scalar_select %p79, %s80, %s81
    %p85 = pneg %p79
    %p86 = scmp.eq.s32.totalorder %s10, 31
    %p87 = por %p85, %p86
    %p88 = scmp.ne.s32.totalorder %s80, %s83
    %p89 = scmp.eq.s32.totalorder %s10, 0
    %p90 = por %p88, %p89
    %p91 = scmp.ne.s32.totalorder %s80, %s83
    %p92 = scmp.eq.s32.totalorder %s15, 31
    %p93 = por %p91, %p92
    %p94 = scmp.ne.s32.totalorder %s83, %s84
    %p95 = scmp.eq.s32.totalorder %s15, 0
    %p96 = por %p94, %p95
    %p97 = scmp.ne.s32.totalorder %s83, %s84
    %p98 = scmp.eq.s32.totalorder %s16, 31
    %p99 = por %p97, %p98
    %p101 = scmp.ne.s32.totalorder %s84, %s100
    %p102 = scmp.eq.s32.totalorder %s16, 0
    %p103 = por %p101, %p102
    %s104 = ssub.s32 %s17, %s43
    %s105 = ssub.s32 %s18, %s39
    %s106 = sor.u32 %s104, %s105
    %s107 = ssub.s32 %s19, %s35
    %s108 = sor.u32 %s106, %s107
    %p109 = scmp.eq.s32.totalorder %s108, 0
    %s111 = sadd.s32 %s110, 1
    %s112 = scalar_select %p109, %s110, %s111
    %p115 = pneg %p109
    %p116 = scmp.eq.s32.totalorder %s10, 31
    %p117 = por %p115, %p116
    %p118 = scmp.ne.s32.totalorder %s110, %s113
    %p119 = scmp.eq.s32.totalorder %s10, 0
    %p120 = por %p118, %p119
    %p121 = scmp.ne.s32.totalorder %s110, %s113
    %p122 = scmp.eq.s32.totalorder %s15, 31
    %p123 = por %p121, %p122
    %p124 = scmp.ne.s32.totalorder %s113, %s114
    %p125 = scmp.eq.s32.totalorder %s15, 0
    %p126 = por %p124, %p125
    %p127 = scmp.ne.s32.totalorder %s113, %s114
    %p128 = scmp.eq.s32.totalorder %s16, 31
    %p129 = por %p127, %p128
    %p131 = scmp.ne.s32.totalorder %s114, %s130
    %p132 = scmp.eq.s32.totalorder %s16, 0
    %p133 = por %p131, %p132
    %s134 = ssub.s32 %s17, %s43
    %s135 = ssub.s32 %s18, %s39
    %s136 = sor.u32 %s134, %s135
    %s137 = ssub.s32 %s19, %s35
    %s138 = sor.u32 %s136, %s137
    %p139 = scmp.eq.s32.totalorder %s138, 0
    %s141 = sadd.s32 %s140, 1
    %s142 = scalar_select %p139, %s140, %s141
    %p145 = pneg %p139
    %p146 = scmp.eq.s32.totalorder %s10, 31
    %p147 = por %p145, %p146
    %p148 = scmp.ne.s32.totalorder %s140, %s143
    %p149 = scmp.eq.s32.totalorder %s10, 0
    %p150 = por %p148, %p149
    %p151 = scmp.ne.s32.totalorder %s140, %s143
    %p152 = scmp.eq.s32.totalorder %s15, 31
    %p153 = por %p151, %p152
    %p154 = scmp.ne.s32.totalorder %s143, %s144
    %p155 = scmp.eq.s32.totalorder %s15, 0
    %p156 = por %p154, %p155
    %p157 = scmp.ne.s32.totalorder %s143, %s144
    %p158 = scmp.eq.s32.totalorder %s16, 31
    %p159 = por %p157, %p158
    %p161 = scmp.ne.s32.totalorder %s144, %s160
    %p162 = scmp.eq.s32.totalorder %s16, 0
    %p163 = por %p161, %p162
    %p164 = scmp.le.s32.totalorder 1, %s10
    %p165 = scmp.lt.s32.totalorder %s10, 33
    %p166 = pnand %p164, %p165
    %p167 = pneg %p166
    // Predicated region
    $region9: #{dcgan_generator_forward.9} parent=5 // pred_check
      _
    $region10: #{dcgan_generator_forward.9} parent=5 // pred_check_branch
      %169 = sbr.rel (%p166) target = $region12
    $region11: #{dcgan_generator_forward.9} parent=5 // pred_region
      %s170 = ssub.s32 %s10, 1
      // Predicated region
      $region13: #{dcgan_generator_forward.9} parent=11 // pred_check
        %p171 = pneg %p66
      $region14: #{dcgan_generator_forward.9} parent=11 // pred_check_branch
        %173 = sbr.rel (%p171) target = $region16
      $region15: #{dcgan_generator_forward.9} parent=11 // pred_region
        %p174 = scmp.lt.s32.totalorder %s21, 0
        %s175 = scalar_select %p174, %s21, 0
        %p176 = scmp.lt.s32.totalorder %s22, 0
        %s177 = scalar_select %p176, %s22, 0
        %p178 = scmp.lt.s32.totalorder %s24, 0
        %s179 = scalar_select %p178, %s24, 0
        %s180 = sadd.s32 %s179, %s177
        %s181 = sadd.s32 %s180, %s175
        %s182 = scalar_lea.vmem %s0, %s181
      $region16: #{dcgan_generator_forward.9} parent=11 // pred_fallthru
        _
    $region12: #{dcgan_generator_forward.9} parent=5 // pred_fallthru
      _
    %p183 = scmp.lt.s32.totalorder %s10, 32
    // Predicated region
    $region17: #{dcgan_generator_forward.9} parent=5 // pred_check
      %p184 = pneg %p183
    $region18: #{dcgan_generator_forward.9} parent=5 // pred_check_branch
      %186 = sbr.rel (%p184) target = $region20
    $region19: #{dcgan_generator_forward.9} parent=5 // pred_region
      // Predicated region
      $region21: #{dcgan_generator_forward.9} parent=19 // pred_check
        %p187 = pneg %p90
      $region22: #{dcgan_generator_forward.9} parent=19 // pred_check_branch
        %189 = sbr.rel (%p187) target = $region24
      $region23: #{dcgan_generator_forward.9} parent=19 // pred_region
        %s190 = smul.u32 2, %s19
        %p191 = scmp.lt.s32.totalorder %s17, 0
        %s192 = scalar_select %p191, %s17, 0
        %p193 = scmp.lt.s32.totalorder %s20, 0
        %s194 = scalar_select %p193, %s20, 0
        %p195 = scmp.lt.s32.totalorder %s190, 63
        %s196 = scalar_select %p195, %s190, 63
        %s197 = smul.addr %s194, 64
        %s198 = sadd.s32 %s196, %s197
        %s199 = smul.addr %s192, 64
        %s200 = sadd.s32 %s198, %s199
        %s201 = smul.addr %s200, 4
        %s202 = scalar_lea.vmem %s1, %s201
        %s203 = smul.u32 2, %s19
      $region24: #{dcgan_generator_forward.9} parent=19 // pred_fallthru
        _
    $region20: #{dcgan_generator_forward.9} parent=5 // pred_fallthru
      _
    %p204 = scmp.le.s32.totalorder 1, %s10
    %p205 = scmp.lt.s32.totalorder %s10, 33
    %p206 = pnand %p204, %p205
    %p207 = pneg %p206
    // Predicated region
    $region25: #{dcgan_generator_forward.9} parent=5 // pred_check
      _
    $region26: #{dcgan_generator_forward.9} parent=5 // pred_check_branch
      %209 = sbr.rel (%p206) target = $region28
    $region27: #{dcgan_generator_forward.9} parent=5 // pred_region
      %s210 = ssub.s32 %s10, 1
      %p211 = scmp.lt.s32.totalorder %s21, 0
      %s212 = scalar_select %p211, %s21, 0
      %p213 = scmp.lt.s32.totalorder %s22, 0
      %s214 = scalar_select %p213, %s22, 0
      %p215 = scmp.lt.s32.totalorder %s24, 0
      %s216 = scalar_select %p215, %s24, 0
      %s217 = sadd.s32 %s216, %s214
      %s218 = sadd.s32 %s217, %s212
      %s219 = scalar_lea.vmem %s0, %s218
      %p220 = pneg %p66
      %p221 = pneg %p63
      %s222 = smul.u32 2, %s23
      %p223 = scmp.lt.s32.totalorder %s21, 0
      %s224 = scalar_select %p223, %s21, 0
      %p225 = scmp.lt.s32.totalorder %s24, 0
      %s226 = scalar_select %p225, %s24, 0
      %p227 = scmp.lt.s32.totalorder %s222, 63
      %s228 = scalar_select %p227, %s222, 63
      %s229 = smul.addr %s226, 64
      %s230 = sadd.s32 %s228, %s229
      %s231 = smul.addr %s224, 64
      %s232 = sadd.s32 %s230, %s231
      %s233 = smul.addr %s232, 4
      %s234 = scalar_lea.vmem %s1, %s233
      %p235 = pneg %p96
      %p236 = pneg %p93
      %p237 = pneg %p126
      %p238 = pneg %p123
      %s239 = smul.u32 2, %s23
      %p240 = scmp.lt.s32.totalorder %s21, 0
      %s241 = scalar_select %p240, %s21, 0
      %p242 = scmp.lt.s32.totalorder %s22, 0
      %s243 = scalar_select %p242, %s22, 0
      %p244 = scmp.lt.s32.totalorder %s239, 63
      %s245 = scalar_select %p244, %s239, 63
      %s246 = smul.addr %s243, 64
      %s247 = sadd.s32 %s245, %s246
      %s248 = smul.addr %s241, 64
      %s249 = sadd.s32 %s247, %s248
      %s250 = scalar_lea.vmem %s2, %s249
      %p251 = pneg %p156
      %p252 = pneg %p153
      %s253 = smul.u32 2, %s23
      %p254 = scmp.lt.s32.totalorder %s21, 0
      %s255 = scalar_select %p254, %s21, 0
      %p256 = scmp.lt.s32.totalorder %s22, 0
      %s257 = scalar_select %p256, %s22, 0
      %p258 = scmp.lt.s32.totalorder %s253, 63
      %s259 = scalar_select %p258, %s253, 63
      %s260 = smul.addr %s257, 64
      %s261 = sadd.s32 %s259, %s260
      %s262 = smul.addr %s255, 64
      %s263 = sadd.s32 %s261, %s262
      %s264 = smul.addr %s263, 8
      %s265 = scalar_lea.vmem %s3, %s264
      %p266 = scmp.lt.s32.totalorder %s21, 0
      %s267 = scalar_select %p266, %s21, 0
      %p268 = scmp.lt.s32.totalorder %s22, 0
      %s269 = scalar_select %p268, %s22, 0
      %p270 = scmp.lt.s32.totalorder %s24, 0
      %s271 = scalar_select %p270, %s24, 0
      %s272 = sadd.s32 %s271, %s269
      %s273 = sadd.s32 %s272, %s267
      %s274 = scalar_lea.vmem %s0, %s273
      %s275 = smul.u32 2, %s23
      %p276 = scmp.lt.s32.totalorder %s21, 0
      %s277 = scalar_select %p276, %s21, 0
      %p278 = scmp.lt.s32.totalorder %s24, 0
      %s279 = scalar_select %p278, %s24, 0
      %p280 = scmp.lt.s32.totalorder %s275, 63
      %s281 = scalar_select %p280, %s275, 63
      %s282 = smul.addr %s279, 64
      %s283 = sadd.s32 %s281, %s282
      %s284 = smul.addr %s277, 64
      %s285 = sadd.s32 %s283, %s284
      %s286 = smul.addr %s285, 4
      %s287 = scalar_lea.vmem %s1, %s286
      %s288 = smul.u32 2, %s23
      %s289 = smul.u32 2, %s23
      %p290 = scmp.lt.s32.totalorder %s21, 0
      %s291 = scalar_select %p290, %s21, 0
      %p292 = scmp.lt.s32.totalorder %s22, 0
      %s293 = scalar_select %p292, %s22, 0
      %p294 = scmp.lt.s32.totalorder %s289, 63
      %s295 = scalar_select %p294, %s289, 63
      %s296 = smul.addr %s293, 64
      %s297 = sadd.s32 %s295, %s296
      %s298 = smul.addr %s291, 64
      %s299 = sadd.s32 %s297, %s298
      %s300 = scalar_lea.vmem %s2, %s299
      %s301 = smul.u32 2, %s23
      %s302 = smul.u32 2, %s23
      %p303 = scmp.lt.s32.totalorder %s21, 0
      %s304 = scalar_select %p303, %s21, 0
      %p305 = scmp.lt.s32.totalorder %s22, 0
      %s306 = scalar_select %p305, %s22, 0
      %p307 = scmp.lt.s32.totalorder %s302, 63
      %s308 = scalar_select %p307, %s302, 63
      %s309 = smul.addr %s306, 64
      %s310 = sadd.s32 %s308, %s309
      %s311 = smul.addr %s304, 64
      %s312 = sadd.s32 %s310, %s311
      %s313 = smul.addr %s312, 8
      %s314 = scalar_lea.vmem %s3, %s313
      %s315 = smul.u32 2, %s23
      %p317 = scmp.eq.s32.totalorder %s24, 0
      // Predicated region
      $region29: #{dcgan_generator_forward.9} parent=27 // pred_check
        %p318 = pneg %p317
      $region30: #{dcgan_generator_forward.9} parent=27 // pred_check_branch
        %320 = sbr.rel (%p318) target = $region32
      $region31: #{dcgan_generator_forward.9} parent=27 // pred_region
        %321 = vst [vmem:[#allocation2] sm:$0xf] 0.0
      $region32: #{dcgan_generator_forward.9} parent=27 // pred_fallthru
        _
      %v322 = vld [vmem:[#allocation2] sm:$0xf]
      %v323 = vld [vmem:[%s274] sm:$0x1]
      %v324 = vld [vmem:[%s287] sm:$0xff]
      %v326 = vunpack.c.l.b16 %v324
      %v327 = vunpack.c.h.b16 %v324
      %v328 = vpack.c.b16 %v326, %v326
      %v329 = vpack.c.b16 %v327, %v327
      %vm330 = vcmask 64512
      %v332 = vsel %vm330, %v323, 0
      %vm334 = vcmask 1043456
      %v336 = vsel %vm334, %v328, 0
      %v339 = vsel %vm334, %v329, 0
      %341 = vmatpush.bf16.msra.mxu0 0
      %342 = vmatpush.bf16.msra.mxu0 0
      %343 = vmatpush.bf16.msra.mxu0 0
      %344 = vmatpush.bf16.msra.mxu0 0
      %345 = vmatpush.bf16.msra.mxu0 0
      %346 = vmatpush.bf16.msra.mxu0 0
      %347 = vmatpush.bf16.msra.mxu0 0
      %348 = vmatpush.bf16.msra.mxu0 %v336
      %349 = vmatmul.bf16.gmra.mxu0 %v332
      %v350 = vpop.f32.mrf.mxu0
      %v351 = vadd.f32 0.0, %v350
      %v352 = vpop.f32.mrf.mxu0
      %353 = vdwg.mxu0
      %354 = vmatpush.bf16.msra.mxu0 0
      %355 = vmatpush.bf16.msra.mxu0 0
      %356 = vmatpush.bf16.msra.mxu0 0
      %357 = vmatpush.bf16.msra.mxu0 0
      %358 = vmatpush.bf16.msra.mxu0 0
      %359 = vmatpush.bf16.msra.mxu0 0
      %360 = vmatpush.bf16.msra.mxu0 0
      %361 = vmatpush.bf16.msra.mxu0 %v339
      %362 = vmatmul.bf16.gmra.mxu0 %v332
      %v363 = vpop.f32.mrf.mxu0
      %v364 = vadd.f32 0.0, %v363
      %v365 = vpop.f32.mrf.mxu0
      %366 = vdwg.mxu0
      %v369 = vrot.slane %v364, 6
      %vm370 = vcmask 1041408
      %v371 = vsel %vm370, %v351, %v369
      %v373 = vadd.f32 %v322, %v371
      %374 = vst [vmem:[#allocation2] sm:$0xf] %v373
      // Predicated region
      $region33: #{dcgan_generator_forward.9} parent=27 // pred_check
        %p375 = pneg %p317
      $region34: #{dcgan_generator_forward.9} parent=27 // pred_check_branch
        %377 = sbr.rel (%p375) target = $region36
      $region35: #{dcgan_generator_forward.9} parent=27 // pred_region
        %v378 = vld [vmem:[#allocation2] sm:$0xf]
        %380 = vst [vmem:[#allocation1] ss:$4 sm:$0xff] %v378
        %v381 = vld.sshfl [vmem:[#allocation1] sm:$0xff pattern:$0x73625140]
        %v382 = vld.sshfl [vmem:[#allocation1 + $0x8] sm:$0xff pattern:$0x73625140]
        %v385 = vpack.c.bf16 %v382, %v381
        %v387 = vrot.slane %v385, 3
        %vm388 = vcmask 1040384
        %v391 = vsel %vm388, %v385, %v387
        %393 = vst [vmem:[%s300] sm:$0x3] %v391
        %394 = vst [vmem:[#allocation1] ss:$4 sm:$0xff] %v378
        %v395 = vld.sshfl [vmem:[#allocation1] sm:$0xff pattern:$0x73625140]
        %v396 = vld.sshfl [vmem:[#allocation1 + $0x8] sm:$0xff pattern:$0x73625140]
        %v399 = vsel %vm370, %v395, 0.0
        %v400 = vrot.slane %v399, 4
        %v401 = vadd.f32 %v399, %v400
        %v402 = vrot.slane %v401, 2
        %v403 = vadd.f32 %v401, %v402
        %v404 = vrot.slane %v403, 1
        %v405 = vadd.f32 %v403, %v404
        %v406 = vsel %vm370, %v396, 0.0
        %v407 = vrot.slane %v406, 4
        %v408 = vadd.f32 %v406, %v407
        %v409 = vrot.slane %v408, 2
        %v410 = vadd.f32 %v408, %v409
        %v411 = vrot.slane %v410, 1
        %v412 = vadd.f32 %v410, %v411
        %v413 = vmul.f32 %v378, %v378
        %415 = vst [vmem:[#allocation1] ss:$4 sm:$0xff] %v413
        %v416 = vld.sshfl [vmem:[#allocation1] sm:$0xff pattern:$0x73625140]
        %v417 = vld.sshfl [vmem:[#allocation1 + $0x8] sm:$0xff pattern:$0x73625140]
        %v420 = vsel %vm370, %v416, 0.0
        %v421 = vrot.slane %v420, 4
        %v422 = vadd.f32 %v420, %v421
        %v423 = vrot.slane %v422, 2
        %v424 = vadd.f32 %v422, %v423
        %v425 = vrot.slane %v424, 1
        %v426 = vadd.f32 %v424, %v425
        %v427 = vsel %vm370, %v417, 0.0
        %v428 = vrot.slane %v427, 4
        %v429 = vadd.f32 %v427, %v428
        %v430 = vrot.slane %v429, 2
        %v431 = vadd.f32 %v429, %v430
        %v432 = vrot.slane %v431, 1
        %v433 = vadd.f32 %v431, %v432
        %v434 = vsel %vm388, %v405, %v426
        %v435 = vsel %vm388, %v412, %v433
        %v436 = vsel %vm370, %v434, 0.0
        %v437 = vsel %vm370, %v435, 0.0
        %438 = vst [vmem:[%s314] sm:$0xff] %v436
        %439 = vst [vmem:[%s314 + $0x8] sm:$0xff] %v437
      $region36: #{dcgan_generator_forward.9} parent=27 // pred_fallthru
        _
      %s440 = smul.u32 2, %s23
      %p441 = scmp.lt.s32.totalorder %s21, 0
      %s442 = scalar_select %p441, %s21, 0
      %p443 = scmp.lt.s32.totalorder %s22, 0
      %s444 = scalar_select %p443, %s22, 0
      %p445 = scmp.lt.s32.totalorder %s440, 63
      %s446 = scalar_select %p445, %s440, 63
      %s447 = smul.addr %s444, 64
      %s448 = sadd.s32 %s446, %s447
      %s449 = smul.addr %s442, 64
      %s450 = sadd.s32 %s448, %s449
      %s451 = scalar_lea.vmem %s2, %s450
      %s452 = smul.u32 2, %s23
      %p453 = scmp.lt.s32.totalorder %s21, 0
      %s454 = scalar_select %p453, %s21, 0
      %p455 = scmp.lt.s32.totalorder %s22, 0
      %s456 = scalar_select %p455, %s22, 0
      %p457 = scmp.lt.s32.totalorder %s452, 63
      %s458 = scalar_select %p457, %s452, 63
      %s459 = smul.addr %s456, 64
      %s460 = sadd.s32 %s458, %s459
      %s461 = smul.addr %s454, 64
      %s462 = sadd.s32 %s460, %s461
      %s463 = smul.addr %s462, 8
      %s464 = scalar_lea.vmem %s3, %s463
      // Predicated region
      $region37: #{dcgan_generator_forward.9} parent=27 // pred_check
        %p465 = pneg %p123
      $region38: #{dcgan_generator_forward.9} parent=27 // pred_check_branch
        %467 = sbr.rel (%p465) target = $region40
      $region39: #{dcgan_generator_forward.9} parent=27 // pred_region
        %s468 = smul.u32 2, %s23
      $region40: #{dcgan_generator_forward.9} parent=27 // pred_fallthru
        _
      // Predicated region
      $region41: #{dcgan_generator_forward.9} parent=27 // pred_check
        %p469 = pneg %p153
      $region42: #{dcgan_generator_forward.9} parent=27 // pred_check_branch
        %471 = sbr.rel (%p469) target = $region44
      $region43: #{dcgan_generator_forward.9} parent=27 // pred_region
        %s472 = smul.u32 2, %s23
      $region44: #{dcgan_generator_forward.9} parent=27 // pred_fallthru
        _
    $region28: #{dcgan_generator_forward.9} parent=5 // pred_fallthru
      _
    %p473 = scmp.le.s32.totalorder 2, %s10
    // Predicated region
    $region45: #{dcgan_generator_forward.9} parent=5 // pred_check
      %p474 = pneg %p473
    $region46: #{dcgan_generator_forward.9} parent=5 // pred_check_branch
      %476 = sbr.rel (%p474) target = $region48
    $region47: #{dcgan_generator_forward.9} parent=5 // pred_region
      %s477 = ssub.s32 %s10, 2
      // Predicated region
      $region49: #{dcgan_generator_forward.9} parent=47 // pred_check
        %p478 = pneg %p129
      $region50: #{dcgan_generator_forward.9} parent=47 // pred_check_branch
        %480 = sbr.rel (%p478) target = $region52
      $region51: #{dcgan_generator_forward.9} parent=47 // pred_region
        %s481 = smul.u32 2, %s27
        %p482 = scmp.lt.s32.totalorder %s25, 0
        %s483 = scalar_select %p482, %s25, 0
        %p484 = scmp.lt.s32.totalorder %s26, 0
        %s485 = scalar_select %p484, %s26, 0
        %p486 = scmp.lt.s32.totalorder %s481, 63
        %s487 = scalar_select %p486, %s481, 63
        %s488 = smul.addr %s485, 64
        %s489 = sadd.s32 %s487, %s488
        %s490 = smul.addr %s483, 64
        %s491 = sadd.s32 %s489, %s490
        %s492 = scalar_lea.vmem %s2, %s491
      $region52: #{dcgan_generator_forward.9} parent=47 // pred_fallthru
        _
      // Predicated region
      $region53: #{dcgan_generator_forward.9} parent=47 // pred_check
        %p493 = pneg %p159
      $region54: #{dcgan_generator_forward.9} parent=47 // pred_check_branch
        %495 = sbr.rel (%p493) target = $region56
      $region55: #{dcgan_generator_forward.9} parent=47 // pred_region
        %s496 = smul.u32 2, %s27
        %p497 = scmp.lt.s32.totalorder %s25, 0
        %s498 = scalar_select %p497, %s25, 0
        %p499 = scmp.lt.s32.totalorder %s26, 0
        %s500 = scalar_select %p499, %s26, 0
        %p501 = scmp.lt.s32.totalorder %s496, 63
        %s502 = scalar_select %p501, %s496, 63
        %s503 = smul.addr %s500, 64
        %s504 = sadd.s32 %s502, %s503
        %s505 = smul.addr %s498, 64
        %s506 = sadd.s32 %s504, %s505
        %s507 = smul.addr %s506, 8
        %s508 = scalar_lea.vmem %s3, %s507
      $region56: #{dcgan_generator_forward.9} parent=47 // pred_fallthru
        _
    $region48: #{dcgan_generator_forward.9} parent=5 // pred_fallthru
      _
  $region6: #{dcgan_generator_forward.9} parent=0 // loop_footer
    %s14 = sadd.s32 1, %s10
  $region7: #{dcgan_generator_forward.9} parent=0 // loop_footer_branch
    %9 = sbr.rel target = $region3
  $region8: #{dcgan_generator_forward.9} parent=0 // loop_exit
    _

// kernel: dcgan_generator_forward.10
$region0: #{dcgan_generator_forward.10}
  #allocation0 [shape = 'u32[]', space=smem, size = 0x4, offset = 0x4, fixed_abs, tag = 'smem constant byte address 0x4 - core index']
  #allocation1 [shape = 'u32[72,128]{1,0:T(1,128)}', space=vmem, size = 0x9000, scoped, tag = 'internal scratch']
  %s0 = inlined_call_operand.vmem [shape: bf16[32,512], index: 0, kind: input, shape index: {}]
  %s1 = inlined_call_operand.vmem [shape: f32[1,512], index: 1, kind: input, shape index: {}]
  %s2 = inlined_call_operand.vmem [shape: f32[1,512], index: 2, kind: input, shape index: {}]
  %s3 = inlined_call_operand.vmem [shape: bf16[32,512], index: 3, kind: output, shape index: {}]
  %s4 = sld [smem:[#allocation0]]
  $region22: #{dcgan_generator_forward.10} parent=0
    _
  %s6 = ssub.s32 1, %s4
  %s7 = scalar_select 0, %s6, %s4
  // Predicated region
  $region2: #{dcgan_generator_forward.10} parent=0 // pred_check
    _
  $region3: #{dcgan_generator_forward.10} parent=0 // pred_check_branch
    %9 = sbr.rel (0) target = $region5
  $region4: #{dcgan_generator_forward.10} parent=0 // pred_region
    _
  $region5: #{dcgan_generator_forward.10} parent=0 // pred_fallthru
    _
  // Predicated region
  $region6: #{dcgan_generator_forward.10} parent=0 // pred_check
    _
  $region7: #{dcgan_generator_forward.10} parent=0 // pred_check_branch
    %11 = sbr.rel (0) target = $region9
  $region8: #{dcgan_generator_forward.10} parent=0 // pred_region
    _
  $region9: #{dcgan_generator_forward.10} parent=0 // pred_fallthru
    _
  // Predicated region
  $region10: #{dcgan_generator_forward.10} parent=0 // pred_check
    _
  $region11: #{dcgan_generator_forward.10} parent=0 // pred_check_branch
    %13 = sbr.rel (0) target = $region13
  $region12: #{dcgan_generator_forward.10} parent=0 // pred_region
    _
  $region13: #{dcgan_generator_forward.10} parent=0 // pred_fallthru
    _
  %v14 = vld [vmem:[%s0] sm:$0xff]
  %v15 = vld [vmem:[%s0 + $0x8] sm:$0xff]
  %v16 = vld [vmem:[%s0 + $0x10] sm:$0xff]
  %v17 = vld [vmem:[%s0 + $0x18] sm:$0xff]
  %v18 = vld [vmem:[%s0 + $0x20] sm:$0xff]
  %v19 = vld [vmem:[%s0 + $0x28] sm:$0xff]
  %v20 = vld [vmem:[%s0 + $0x30] sm:$0xff]
  %v21 = vld [vmem:[%s0 + $0x38] sm:$0xff]
  %v22 = vunpack.c.l.bf16 %v14
  %v23 = vunpack.c.h.bf16 %v14
  %v24 = vunpack.c.l.bf16 %v15
  %v25 = vunpack.c.h.bf16 %v15
  %v26 = vunpack.c.l.bf16 %v16
  %v27 = vunpack.c.h.bf16 %v16
  %v28 = vunpack.c.l.bf16 %v17
  %v29 = vunpack.c.h.bf16 %v17
  %v30 = vunpack.c.l.bf16 %v18
  %v31 = vunpack.c.h.bf16 %v18
  %v32 = vunpack.c.l.bf16 %v19
  %v33 = vunpack.c.h.bf16 %v19
  %v34 = vunpack.c.l.bf16 %v20
  %v35 = vunpack.c.h.bf16 %v20
  %v36 = vunpack.c.l.bf16 %v21
  %v37 = vunpack.c.h.bf16 %v21
  %v38 = vld [vmem:[%s1] sm:$0xf]
  %v40 = vperm.slane %v38, 0
  %v41 = vperm.slane %v38, 1
  %v42 = vperm.slane %v38, 2
  %v43 = vperm.slane %v38, 3
  %v48 = vmul.f32 %v22, %v40
  %v49 = vmul.f32 %v23, %v41
  %v50 = vmul.f32 %v24, %v42
  %v51 = vmul.f32 %v25, %v43
  %v52 = vmul.f32 %v26, %v40
  %v53 = vmul.f32 %v27, %v41
  %v54 = vmul.f32 %v28, %v42
  %v55 = vmul.f32 %v29, %v43
  %v56 = vmul.f32 %v30, %v40
  %v57 = vmul.f32 %v31, %v41
  %v58 = vmul.f32 %v32, %v42
  %v59 = vmul.f32 %v33, %v43
  %v60 = vmul.f32 %v34, %v40
  %v61 = vmul.f32 %v35, %v41
  %v62 = vmul.f32 %v36, %v42
  %v63 = vmul.f32 %v37, %v43
  %v64 = vld [vmem:[%s2] sm:$0xf]
  %v66 = vperm.slane %v64, 0
  %v67 = vperm.slane %v64, 1
  %v68 = vperm.slane %v64, 2
  %v69 = vperm.slane %v64, 3
  %v74 = vadd.f32 %v48, %v66
  %v75 = vadd.f32 %v49, %v67
  %v76 = vadd.f32 %v50, %v68
  %v77 = vadd.f32 %v51, %v69
  %v78 = vadd.f32 %v52, %v66
  %v79 = vadd.f32 %v53, %v67
  %v80 = vadd.f32 %v54, %v68
  %v81 = vadd.f32 %v55, %v69
  %v82 = vadd.f32 %v56, %v66
  %v83 = vadd.f32 %v57, %v67
  %v84 = vadd.f32 %v58, %v68
  %v85 = vadd.f32 %v59, %v69
  %v86 = vadd.f32 %v60, %v66
  %v87 = vadd.f32 %v61, %v67
  %v88 = vadd.f32 %v62, %v68
  %v89 = vadd.f32 %v63, %v69
  %v90 = vmax.f32 %v74, 0.0
  %v91 = vmax.f32 %v75, 0.0
  %v92 = vmax.f32 %v76, 0.0
  %v93 = vmax.f32 %v77, 0.0
  %v94 = vmax.f32 %v78, 0.0
  %v95 = vmax.f32 %v79, 0.0
  %v96 = vmax.f32 %v80, 0.0
  %v97 = vmax.f32 %v81, 0.0
  %v98 = vmax.f32 %v82, 0.0
  %v99 = vmax.f32 %v83, 0.0
  %v100 = vmax.f32 %v84, 0.0
  %v101 = vmax.f32 %v85, 0.0
  %v102 = vmax.f32 %v86, 0.0
  %v103 = vmax.f32 %v87, 0.0
  %v104 = vmax.f32 %v88, 0.0
  %v105 = vmax.f32 %v89, 0.0
  %v106 = vpack.c.bf16 %v91, %v90
  %v107 = vpack.c.bf16 %v93, %v92
  %v108 = vpack.c.bf16 %v95, %v94
  %v109 = vpack.c.bf16 %v97, %v96
  %v110 = vpack.c.bf16 %v99, %v98
  %v111 = vpack.c.bf16 %v101, %v100
  %v112 = vpack.c.bf16 %v103, %v102
  %v113 = vpack.c.bf16 %v105, %v104
  %114 = vst [vmem:[%s3] sm:$0xff] %v106
  %115 = vst [vmem:[%s3 + $0x8] sm:$0xff] %v107
  %116 = vst [vmem:[%s3 + $0x10] sm:$0xff] %v108
  %117 = vst [vmem:[%s3 + $0x18] sm:$0xff] %v109
  %118 = vst [vmem:[%s3 + $0x20] sm:$0xff] %v110
  %119 = vst [vmem:[%s3 + $0x28] sm:$0xff] %v111
  %120 = vst [vmem:[%s3 + $0x30] sm:$0xff] %v112
  %121 = vst [vmem:[%s3 + $0x38] sm:$0xff] %v113
  // Predicated region
  $region14: #{dcgan_generator_forward.10} parent=0 // pred_check
    _
  $region15: #{dcgan_generator_forward.10} parent=0 // pred_check_branch
    %123 = sbr.rel (0) target = $region17
  $region16: #{dcgan_generator_forward.10} parent=0 // pred_region
    _
  $region17: #{dcgan_generator_forward.10} parent=0 // pred_fallthru
    _
  // Predicated region
  $region18: #{dcgan_generator_forward.10} parent=0 // pred_check
    _
  $region19: #{dcgan_generator_forward.10} parent=0 // pred_check_branch
    %125 = sbr.rel (0) target = $region21
  $region20: #{dcgan_generator_forward.10} parent=0 // pred_region
    _
  $region21: #{dcgan_generator_forward.10} parent=0 // pred_fallthru
    _

// kernel: dcgan_generator_forward.11
$region0: #{dcgan_generator_forward.11}
  #allocation0 [shape = 'u32[]', space=smem, size = 0x4, offset = 0x4, fixed_abs, tag = 'smem constant byte address 0x4 - core index']
  #allocation1 [shape = 'u32[72,128]{1,0:T(1,128)}', space=vmem, size = 0x9000, scoped, tag = 'internal scratch']
  #allocation2 [shape = 'f32[32,256]{1,0:T(8,128)}', space=vmem, size = 0x8000, scoped, tag = 'scratch operand']
  %s0 = inlined_call_operand.vmem [shape: bf16[4,32,2048], index: 0, kind: input, shape index: {}]
  %s1 = inlined_call_operand.vmem [shape: bf16[4,2048,256], index: 1, kind: input, shape index: {}]
  %s2 = inlined_call_operand.vmem [shape: bf16[4,32,256], index: 2, kind: output, shape index: {0}]
  %s3 = inlined_call_operand.vmem [shape: f32[4,1,8,256], index: 3, kind: output, shape index: {1}]
  %4 = xla_tuple %s2, %s3
  %s5 = sld [smem:[#allocation0]]
  $region80: #{dcgan_generator_forward.11} parent=0
    _
  %s7 = ssub.s32 1, %s5
  %s8 = scalar_select 0, %s7, %s5
  $region1: #{dcgan_generator_forward.11} parent=0
    #allocation3 [shape = 'u8[65536]{0}', space=vmem, size = 0x10000, scoped, tag = 'input window, operand 0']
    loop: start=0, step=1, limit=18
    $region2: #{dcgan_generator_forward.11} parent=1 // loop_pre_header
      _
    $region3: #{dcgan_generator_forward.11} parent=1 // loop_header
      %s10 = sphi 0, %s14
      %p11 = scmp.ge.s32.totalorder %s10, 18
      %s17 = sphi 0, %s43
      %s18 = sphi 0, %s39
      %s19 = sphi 0, %s35
      %s20 = sphi 0, %s31
      %s21 = sphi 0, %s17
      %s22 = sphi 0, %s18
      %s23 = sphi 0, %s19
      %s24 = sphi 0, %s20
      %s25 = sphi 0, %s21
      %s26 = sphi 0, %s22
      %s27 = sphi 0, %s23
      %s28 = sphi 0, %s24
      %s50 = sphi 0, %s52
      %s53 = sphi 0, %s50
      %s54 = sphi 0, %s53
      %s70 = sphi 0, %s54
      %s80 = sphi 0, %s82
      %s83 = sphi 0, %s80
      %s84 = sphi 0, %s83
      %s100 = sphi 0, %s84
      %s110 = sphi 0, %s112
      %s113 = sphi 0, %s110
      %s114 = sphi 0, %s113
      %s130 = sphi 0, %s114
      %s140 = sphi 0, %s142
      %s143 = sphi 0, %s140
      %s144 = sphi 0, %s143
      %s160 = sphi 0, %s144
    $region4: #{dcgan_generator_forward.11} parent=1 // loop_header_branch
      %13 = sbr.rel (%p11) target = $region8
    $region5: #{dcgan_generator_forward.11} parent=1 // loop_body
      %s15 = ssub.s32 %s10, 1
      %s16 = ssub.s32 %s10, 2
      %s29 = sadd.s32 1, %s20
      %p30 = scmp.ge.s32.totalorder %s29, 4
      %s31 = scalar_select %p30, 0, %s29
      %s32 = sadd.s32 1, %s19
      %s33 = scalar_select %p30, %s32, %s19
      %p34 = scmp.ge.s32.totalorder %s33, 1
      %s35 = scalar_select %p34, 0, %s33
      %s36 = sadd.s32 1, %s18
      %s37 = scalar_select %p34, %s36, %s18
      %p38 = scmp.ge.s32.totalorder %s37, 1
      %s39 = scalar_select %p38, 0, %s37
      %s40 = sadd.s32 1, %s17
      %s41 = scalar_select %p38, %s40, %s17
      %p42 = scmp.ge.s32.totalorder %s41, 4
      %s43 = scalar_select %p42, 0, %s41
      %s44 = ssub.s32 %s17, %s43
      %s45 = ssub.s32 %s18, %s39
      %s46 = sor.u32 %s44, %s45
      %s47 = ssub.s32 %s20, %s31
      %s48 = sor.u32 %s46, %s47
      %p49 = scmp.eq.s32.totalorder %s48, 0
      %s51 = sadd.s32 %s50, 1
      %s52 = scalar_select %p49, %s50, %s51
      %p55 = pneg %p49
      %p56 = scmp.eq.s32.totalorder %s10, 15
      %p57 = por %p55, %p56
      %p58 = scmp.ne.s32.totalorder %s50, %s53
      %p59 = scmp.eq.s32.totalorder %s10, 0
      %p60 = por %p58, %p59
      %p61 = scmp.ne.s32.totalorder %s50, %s53
      %p62 = scmp.eq.s32.totalorder %s15, 15
      %p63 = por %p61, %p62
      %p64 = scmp.ne.s32.totalorder %s53, %s54
      %p65 = scmp.eq.s32.totalorder %s15, 0
      %p66 = por %p64, %p65
      %p67 = scmp.ne.s32.totalorder %s53, %s54
      %p68 = scmp.eq.s32.totalorder %s16, 15
      %p69 = por %p67, %p68
      %p71 = scmp.ne.s32.totalorder %s54, %s70
      %p72 = scmp.eq.s32.totalorder %s16, 0
      %p73 = por %p71, %p72
      %s74 = ssub.s32 %s17, %s43
      %s75 = ssub.s32 %s20, %s31
      %s76 = sor.u32 %s74, %s75
      %s77 = ssub.s32 %s19, %s35
      %s78 = sor.u32 %s76, %s77
      %p79 = scmp.eq.s32.totalorder %s78, 0
      %s81 = sadd.s32 %s80, 1
      %s82 = scalar_select %p79, %s80, %s81
      %p85 = pneg %p79
      %p86 = scmp.eq.s32.totalorder %s10, 15
      %p87 = por %p85, %p86
      %p88 = scmp.ne.s32.totalorder %s80, %s83
      %p89 = scmp.eq.s32.totalorder %s10, 0
      %p90 = por %p88, %p89
      %p91 = scmp.ne.s32.totalorder %s80, %s83
      %p92 = scmp.eq.s32.totalorder %s15, 15
      %p93 = por %p91, %p92
      %p94 = scmp.ne.s32.totalorder %s83, %s84
      %p95 = scmp.eq.s32.totalorder %s15, 0
      %p96 = por %p94, %p95
      %p97 = scmp.ne.s32.totalorder %s83, %s84
      %p98 = scmp.eq.s32.totalorder %s16, 15
      %p99 = por %p97, %p98
      %p101 = scmp.ne.s32.totalorder %s84, %s100
      %p102 = scmp.eq.s32.totalorder %s16, 0
      %p103 = por %p101, %p102
      %s104 = ssub.s32 %s17, %s43
      %s105 = ssub.s32 %s18, %s39
      %s106 = sor.u32 %s104, %s105
      %s107 = ssub.s32 %s19, %s35
      %s108 = sor.u32 %s106, %s107
      %p109 = scmp.eq.s32.totalorder %s108, 0
      %s111 = sadd.s32 %s110, 1
      %s112 = scalar_select %p109, %s110, %s111
      %p115 = pneg %p109
      %p116 = scmp.eq.s32.totalorder %s10, 15
      %p117 = por %p115, %p116
      %p118 = scmp.ne.s32.totalorder %s110, %s113
      %p119 = scmp.eq.s32.totalorder %s10, 0
      %p120 = por %p118, %p119
      %p121 = scmp.ne.s32.totalorder %s110, %s113
      %p122 = scmp.eq.s32.totalorder %s15, 15
      %p123 = por %p121, %p122
      %p124 = scmp.ne.s32.totalorder %s113, %s114
      %p125 = scmp.eq.s32.totalorder %s15, 0
      %p126 = por %p124, %p125
      %p127 = scmp.ne.s32.totalorder %s113, %s114
      %p128 = scmp.eq.s32.totalorder %s16, 15
      %p129 = por %p127, %p128
      %p131 = scmp.ne.s32.totalorder %s114, %s130
      %p132 = scmp.eq.s32.totalorder %s16, 0
      %p133 = por %p131, %p132
      %s134 = ssub.s32 %s17, %s43
      %s135 = ssub.s32 %s18, %s39
      %s136 = sor.u32 %s134, %s135
      %s137 = ssub.s32 %s19, %s35
      %s138 = sor.u32 %s136, %s137
      %p139 = scmp.eq.s32.totalorder %s138, 0
      %s141 = sadd.s32 %s140, 1
      %s142 = scalar_select %p139, %s140, %s141
      %p145 = pneg %p139
      %p146 = scmp.eq.s32.totalorder %s10, 15
      %p147 = por %p145, %p146
      %p148 = scmp.ne.s32.totalorder %s140, %s143
      %p149 = scmp.eq.s32.totalorder %s10, 0
      %p150 = por %p148, %p149
      %p151 = scmp.ne.s32.totalorder %s140, %s143
      %p152 = scmp.eq.s32.totalorder %s15, 15
      %p153 = por %p151, %p152
      %p154 = scmp.ne.s32.totalorder %s143, %s144
      %p155 = scmp.eq.s32.totalorder %s15, 0
      %p156 = por %p154, %p155
      %p157 = scmp.ne.s32.totalorder %s143, %s144
      %p158 = scmp.eq.s32.totalorder %s16, 15
      %p159 = por %p157, %p158
      %p161 = scmp.ne.s32.totalorder %s144, %s160
      %p162 = scmp.eq.s32.totalorder %s16, 0
      %p163 = por %p161, %p162
      %p164 = scmp.le.s32.totalorder 1, %s10
      %p165 = scmp.lt.s32.totalorder %s10, 17
      %p166 = pnand %p164, %p165
      %p167 = pneg %p166
      // Predicated region
      $region9: #{dcgan_generator_forward.11} parent=5 // pred_check
        _
      $region10: #{dcgan_generator_forward.11} parent=5 // pred_check_branch
        %169 = sbr.rel (%p166) target = $region12
      $region11: #{dcgan_generator_forward.11} parent=5 // pred_region
        %s170 = ssub.s32 %s10, 1
      $region12: #{dcgan_generator_forward.11} parent=5 // pred_fallthru
        _
      %p171 = scmp.lt.s32.totalorder %s10, 16
      // Predicated region
      $region13: #{dcgan_generator_forward.11} parent=5 // pred_check
        %p172 = pneg %p171
      $region14: #{dcgan_generator_forward.11} parent=5 // pred_check_branch
        %174 = sbr.rel (%p172) target = $region16
      $region15: #{dcgan_generator_forward.11} parent=5 // pred_region
        // Predicated region
        $region17: #{dcgan_generator_forward.11} parent=15 // pred_check
          %p175 = pneg %p60
        $region18: #{dcgan_generator_forward.11} parent=15 // pred_check_branch
          %177 = sbr.rel (%p175) target = $region20
        $region19: #{dcgan_generator_forward.11} parent=15 // pred_region
          %s178 = sand.u32 %s50, 1
          %s179 = sand.u32 %s50, 1
          %s180 = smul.addr %s179, 64
          %s181 = scalar_lea.vmem [#allocation3], %s180
          %s182 = smul.u32 4, %s18
          %s183 = smul.u32 4, %s20
          %s184 = smul.addr %s182, 16
          %s185 = sadd.s32 %s183, %s184
          %s186 = smul.addr %s17, 64
          %s187 = sadd.s32 %s185, %s186
          %s188 = smul.addr %s187, 4
          %s189 = scalar_lea.vmem %s0, %s188
          // Predicated region
          $region21: #{dcgan_generator_forward.11} parent=19 // pred_check
            _
          $region22: #{dcgan_generator_forward.11} parent=19 // pred_check_branch
            %191 = sbr.rel (0) target = $region24
          $region23: #{dcgan_generator_forward.11} parent=19 // pred_region
            // Predicated region
            $region25: #{dcgan_generator_forward.11} parent=23 // pred_check
              _
            $region26: #{dcgan_generator_forward.11} parent=23 // pred_check_branch
              %193 = sbr.rel (0) target = $region28
            $region27: #{dcgan_generator_forward.11} parent=23 // pred_region
              loop: start=0, step=1, limit=1
              $region29: #{dcgan_generator_forward.11} parent=27 // loop_pre_header
                _
              $region30: #{dcgan_generator_forward.11} parent=27 // loop_header
                %s195 = sphi 0, %s199
                %p196 = scmp.ge.s32.totalorder %s195, 1
                %s200 = sphi %s189, %s189
                %s201 = sphi %s181, %s181
              $region31: #{dcgan_generator_forward.11} parent=27 // loop_header_branch
                %198 = sbr.rel (%p196) target = $region35
              $region32: #{dcgan_generator_forward.11} parent=27 // loop_body
                %v202 = vld [vmem:[%s200] sm:$0xff]
                %203 = vst [vmem:[%s201] sm:$0xff] %v202
                %v204 = vld [vmem:[%s200 + $0x8] sm:$0xff]
                %205 = vst [vmem:[%s201 + $0x8] sm:$0xff] %v204
                %v206 = vld [vmem:[%s200 + $0x40] sm:$0xff]
                %207 = vst [vmem:[%s201 + $0x10] sm:$0xff] %v206
                %v208 = vld [vmem:[%s200 + $0x48] sm:$0xff]
                %209 = vst [vmem:[%s201 + $0x18] sm:$0xff] %v208
                %v210 = vld [vmem:[%s200 + $0x80] sm:$0xff]
                %211 = vst [vmem:[%s201 + $0x20] sm:$0xff] %v210
                %v212 = vld [vmem:[%s200 + $0x88] sm:$0xff]
                %213 = vst [vmem:[%s201 + $0x28] sm:$0xff] %v212
                %v214 = vld [vmem:[%s200 + $0xc0] sm:$0xff]
                %215 = vst [vmem:[%s201 + $0x30] sm:$0xff] %v214
                %v216 = vld [vmem:[%s200 + $0xc8] sm:$0xff]
                %217 = vst [vmem:[%s201 + $0x38] sm:$0xff] %v216
              $region33: #{dcgan_generator_forward.11} parent=27 // loop_footer
                %s199 = sadd.s32 1, %s195
              $region34: #{dcgan_generator_forward.11} parent=27 // loop_footer_branch
                %194 = sbr.rel target = $region30
              $region35: #{dcgan_generator_forward.11} parent=27 // loop_exit
                _
            $region28: #{dcgan_generator_forward.11} parent=23 // pred_fallthru
              _
            // Predicated region
            $region36: #{dcgan_generator_forward.11} parent=23 // pred_check
              _
            $region37: #{dcgan_generator_forward.11} parent=23 // pred_check_branch
              %219 = sbr.rel target = $region39
            $region38: #{dcgan_generator_forward.11} parent=23 // pred_region
              _
            $region39: #{dcgan_generator_forward.11} parent=23 // pred_fallthru
              _
          $region24: #{dcgan_generator_forward.11} parent=19 // pred_fallthru
            _
          %220 = vnop
        $region20: #{dcgan_generator_forward.11} parent=15 // pred_fallthru
          _
        // Predicated region
        $region40: #{dcgan_generator_forward.11} parent=15 // pred_check
          %p221 = pneg %p90
        $region41: #{dcgan_generator_forward.11} parent=15 // pred_check_branch
          %223 = sbr.rel (%p221) target = $region43
        $region42: #{dcgan_generator_forward.11} parent=15 // pred_region
          %s224 = smul.u32 64, %s20
          %s225 = smul.u32 2, %s19
          %p226 = scmp.lt.s32.totalorder %s17, 3
          %s227 = scalar_select %p226, %s17, 3
          %p228 = scmp.lt.s32.totalorder %s224, 255
          %s229 = scalar_select %p228, %s224, 255
          %p230 = scmp.lt.s32.totalorder %s225, 1
          %s231 = scalar_select %p230, %s225, 1
          %s232 = smul.addr %s229, 2
          %s233 = sadd.s32 %s231, %s232
          %s234 = smul.addr %s227, 512
          %s235 = sadd.s32 %s233, %s234
          %s236 = smul.addr %s235, 4
          %s237 = scalar_lea.vmem %s1, %s236
          %s238 = smul.u32 64, %s20
          %s239 = smul.u32 2, %s19
        $region43: #{dcgan_generator_forward.11} parent=15 // pred_fallthru
          _
      $region16: #{dcgan_generator_forward.11} parent=5 // pred_fallthru
        _
      %p240 = scmp.le.s32.totalorder 1, %s10
      %p241 = scmp.lt.s32.totalorder %s10, 17
      %p242 = pnand %p240, %p241
      %p243 = pneg %p242
      // Predicated region
      $region44: #{dcgan_generator_forward.11} parent=5 // pred_check
        _
      $region45: #{dcgan_generator_forward.11} parent=5 // pred_check_branch
        %245 = sbr.rel (%p242) target = $region47
      $region46: #{dcgan_generator_forward.11} parent=5 // pred_region
        %s246 = ssub.s32 %s10, 1
        %s247 = sand.u32 %s53, 1
        %s248 = sand.u32 %s53, 1
        %s249 = smul.addr %s248, 64
        %s250 = scalar_lea.vmem [#allocation3], %s249
        // Predicated region
        $region48: #{dcgan_generator_forward.11} parent=46 // pred_check
          %p251 = pneg %p66
        $region49: #{dcgan_generator_forward.11} parent=46 // pred_check_branch
          %253 = sbr.rel (%p251) target = $region51
        $region50: #{dcgan_generator_forward.11} parent=46 // pred_region
          _
        $region51: #{dcgan_generator_forward.11} parent=46 // pred_fallthru
          _
        %s254 = sand.u32 %s53, 1
        %s255 = sand.u32 %s53, 1
        %s256 = smul.addr %s255, 64
        %s257 = scalar_lea.vmem [#allocation3], %s256
        %p258 = pneg %p66
        %p259 = pneg %p63
        %s260 = smul.u32 64, %s24
        %s261 = smul.u32 2, %s23
        %p262 = scmp.lt.s32.totalorder %s21, 3
        %s263 = scalar_select %p262, %s21, 3
        %p264 = scmp.lt.s32.totalorder %s260, 255
        %s265 = scalar_select %p264, %s260, 255
        %p266 = scmp.lt.s32.totalorder %s261, 1
        %s267 = scalar_select %p266, %s261, 1
        %s268 = smul.addr %s265, 2
        %s269 = sadd.s32 %s267, %s268
        %s270 = smul.addr %s263, 512
        %s271 = sadd.s32 %s269, %s270
        %s272 = smul.addr %s271, 4
        %s273 = scalar_lea.vmem %s1, %s272
        %p274 = pneg %p96
        %p275 = pneg %p93
        %p276 = pneg %p126
        %p277 = pneg %p123
        %s278 = smul.u32 4, %s22
        %s279 = smul.u32 2, %s23
        %p280 = scmp.lt.s32.totalorder %s21, 3
        %s281 = scalar_select %p280, %s21, 3
        %p282 = scmp.lt.s32.totalorder %s278, 3
        %s283 = scalar_select %p282, %s278, 3
        %p284 = scmp.lt.s32.totalorder %s279, 1
        %s285 = scalar_select %p284, %s279, 1
        %s286 = smul.addr %s283, 2
        %s287 = sadd.s32 %s285, %s286
        %s288 = smul.addr %s281, 8
        %s289 = sadd.s32 %s287, %s288
        %s290 = smul.addr %s289, 4
        %s291 = scalar_lea.vmem %s2, %s290
        %p292 = pneg %p156
        %p293 = pneg %p153
        %s294 = smul.u32 2, %s23
        %p295 = scmp.lt.s32.totalorder %s21, 3
        %s296 = scalar_select %p295, %s21, 3
        %p297 = scmp.lt.s32.totalorder %s22, 0
        %s298 = scalar_select %p297, %s22, 0
        %p299 = scmp.lt.s32.totalorder %s294, 1
        %s300 = scalar_select %p299, %s294, 1
        %s301 = smul.addr %s298, 2
        %s302 = sadd.s32 %s300, %s301
        %s303 = smul.addr %s296, 2
        %s304 = sadd.s32 %s302, %s303
        %s305 = smul.addr %s304, 8
        %s306 = scalar_lea.vmem %s3, %s305
        %s307 = smul.u32 4, %s22
        %s308 = smul.u32 4, %s24
        %s309 = smul.u32 64, %s24
        %s310 = smul.u32 2, %s23
        %p311 = scmp.lt.s32.totalorder %s21, 3
        %s312 = scalar_select %p311, %s21, 3
        %p313 = scmp.lt.s32.totalorder %s309, 255
        %s314 = scalar_select %p313, %s309, 255
        %p315 = scmp.lt.s32.totalorder %s310, 1
        %s316 = scalar_select %p315, %s310, 1
        %s317 = smul.addr %s314, 2
        %s318 = sadd.s32 %s316, %s317
        %s319 = smul.addr %s312, 512
        %s320 = sadd.s32 %s318, %s319
        %s321 = smul.addr %s320, 4
        %s322 = scalar_lea.vmem %s1, %s321
        %s323 = smul.u32 64, %s24
        %s324 = smul.u32 2, %s23
        %s325 = smul.u32 4, %s22
        %s326 = smul.u32 2, %s23
        %p327 = scmp.lt.s32.totalorder %s21, 3
        %s328 = scalar_select %p327, %s21, 3
        %p329 = scmp.lt.s32.totalorder %s325, 3
        %s330 = scalar_select %p329, %s325, 3
        %p331 = scmp.lt.s32.totalorder %s326, 1
        %s332 = scalar_select %p331, %s326, 1
        %s333 = smul.addr %s330, 2
        %s334 = sadd.s32 %s332, %s333
        %s335 = smul.addr %s328, 8
        %s336 = sadd.s32 %s334, %s335
        %s337 = smul.addr %s336, 4
        %s338 = scalar_lea.vmem %s2, %s337
        %s339 = smul.u32 4, %s22
        %s340 = smul.u32 2, %s23
        %s341 = smul.u32 2, %s23
        %p342 = scmp.lt.s32.totalorder %s21, 3
        %s343 = scalar_select %p342, %s21, 3
        %p344 = scmp.lt.s32.totalorder %s22, 0
        %s345 = scalar_select %p344, %s22, 0
        %p346 = scmp.lt.s32.totalorder %s341, 1
        %s347 = scalar_select %p346, %s341, 1
        %s348 = smul.addr %s345, 2
        %s349 = sadd.s32 %s347, %s348
        %s350 = smul.addr %s343, 2
        %s351 = sadd.s32 %s349, %s350
        %s352 = smul.addr %s351, 8
        %s353 = scalar_lea.vmem %s3, %s352
        %s354 = smul.u32 2, %s23
        %p355 = scmp.eq.s32.totalorder %s24, 0
        // Predicated region
        $region52: #{dcgan_generator_forward.11} parent=46 // pred_check
          %p356 = pneg %p355
        $region53: #{dcgan_generator_forward.11} parent=46 // pred_check_branch
          %358 = sbr.rel (%p356) target = $region55
        $region54: #{dcgan_generator_forward.11} parent=46 // pred_region
          %359 = vst [vmem:[#allocation2] sm:$0xff] 0.0
          %360 = vst [vmem:[#allocation2 + $0x8] sm:$0xff] 0.0
          %361 = vst [vmem:[#allocation2 + $0x10] sm:$0xff] 0.0
          %362 = vst [vmem:[#allocation2 + $0x18] sm:$0xff] 0.0
          %363 = vst [vmem:[#allocation2 + $0x20] sm:$0xff] 0.0
          %364 = vst [vmem:[#allocation2 + $0x28] sm:$0xff] 0.0
          %365 = vst [vmem:[#allocation2 + $0x30] sm:$0xff] 0.0
          %366 = vst [vmem:[#allocation2 + $0x38] sm:$0xff] 0.0
        $region55: #{dcgan_generator_forward.11} parent=46 // pred_fallthru
          _
        %v367 = vld [vmem:[#allocation2] sm:$0xff]
        %v368 = vld [vmem:[#allocation2 + $0x8] sm:$0xff]
        %v369 = vld [vmem:[#allocation2 + $0x10] sm:$0xff]
        %v370 = vld [vmem:[#allocation2 + $0x18] sm:$0xff]
        %v371 = vld [vmem:[#allocation2 + $0x20] sm:$0xff]
        %v372 = vld [vmem:[#allocation2 + $0x28] sm:$0xff]
        %v373 = vld [vmem:[#allocation2 + $0x30] sm:$0xff]
        %v374 = vld [vmem:[#allocation2 + $0x38] sm:$0xff]
        %v375 = vld [vmem:[%s250] sm:$0xff]
        %v376 = vld [vmem:[%s250 + $0x8] sm:$0xff]
        %v377 = vld [vmem:[%s250 + $0x10] sm:$0xff]
        %v378 = vld [vmem:[%s250 + $0x18] sm:$0xff]
        %v379 = vld [vmem:[%s250 + $0x20] sm:$0xff]
        %v380 = vld [vmem:[%s250 + $0x28] sm:$0xff]
        %v381 = vld [vmem:[%s250 + $0x30] sm:$0xff]
        %v382 = vld [vmem:[%s250 + $0x38] sm:$0xff]
        %v383 = vld [vmem:[%s322] sm:$0xff]
        %v384 = vld [vmem:[%s322 + $0x8] sm:$0xff]
        %v385 = vld [vmem:[%s322 + $0x10] sm:$0xff]
        %v386 = vld [vmem:[%s322 + $0x18] sm:$0xff]
        %v387 = vld [vmem:[%s322 + $0x20] sm:$0xff]
        %v388 = vld [vmem:[%s322 + $0x28] sm:$0xff]
        %v389 = vld [vmem:[%s322 + $0x30] sm:$0xff]
        %v390 = vld [vmem:[%s322 + $0x38] sm:$0xff]
        %v391 = vld [vmem:[%s322 + $0x40] sm:$0xff]
        %v392 = vld [vmem:[%s322 + $0x48] sm:$0xff]
        %v393 = vld [vmem:[%s322 + $0x50] sm:$0xff]
        %v394 = vld [vmem:[%s322 + $0x58] sm:$0xff]
        %v395 = vld [vmem:[%s322 + $0x60] sm:$0xff]
        %v396 = vld [vmem:[%s322 + $0x68] sm:$0xff]
        %v397 = vld [vmem:[%s322 + $0x70] sm:$0xff]
        %v398 = vld [vmem:[%s322 + $0x78] sm:$0xff]
        %v399 = vld [vmem:[%s322 + $0x80] sm:$0xff]
        %v400 = vld [vmem:[%s322 + $0x88] sm:$0xff]
        %v401 = vld [vmem:[%s322 + $0x90] sm:$0xff]
        %v402 = vld [vmem:[%s322 + $0x98] sm:$0xff]
        %v403 = vld [vmem:[%s322 + $0xa0] sm:$0xff]
        %v404 = vld [vmem:[%s322 + $0xa8] sm:$0xff]
        %v405 = vld [vmem:[%s322 + $0xb0] sm:$0xff]
        %v406 = vld [vmem:[%s322 + $0xb8] sm:$0xff]
        %v407 = vld [vmem:[%s322 + $0xc0] sm:$0xff]
        %v408 = vld [vmem:[%s322 + $0xc8] sm:$0xff]
        %v409 = vld [vmem:[%s322 + $0xd0] sm:$0xff]
        %v410 = vld [vmem:[%s322 + $0xd8] sm:$0xff]
        %v411 = vld [vmem:[%s322 + $0xe0] sm:$0xff]
        %v412 = vld [vmem:[%s322 + $0xe8] sm:$0xff]
        %v413 = vld [vmem:[%s322 + $0xf0] sm:$0xff]
        %v414 = vld [vmem:[%s322 + $0xf8] sm:$0xff]
        %v415 = vld [vmem:[%s322 + $0x100] sm:$0xff]
        %v416 = vld [vmem:[%s322 + $0x108] sm:$0xff]
        %v417 = vld [vmem:[%s322 + $0x110] sm:$0xff]
        %v418 = vld [vmem:[%s322 + $0x118] sm:$0xff]
        %v419 = vld [vmem:[%s322 + $0x120] sm:$0xff]
        %v420 = vld [vmem:[%s322 + $0x128] sm:$0xff]
        %v421 = vld [vmem:[%s322 + $0x130] sm:$0xff]
        %v422 = vld [vmem:[%s322 + $0x138] sm:$0xff]
        %v423 = vld [vmem:[%s322 + $0x140] sm:$0xff]
        %v424 = vld [vmem:[%s322 + $0x148] sm:$0xff]
        %v425 = vld [vmem:[%s322 + $0x150] sm:$0xff]
        %v426 = vld [vmem:[%s322 + $0x158] sm:$0xff]
        %v427 = vld [vmem:[%s322 + $0x160] sm:$0xff]
        %v428 = vld [vmem:[%s322 + $0x168] sm:$0xff]
        %v429 = vld [vmem:[%s322 + $0x170] sm:$0xff]
        %v430 = vld [vmem:[%s322 + $0x178] sm:$0xff]
        %v431 = vld [vmem:[%s322 + $0x180] sm:$0xff]
        %v432 = vld [vmem:[%s322 + $0x188] sm:$0xff]
        %v433 = vld [vmem:[%s322 + $0x190] sm:$0xff]
        %v434 = vld [vmem:[%s322 + $0x198] sm:$0xff]
        %v435 = vld [vmem:[%s322 + $0x1a0] sm:$0xff]
        %v436 = vld [vmem:[%s322 + $0x1a8] sm:$0xff]
        %v437 = vld [vmem:[%s322 + $0x1b0] sm:$0xff]
        %v438 = vld [vmem:[%s322 + $0x1b8] sm:$0xff]
        %v439 = vld [vmem:[%s322 + $0x1c0] sm:$0xff]
        %v440 = vld [vmem:[%s322 + $0x1c8] sm:$0xff]
        %v441 = vld [vmem:[%s322 + $0x1d0] sm:$0xff]
        %v442 = vld [vmem:[%s322 + $0x1d8] sm:$0xff]
        %v443 = vld [vmem:[%s322 + $0x1e0] sm:$0xff]
        %v444 = vld [vmem:[%s322 + $0x1e8] sm:$0xff]
        %v445 = vld [vmem:[%s322 + $0x1f0] sm:$0xff]
        %v446 = vld [vmem:[%s322 + $0x1f8] sm:$0xff]
        %v455 = vunpack.c.l.b16 %v375
        %v456 = vunpack.c.h.b16 %v375
        %v457 = vunpack.c.l.b16 %v376
        %v458 = vunpack.c.h.b16 %v376
        %v459 = vunpack.c.l.b16 %v377
        %v460 = vunpack.c.h.b16 %v377
        %v461 = vunpack.c.l.b16 %v378
        %v462 = vunpack.c.h.b16 %v378
        %v463 = vunpack.c.l.b16 %v379
        %v464 = vunpack.c.h.b16 %v379
        %v465 = vunpack.c.l.b16 %v380
        %v466 = vunpack.c.h.b16 %v380
        %v467 = vunpack.c.l.b16 %v381
        %v468 = vunpack.c.h.b16 %v381
        %v469 = vunpack.c.l.b16 %v382
        %v470 = vunpack.c.h.b16 %v382
        %v471 = vpack.c.b16 %v459, %v455
        %v472 = vpack.c.b16 %v460, %v456
        %v473 = vpack.c.b16 %v461, %v457
        %v474 = vpack.c.b16 %v462, %v458
        %v475 = vpack.c.b16 %v467, %v463
        %v476 = vpack.c.b16 %v468, %v464
        %v477 = vpack.c.b16 %v469, %v465
        %v478 = vpack.c.b16 %v470, %v466
        %v551 = vunpack.c.l.b16 %v383
        %v552 = vunpack.c.h.b16 %v383
        %v553 = vunpack.c.l.b16 %v384
        %v554 = vunpack.c.h.b16 %v384
        %v555 = vunpack.c.l.b16 %v385
        %v556 = vunpack.c.h.b16 %v385
        %v557 = vunpack.c.l.b16 %v386
        %v558 = vunpack.c.h.b16 %v386
        %v559 = vunpack.c.l.b16 %v387
        %v560 = vunpack.c.h.b16 %v387
        %v561 = vunpack.c.l.b16 %v388
        %v562 = vunpack.c.h.b16 %v388
        %v563 = vunpack.c.l.b16 %v389
        %v564 = vunpack.c.h.b16 %v389
        %v565 = vunpack.c.l.b16 %v390
        %v566 = vunpack.c.h.b16 %v390
        %v567 = vunpack.c.l.b16 %v391
        %v568 = vunpack.c.h.b16 %v391
        %v569 = vunpack.c.l.b16 %v392
        %v570 = vunpack.c.h.b16 %v392
        %v571 = vunpack.c.l.b16 %v393
        %v572 = vunpack.c.h.b16 %v393
        %v573 = vunpack.c.l.b16 %v394
        %v574 = vunpack.c.h.b16 %v394
        %v575 = vunpack.c.l.b16 %v395
        %v576 = vunpack.c.h.b16 %v395
        %v577 = vunpack.c.l.b16 %v396
        %v578 = vunpack.c.h.b16 %v396
        %v579 = vunpack.c.l.b16 %v397
        %v580 = vunpack.c.h.b16 %v397
        %v581 = vunpack.c.l.b16 %v398
        %v582 = vunpack.c.h.b16 %v398
        %v583 = vunpack.c.l.b16 %v399
        %v584 = vunpack.c.h.b16 %v399
        %v585 = vunpack.c.l.b16 %v400
        %v586 = vunpack.c.h.b16 %v400
        %v587 = vunpack.c.l.b16 %v401
        %v588 = vunpack.c.h.b16 %v401
        %v589 = vunpack.c.l.b16 %v402
        %v590 = vunpack.c.h.b16 %v402
        %v591 = vunpack.c.l.b16 %v403
        %v592 = vunpack.c.h.b16 %v403
        %v593 = vunpack.c.l.b16 %v404
        %v594 = vunpack.c.h.b16 %v404
        %v595 = vunpack.c.l.b16 %v405
        %v596 = vunpack.c.h.b16 %v405
        %v597 = vunpack.c.l.b16 %v406
        %v598 = vunpack.c.h.b16 %v406
        %v599 = vunpack.c.l.b16 %v407
        %v600 = vunpack.c.h.b16 %v407
        %v601 = vunpack.c.l.b16 %v408
        %v602 = vunpack.c.h.b16 %v408
        %v603 = vunpack.c.l.b16 %v409
        %v604 = vunpack.c.h.b16 %v409
        %v605 = vunpack.c.l.b16 %v410
        %v606 = vunpack.c.h.b16 %v410
        %v607 = vunpack.c.l.b16 %v411
        %v608 = vunpack.c.h.b16 %v411
        %v609 = vunpack.c.l.b16 %v412
        %v610 = vunpack.c.h.b16 %v412
        %v611 = vunpack.c.l.b16 %v413
        %v612 = vunpack.c.h.b16 %v413
        %v613 = vunpack.c.l.b16 %v414
        %v614 = vunpack.c.h.b16 %v414
        %v615 = vunpack.c.l.b16 %v415
        %v616 = vunpack.c.h.b16 %v415
        %v617 = vunpack.c.l.b16 %v416
        %v618 = vunpack.c.h.b16 %v416
        %v619 = vunpack.c.l.b16 %v417
        %v620 = vunpack.c.h.b16 %v417
        %v621 = vunpack.c.l.b16 %v418
        %v622 = vunpack.c.h.b16 %v418
        %v623 = vunpack.c.l.b16 %v419
        %v624 = vunpack.c.h.b16 %v419
        %v625 = vunpack.c.l.b16 %v420
        %v626 = vunpack.c.h.b16 %v420
        %v627 = vunpack.c.l.b16 %v421
        %v628 = vunpack.c.h.b16 %v421
        %v629 = vunpack.c.l.b16 %v422
        %v630 = vunpack.c.h.b16 %v422
        %v631 = vunpack.c.l.b16 %v423
        %v632 = vunpack.c.h.b16 %v423
        %v633 = vunpack.c.l.b16 %v424
        %v634 = vunpack.c.h.b16 %v424
        %v635 = vunpack.c.l.b16 %v425
        %v636 = vunpack.c.h.b16 %v425
        %v637 = vunpack.c.l.b16 %v426
        %v638 = vunpack.c.h.b16 %v426
        %v639 = vunpack.c.l.b16 %v427
        %v640 = vunpack.c.h.b16 %v427
        %v641 = vunpack.c.l.b16 %v428
        %v642 = vunpack.c.h.b16 %v428
        %v643 = vunpack.c.l.b16 %v429
        %v644 = vunpack.c.h.b16 %v429
        %v645 = vunpack.c.l.b16 %v430
        %v646 = vunpack.c.h.b16 %v430
        %v647 = vunpack.c.l.b16 %v431
        %v648 = vunpack.c.h.b16 %v431
        %v649 = vunpack.c.l.b16 %v432
        %v650 = vunpack.c.h.b16 %v432
        %v651 = vunpack.c.l.b16 %v433
        %v652 = vunpack.c.h.b16 %v433
        %v653 = vunpack.c.l.b16 %v434
        %v654 = vunpack.c.h.b16 %v434
        %v655 = vunpack.c.l.b16 %v435
        %v656 = vunpack.c.h.b16 %v435
        %v657 = vunpack.c.l.b16 %v436
        %v658 = vunpack.c.h.b16 %v436
        %v659 = vunpack.c.l.b16 %v437
        %v660 = vunpack.c.h.b16 %v437
        %v661 = vunpack.c.l.b16 %v438
        %v662 = vunpack.c.h.b16 %v438
        %v663 = vunpack.c.l.b16 %v439
        %v664 = vunpack.c.h.b16 %v439
        %v665 = vunpack.c.l.b16 %v440
        %v666 = vunpack.c.h.b16 %v440
        %v667 = vunpack.c.l.b16 %v441
        %v668 = vunpack.c.h.b16 %v441
        %v669 = vunpack.c.l.b16 %v442
        %v670 = vunpack.c.h.b16 %v442
        %v671 = vunpack.c.l.b16 %v443
        %v672 = vunpack.c.h.b16 %v443
        %v673 = vunpack.c.l.b16 %v444
        %v674 = vunpack.c.h.b16 %v444
        %v675 = vunpack.c.l.b16 %v445
        %v676 = vunpack.c.h.b16 %v445
        %v677 = vunpack.c.l.b16 %v446
        %v678 = vunpack.c.h.b16 %v446
        %v679 = vpack.c.b16 %v553, %v551
        %v680 = vpack.c.b16 %v554, %v552
        %v681 = vpack.c.b16 %v557, %v555
        %v682 = vpack.c.b16 %v558, %v556
        %v683 = vpack.c.b16 %v561, %v559
        %v684 = vpack.c.b16 %v562, %v560
        %v685 = vpack.c.b16 %v565, %v563
        %v686 = vpack.c.b16 %v566, %v564
        %v687 = vpack.c.b16 %v569, %v567
        %v688 = vpack.c.b16 %v570, %v568
        %v689 = vpack.c.b16 %v573, %v571
        %v690 = vpack.c.b16 %v574, %v572
        %v691 = vpack.c.b16 %v577, %v575
        %v692 = vpack.c.b16 %v578, %v576
        %v693 = vpack.c.b16 %v581, %v579
        %v694 = vpack.c.b16 %v582, %v580
        %v695 = vpack.c.b16 %v585, %v583
        %v696 = vpack.c.b16 %v586, %v584
        %v697 = vpack.c.b16 %v589, %v587
        %v698 = vpack.c.b16 %v590, %v588
        %v699 = vpack.c.b16 %v593, %v591
        %v700 = vpack.c.b16 %v594, %v592
        %v701 = vpack.c.b16 %v597, %v595
        %v702 = vpack.c.b16 %v598, %v596
        %v703 = vpack.c.b16 %v601, %v599
        %v704 = vpack.c.b16 %v602, %v600
        %v705 = vpack.c.b16 %v605, %v603
        %v706 = vpack.c.b16 %v606, %v604
        %v707 = vpack.c.b16 %v609, %v607
        %v708 = vpack.c.b16 %v610, %v608
        %v709 = vpack.c.b16 %v613, %v611
        %v710 = vpack.c.b16 %v614, %v612
        %v711 = vpack.c.b16 %v617, %v615
        %v712 = vpack.c.b16 %v618, %v616
        %v713 = vpack.c.b16 %v621, %v619
        %v714 = vpack.c.b16 %v622, %v620
        %v715 = vpack.c.b16 %v625, %v623
        %v716 = vpack.c.b16 %v626, %v624
        %v717 = vpack.c.b16 %v629, %v627
        %v718 = vpack.c.b16 %v630, %v628
        %v719 = vpack.c.b16 %v633, %v631
        %v720 = vpack.c.b16 %v634, %v632
        %v721 = vpack.c.b16 %v637, %v635
        %v722 = vpack.c.b16 %v638, %v636
        %v723 = vpack.c.b16 %v641, %v639
        %v724 = vpack.c.b16 %v642, %v640
        %v725 = vpack.c.b16 %v645, %v643
        %v726 = vpack.c.b16 %v646, %v644
        %v727 = vpack.c.b16 %v649, %v647
        %v728 = vpack.c.b16 %v650, %v648
        %v729 = vpack.c.b16 %v653, %v651
        %v730 = vpack.c.b16 %v654, %v652
        %v731 = vpack.c.b16 %v657, %v655
        %v732 = vpack.c.b16 %v658, %v656
        %v733 = vpack.c.b16 %v661, %v659
        %v734 = vpack.c.b16 %v662, %v660
        %v735 = vpack.c.b16 %v665, %v663
        %v736 = vpack.c.b16 %v666, %v664
        %v737 = vpack.c.b16 %v669, %v667
        %v738 = vpack.c.b16 %v670, %v668
        %v739 = vpack.c.b16 %v673, %v671
        %v740 = vpack.c.b16 %v674, %v672
        %v741 = vpack.c.b16 %v677, %v675
        %v742 = vpack.c.b16 %v678, %v676
        %807 = vmatpush.bf16.msra.mxu0 %v693
        %808 = vmatpush.bf16.msra.mxu0 %v691
        %809 = vmatpush.bf16.msra.mxu0 %v689
        %810 = vmatpush.bf16.msra.mxu0 %v687
        %811 = vmatpush.bf16.msra.mxu0 %v685
        %812 = vmatpush.bf16.msra.mxu0 %v683
        %813 = vmatpush.bf16.msra.mxu0 %v681
        %814 = vmatpush.bf16.msra.mxu0 %v679
        %815 = vmatmul.bf16.gmra.mxu0 %v471
        %v816 = vpop.f32.mrf.mxu0
        %v817 = vadd.f32 0.0, %v816
        %v818 = vpop.f32.mrf.mxu0
        %v819 = vadd.f32 0.0, %v818
        %820 = vmatmul.bf16.gmra.mxu0 %v475
        %v821 = vpop.f32.mrf.mxu0
        %v822 = vadd.f32 0.0, %v821
        %v823 = vpop.f32.mrf.mxu0
        %v824 = vadd.f32 0.0, %v823
        %825 = vdwg.mxu0
        %826 = vmatpush.bf16.msra.mxu0 %v709
        %827 = vmatpush.bf16.msra.mxu0 %v707
        %828 = vmatpush.bf16.msra.mxu0 %v705
        %829 = vmatpush.bf16.msra.mxu0 %v703
        %830 = vmatpush.bf16.msra.mxu0 %v701
        %831 = vmatpush.bf16.msra.mxu0 %v699
        %832 = vmatpush.bf16.msra.mxu0 %v697
        %833 = vmatpush.bf16.msra.mxu0 %v695
        %834 = vmatmul.bf16.gmra.mxu0 %v472
        %v835 = vpop.f32.mrf.mxu0
        %v836 = vadd.f32 %v817, %v835
        %v837 = vpop.f32.mrf.mxu0
        %v838 = vadd.f32 %v819, %v837
        %839 = vmatmul.bf16.gmra.mxu0 %v476
        %v840 = vpop.f32.mrf.mxu0
        %v841 = vadd.f32 %v822, %v840
        %v842 = vpop.f32.mrf.mxu0
        %v843 = vadd.f32 %v824, %v842
        %844 = vdwg.mxu0
        %845 = vmatpush.bf16.msra.mxu0 %v725
        %846 = vmatpush.bf16.msra.mxu0 %v723
        %847 = vmatpush.bf16.msra.mxu0 %v721
        %848 = vmatpush.bf16.msra.mxu0 %v719
        %849 = vmatpush.bf16.msra.mxu0 %v717
        %850 = vmatpush.bf16.msra.mxu0 %v715
        %851 = vmatpush.bf16.msra.mxu0 %v713
        %852 = vmatpush.bf16.msra.mxu0 %v711
        %853 = vmatmul.bf16.gmra.mxu0 %v473
        %v854 = vpop.f32.mrf.mxu0
        %v855 = vadd.f32 %v836, %v854
        %v856 = vpop.f32.mrf.mxu0
        %v857 = vadd.f32 %v838, %v856
        %858 = vmatmul.bf16.gmra.mxu0 %v477
        %v859 = vpop.f32.mrf.mxu0
        %v860 = vadd.f32 %v841, %v859
        %v861 = vpop.f32.mrf.mxu0
        %v862 = vadd.f32 %v843, %v861
        %863 = vdwg.mxu0
        %864 = vmatpush.bf16.msra.mxu0 %v741
        %865 = vmatpush.bf16.msra.mxu0 %v739
        %866 = vmatpush.bf16.msra.mxu0 %v737
        %867 = vmatpush.bf16.msra.mxu0 %v735
        %868 = vmatpush.bf16.msra.mxu0 %v733
        %869 = vmatpush.bf16.msra.mxu0 %v731
        %870 = vmatpush.bf16.msra.mxu0 %v729
        %871 = vmatpush.bf16.msra.mxu0 %v727
        %872 = vmatmul.bf16.gmra.mxu0 %v474
        %v873 = vpop.f32.mrf.mxu0
        %v874 = vadd.f32 %v855, %v873
        %v875 = vpop.f32.mrf.mxu0
        %v876 = vadd.f32 %v857, %v875
        %877 = vmatmul.bf16.gmra.mxu0 %v478
        %v878 = vpop.f32.mrf.mxu0
        %v879 = vadd.f32 %v860, %v878
        %v880 = vpop.f32.mrf.mxu0
        %v881 = vadd.f32 %v862, %v880
        %882 = vdwg.mxu0
        %883 = vmatpush.bf16.msra.mxu0 %v694
        %884 = vmatpush.bf16.msra.mxu0 %v692
        %885 = vmatpush.bf16.msra.mxu0 %v690
        %886 = vmatpush.bf16.msra.mxu0 %v688
        %887 = vmatpush.bf16.msra.mxu0 %v686
        %888 = vmatpush.bf16.msra.mxu0 %v684
        %889 = vmatpush.bf16.msra.mxu0 %v682
        %890 = vmatpush.bf16.msra.mxu0 %v680
        %891 = vmatmul.bf16.gmra.mxu0 %v471
        %v892 = vpop.f32.mrf.mxu0
        %v893 = vadd.f32 0.0, %v892
        %v894 = vpop.f32.mrf.mxu0
        %v895 = vadd.f32 0.0, %v894
        %896 = vmatmul.bf16.gmra.mxu0 %v475
        %v897 = vpop.f32.mrf.mxu0
        %v898 = vadd.f32 0.0, %v897
        %v899 = vpop.f32.mrf.mxu0
        %v900 = vadd.f32 0.0, %v899
        %901 = vdwg.mxu0
        %902 = vmatpush.bf16.msra.mxu0 %v710
        %903 = vmatpush.bf16.msra.mxu0 %v708
        %904 = vmatpush.bf16.msra.mxu0 %v706
        %905 = vmatpush.bf16.msra.mxu0 %v704
        %906 = vmatpush.bf16.msra.mxu0 %v702
        %907 = vmatpush.bf16.msra.mxu0 %v700
        %908 = vmatpush.bf16.msra.mxu0 %v698
        %909 = vmatpush.bf16.msra.mxu0 %v696
        %910 = vmatmul.bf16.gmra.mxu0 %v472
        %v911 = vpop.f32.mrf.mxu0
        %v912 = vadd.f32 %v893, %v911
        %v913 = vpop.f32.mrf.mxu0
        %v914 = vadd.f32 %v895, %v913
        %915 = vmatmul.bf16.gmra.mxu0 %v476
        %v916 = vpop.f32.mrf.mxu0
        %v917 = vadd.f32 %v898, %v916
        %v918 = vpop.f32.mrf.mxu0
        %v919 = vadd.f32 %v900, %v918
        %920 = vdwg.mxu0
        %921 = vmatpush.bf16.msra.mxu0 %v726
        %922 = vmatpush.bf16.msra.mxu0 %v724
        %923 = vmatpush.bf16.msra.mxu0 %v722
        %924 = vmatpush.bf16.msra.mxu0 %v720
        %925 = vmatpush.bf16.msra.mxu0 %v718
        %926 = vmatpush.bf16.msra.mxu0 %v716
        %927 = vmatpush.bf16.msra.mxu0 %v714
        %928 = vmatpush.bf16.msra.mxu0 %v712
        %929 = vmatmul.bf16.gmra.mxu0 %v473
        %v930 = vpop.f32.mrf.mxu0
        %v931 = vadd.f32 %v912, %v930
        %v932 = vpop.f32.mrf.mxu0
        %v933 = vadd.f32 %v914, %v932
        %934 = vmatmul.bf16.gmra.mxu0 %v477
        %v935 = vpop.f32.mrf.mxu0
        %v936 = vadd.f32 %v917, %v935
        %v937 = vpop.f32.mrf.mxu0
        %v938 = vadd.f32 %v919, %v937
        %939 = vdwg.mxu0
        %940 = vmatpush.bf16.msra.mxu0 %v742
        %941 = vmatpush.bf16.msra.mxu0 %v740
        %942 = vmatpush.bf16.msra.mxu0 %v738
        %943 = vmatpush.bf16.msra.mxu0 %v736
        %944 = vmatpush.bf16.msra.mxu0 %v734
        %945 = vmatpush.bf16.msra.mxu0 %v732
        %946 = vmatpush.bf16.msra.mxu0 %v730
        %947 = vmatpush.bf16.msra.mxu0 %v728
        %948 = vmatmul.bf16.gmra.mxu0 %v474
        %v949 = vpop.f32.mrf.mxu0
        %v950 = vadd.f32 %v931, %v949
        %v951 = vpop.f32.mrf.mxu0
        %v952 = vadd.f32 %v933, %v951
        %953 = vmatmul.bf16.gmra.mxu0 %v478
        %v954 = vpop.f32.mrf.mxu0
        %v955 = vadd.f32 %v936, %v954
        %v956 = vpop.f32.mrf.mxu0
        %v957 = vadd.f32 %v938, %v956
        %958 = vdwg.mxu0
        %v959 = vadd.f32 %v367, %v874
        %v960 = vadd.f32 %v368, %v950
        %v961 = vadd.f32 %v369, %v876
        %v962 = vadd.f32 %v370, %v952
        %v963 = vadd.f32 %v371, %v879
        %v964 = vadd.f32 %v372, %v955
        %v965 = vadd.f32 %v373, %v881
        %v966 = vadd.f32 %v374, %v957
        %967 = vst [vmem:[#allocation2] sm:$0xff] %v959
        %968 = vst [vmem:[#allocation2 + $0x8] sm:$0xff] %v960
        %969 = vst [vmem:[#allocation2 + $0x10] sm:$0xff] %v961
        %970 = vst [vmem:[#allocation2 + $0x18] sm:$0xff] %v962
        %971 = vst [vmem:[#allocation2 + $0x20] sm:$0xff] %v963
        %972 = vst [vmem:[#allocation2 + $0x28] sm:$0xff] %v964
        %973 = vst [vmem:[#allocation2 + $0x30] sm:$0xff] %v965
        %974 = vst [vmem:[#allocation2 + $0x38] sm:$0xff] %v966
        %p975 = scmp.eq.s32.totalorder %s24, 3
        // Predicated region
        $region56: #{dcgan_generator_forward.11} parent=46 // pred_check
          %p976 = pneg %p975
        $region57: #{dcgan_generator_forward.11} parent=46 // pred_check_branch
          %978 = sbr.rel (%p976) target = $region59
        $region58: #{dcgan_generator_forward.11} parent=46 // pred_region
          %v979 = vld [vmem:[#allocation2] sm:$0xff]
          %v980 = vld [vmem:[#allocation2 + $0x8] sm:$0xff]
          %v981 = vld [vmem:[#allocation2 + $0x10] sm:$0xff]
          %v982 = vld [vmem:[#allocation2 + $0x18] sm:$0xff]
          %v983 = vld [vmem:[#allocation2 + $0x20] sm:$0xff]
          %v984 = vld [vmem:[#allocation2 + $0x28] sm:$0xff]
          %v985 = vld [vmem:[#allocation2 + $0x30] sm:$0xff]
          %v986 = vld [vmem:[#allocation2 + $0x38] sm:$0xff]
          %v987 = vpack.c.bf16 %v980, %v979
          %v988 = vpack.c.bf16 %v982, %v981
          %v989 = vpack.c.bf16 %v984, %v983
          %v990 = vpack.c.bf16 %v986, %v985
          %991 = vst [vmem:[%s338] sm:$0xff] %v987
          %992 = vst [vmem:[%s338 + $0x8] sm:$0xff] %v988
          %993 = vst [vmem:[%s338 + $0x10] sm:$0xff] %v989
          %994 = vst [vmem:[%s338 + $0x18] sm:$0xff] %v990
          %v995 = vadd.f32 %v979, %v981
          %v996 = vadd.f32 %v995, %v983
          %v997 = vadd.f32 %v996, %v985
          %v998 = vrot.slane %v997, 4
          %v999 = vadd.f32 %v997, %v998
          %v1000 = vrot.slane %v999, 2
          %v1001 = vadd.f32 %v999, %v1000
          %v1002 = vrot.slane %v1001, 1
          %v1003 = vadd.f32 %v1001, %v1002
          %v1004 = vadd.f32 %v980, %v982
          %v1005 = vadd.f32 %v1004, %v984
          %v1006 = vadd.f32 %v1005, %v986
          %v1007 = vrot.slane %v1006, 4
          %v1008 = vadd.f32 %v1006, %v1007
          %v1009 = vrot.slane %v1008, 2
          %v1010 = vadd.f32 %v1008, %v1009
          %v1011 = vrot.slane %v1010, 1
          %v1012 = vadd.f32 %v1010, %v1011
          %v1013 = vmul.f32 %v979, %v979
          %v1014 = vmul.f32 %v980, %v980
          %v1015 = vmul.f32 %v981, %v981
          %v1016 = vmul.f32 %v982, %v982
          %v1017 = vmul.f32 %v983, %v983
          %v1018 = vmul.f32 %v984, %v984
          %v1019 = vmul.f32 %v985, %v985
          %v1020 = vmul.f32 %v986, %v986
          %v1021 = vadd.f32 %v1013, %v1015
          %v1022 = vadd.f32 %v1021, %v1017
          %v1023 = vadd.f32 %v1022, %v1019
          %v1024 = vrot.slane %v1023, 4
          %v1025 = vadd.f32 %v1023, %v1024
          %v1026 = vrot.slane %v1025, 2
          %v1027 = vadd.f32 %v1025, %v1026
          %v1028 = vrot.slane %v1027, 1
          %v1029 = vadd.f32 %v1027, %v1028
          %v1030 = vadd.f32 %v1014, %v1016
          %v1031 = vadd.f32 %v1030, %v1018
          %v1032 = vadd.f32 %v1031, %v1020
          %v1033 = vrot.slane %v1032, 4
          %v1034 = vadd.f32 %v1032, %v1033
          %v1035 = vrot.slane %v1034, 2
          %v1036 = vadd.f32 %v1034, %v1035
          %v1037 = vrot.slane %v1036, 1
          %v1038 = vadd.f32 %v1036, %v1037
          %vm1039 = vcmask 1040384
          %v1040 = vsel %vm1039, %v1003, %v1029
          %v1041 = vsel %vm1039, %v1012, %v1038
          %vm1042 = vcmask 1041408
          %v1043 = vsel %vm1042, %v1040, 0.0
          %v1044 = vsel %vm1042, %v1041, 0.0
          %1045 = vst [vmem:[%s353] sm:$0xff] %v1043
          %1046 = vst [vmem:[%s353 + $0x8] sm:$0xff] %v1044
        $region59: #{dcgan_generator_forward.11} parent=46 // pred_fallthru
          _
        %s1047 = smul.u32 4, %s22
        %s1048 = smul.u32 2, %s23
        %p1049 = scmp.lt.s32.totalorder %s21, 3
        %s1050 = scalar_select %p1049, %s21, 3
        %p1051 = scmp.lt.s32.totalorder %s1047, 3
        %s1052 = scalar_select %p1051, %s1047, 3
        %p1053 = scmp.lt.s32.totalorder %s1048, 1
        %s1054 = scalar_select %p1053, %s1048, 1
        %s1055 = smul.addr %s1052, 2
        %s1056 = sadd.s32 %s1054, %s1055
        %s1057 = smul.addr %s1050, 8
        %s1058 = sadd.s32 %s1056, %s1057
        %s1059 = smul.addr %s1058, 4
        %s1060 = scalar_lea.vmem %s2, %s1059
        %s1061 = smul.u32 2, %s23
        %p1062 = scmp.lt.s32.totalorder %s21, 3
        %s1063 = scalar_select %p1062, %s21, 3
        %p1064 = scmp.lt.s32.totalorder %s22, 0
        %s1065 = scalar_select %p1064, %s22, 0
        %p1066 = scmp.lt.s32.totalorder %s1061, 1
        %s1067 = scalar_select %p1066, %s1061, 1
        %s1068 = smul.addr %s1065, 2
        %s1069 = sadd.s32 %s1067, %s1068
        %s1070 = smul.addr %s1063, 2
        %s1071 = sadd.s32 %s1069, %s1070
        %s1072 = smul.addr %s1071, 8
        %s1073 = scalar_lea.vmem %s3, %s1072
        // Predicated region
        $region60: #{dcgan_generator_forward.11} parent=46 // pred_check
          %p1074 = pneg %p123
        $region61: #{dcgan_generator_forward.11} parent=46 // pred_check_branch
          %1076 = sbr.rel (%p1074) target = $region63
        $region62: #{dcgan_generator_forward.11} parent=46 // pred_region
          %s1077 = smul.u32 4, %s22
          %s1078 = smul.u32 2, %s23
        $region63: #{dcgan_generator_forward.11} parent=46 // pred_fallthru
          _
        // Predicated region
        $region64: #{dcgan_generator_forward.11} parent=46 // pred_check
          %p1079 = pneg %p153
        $region65: #{dcgan_generator_forward.11} parent=46 // pred_check_branch
          %1081 = sbr.rel (%p1079) target = $region67
        $region66: #{dcgan_generator_forward.11} parent=46 // pred_region
          %s1082 = smul.u32 2, %s23
        $region67: #{dcgan_generator_forward.11} parent=46 // pred_fallthru
          _
      $region47: #{dcgan_generator_forward.11} parent=5 // pred_fallthru
        _
      %p1083 = scmp.le.s32.totalorder 2, %s10
      // Predicated region
      $region68: #{dcgan_generator_forward.11} parent=5 // pred_check
        %p1084 = pneg %p1083
      $region69: #{dcgan_generator_forward.11} parent=5 // pred_check_branch
        %1086 = sbr.rel (%p1084) target = $region71
      $region70: #{dcgan_generator_forward.11} parent=5 // pred_region
        %s1087 = ssub.s32 %s10, 2
        // Predicated region
        $region72: #{dcgan_generator_forward.11} parent=70 // pred_check
          %p1088 = pneg %p129
        $region73: #{dcgan_generator_forward.11} parent=70 // pred_check_branch
          %1090 = sbr.rel (%p1088) target = $region75
        $region74: #{dcgan_generator_forward.11} parent=70 // pred_region
          %s1091 = smul.u32 4, %s26
          %s1092 = smul.u32 2, %s27
          %p1093 = scmp.lt.s32.totalorder %s25, 3
          %s1094 = scalar_select %p1093, %s25, 3
          %p1095 = scmp.lt.s32.totalorder %s1091, 3
          %s1096 = scalar_select %p1095, %s1091, 3
          %p1097 = scmp.lt.s32.totalorder %s1092, 1
          %s1098 = scalar_select %p1097, %s1092, 1
          %s1099 = smul.addr %s1096, 2
          %s1100 = sadd.s32 %s1098, %s1099
          %s1101 = smul.addr %s1094, 8
          %s1102 = sadd.s32 %s1100, %s1101
          %s1103 = smul.addr %s1102, 4
          %s1104 = scalar_lea.vmem %s2, %s1103
        $region75: #{dcgan_generator_forward.11} parent=70 // pred_fallthru
          _
        // Predicated region
        $region76: #{dcgan_generator_forward.11} parent=70 // pred_check
          %p1105 = pneg %p159
        $region77: #{dcgan_generator_forward.11} parent=70 // pred_check_branch
          %1107 = sbr.rel (%p1105) target = $region79
        $region78: #{dcgan_generator_forward.11} parent=70 // pred_region
          %s1108 = smul.u32 2, %s27
          %p1109 = scmp.lt.s32.totalorder %s25, 3
          %s1110 = scalar_select %p1109, %s25, 3
          %p1111 = scmp.lt.s32.totalorder %s26, 0
          %s1112 = scalar_select %p1111, %s26, 0
          %p1113 = scmp.lt.s32.totalorder %s1108, 1
          %s1114 = scalar_select %p1113, %s1108, 1
          %s1115 = smul.addr %s1112, 2
          %s1116 = sadd.s32 %s1114, %s1115
          %s1117 = smul.addr %s1110, 2
          %s1118 = sadd.s32 %s1116, %s1117
          %s1119 = smul.addr %s1118, 8
          %s1120 = scalar_lea.vmem %s3, %s1119
        $region79: #{dcgan_generator_forward.11} parent=70 // pred_fallthru
          _
      $region71: #{dcgan_generator_forward.11} parent=5 // pred_fallthru
        _
    $region6: #{dcgan_generator_forward.11} parent=1 // loop_footer
      %s14 = sadd.s32 1, %s10
    $region7: #{dcgan_generator_forward.11} parent=1 // loop_footer_branch
      %9 = sbr.rel target = $region3
    $region8: #{dcgan_generator_forward.11} parent=1 // loop_exit
      _

// kernel: dcgan_generator_forward.12
$region0: #{dcgan_generator_forward.12}
  #allocation0 [shape = 'u32[]', space=smem, size = 0x4, offset = 0x4, fixed_abs, tag = 'smem constant byte address 0x4 - core index']
  #allocation1 [shape = 'u32[72,128]{1,0:T(1,128)}', space=vmem, size = 0x9000, scoped, tag = 'internal scratch']
  %s0 = inlined_call_operand.vmem [shape: bf16[128,256], index: 0, kind: input, shape index: {}]
  %s1 = inlined_call_operand.vmem [shape: f32[1,256], index: 1, kind: input, shape index: {}]
  %s2 = inlined_call_operand.vmem [shape: f32[1,256], index: 2, kind: input, shape index: {}]
  %s3 = inlined_call_operand.vmem [shape: bf16[128,256], index: 3, kind: output, shape index: {}]
  %s4 = sld [smem:[#allocation0]]
  $region22: #{dcgan_generator_forward.12} parent=0
    _
  %s6 = ssub.s32 1, %s4
  %s7 = scalar_select 0, %s6, %s4
  // Predicated region
  $region2: #{dcgan_generator_forward.12} parent=0 // pred_check
    _
  $region3: #{dcgan_generator_forward.12} parent=0 // pred_check_branch
    %9 = sbr.rel (0) target = $region5
  $region4: #{dcgan_generator_forward.12} parent=0 // pred_region
    _
  $region5: #{dcgan_generator_forward.12} parent=0 // pred_fallthru
    _
  // Predicated region
  $region6: #{dcgan_generator_forward.12} parent=0 // pred_check
    _
  $region7: #{dcgan_generator_forward.12} parent=0 // pred_check_branch
    %11 = sbr.rel (0) target = $region9
  $region8: #{dcgan_generator_forward.12} parent=0 // pred_region
    _
  $region9: #{dcgan_generator_forward.12} parent=0 // pred_fallthru
    _
  // Predicated region
  $region10: #{dcgan_generator_forward.12} parent=0 // pred_check
    _
  $region11: #{dcgan_generator_forward.12} parent=0 // pred_check_branch
    %13 = sbr.rel (0) target = $region13
  $region12: #{dcgan_generator_forward.12} parent=0 // pred_region
    _
  $region13: #{dcgan_generator_forward.12} parent=0 // pred_fallthru
    _
  %v14 = vld [vmem:[%s0] sm:$0xff]
  %v15 = vld [vmem:[%s0 + $0x8] sm:$0xff]
  %v16 = vld [vmem:[%s0 + $0x10] sm:$0xff]
  %v17 = vld [vmem:[%s0 + $0x18] sm:$0xff]
  %v18 = vld [vmem:[%s0 + $0x20] sm:$0xff]
  %v19 = vld [vmem:[%s0 + $0x28] sm:$0xff]
  %v20 = vld [vmem:[%s0 + $0x30] sm:$0xff]
  %v21 = vld [vmem:[%s0 + $0x38] sm:$0xff]
  %v22 = vld [vmem:[%s0 + $0x40] sm:$0xff]
  %v23 = vld [vmem:[%s0 + $0x48] sm:$0xff]
  %v24 = vld [vmem:[%s0 + $0x50] sm:$0xff]
  %v25 = vld [vmem:[%s0 + $0x58] sm:$0xff]
  %v26 = vld [vmem:[%s0 + $0x60] sm:$0xff]
  %v27 = vld [vmem:[%s0 + $0x68] sm:$0xff]
  %v28 = vld [vmem:[%s0 + $0x70] sm:$0xff]
  %v29 = vld [vmem:[%s0 + $0x78] sm:$0xff]
  %v30 = vunpack.c.l.bf16 %v14
  %v31 = vunpack.c.h.bf16 %v14
  %v32 = vunpack.c.l.bf16 %v15
  %v33 = vunpack.c.h.bf16 %v15
  %v34 = vunpack.c.l.bf16 %v16
  %v35 = vunpack.c.h.bf16 %v16
  %v36 = vunpack.c.l.bf16 %v17
  %v37 = vunpack.c.h.bf16 %v17
  %v38 = vunpack.c.l.bf16 %v18
  %v39 = vunpack.c.h.bf16 %v18
  %v40 = vunpack.c.l.bf16 %v19
  %v41 = vunpack.c.h.bf16 %v19
  %v42 = vunpack.c.l.bf16 %v20
  %v43 = vunpack.c.h.bf16 %v20
  %v44 = vunpack.c.l.bf16 %v21
  %v45 = vunpack.c.h.bf16 %v21
  %v46 = vunpack.c.l.bf16 %v22
  %v47 = vunpack.c.h.bf16 %v22
  %v48 = vunpack.c.l.bf16 %v23
  %v49 = vunpack.c.h.bf16 %v23
  %v50 = vunpack.c.l.bf16 %v24
  %v51 = vunpack.c.h.bf16 %v24
  %v52 = vunpack.c.l.bf16 %v25
  %v53 = vunpack.c.h.bf16 %v25
  %v54 = vunpack.c.l.bf16 %v26
  %v55 = vunpack.c.h.bf16 %v26
  %v56 = vunpack.c.l.bf16 %v27
  %v57 = vunpack.c.h.bf16 %v27
  %v58 = vunpack.c.l.bf16 %v28
  %v59 = vunpack.c.h.bf16 %v28
  %v60 = vunpack.c.l.bf16 %v29
  %v61 = vunpack.c.h.bf16 %v29
  %v62 = vld [vmem:[%s1] sm:$0x3]
  %v64 = vperm.slane %v62, 0
  %v65 = vperm.slane %v62, 1
  %v68 = vmul.f32 %v30, %v64
  %v69 = vmul.f32 %v31, %v65
  %v70 = vmul.f32 %v32, %v64
  %v71 = vmul.f32 %v33, %v65
  %v72 = vmul.f32 %v34, %v64
  %v73 = vmul.f32 %v35, %v65
  %v74 = vmul.f32 %v36, %v64
  %v75 = vmul.f32 %v37, %v65
  %v76 = vmul.f32 %v38, %v64
  %v77 = vmul.f32 %v39, %v65
  %v78 = vmul.f32 %v40, %v64
  %v79 = vmul.f32 %v41, %v65
  %v80 = vmul.f32 %v42, %v64
  %v81 = vmul.f32 %v43, %v65
  %v82 = vmul.f32 %v44, %v64
  %v83 = vmul.f32 %v45, %v65
  %v84 = vmul.f32 %v46, %v64
  %v85 = vmul.f32 %v47, %v65
  %v86 = vmul.f32 %v48, %v64
  %v87 = vmul.f32 %v49, %v65
  %v88 = vmul.f32 %v50, %v64
  %v89 = vmul.f32 %v51, %v65
  %v90 = vmul.f32 %v52, %v64
  %v91 = vmul.f32 %v53, %v65
  %v92 = vmul.f32 %v54, %v64
  %v93 = vmul.f32 %v55, %v65
  %v94 = vmul.f32 %v56, %v64
  %v95 = vmul.f32 %v57, %v65
  %v96 = vmul.f32 %v58, %v64
  %v97 = vmul.f32 %v59, %v65
  %v98 = vmul.f32 %v60, %v64
  %v99 = vmul.f32 %v61, %v65
  %v100 = vld [vmem:[%s2] sm:$0x3]
  %v102 = vperm.slane %v100, 0
  %v103 = vperm.slane %v100, 1
  %v106 = vadd.f32 %v68, %v102
  %v107 = vadd.f32 %v69, %v103
  %v108 = vadd.f32 %v70, %v102
  %v109 = vadd.f32 %v71, %v103
  %v110 = vadd.f32 %v72, %v102
  %v111 = vadd.f32 %v73, %v103
  %v112 = vadd.f32 %v74, %v102
  %v113 = vadd.f32 %v75, %v103
  %v114 = vadd.f32 %v76, %v102
  %v115 = vadd.f32 %v77, %v103
  %v116 = vadd.f32 %v78, %v102
  %v117 = vadd.f32 %v79, %v103
  %v118 = vadd.f32 %v80, %v102
  %v119 = vadd.f32 %v81, %v103
  %v120 = vadd.f32 %v82, %v102
  %v121 = vadd.f32 %v83, %v103
  %v122 = vadd.f32 %v84, %v102
  %v123 = vadd.f32 %v85, %v103
  %v124 = vadd.f32 %v86, %v102
  %v125 = vadd.f32 %v87, %v103
  %v126 = vadd.f32 %v88, %v102
  %v127 = vadd.f32 %v89, %v103
  %v128 = vadd.f32 %v90, %v102
  %v129 = vadd.f32 %v91, %v103
  %v130 = vadd.f32 %v92, %v102
  %v131 = vadd.f32 %v93, %v103
  %v132 = vadd.f32 %v94, %v102
  %v133 = vadd.f32 %v95, %v103
  %v134 = vadd.f32 %v96, %v102
  %v135 = vadd.f32 %v97, %v103
  %v136 = vadd.f32 %v98, %v102
  %v137 = vadd.f32 %v99, %v103
  %v138 = vmax.f32 %v106, 0.0
  %v139 = vmax.f32 %v107, 0.0
  %v140 = vmax.f32 %v108, 0.0
  %v141 = vmax.f32 %v109, 0.0
  %v142 = vmax.f32 %v110, 0.0
  %v143 = vmax.f32 %v111, 0.0
  %v144 = vmax.f32 %v112, 0.0
  %v145 = vmax.f32 %v113, 0.0
  %v146 = vmax.f32 %v114, 0.0
  %v147 = vmax.f32 %v115, 0.0
  %v148 = vmax.f32 %v116, 0.0
  %v149 = vmax.f32 %v117, 0.0
  %v150 = vmax.f32 %v118, 0.0
  %v151 = vmax.f32 %v119, 0.0
  %v152 = vmax.f32 %v120, 0.0
  %v153 = vmax.f32 %v121, 0.0
  %v154 = vmax.f32 %v122, 0.0
  %v155 = vmax.f32 %v123, 0.0
  %v156 = vmax.f32 %v124, 0.0
  %v157 = vmax.f32 %v125, 0.0
  %v158 = vmax.f32 %v126, 0.0
  %v159 = vmax.f32 %v127, 0.0
  %v160 = vmax.f32 %v128, 0.0
  %v161 = vmax.f32 %v129, 0.0
  %v162 = vmax.f32 %v130, 0.0
  %v163 = vmax.f32 %v131, 0.0
  %v164 = vmax.f32 %v132, 0.0
  %v165 = vmax.f32 %v133, 0.0
  %v166 = vmax.f32 %v134, 0.0
  %v167 = vmax.f32 %v135, 0.0
  %v168 = vmax.f32 %v136, 0.0
  %v169 = vmax.f32 %v137, 0.0
  %v170 = vpack.c.bf16 %v139, %v138
  %v171 = vpack.c.bf16 %v141, %v140
  %v172 = vpack.c.bf16 %v143, %v142
  %v173 = vpack.c.bf16 %v145, %v144
  %v174 = vpack.c.bf16 %v147, %v146
  %v175 = vpack.c.bf16 %v149, %v148
  %v176 = vpack.c.bf16 %v151, %v150
  %v177 = vpack.c.bf16 %v153, %v152
  %v178 = vpack.c.bf16 %v155, %v154
  %v179 = vpack.c.bf16 %v157, %v156
  %v180 = vpack.c.bf16 %v159, %v158
  %v181 = vpack.c.bf16 %v161, %v160
  %v182 = vpack.c.bf16 %v163, %v162
  %v183 = vpack.c.bf16 %v165, %v164
  %v184 = vpack.c.bf16 %v167, %v166
  %v185 = vpack.c.bf16 %v169, %v168
  %186 = vst [vmem:[%s3] sm:$0xff] %v170
  %187 = vst [vmem:[%s3 + $0x8] sm:$0xff] %v171
  %188 = vst [vmem:[%s3 + $0x10] sm:$0xff] %v172
  %189 = vst [vmem:[%s3 + $0x18] sm:$0xff] %v173
  %190 = vst [vmem:[%s3 + $0x20] sm:$0xff] %v174
  %191 = vst [vmem:[%s3 + $0x28] sm:$0xff] %v175
  %192 = vst [vmem:[%s3 + $0x30] sm:$0xff] %v176
  %193 = vst [vmem:[%s3 + $0x38] sm:$0xff] %v177
  %194 = vst [vmem:[%s3 + $0x40] sm:$0xff] %v178
  %195 = vst [vmem:[%s3 + $0x48] sm:$0xff] %v179
  %196 = vst [vmem:[%s3 + $0x50] sm:$0xff] %v180
  %197 = vst [vmem:[%s3 + $0x58] sm:$0xff] %v181
  %198 = vst [vmem:[%s3 + $0x60] sm:$0xff] %v182
  %199 = vst [vmem:[%s3 + $0x68] sm:$0xff] %v183
  %200 = vst [vmem:[%s3 + $0x70] sm:$0xff] %v184
  %201 = vst [vmem:[%s3 + $0x78] sm:$0xff] %v185
  // Predicated region
  $region14: #{dcgan_generator_forward.12} parent=0 // pred_check
    _
  $region15: #{dcgan_generator_forward.12} parent=0 // pred_check_branch
    %203 = sbr.rel (0) target = $region17
  $region16: #{dcgan_generator_forward.12} parent=0 // pred_region
    _
  $region17: #{dcgan_generator_forward.12} parent=0 // pred_fallthru
    _
  // Predicated region
  $region18: #{dcgan_generator_forward.12} parent=0 // pred_check
    _
  $region19: #{dcgan_generator_forward.12} parent=0 // pred_check_branch
    %205 = sbr.rel (0) target = $region21
  $region20: #{dcgan_generator_forward.12} parent=0 // pred_region
    _
  $region21: #{dcgan_generator_forward.12} parent=0 // pred_fallthru
    _

// kernel: dcgan_generator_forward.13
$region0: #{dcgan_generator_forward.13}
  #allocation0 [shape = 'u32[]', space=smem, size = 0x4, offset = 0x4, fixed_abs, tag = 'smem constant byte address 0x4 - core index']
  #allocation1 [shape = 'u32[72,128]{1,0:T(1,128)}', space=vmem, size = 0x9000, scoped, tag = 'internal scratch']
  #allocation2 [shape = 'f32[128,128]{1,0:T(8,128)}', space=vmem, size = 0x10000, scoped, tag = 'scratch operand']
  %s0 = inlined_call_operand.vmem [shape: bf16[4,128,1024], index: 0, kind: input, shape index: {}]
  %s1 = inlined_call_operand.vmem [shape: bf16[4,1024,128], index: 1, kind: input, shape index: {}]
  %s2 = inlined_call_operand.vmem [shape: bf16[4,128,128], index: 2, kind: output, shape index: {0}]
  %s3 = inlined_call_operand.vmem [shape: f32[4,1,8,128], index: 3, kind: output, shape index: {1}]
  %4 = xla_tuple %s2, %s3
  %s5 = sld [smem:[#allocation0]]
  $region80: #{dcgan_generator_forward.13} parent=0
    _
  %s7 = ssub.s32 1, %s5
  %s8 = scalar_select 0, %s7, %s5
  $region1: #{dcgan_generator_forward.13} parent=0
    #allocation3 [shape = 'u8[262144]{0}', space=vmem, size = 0x40000, scoped, tag = 'input window, operand 0']
    loop: start=0, step=1, limit=10
    $region2: #{dcgan_generator_forward.13} parent=1 // loop_pre_header
      _
    $region3: #{dcgan_generator_forward.13} parent=1 // loop_header
      %s10 = sphi 0, %s14
      %p11 = scmp.ge.s32.totalorder %s10, 10
      %s17 = sphi 0, %s43
      %s18 = sphi 0, %s39
      %s19 = sphi 0, %s35
      %s20 = sphi 0, %s31
      %s21 = sphi 0, %s17
      %s22 = sphi 0, %s18
      %s23 = sphi 0, %s19
      %s24 = sphi 0, %s20
      %s25 = sphi 0, %s21
      %s26 = sphi 0, %s22
      %s27 = sphi 0, %s23
      %s28 = sphi 0, %s24
      %s50 = sphi 0, %s52
      %s53 = sphi 0, %s50
      %s54 = sphi 0, %s53
      %s70 = sphi 0, %s54
      %s80 = sphi 0, %s82
      %s83 = sphi 0, %s80
      %s84 = sphi 0, %s83
      %s100 = sphi 0, %s84
      %s110 = sphi 0, %s112
      %s113 = sphi 0, %s110
      %s114 = sphi 0, %s113
      %s130 = sphi 0, %s114
      %s140 = sphi 0, %s142
      %s143 = sphi 0, %s140
      %s144 = sphi 0, %s143
      %s160 = sphi 0, %s144
    $region4: #{dcgan_generator_forward.13} parent=1 // loop_header_branch
      %13 = sbr.rel (%p11) target = $region8
    $region5: #{dcgan_generator_forward.13} parent=1 // loop_body
      %s15 = ssub.s32 %s10, 1
      %s16 = ssub.s32 %s10, 2
      %s29 = sadd.s32 1, %s20
      %p30 = scmp.ge.s32.totalorder %s29, 2
      %s31 = scalar_select %p30, 0, %s29
      %s32 = sadd.s32 1, %s19
      %s33 = scalar_select %p30, %s32, %s19
      %p34 = scmp.ge.s32.totalorder %s33, 1
      %s35 = scalar_select %p34, 0, %s33
      %s36 = sadd.s32 1, %s18
      %s37 = scalar_select %p34, %s36, %s18
      %p38 = scmp.ge.s32.totalorder %s37, 1
      %s39 = scalar_select %p38, 0, %s37
      %s40 = sadd.s32 1, %s17
      %s41 = scalar_select %p38, %s40, %s17
      %p42 = scmp.ge.s32.totalorder %s41, 4
      %s43 = scalar_select %p42, 0, %s41
      %s44 = ssub.s32 %s17, %s43
      %s45 = ssub.s32 %s18, %s39
      %s46 = sor.u32 %s44, %s45
      %s47 = ssub.s32 %s20, %s31
      %s48 = sor.u32 %s46, %s47
      %p49 = scmp.eq.s32.totalorder %s48, 0
      %s51 = sadd.s32 %s50, 1
      %s52 = scalar_select %p49, %s50, %s51
      %p55 = pneg %p49
      %p56 = scmp.eq.s32.totalorder %s10, 7
      %p57 = por %p55, %p56
      %p58 = scmp.ne.s32.totalorder %s50, %s53
      %p59 = scmp.eq.s32.totalorder %s10, 0
      %p60 = por %p58, %p59
      %p61 = scmp.ne.s32.totalorder %s50, %s53
      %p62 = scmp.eq.s32.totalorder %s15, 7
      %p63 = por %p61, %p62
      %p64 = scmp.ne.s32.totalorder %s53, %s54
      %p65 = scmp.eq.s32.totalorder %s15, 0
      %p66 = por %p64, %p65
      %p67 = scmp.ne.s32.totalorder %s53, %s54
      %p68 = scmp.eq.s32.totalorder %s16, 7
      %p69 = por %p67, %p68
      %p71 = scmp.ne.s32.totalorder %s54, %s70
      %p72 = scmp.eq.s32.totalorder %s16, 0
      %p73 = por %p71, %p72
      %s74 = ssub.s32 %s17, %s43
      %s75 = ssub.s32 %s20, %s31
      %s76 = sor.u32 %s74, %s75
      %s77 = ssub.s32 %s19, %s35
      %s78 = sor.u32 %s76, %s77
      %p79 = scmp.eq.s32.totalorder %s78, 0
      %s81 = sadd.s32 %s80, 1
      %s82 = scalar_select %p79, %s80, %s81
      %p85 = pneg %p79
      %p86 = scmp.eq.s32.totalorder %s10, 7
      %p87 = por %p85, %p86
      %p88 = scmp.ne.s32.totalorder %s80, %s83
      %p89 = scmp.eq.s32.totalorder %s10, 0
      %p90 = por %p88, %p89
      %p91 = scmp.ne.s32.totalorder %s80, %s83
      %p92 = scmp.eq.s32.totalorder %s15, 7
      %p93 = por %p91, %p92
      %p94 = scmp.ne.s32.totalorder %s83, %s84
      %p95 = scmp.eq.s32.totalorder %s15, 0
      %p96 = por %p94, %p95
      %p97 = scmp.ne.s32.totalorder %s83, %s84
      %p98 = scmp.eq.s32.totalorder %s16, 7
      %p99 = por %p97, %p98
      %p101 = scmp.ne.s32.totalorder %s84, %s100
      %p102 = scmp.eq.s32.totalorder %s16, 0
      %p103 = por %p101, %p102
      %s104 = ssub.s32 %s17, %s43
      %s105 = ssub.s32 %s18, %s39
      %s106 = sor.u32 %s104, %s105
      %s107 = ssub.s32 %s19, %s35
      %s108 = sor.u32 %s106, %s107
      %p109 = scmp.eq.s32.totalorder %s108, 0
      %s111 = sadd.s32 %s110, 1
      %s112 = scalar_select %p109, %s110, %s111
      %p115 = pneg %p109
      %p116 = scmp.eq.s32.totalorder %s10, 7
      %p117 = por %p115, %p116
      %p118 = scmp.ne.s32.totalorder %s110, %s113
      %p119 = scmp.eq.s32.totalorder %s10, 0
      %p120 = por %p118, %p119
      %p121 = scmp.ne.s32.totalorder %s110, %s113
      %p122 = scmp.eq.s32.totalorder %s15, 7
      %p123 = por %p121, %p122
      %p124 = scmp.ne.s32.totalorder %s113, %s114
      %p125 = scmp.eq.s32.totalorder %s15, 0
      %p126 = por %p124, %p125
      %p127 = scmp.ne.s32.totalorder %s113, %s114
      %p128 = scmp.eq.s32.totalorder %s16, 7
      %p129 = por %p127, %p128
      %p131 = scmp.ne.s32.totalorder %s114, %s130
      %p132 = scmp.eq.s32.totalorder %s16, 0
      %p133 = por %p131, %p132
      %s134 = ssub.s32 %s17, %s43
      %s135 = ssub.s32 %s18, %s39
      %s136 = sor.u32 %s134, %s135
      %s137 = ssub.s32 %s19, %s35
      %s138 = sor.u32 %s136, %s137
      %p139 = scmp.eq.s32.totalorder %s138, 0
      %s141 = sadd.s32 %s140, 1
      %s142 = scalar_select %p139, %s140, %s141
      %p145 = pneg %p139
      %p146 = scmp.eq.s32.totalorder %s10, 7
      %p147 = por %p145, %p146
      %p148 = scmp.ne.s32.totalorder %s140, %s143
      %p149 = scmp.eq.s32.totalorder %s10, 0
      %p150 = por %p148, %p149
      %p151 = scmp.ne.s32.totalorder %s140, %s143
      %p152 = scmp.eq.s32.totalorder %s15, 7
      %p153 = por %p151, %p152
      %p154 = scmp.ne.s32.totalorder %s143, %s144
      %p155 = scmp.eq.s32.totalorder %s15, 0
      %p156 = por %p154, %p155
      %p157 = scmp.ne.s32.totalorder %s143, %s144
      %p158 = scmp.eq.s32.totalorder %s16, 7
      %p159 = por %p157, %p158
      %p161 = scmp.ne.s32.totalorder %s144, %s160
      %p162 = scmp.eq.s32.totalorder %s16, 0
      %p163 = por %p161, %p162
      %p164 = scmp.le.s32.totalorder 1, %s10
      %p165 = scmp.lt.s32.totalorder %s10, 9
      %p166 = pnand %p164, %p165
      %p167 = pneg %p166
      // Predicated region
      $region9: #{dcgan_generator_forward.13} parent=5 // pred_check
        _
      $region10: #{dcgan_generator_forward.13} parent=5 // pred_check_branch
        %169 = sbr.rel (%p166) target = $region12
      $region11: #{dcgan_generator_forward.13} parent=5 // pred_region
        %s170 = ssub.s32 %s10, 1
      $region12: #{dcgan_generator_forward.13} parent=5 // pred_fallthru
        _
      %p171 = scmp.lt.s32.totalorder %s10, 8
      // Predicated region
      $region13: #{dcgan_generator_forward.13} parent=5 // pred_check
        %p172 = pneg %p171
      $region14: #{dcgan_generator_forward.13} parent=5 // pred_check_branch
        %174 = sbr.rel (%p172) target = $region16
      $region15: #{dcgan_generator_forward.13} parent=5 // pred_region
        // Predicated region
        $region17: #{dcgan_generator_forward.13} parent=15 // pred_check
          %p175 = pneg %p60
        $region18: #{dcgan_generator_forward.13} parent=15 // pred_check_branch
          %177 = sbr.rel (%p175) target = $region20
        $region19: #{dcgan_generator_forward.13} parent=15 // pred_region
          %s178 = sand.u32 %s50, 1
          %s179 = sand.u32 %s50, 1
          %s180 = smul.addr %s179, 256
          %s181 = scalar_lea.vmem [#allocation3], %s180
          %s182 = smul.u32 16, %s18
          %s183 = smul.u32 4, %s20
          %s184 = smul.addr %s182, 8
          %s185 = sadd.s32 %s183, %s184
          %s186 = smul.addr %s17, 128
          %s187 = sadd.s32 %s185, %s186
          %s188 = smul.addr %s187, 4
          %s189 = scalar_lea.vmem %s0, %s188
          // Predicated region
          $region21: #{dcgan_generator_forward.13} parent=19 // pred_check
            _
          $region22: #{dcgan_generator_forward.13} parent=19 // pred_check_branch
            %191 = sbr.rel (0) target = $region24
          $region23: #{dcgan_generator_forward.13} parent=19 // pred_region
            // Predicated region
            $region25: #{dcgan_generator_forward.13} parent=23 // pred_check
              _
            $region26: #{dcgan_generator_forward.13} parent=23 // pred_check_branch
              %193 = sbr.rel (0) target = $region28
            $region27: #{dcgan_generator_forward.13} parent=23 // pred_region
              loop: start=0, step=1, limit=1
              $region29: #{dcgan_generator_forward.13} parent=27 // loop_pre_header
                _
              $region30: #{dcgan_generator_forward.13} parent=27 // loop_header
                %s195 = sphi 0, %s199
                %p196 = scmp.ge.s32.totalorder %s195, 1
                %s200 = sphi %s189, %s189
                %s201 = sphi %s181, %s181
              $region31: #{dcgan_generator_forward.13} parent=27 // loop_header_branch
                %198 = sbr.rel (%p196) target = $region35
              $region32: #{dcgan_generator_forward.13} parent=27 // loop_body
                %v202 = vld [vmem:[%s200] sm:$0xff]
                %203 = vst [vmem:[%s201] sm:$0xff] %v202
                %v204 = vld [vmem:[%s200 + $0x8] sm:$0xff]
                %205 = vst [vmem:[%s201 + $0x8] sm:$0xff] %v204
                %v206 = vld [vmem:[%s200 + $0x20] sm:$0xff]
                %207 = vst [vmem:[%s201 + $0x10] sm:$0xff] %v206
                %v208 = vld [vmem:[%s200 + $0x28] sm:$0xff]
                %209 = vst [vmem:[%s201 + $0x18] sm:$0xff] %v208
                %v210 = vld [vmem:[%s200 + $0x40] sm:$0xff]
                %211 = vst [vmem:[%s201 + $0x20] sm:$0xff] %v210
                %v212 = vld [vmem:[%s200 + $0x48] sm:$0xff]
                %213 = vst [vmem:[%s201 + $0x28] sm:$0xff] %v212
                %v214 = vld [vmem:[%s200 + $0x60] sm:$0xff]
                %215 = vst [vmem:[%s201 + $0x30] sm:$0xff] %v214
                %v216 = vld [vmem:[%s200 + $0x68] sm:$0xff]
                %217 = vst [vmem:[%s201 + $0x38] sm:$0xff] %v216
                %v218 = vld [vmem:[%s200 + $0x80] sm:$0xff]
                %219 = vst [vmem:[%s201 + $0x40] sm:$0xff] %v218
                %v220 = vld [vmem:[%s200 + $0x88] sm:$0xff]
                %221 = vst [vmem:[%s201 + $0x48] sm:$0xff] %v220
                %v222 = vld [vmem:[%s200 + $0xa0] sm:$0xff]
                %223 = vst [vmem:[%s201 + $0x50] sm:$0xff] %v222
                %v224 = vld [vmem:[%s200 + $0xa8] sm:$0xff]
                %225 = vst [vmem:[%s201 + $0x58] sm:$0xff] %v224
                %v226 = vld [vmem:[%s200 + $0xc0] sm:$0xff]
                %227 = vst [vmem:[%s201 + $0x60] sm:$0xff] %v226
                %v228 = vld [vmem:[%s200 + $0xc8] sm:$0xff]
                %229 = vst [vmem:[%s201 + $0x68] sm:$0xff] %v228
                %v230 = vld [vmem:[%s200 + $0xe0] sm:$0xff]
                %231 = vst [vmem:[%s201 + $0x70] sm:$0xff] %v230
                %v232 = vld [vmem:[%s200 + $0xe8] sm:$0xff]
                %233 = vst [vmem:[%s201 + $0x78] sm:$0xff] %v232
                %v234 = vld [vmem:[%s200 + $0x100] sm:$0xff]
                %235 = vst [vmem:[%s201 + $0x80] sm:$0xff] %v234
                %v236 = vld [vmem:[%s200 + $0x108] sm:$0xff]
                %237 = vst [vmem:[%s201 + $0x88] sm:$0xff] %v236
                %v238 = vld [vmem:[%s200 + $0x120] sm:$0xff]
                %239 = vst [vmem:[%s201 + $0x90] sm:$0xff] %v238
                %v240 = vld [vmem:[%s200 + $0x128] sm:$0xff]
                %241 = vst [vmem:[%s201 + $0x98] sm:$0xff] %v240
                %v242 = vld [vmem:[%s200 + $0x140] sm:$0xff]
                %243 = vst [vmem:[%s201 + $0xa0] sm:$0xff] %v242
                %v244 = vld [vmem:[%s200 + $0x148] sm:$0xff]
                %245 = vst [vmem:[%s201 + $0xa8] sm:$0xff] %v244
                %v246 = vld [vmem:[%s200 + $0x160] sm:$0xff]
                %247 = vst [vmem:[%s201 + $0xb0] sm:$0xff] %v246
                %v248 = vld [vmem:[%s200 + $0x168] sm:$0xff]
                %249 = vst [vmem:[%s201 + $0xb8] sm:$0xff] %v248
                %v250 = vld [vmem:[%s200 + $0x180] sm:$0xff]
                %251 = vst [vmem:[%s201 + $0xc0] sm:$0xff] %v250
                %v252 = vld [vmem:[%s200 + $0x188] sm:$0xff]
                %253 = vst [vmem:[%s201 + $0xc8] sm:$0xff] %v252
                %v254 = vld [vmem:[%s200 + $0x1a0] sm:$0xff]
                %255 = vst [vmem:[%s201 + $0xd0] sm:$0xff] %v254
                %v256 = vld [vmem:[%s200 + $0x1a8] sm:$0xff]
                %257 = vst [vmem:[%s201 + $0xd8] sm:$0xff] %v256
                %v258 = vld [vmem:[%s200 + $0x1c0] sm:$0xff]
                %259 = vst [vmem:[%s201 + $0xe0] sm:$0xff] %v258
                %v260 = vld [vmem:[%s200 + $0x1c8] sm:$0xff]
                %261 = vst [vmem:[%s201 + $0xe8] sm:$0xff] %v260
                %v262 = vld [vmem:[%s200 + $0x1e0] sm:$0xff]
                %263 = vst [vmem:[%s201 + $0xf0] sm:$0xff] %v262
                %v264 = vld [vmem:[%s200 + $0x1e8] sm:$0xff]
                %265 = vst [vmem:[%s201 + $0xf8] sm:$0xff] %v264
              $region33: #{dcgan_generator_forward.13} parent=27 // loop_footer
                %s199 = sadd.s32 1, %s195
              $region34: #{dcgan_generator_forward.13} parent=27 // loop_footer_branch
                %194 = sbr.rel target = $region30
              $region35: #{dcgan_generator_forward.13} parent=27 // loop_exit
                _
            $region28: #{dcgan_generator_forward.13} parent=23 // pred_fallthru
              _
            // Predicated region
            $region36: #{dcgan_generator_forward.13} parent=23 // pred_check
              _
            $region37: #{dcgan_generator_forward.13} parent=23 // pred_check_branch
              %267 = sbr.rel target = $region39
            $region38: #{dcgan_generator_forward.13} parent=23 // pred_region
              _
            $region39: #{dcgan_generator_forward.13} parent=23 // pred_fallthru
              _
          $region24: #{dcgan_generator_forward.13} parent=19 // pred_fallthru
            _
          %268 = vnop
        $region20: #{dcgan_generator_forward.13} parent=15 // pred_fallthru
          _
        // Predicated region
        $region40: #{dcgan_generator_forward.13} parent=15 // pred_check
          %p269 = pneg %p90
        $region41: #{dcgan_generator_forward.13} parent=15 // pred_check_branch
          %271 = sbr.rel (%p269) target = $region43
        $region42: #{dcgan_generator_forward.13} parent=15 // pred_region
          %s272 = smul.u32 64, %s20
          %p273 = scmp.lt.s32.totalorder %s17, 3
          %s274 = scalar_select %p273, %s17, 3
          %p275 = scmp.lt.s32.totalorder %s272, 127
          %s276 = scalar_select %p275, %s272, 127
          %p277 = scmp.lt.s32.totalorder %s19, 0
          %s278 = scalar_select %p277, %s19, 0
          %s279 = sadd.s32 %s278, %s276
          %s280 = smul.addr %s274, 128
          %s281 = sadd.s32 %s279, %s280
          %s282 = smul.addr %s281, 4
          %s283 = scalar_lea.vmem %s1, %s282
          %s284 = smul.u32 64, %s20
        $region43: #{dcgan_generator_forward.13} parent=15 // pred_fallthru
          _
      $region16: #{dcgan_generator_forward.13} parent=5 // pred_fallthru
        _
      %p285 = scmp.le.s32.totalorder 1, %s10
      %p286 = scmp.lt.s32.totalorder %s10, 9
      %p287 = pnand %p285, %p286
      %p288 = pneg %p287
      // Predicated region
      $region44: #{dcgan_generator_forward.13} parent=5 // pred_check
        _
      $region45: #{dcgan_generator_forward.13} parent=5 // pred_check_branch
        %290 = sbr.rel (%p287) target = $region47
      $region46: #{dcgan_generator_forward.13} parent=5 // pred_region
        %s291 = ssub.s32 %s10, 1
        %s292 = sand.u32 %s53, 1
        %s293 = sand.u32 %s53, 1
        %s294 = smul.addr %s293, 256
        %s295 = scalar_lea.vmem [#allocation3], %s294
        // Predicated region
        $region48: #{dcgan_generator_forward.13} parent=46 // pred_check
          %p296 = pneg %p66
        $region49: #{dcgan_generator_forward.13} parent=46 // pred_check_branch
          %298 = sbr.rel (%p296) target = $region51
        $region50: #{dcgan_generator_forward.13} parent=46 // pred_region
          _
        $region51: #{dcgan_generator_forward.13} parent=46 // pred_fallthru
          _
        %s299 = sand.u32 %s53, 1
        %s300 = sand.u32 %s53, 1
        %s301 = smul.addr %s300, 256
        %s302 = scalar_lea.vmem [#allocation3], %s301
        %p303 = pneg %p66
        %p304 = pneg %p63
        %s305 = smul.u32 64, %s24
        %p306 = scmp.lt.s32.totalorder %s21, 3
        %s307 = scalar_select %p306, %s21, 3
        %p308 = scmp.lt.s32.totalorder %s305, 127
        %s309 = scalar_select %p308, %s305, 127
        %p310 = scmp.lt.s32.totalorder %s23, 0
        %s311 = scalar_select %p310, %s23, 0
        %s312 = sadd.s32 %s311, %s309
        %s313 = smul.addr %s307, 128
        %s314 = sadd.s32 %s312, %s313
        %s315 = smul.addr %s314, 4
        %s316 = scalar_lea.vmem %s1, %s315
        %p317 = pneg %p96
        %p318 = pneg %p93
        %p319 = pneg %p126
        %p320 = pneg %p123
        %s321 = smul.u32 16, %s22
        %p322 = scmp.lt.s32.totalorder %s21, 3
        %s323 = scalar_select %p322, %s21, 3
        %p324 = scmp.lt.s32.totalorder %s321, 15
        %s325 = scalar_select %p324, %s321, 15
        %p326 = scmp.lt.s32.totalorder %s23, 0
        %s327 = scalar_select %p326, %s23, 0
        %s328 = sadd.s32 %s327, %s325
        %s329 = smul.addr %s323, 16
        %s330 = sadd.s32 %s328, %s329
        %s331 = smul.addr %s330, 4
        %s332 = scalar_lea.vmem %s2, %s331
        %p333 = pneg %p156
        %p334 = pneg %p153
        %p335 = scmp.lt.s32.totalorder %s21, 3
        %s336 = scalar_select %p335, %s21, 3
        %p337 = scmp.lt.s32.totalorder %s22, 0
        %s338 = scalar_select %p337, %s22, 0
        %p339 = scmp.lt.s32.totalorder %s23, 0
        %s340 = scalar_select %p339, %s23, 0
        %s341 = sadd.s32 %s340, %s338
        %s342 = sadd.s32 %s341, %s336
        %s343 = smul.addr %s342, 8
        %s344 = scalar_lea.vmem %s3, %s343
        %s345 = smul.u32 16, %s22
        %s346 = smul.u32 4, %s24
        %s347 = smul.u32 64, %s24
        %p348 = scmp.lt.s32.totalorder %s21, 3
        %s349 = scalar_select %p348, %s21, 3
        %p350 = scmp.lt.s32.totalorder %s347, 127
        %s351 = scalar_select %p350, %s347, 127
        %p352 = scmp.lt.s32.totalorder %s23, 0
        %s353 = scalar_select %p352, %s23, 0
        %s354 = sadd.s32 %s353, %s351
        %s355 = smul.addr %s349, 128
        %s356 = sadd.s32 %s354, %s355
        %s357 = smul.addr %s356, 4
        %s358 = scalar_lea.vmem %s1, %s357
        %s359 = smul.u32 64, %s24
        %s360 = smul.u32 16, %s22
        %p361 = scmp.lt.s32.totalorder %s21, 3
        %s362 = scalar_select %p361, %s21, 3
        %p363 = scmp.lt.s32.totalorder %s360, 15
        %s364 = scalar_select %p363, %s360, 15
        %p365 = scmp.lt.s32.totalorder %s23, 0
        %s366 = scalar_select %p365, %s23, 0
        %s367 = sadd.s32 %s366, %s364
        %s368 = smul.addr %s362, 16
        %s369 = sadd.s32 %s367, %s368
        %s370 = smul.addr %s369, 4
        %s371 = scalar_lea.vmem %s2, %s370
        %s372 = smul.u32 16, %s22
        %p373 = scmp.lt.s32.totalorder %s21, 3
        %s374 = scalar_select %p373, %s21, 3
        %p375 = scmp.lt.s32.totalorder %s22, 0
        %s376 = scalar_select %p375, %s22, 0
        %p377 = scmp.lt.s32.totalorder %s23, 0
        %s378 = scalar_select %p377, %s23, 0
        %s379 = sadd.s32 %s378, %s376
        %s380 = sadd.s32 %s379, %s374
        %s381 = smul.addr %s380, 8
        %s382 = scalar_lea.vmem %s3, %s381
        %p383 = scmp.eq.s32.totalorder %s24, 0
        // Predicated region
        $region52: #{dcgan_generator_forward.13} parent=46 // pred_check
          %p384 = pneg %p383
        $region53: #{dcgan_generator_forward.13} parent=46 // pred_check_branch
          %386 = sbr.rel (%p384) target = $region55
        $region54: #{dcgan_generator_forward.13} parent=46 // pred_region
          %387 = vst [vmem:[#allocation2] sm:$0xff] 0.0
          %388 = vst [vmem:[#allocation2 + $0x8] sm:$0xff] 0.0
          %389 = vst [vmem:[#allocation2 + $0x10] sm:$0xff] 0.0
          %390 = vst [vmem:[#allocation2 + $0x18] sm:$0xff] 0.0
          %391 = vst [vmem:[#allocation2 + $0x20] sm:$0xff] 0.0
          %392 = vst [vmem:[#allocation2 + $0x28] sm:$0xff] 0.0
          %393 = vst [vmem:[#allocation2 + $0x30] sm:$0xff] 0.0
          %394 = vst [vmem:[#allocation2 + $0x38] sm:$0xff] 0.0
          %395 = vst [vmem:[#allocation2 + $0x40] sm:$0xff] 0.0
          %396 = vst [vmem:[#allocation2 + $0x48] sm:$0xff] 0.0
          %397 = vst [vmem:[#allocation2 + $0x50] sm:$0xff] 0.0
          %398 = vst [vmem:[#allocation2 + $0x58] sm:$0xff] 0.0
          %399 = vst [vmem:[#allocation2 + $0x60] sm:$0xff] 0.0
          %400 = vst [vmem:[#allocation2 + $0x68] sm:$0xff] 0.0
          %401 = vst [vmem:[#allocation2 + $0x70] sm:$0xff] 0.0
          %402 = vst [vmem:[#allocation2 + $0x78] sm:$0xff] 0.0
        $region55: #{dcgan_generator_forward.13} parent=46 // pred_fallthru
          _
        %v403 = vld [vmem:[#allocation2] sm:$0xff]
        %v404 = vld [vmem:[#allocation2 + $0x8] sm:$0xff]
        %v405 = vld [vmem:[#allocation2 + $0x10] sm:$0xff]
        %v406 = vld [vmem:[#allocation2 + $0x18] sm:$0xff]
        %v407 = vld [vmem:[#allocation2 + $0x20] sm:$0xff]
        %v408 = vld [vmem:[#allocation2 + $0x28] sm:$0xff]
        %v409 = vld [vmem:[#allocation2 + $0x30] sm:$0xff]
        %v410 = vld [vmem:[#allocation2 + $0x38] sm:$0xff]
        %v411 = vld [vmem:[#allocation2 + $0x40] sm:$0xff]
        %v412 = vld [vmem:[#allocation2 + $0x48] sm:$0xff]
        %v413 = vld [vmem:[#allocation2 + $0x50] sm:$0xff]
        %v414 = vld [vmem:[#allocation2 + $0x58] sm:$0xff]
        %v415 = vld [vmem:[#allocation2 + $0x60] sm:$0xff]
        %v416 = vld [vmem:[#allocation2 + $0x68] sm:$0xff]
        %v417 = vld [vmem:[#allocation2 + $0x70] sm:$0xff]
        %v418 = vld [vmem:[#allocation2 + $0x78] sm:$0xff]
        %v419 = vld [vmem:[%s295] sm:$0xff]
        %v420 = vld [vmem:[%s295 + $0x8] sm:$0xff]
        %v421 = vld [vmem:[%s295 + $0x10] sm:$0xff]
        %v422 = vld [vmem:[%s295 + $0x18] sm:$0xff]
        %v423 = vld [vmem:[%s295 + $0x20] sm:$0xff]
        %v424 = vld [vmem:[%s295 + $0x28] sm:$0xff]
        %v425 = vld [vmem:[%s295 + $0x30] sm:$0xff]
        %v426 = vld [vmem:[%s295 + $0x38] sm:$0xff]
        %v427 = vld [vmem:[%s295 + $0x40] sm:$0xff]
        %v428 = vld [vmem:[%s295 + $0x48] sm:$0xff]
        %v429 = vld [vmem:[%s295 + $0x50] sm:$0xff]
        %v430 = vld [vmem:[%s295 + $0x58] sm:$0xff]
        %v431 = vld [vmem:[%s295 + $0x60] sm:$0xff]
        %v432 = vld [vmem:[%s295 + $0x68] sm:$0xff]
        %v433 = vld [vmem:[%s295 + $0x70] sm:$0xff]
        %v434 = vld [vmem:[%s295 + $0x78] sm:$0xff]
        %v435 = vld [vmem:[%s295 + $0x80] sm:$0xff]
        %v436 = vld [vmem:[%s295 + $0x88] sm:$0xff]
        %v437 = vld [vmem:[%s295 + $0x90] sm:$0xff]
        %v438 = vld [vmem:[%s295 + $0x98] sm:$0xff]
        %v439 = vld [vmem:[%s295 + $0xa0] sm:$0xff]
        %v440 = vld [vmem:[%s295 + $0xa8] sm:$0xff]
        %v441 = vld [vmem:[%s295 + $0xb0] sm:$0xff]
        %v442 = vld [vmem:[%s295 + $0xb8] sm:$0xff]
        %v443 = vld [vmem:[%s295 + $0xc0] sm:$0xff]
        %v444 = vld [vmem:[%s295 + $0xc8] sm:$0xff]
        %v445 = vld [vmem:[%s295 + $0xd0] sm:$0xff]
        %v446 = vld [vmem:[%s295 + $0xd8] sm:$0xff]
        %v447 = vld [vmem:[%s295 + $0xe0] sm:$0xff]
        %v448 = vld [vmem:[%s295 + $0xe8] sm:$0xff]
        %v449 = vld [vmem:[%s295 + $0xf0] sm:$0xff]
        %v450 = vld [vmem:[%s295 + $0xf8] sm:$0xff]
        %v451 = vld [vmem:[%s358] sm:$0xf]
        %v452 = vld [vmem:[%s358 + $0x4] sm:$0xf]
        %v453 = vld [vmem:[%s358 + $0x8] sm:$0xf]
        %v454 = vld [vmem:[%s358 + $0xc] sm:$0xf]
        %v455 = vld [vmem:[%s358 + $0x10] sm:$0xf]
        %v456 = vld [vmem:[%s358 + $0x14] sm:$0xf]
        %v457 = vld [vmem:[%s358 + $0x18] sm:$0xf]
        %v458 = vld [vmem:[%s358 + $0x1c] sm:$0xf]
        %v459 = vld [vmem:[%s358 + $0x20] sm:$0xf]
        %v460 = vld [vmem:[%s358 + $0x24] sm:$0xf]
        %v461 = vld [vmem:[%s358 + $0x28] sm:$0xf]
        %v462 = vld [vmem:[%s358 + $0x2c] sm:$0xf]
        %v463 = vld [vmem:[%s358 + $0x30] sm:$0xf]
        %v464 = vld [vmem:[%s358 + $0x34] sm:$0xf]
        %v465 = vld [vmem:[%s358 + $0x38] sm:$0xf]
        %v466 = vld [vmem:[%s358 + $0x3c] sm:$0xf]
        %v467 = vld [vmem:[%s358 + $0x40] sm:$0xf]
        %v468 = vld [vmem:[%s358 + $0x44] sm:$0xf]
        %v469 = vld [vmem:[%s358 + $0x48] sm:$0xf]
        %v470 = vld [vmem:[%s358 + $0x4c] sm:$0xf]
        %v471 = vld [vmem:[%s358 + $0x50] sm:$0xf]
        %v472 = vld [vmem:[%s358 + $0x54] sm:$0xf]
        %v473 = vld [vmem:[%s358 + $0x58] sm:$0xf]
        %v474 = vld [vmem:[%s358 + $0x5c] sm:$0xf]
        %v475 = vld [vmem:[%s358 + $0x60] sm:$0xf]
        %v476 = vld [vmem:[%s358 + $0x64] sm:$0xf]
        %v477 = vld [vmem:[%s358 + $0x68] sm:$0xf]
        %v478 = vld [vmem:[%s358 + $0x6c] sm:$0xf]
        %v479 = vld [vmem:[%s358 + $0x70] sm:$0xf]
        %v480 = vld [vmem:[%s358 + $0x74] sm:$0xf]
        %v481 = vld [vmem:[%s358 + $0x78] sm:$0xf]
        %v482 = vld [vmem:[%s358 + $0x7c] sm:$0xf]
        %v483 = vld [vmem:[%s358 + $0x80] sm:$0xf]
        %v484 = vld [vmem:[%s358 + $0x84] sm:$0xf]
        %v485 = vld [vmem:[%s358 + $0x88] sm:$0xf]
        %v486 = vld [vmem:[%s358 + $0x8c] sm:$0xf]
        %v487 = vld [vmem:[%s358 + $0x90] sm:$0xf]
        %v488 = vld [vmem:[%s358 + $0x94] sm:$0xf]
        %v489 = vld [vmem:[%s358 + $0x98] sm:$0xf]
        %v490 = vld [vmem:[%s358 + $0x9c] sm:$0xf]
        %v491 = vld [vmem:[%s358 + $0xa0] sm:$0xf]
        %v492 = vld [vmem:[%s358 + $0xa4] sm:$0xf]
        %v493 = vld [vmem:[%s358 + $0xa8] sm:$0xf]
        %v494 = vld [vmem:[%s358 + $0xac] sm:$0xf]
        %v495 = vld [vmem:[%s358 + $0xb0] sm:$0xf]
        %v496 = vld [vmem:[%s358 + $0xb4] sm:$0xf]
        %v497 = vld [vmem:[%s358 + $0xb8] sm:$0xf]
        %v498 = vld [vmem:[%s358 + $0xbc] sm:$0xf]
        %v499 = vld [vmem:[%s358 + $0xc0] sm:$0xf]
        %v500 = vld [vmem:[%s358 + $0xc4] sm:$0xf]
        %v501 = vld [vmem:[%s358 + $0xc8] sm:$0xf]
        %v502 = vld [vmem:[%s358 + $0xcc] sm:$0xf]
        %v503 = vld [vmem:[%s358 + $0xd0] sm:$0xf]
        %v504 = vld [vmem:[%s358 + $0xd4] sm:$0xf]
        %v505 = vld [vmem:[%s358 + $0xd8] sm:$0xf]
        %v506 = vld [vmem:[%s358 + $0xdc] sm:$0xf]
        %v507 = vld [vmem:[%s358 + $0xe0] sm:$0xf]
        %v508 = vld [vmem:[%s358 + $0xe4] sm:$0xf]
        %v509 = vld [vmem:[%s358 + $0xe8] sm:$0xf]
        %v510 = vld [vmem:[%s358 + $0xec] sm:$0xf]
        %v511 = vld [vmem:[%s358 + $0xf0] sm:$0xf]
        %v512 = vld [vmem:[%s358 + $0xf4] sm:$0xf]
        %v513 = vld [vmem:[%s358 + $0xf8] sm:$0xf]
        %v514 = vld [vmem:[%s358 + $0xfc] sm:$0xf]
        %v547 = vunpack.c.l.b16 %v419
        %v548 = vunpack.c.h.b16 %v419
        %v549 = vunpack.c.l.b16 %v420
        %v550 = vunpack.c.h.b16 %v420
        %v551 = vunpack.c.l.b16 %v421
        %v552 = vunpack.c.h.b16 %v421
        %v553 = vunpack.c.l.b16 %v422
        %v554 = vunpack.c.h.b16 %v422
        %v555 = vunpack.c.l.b16 %v423
        %v556 = vunpack.c.h.b16 %v423
        %v557 = vunpack.c.l.b16 %v424
        %v558 = vunpack.c.h.b16 %v424
        %v559 = vunpack.c.l.b16 %v425
        %v560 = vunpack.c.h.b16 %v425
        %v561 = vunpack.c.l.b16 %v426
        %v562 = vunpack.c.h.b16 %v426
        %v563 = vunpack.c.l.b16 %v427
        %v564 = vunpack.c.h.b16 %v427
        %v565 = vunpack.c.l.b16 %v428
        %v566 = vunpack.c.h.b16 %v428
        %v567 = vunpack.c.l.b16 %v429
        %v568 = vunpack.c.h.b16 %v429
        %v569 = vunpack.c.l.b16 %v430
        %v570 = vunpack.c.h.b16 %v430
        %v571 = vunpack.c.l.b16 %v431
        %v572 = vunpack.c.h.b16 %v431
        %v573 = vunpack.c.l.b16 %v432
        %v574 = vunpack.c.h.b16 %v432
        %v575 = vunpack.c.l.b16 %v433
        %v576 = vunpack.c.h.b16 %v433
        %v577 = vunpack.c.l.b16 %v434
        %v578 = vunpack.c.h.b16 %v434
        %v579 = vunpack.c.l.b16 %v435
        %v580 = vunpack.c.h.b16 %v435
        %v581 = vunpack.c.l.b16 %v436
        %v582 = vunpack.c.h.b16 %v436
        %v583 = vunpack.c.l.b16 %v437
        %v584 = vunpack.c.h.b16 %v437
        %v585 = vunpack.c.l.b16 %v438
        %v586 = vunpack.c.h.b16 %v438
        %v587 = vunpack.c.l.b16 %v439
        %v588 = vunpack.c.h.b16 %v439
        %v589 = vunpack.c.l.b16 %v440
        %v590 = vunpack.c.h.b16 %v440
        %v591 = vunpack.c.l.b16 %v441
        %v592 = vunpack.c.h.b16 %v441
        %v593 = vunpack.c.l.b16 %v442
        %v594 = vunpack.c.h.b16 %v442
        %v595 = vunpack.c.l.b16 %v443
        %v596 = vunpack.c.h.b16 %v443
        %v597 = vunpack.c.l.b16 %v444
        %v598 = vunpack.c.h.b16 %v444
        %v599 = vunpack.c.l.b16 %v445
        %v600 = vunpack.c.h.b16 %v445
        %v601 = vunpack.c.l.b16 %v446
        %v602 = vunpack.c.h.b16 %v446
        %v603 = vunpack.c.l.b16 %v447
        %v604 = vunpack.c.h.b16 %v447
        %v605 = vunpack.c.l.b16 %v448
        %v606 = vunpack.c.h.b16 %v448
        %v607 = vunpack.c.l.b16 %v449
        %v608 = vunpack.c.h.b16 %v449
        %v609 = vunpack.c.l.b16 %v450
        %v610 = vunpack.c.h.b16 %v450
        %v611 = vpack.c.b16 %v551, %v547
        %v612 = vpack.c.b16 %v552, %v548
        %v613 = vpack.c.b16 %v553, %v549
        %v614 = vpack.c.b16 %v554, %v550
        %v615 = vpack.c.b16 %v559, %v555
        %v616 = vpack.c.b16 %v560, %v556
        %v617 = vpack.c.b16 %v561, %v557
        %v618 = vpack.c.b16 %v562, %v558
        %v619 = vpack.c.b16 %v567, %v563
        %v620 = vpack.c.b16 %v568, %v564
        %v621 = vpack.c.b16 %v569, %v565
        %v622 = vpack.c.b16 %v570, %v566
        %v623 = vpack.c.b16 %v575, %v571
        %v624 = vpack.c.b16 %v576, %v572
        %v625 = vpack.c.b16 %v577, %v573
        %v626 = vpack.c.b16 %v578, %v574
        %v627 = vpack.c.b16 %v583, %v579
        %v628 = vpack.c.b16 %v584, %v580
        %v629 = vpack.c.b16 %v585, %v581
        %v630 = vpack.c.b16 %v586, %v582
        %v631 = vpack.c.b16 %v591, %v587
        %v632 = vpack.c.b16 %v592, %v588
        %v633 = vpack.c.b16 %v593, %v589
        %v634 = vpack.c.b16 %v594, %v590
        %v635 = vpack.c.b16 %v599, %v595
        %v636 = vpack.c.b16 %v600, %v596
        %v637 = vpack.c.b16 %v601, %v597
        %v638 = vpack.c.b16 %v602, %v598
        %v639 = vpack.c.b16 %v607, %v603
        %v640 = vpack.c.b16 %v608, %v604
        %v641 = vpack.c.b16 %v609, %v605
        %v642 = vpack.c.b16 %v610, %v606
        %v739 = vunpack.c.l.b16 %v451
        %v740 = vunpack.c.l.b16 %v452
        %v741 = vunpack.c.l.b16 %v453
        %v742 = vunpack.c.l.b16 %v454
        %v743 = vunpack.c.l.b16 %v455
        %v744 = vunpack.c.l.b16 %v456
        %v745 = vunpack.c.l.b16 %v457
        %v746 = vunpack.c.l.b16 %v458
        %v747 = vunpack.c.l.b16 %v459
        %v748 = vunpack.c.l.b16 %v460
        %v749 = vunpack.c.l.b16 %v461
        %v750 = vunpack.c.l.b16 %v462
        %v751 = vunpack.c.l.b16 %v463
        %v752 = vunpack.c.l.b16 %v464
        %v753 = vunpack.c.l.b16 %v465
        %v754 = vunpack.c.l.b16 %v466
        %v755 = vunpack.c.l.b16 %v467
        %v756 = vunpack.c.l.b16 %v468
        %v757 = vunpack.c.l.b16 %v469
        %v758 = vunpack.c.l.b16 %v470
        %v759 = vunpack.c.l.b16 %v471
        %v760 = vunpack.c.l.b16 %v472
        %v761 = vunpack.c.l.b16 %v473
        %v762 = vunpack.c.l.b16 %v474
        %v763 = vunpack.c.l.b16 %v475
        %v764 = vunpack.c.l.b16 %v476
        %v765 = vunpack.c.l.b16 %v477
        %v766 = vunpack.c.l.b16 %v478
        %v767 = vunpack.c.l.b16 %v479
        %v768 = vunpack.c.l.b16 %v480
        %v769 = vunpack.c.l.b16 %v481
        %v770 = vunpack.c.l.b16 %v482
        %v771 = vunpack.c.l.b16 %v483
        %v772 = vunpack.c.l.b16 %v484
        %v773 = vunpack.c.l.b16 %v485
        %v774 = vunpack.c.l.b16 %v486
        %v775 = vunpack.c.l.b16 %v487
        %v776 = vunpack.c.l.b16 %v488
        %v777 = vunpack.c.l.b16 %v489
        %v778 = vunpack.c.l.b16 %v490
        %v779 = vunpack.c.l.b16 %v491
        %v780 = vunpack.c.l.b16 %v492
        %v781 = vunpack.c.l.b16 %v493
        %v782 = vunpack.c.l.b16 %v494
        %v783 = vunpack.c.l.b16 %v495
        %v784 = vunpack.c.l.b16 %v496
        %v785 = vunpack.c.l.b16 %v497
        %v786 = vunpack.c.l.b16 %v498
        %v787 = vunpack.c.l.b16 %v499
        %v788 = vunpack.c.l.b16 %v500
        %v789 = vunpack.c.l.b16 %v501
        %v790 = vunpack.c.l.b16 %v502
        %v791 = vunpack.c.l.b16 %v503
        %v792 = vunpack.c.l.b16 %v504
        %v793 = vunpack.c.l.b16 %v505
        %v794 = vunpack.c.l.b16 %v506
        %v795 = vunpack.c.l.b16 %v507
        %v796 = vunpack.c.l.b16 %v508
        %v797 = vunpack.c.l.b16 %v509
        %v798 = vunpack.c.l.b16 %v510
        %v799 = vunpack.c.l.b16 %v511
        %v800 = vunpack.c.l.b16 %v512
        %v801 = vunpack.c.l.b16 %v513
        %v802 = vunpack.c.l.b16 %v514
        %v803 = vpack.c.b16 %v740, %v739
        %v804 = vpack.c.b16 %v742, %v741
        %v805 = vpack.c.b16 %v744, %v743
        %v806 = vpack.c.b16 %v746, %v745
        %v807 = vpack.c.b16 %v748, %v747
        %v808 = vpack.c.b16 %v750, %v749
        %v809 = vpack.c.b16 %v752, %v751
        %v810 = vpack.c.b16 %v754, %v753
        %v811 = vpack.c.b16 %v756, %v755
        %v812 = vpack.c.b16 %v758, %v757
        %v813 = vpack.c.b16 %v760, %v759
        %v814 = vpack.c.b16 %v762, %v761
        %v815 = vpack.c.b16 %v764, %v763
        %v816 = vpack.c.b16 %v766, %v765
        %v817 = vpack.c.b16 %v768, %v767
        %v818 = vpack.c.b16 %v770, %v769
        %v819 = vpack.c.b16 %v772, %v771
        %v820 = vpack.c.b16 %v774, %v773
        %v821 = vpack.c.b16 %v776, %v775
        %v822 = vpack.c.b16 %v778, %v777
        %v823 = vpack.c.b16 %v780, %v779
        %v824 = vpack.c.b16 %v782, %v781
        %v825 = vpack.c.b16 %v784, %v783
        %v826 = vpack.c.b16 %v786, %v785
        %v827 = vpack.c.b16 %v788, %v787
        %v828 = vpack.c.b16 %v790, %v789
        %v829 = vpack.c.b16 %v792, %v791
        %v830 = vpack.c.b16 %v794, %v793
        %v831 = vpack.c.b16 %v796, %v795
        %v832 = vpack.c.b16 %v798, %v797
        %v833 = vpack.c.b16 %v800, %v799
        %v834 = vpack.c.b16 %v802, %v801
        %867 = vmatpush.bf16.msra.mxu0 %v810
        %868 = vmatpush.bf16.msra.mxu0 %v809
        %869 = vmatpush.bf16.msra.mxu0 %v808
        %870 = vmatpush.bf16.msra.mxu0 %v807
        %871 = vmatpush.bf16.msra.mxu0 %v806
        %872 = vmatpush.bf16.msra.mxu0 %v805
        %873 = vmatpush.bf16.msra.mxu0 %v804
        %874 = vmatpush.bf16.msra.mxu0 %v803
        %875 = vmatmul.bf16.gmra.mxu0 %v611
        %v876 = vpop.f32.mrf.mxu0
        %v877 = vadd.f32 0.0, %v876
        %v878 = vpop.f32.mrf.mxu0
        %v879 = vadd.f32 0.0, %v878
        %880 = vmatmul.bf16.gmra.mxu0 %v615
        %v881 = vpop.f32.mrf.mxu0
        %v882 = vadd.f32 0.0, %v881
        %v883 = vpop.f32.mrf.mxu0
        %v884 = vadd.f32 0.0, %v883
        %885 = vmatmul.bf16.gmra.mxu0 %v619
        %v886 = vpop.f32.mrf.mxu0
        %v887 = vadd.f32 0.0, %v886
        %v888 = vpop.f32.mrf.mxu0
        %v889 = vadd.f32 0.0, %v888
        %890 = vmatmul.bf16.gmra.mxu0 %v623
        %v891 = vpop.f32.mrf.mxu0
        %v892 = vadd.f32 0.0, %v891
        %v893 = vpop.f32.mrf.mxu0
        %v894 = vadd.f32 0.0, %v893
        %895 = vmatmul.bf16.gmra.mxu0 %v627
        %v896 = vpop.f32.mrf.mxu0
        %v897 = vadd.f32 0.0, %v896
        %v898 = vpop.f32.mrf.mxu0
        %v899 = vadd.f32 0.0, %v898
        %900 = vmatmul.bf16.gmra.mxu0 %v631
        %v901 = vpop.f32.mrf.mxu0
        %v902 = vadd.f32 0.0, %v901
        %v903 = vpop.f32.mrf.mxu0
        %v904 = vadd.f32 0.0, %v903
        %905 = vmatmul.bf16.gmra.mxu0 %v635
        %v906 = vpop.f32.mrf.mxu0
        %v907 = vadd.f32 0.0, %v906
        %v908 = vpop.f32.mrf.mxu0
        %v909 = vadd.f32 0.0, %v908
        %910 = vmatmul.bf16.gmra.mxu0 %v639
        %v911 = vpop.f32.mrf.mxu0
        %v912 = vadd.f32 0.0, %v911
        %v913 = vpop.f32.mrf.mxu0
        %v914 = vadd.f32 0.0, %v913
        %915 = vdwg.mxu0
        %916 = vmatpush.bf16.msra.mxu0 %v818
        %917 = vmatpush.bf16.msra.mxu0 %v817
        %918 = vmatpush.bf16.msra.mxu0 %v816
        %919 = vmatpush.bf16.msra.mxu0 %v815
        %920 = vmatpush.bf16.msra.mxu0 %v814
        %921 = vmatpush.bf16.msra.mxu0 %v813
        %922 = vmatpush.bf16.msra.mxu0 %v812
        %923 = vmatpush.bf16.msra.mxu0 %v811
        %924 = vmatmul.bf16.gmra.mxu0 %v612
        %v925 = vpop.f32.mrf.mxu0
        %v926 = vadd.f32 %v877, %v925
        %v927 = vpop.f32.mrf.mxu0
        %v928 = vadd.f32 %v879, %v927
        %929 = vmatmul.bf16.gmra.mxu0 %v616
        %v930 = vpop.f32.mrf.mxu0
        %v931 = vadd.f32 %v882, %v930
        %v932 = vpop.f32.mrf.mxu0
        %v933 = vadd.f32 %v884, %v932
        %934 = vmatmul.bf16.gmra.mxu0 %v620
        %v935 = vpop.f32.mrf.mxu0
        %v936 = vadd.f32 %v887, %v935
        %v937 = vpop.f32.mrf.mxu0
        %v938 = vadd.f32 %v889, %v937
        %939 = vmatmul.bf16.gmra.mxu0 %v624
        %v940 = vpop.f32.mrf.mxu0
        %v941 = vadd.f32 %v892, %v940
        %v942 = vpop.f32.mrf.mxu0
        %v943 = vadd.f32 %v894, %v942
        %944 = vmatmul.bf16.gmra.mxu0 %v628
        %v945 = vpop.f32.mrf.mxu0
        %v946 = vadd.f32 %v897, %v945
        %v947 = vpop.f32.mrf.mxu0
        %v948 = vadd.f32 %v899, %v947
        %949 = vmatmul.bf16.gmra.mxu0 %v632
        %v950 = vpop.f32.mrf.mxu0
        %v951 = vadd.f32 %v902, %v950
        %v952 = vpop.f32.mrf.mxu0
        %v953 = vadd.f32 %v904, %v952
        %954 = vmatmul.bf16.gmra.mxu0 %v636
        %v955 = vpop.f32.mrf.mxu0
        %v956 = vadd.f32 %v907, %v955
        %v957 = vpop.f32.mrf.mxu0
        %v958 = vadd.f32 %v909, %v957
        %959 = vmatmul.bf16.gmra.mxu0 %v640
        %v960 = vpop.f32.mrf.mxu0
        %v961 = vadd.f32 %v912, %v960
        %v962 = vpop.f32.mrf.mxu0
        %v963 = vadd.f32 %v914, %v962
        %964 = vdwg.mxu0
        %965 = vmatpush.bf16.msra.mxu0 %v826
        %966 = vmatpush.bf16.msra.mxu0 %v825
        %967 = vmatpush.bf16.msra.mxu0 %v824
        %968 = vmatpush.bf16.msra.mxu0 %v823
        %969 = vmatpush.bf16.msra.mxu0 %v822
        %970 = vmatpush.bf16.msra.mxu0 %v821
        %971 = vmatpush.bf16.msra.mxu0 %v820
        %972 = vmatpush.bf16.msra.mxu0 %v819
        %973 = vmatmul.bf16.gmra.mxu0 %v613
        %v974 = vpop.f32.mrf.mxu0
        %v975 = vadd.f32 %v926, %v974
        %v976 = vpop.f32.mrf.mxu0
        %v977 = vadd.f32 %v928, %v976
        %978 = vmatmul.bf16.gmra.mxu0 %v617
        %v979 = vpop.f32.mrf.mxu0
        %v980 = vadd.f32 %v931, %v979
        %v981 = vpop.f32.mrf.mxu0
        %v982 = vadd.f32 %v933, %v981
        %983 = vmatmul.bf16.gmra.mxu0 %v621
        %v984 = vpop.f32.mrf.mxu0
        %v985 = vadd.f32 %v936, %v984
        %v986 = vpop.f32.mrf.mxu0
        %v987 = vadd.f32 %v938, %v986
        %988 = vmatmul.bf16.gmra.mxu0 %v625
        %v989 = vpop.f32.mrf.mxu0
        %v990 = vadd.f32 %v941, %v989
        %v991 = vpop.f32.mrf.mxu0
        %v992 = vadd.f32 %v943, %v991
        %993 = vmatmul.bf16.gmra.mxu0 %v629
        %v994 = vpop.f32.mrf.mxu0
        %v995 = vadd.f32 %v946, %v994
        %v996 = vpop.f32.mrf.mxu0
        %v997 = vadd.f32 %v948, %v996
        %998 = vmatmul.bf16.gmra.mxu0 %v633
        %v999 = vpop.f32.mrf.mxu0
        %v1000 = vadd.f32 %v951, %v999
        %v1001 = vpop.f32.mrf.mxu0
        %v1002 = vadd.f32 %v953, %v1001
        %1003 = vmatmul.bf16.gmra.mxu0 %v637
        %v1004 = vpop.f32.mrf.mxu0
        %v1005 = vadd.f32 %v956, %v1004
        %v1006 = vpop.f32.mrf.mxu0
        %v1007 = vadd.f32 %v958, %v1006
        %1008 = vmatmul.bf16.gmra.mxu0 %v641
        %v1009 = vpop.f32.mrf.mxu0
        %v1010 = vadd.f32 %v961, %v1009
        %v1011 = vpop.f32.mrf.mxu0
        %v1012 = vadd.f32 %v963, %v1011
        %1013 = vdwg.mxu0
        %1014 = vmatpush.bf16.msra.mxu0 %v834
        %1015 = vmatpush.bf16.msra.mxu0 %v833
        %1016 = vmatpush.bf16.msra.mxu0 %v832
        %1017 = vmatpush.bf16.msra.mxu0 %v831
        %1018 = vmatpush.bf16.msra.mxu0 %v830
        %1019 = vmatpush.bf16.msra.mxu0 %v829
        %1020 = vmatpush.bf16.msra.mxu0 %v828
        %1021 = vmatpush.bf16.msra.mxu0 %v827
        %1022 = vmatmul.bf16.gmra.mxu0 %v614
        %v1023 = vpop.f32.mrf.mxu0
        %v1024 = vadd.f32 %v975, %v1023
        %v1025 = vpop.f32.mrf.mxu0
        %v1026 = vadd.f32 %v977, %v1025
        %1027 = vmatmul.bf16.gmra.mxu0 %v618
        %v1028 = vpop.f32.mrf.mxu0
        %v1029 = vadd.f32 %v980, %v1028
        %v1030 = vpop.f32.mrf.mxu0
        %v1031 = vadd.f32 %v982, %v1030
        %1032 = vmatmul.bf16.gmra.mxu0 %v622
        %v1033 = vpop.f32.mrf.mxu0
        %v1034 = vadd.f32 %v985, %v1033
        %v1035 = vpop.f32.mrf.mxu0
        %v1036 = vadd.f32 %v987, %v1035
        %1037 = vmatmul.bf16.gmra.mxu0 %v626
        %v1038 = vpop.f32.mrf.mxu0
        %v1039 = vadd.f32 %v990, %v1038
        %v1040 = vpop.f32.mrf.mxu0
        %v1041 = vadd.f32 %v992, %v1040
        %1042 = vmatmul.bf16.gmra.mxu0 %v630
        %v1043 = vpop.f32.mrf.mxu0
        %v1044 = vadd.f32 %v995, %v1043
        %v1045 = vpop.f32.mrf.mxu0
        %v1046 = vadd.f32 %v997, %v1045
        %1047 = vmatmul.bf16.gmra.mxu0 %v634
        %v1048 = vpop.f32.mrf.mxu0
        %v1049 = vadd.f32 %v1000, %v1048
        %v1050 = vpop.f32.mrf.mxu0
        %v1051 = vadd.f32 %v1002, %v1050
        %1052 = vmatmul.bf16.gmra.mxu0 %v638
        %v1053 = vpop.f32.mrf.mxu0
        %v1054 = vadd.f32 %v1005, %v1053
        %v1055 = vpop.f32.mrf.mxu0
        %v1056 = vadd.f32 %v1007, %v1055
        %1057 = vmatmul.bf16.gmra.mxu0 %v642
        %v1058 = vpop.f32.mrf.mxu0
        %v1059 = vadd.f32 %v1010, %v1058
        %v1060 = vpop.f32.mrf.mxu0
        %v1061 = vadd.f32 %v1012, %v1060
        %1062 = vdwg.mxu0
        %v1063 = vadd.f32 %v403, %v1024
        %v1064 = vadd.f32 %v404, %v1026
        %v1065 = vadd.f32 %v405, %v1029
        %v1066 = vadd.f32 %v406, %v1031
        %v1067 = vadd.f32 %v407, %v1034
        %v1068 = vadd.f32 %v408, %v1036
        %v1069 = vadd.f32 %v409, %v1039
        %v1070 = vadd.f32 %v410, %v1041
        %v1071 = vadd.f32 %v411, %v1044
        %v1072 = vadd.f32 %v412, %v1046
        %v1073 = vadd.f32 %v413, %v1049
        %v1074 = vadd.f32 %v414, %v1051
        %v1075 = vadd.f32 %v415, %v1054
        %v1076 = vadd.f32 %v416, %v1056
        %v1077 = vadd.f32 %v417, %v1059
        %v1078 = vadd.f32 %v418, %v1061
        %1079 = vst [vmem:[#allocation2] sm:$0xff] %v1063
        %1080 = vst [vmem:[#allocation2 + $0x8] sm:$0xff] %v1064
        %1081 = vst [vmem:[#allocation2 + $0x10] sm:$0xff] %v1065
        %1082 = vst [vmem:[#allocation2 + $0x18] sm:$0xff] %v1066
        %1083 = vst [vmem:[#allocation2 + $0x20] sm:$0xff] %v1067
        %1084 = vst [vmem:[#allocation2 + $0x28] sm:$0xff] %v1068
        %1085 = vst [vmem:[#allocation2 + $0x30] sm:$0xff] %v1069
        %1086 = vst [vmem:[#allocation2 + $0x38] sm:$0xff] %v1070
        %1087 = vst [vmem:[#allocation2 + $0x40] sm:$0xff] %v1071
        %1088 = vst [vmem:[#allocation2 + $0x48] sm:$0xff] %v1072
        %1089 = vst [vmem:[#allocation2 + $0x50] sm:$0xff] %v1073
        %1090 = vst [vmem:[#allocation2 + $0x58] sm:$0xff] %v1074
        %1091 = vst [vmem:[#allocation2 + $0x60] sm:$0xff] %v1075
        %1092 = vst [vmem:[#allocation2 + $0x68] sm:$0xff] %v1076
        %1093 = vst [vmem:[#allocation2 + $0x70] sm:$0xff] %v1077
        %1094 = vst [vmem:[#allocation2 + $0x78] sm:$0xff] %v1078
        %p1095 = scmp.eq.s32.totalorder %s24, 1
        // Predicated region
        $region56: #{dcgan_generator_forward.13} parent=46 // pred_check
          %p1096 = pneg %p1095
        $region57: #{dcgan_generator_forward.13} parent=46 // pred_check_branch
          %1098 = sbr.rel (%p1096) target = $region59
        $region58: #{dcgan_generator_forward.13} parent=46 // pred_region
          %v1099 = vld [vmem:[#allocation2] sm:$0xff]
          %v1100 = vld [vmem:[#allocation2 + $0x8] sm:$0xff]
          %v1101 = vld [vmem:[#allocation2 + $0x10] sm:$0xff]
          %v1102 = vld [vmem:[#allocation2 + $0x18] sm:$0xff]
          %v1103 = vld [vmem:[#allocation2 + $0x20] sm:$0xff]
          %v1104 = vld [vmem:[#allocation2 + $0x28] sm:$0xff]
          %v1105 = vld [vmem:[#allocation2 + $0x30] sm:$0xff]
          %v1106 = vld [vmem:[#allocation2 + $0x38] sm:$0xff]
          %v1107 = vld [vmem:[#allocation2 + $0x40] sm:$0xff]
          %v1108 = vld [vmem:[#allocation2 + $0x48] sm:$0xff]
          %v1109 = vld [vmem:[#allocation2 + $0x50] sm:$0xff]
          %v1110 = vld [vmem:[#allocation2 + $0x58] sm:$0xff]
          %v1111 = vld [vmem:[#allocation2 + $0x60] sm:$0xff]
          %v1112 = vld [vmem:[#allocation2 + $0x68] sm:$0xff]
          %v1113 = vld [vmem:[#allocation2 + $0x70] sm:$0xff]
          %v1114 = vld [vmem:[#allocation2 + $0x78] sm:$0xff]
          %v1115 = vpack.c.bf16 %v1099, %v1099
          %v1116 = vpack.c.bf16 %v1100, %v1100
          %v1117 = vpack.c.bf16 %v1101, %v1101
          %v1118 = vpack.c.bf16 %v1102, %v1102
          %v1119 = vpack.c.bf16 %v1103, %v1103
          %v1120 = vpack.c.bf16 %v1104, %v1104
          %v1121 = vpack.c.bf16 %v1105, %v1105
          %v1122 = vpack.c.bf16 %v1106, %v1106
          %v1123 = vpack.c.bf16 %v1107, %v1107
          %v1124 = vpack.c.bf16 %v1108, %v1108
          %v1125 = vpack.c.bf16 %v1109, %v1109
          %v1126 = vpack.c.bf16 %v1110, %v1110
          %v1127 = vpack.c.bf16 %v1111, %v1111
          %v1128 = vpack.c.bf16 %v1112, %v1112
          %v1129 = vpack.c.bf16 %v1113, %v1113
          %v1130 = vpack.c.bf16 %v1114, %v1114
          %1131 = vst [vmem:[%s371] sm:$0xf] %v1115
          %1132 = vst [vmem:[%s371 + $0x4] sm:$0xf] %v1116
          %1133 = vst [vmem:[%s371 + $0x8] sm:$0xf] %v1117
          %1134 = vst [vmem:[%s371 + $0xc] sm:$0xf] %v1118
          %1135 = vst [vmem:[%s371 + $0x10] sm:$0xf] %v1119
          %1136 = vst [vmem:[%s371 + $0x14] sm:$0xf] %v1120
          %1137 = vst [vmem:[%s371 + $0x18] sm:$0xf] %v1121
          %1138 = vst [vmem:[%s371 + $0x1c] sm:$0xf] %v1122
          %1139 = vst [vmem:[%s371 + $0x20] sm:$0xf] %v1123
          %1140 = vst [vmem:[%s371 + $0x24] sm:$0xf] %v1124
          %1141 = vst [vmem:[%s371 + $0x28] sm:$0xf] %v1125
          %1142 = vst [vmem:[%s371 + $0x2c] sm:$0xf] %v1126
          %1143 = vst [vmem:[%s371 + $0x30] sm:$0xf] %v1127
          %1144 = vst [vmem:[%s371 + $0x34] sm:$0xf] %v1128
          %1145 = vst [vmem:[%s371 + $0x38] sm:$0xf] %v1129
          %1146 = vst [vmem:[%s371 + $0x3c] sm:$0xf] %v1130
          %v1147 = vadd.f32 %v1099, %v1100
          %v1148 = vadd.f32 %v1147, %v1101
          %v1149 = vadd.f32 %v1148, %v1102
          %v1150 = vadd.f32 %v1149, %v1103
          %v1151 = vadd.f32 %v1150, %v1104
          %v1152 = vadd.f32 %v1151, %v1105
          %v1153 = vadd.f32 %v1152, %v1106
          %v1154 = vadd.f32 %v1153, %v1107
          %v1155 = vadd.f32 %v1154, %v1108
          %v1156 = vadd.f32 %v1155, %v1109
          %v1157 = vadd.f32 %v1156, %v1110
          %v1158 = vadd.f32 %v1157, %v1111
          %v1159 = vadd.f32 %v1158, %v1112
          %v1160 = vadd.f32 %v1159, %v1113
          %v1161 = vadd.f32 %v1160, %v1114
          %v1162 = vrot.slane %v1161, 4
          %v1163 = vadd.f32 %v1161, %v1162
          %v1164 = vrot.slane %v1163, 2
          %v1165 = vadd.f32 %v1163, %v1164
          %v1166 = vrot.slane %v1165, 1
          %v1167 = vadd.f32 %v1165, %v1166
          %v1168 = vmul.f32 %v1099, %v1099
          %v1169 = vmul.f32 %v1100, %v1100
          %v1170 = vmul.f32 %v1101, %v1101
          %v1171 = vmul.f32 %v1102, %v1102
          %v1172 = vmul.f32 %v1103, %v1103
          %v1173 = vmul.f32 %v1104, %v1104
          %v1174 = vmul.f32 %v1105, %v1105
          %v1175 = vmul.f32 %v1106, %v1106
          %v1176 = vmul.f32 %v1107, %v1107
          %v1177 = vmul.f32 %v1108, %v1108
          %v1178 = vmul.f32 %v1109, %v1109
          %v1179 = vmul.f32 %v1110, %v1110
          %v1180 = vmul.f32 %v1111, %v1111
          %v1181 = vmul.f32 %v1112, %v1112
          %v1182 = vmul.f32 %v1113, %v1113
          %v1183 = vmul.f32 %v1114, %v1114
          %v1184 = vadd.f32 %v1168, %v1169
          %v1185 = vadd.f32 %v1184, %v1170
          %v1186 = vadd.f32 %v1185, %v1171
          %v1187 = vadd.f32 %v1186, %v1172
          %v1188 = vadd.f32 %v1187, %v1173
          %v1189 = vadd.f32 %v1188, %v1174
          %v1190 = vadd.f32 %v1189, %v1175
          %v1191 = vadd.f32 %v1190, %v1176
          %v1192 = vadd.f32 %v1191, %v1177
          %v1193 = vadd.f32 %v1192, %v1178
          %v1194 = vadd.f32 %v1193, %v1179
          %v1195 = vadd.f32 %v1194, %v1180
          %v1196 = vadd.f32 %v1195, %v1181
          %v1197 = vadd.f32 %v1196, %v1182
          %v1198 = vadd.f32 %v1197, %v1183
          %v1199 = vrot.slane %v1198, 4
          %v1200 = vadd.f32 %v1198, %v1199
          %v1201 = vrot.slane %v1200, 2
          %v1202 = vadd.f32 %v1200, %v1201
          %v1203 = vrot.slane %v1202, 1
          %v1204 = vadd.f32 %v1202, %v1203
          %vm1205 = vcmask 1040384
          %v1206 = vsel %vm1205, %v1167, %v1204
          %vm1207 = vcmask 1041408
          %v1208 = vsel %vm1207, %v1206, 0.0
          %1209 = vst [vmem:[%s382] sm:$0xff] %v1208
        $region59: #{dcgan_generator_forward.13} parent=46 // pred_fallthru
          _
        %s1210 = smul.u32 16, %s22
        %p1211 = scmp.lt.s32.totalorder %s21, 3
        %s1212 = scalar_select %p1211, %s21, 3
        %p1213 = scmp.lt.s32.totalorder %s1210, 15
        %s1214 = scalar_select %p1213, %s1210, 15
        %p1215 = scmp.lt.s32.totalorder %s23, 0
        %s1216 = scalar_select %p1215, %s23, 0
        %s1217 = sadd.s32 %s1216, %s1214
        %s1218 = smul.addr %s1212, 16
        %s1219 = sadd.s32 %s1217, %s1218
        %s1220 = smul.addr %s1219, 4
        %s1221 = scalar_lea.vmem %s2, %s1220
        %p1222 = scmp.lt.s32.totalorder %s21, 3
        %s1223 = scalar_select %p1222, %s21, 3
        %p1224 = scmp.lt.s32.totalorder %s22, 0
        %s1225 = scalar_select %p1224, %s22, 0
        %p1226 = scmp.lt.s32.totalorder %s23, 0
        %s1227 = scalar_select %p1226, %s23, 0
        %s1228 = sadd.s32 %s1227, %s1225
        %s1229 = sadd.s32 %s1228, %s1223
        %s1230 = smul.addr %s1229, 8
        %s1231 = scalar_lea.vmem %s3, %s1230
        // Predicated region
        $region60: #{dcgan_generator_forward.13} parent=46 // pred_check
          %p1232 = pneg %p123
        $region61: #{dcgan_generator_forward.13} parent=46 // pred_check_branch
          %1234 = sbr.rel (%p1232) target = $region63
        $region62: #{dcgan_generator_forward.13} parent=46 // pred_region
          %s1235 = smul.u32 16, %s22
        $region63: #{dcgan_generator_forward.13} parent=46 // pred_fallthru
          _
        // Predicated region
        $region64: #{dcgan_generator_forward.13} parent=46 // pred_check
          %p1236 = pneg %p153
        $region65: #{dcgan_generator_forward.13} parent=46 // pred_check_branch
          %1238 = sbr.rel (%p1236) target = $region67
        $region66: #{dcgan_generator_forward.13} parent=46 // pred_region
          _
        $region67: #{dcgan_generator_forward.13} parent=46 // pred_fallthru
          _
      $region47: #{dcgan_generator_forward.13} parent=5 // pred_fallthru
        _
      %p1239 = scmp.le.s32.totalorder 2, %s10
      // Predicated region
      $region68: #{dcgan_generator_forward.13} parent=5 // pred_check
        %p1240 = pneg %p1239
      $region69: #{dcgan_generator_forward.13} parent=5 // pred_check_branch
        %1242 = sbr.rel (%p1240) target = $region71
      $region70: #{dcgan_generator_forward.13} parent=5 // pred_region
        %s1243 = ssub.s32 %s10, 2
        // Predicated region
        $region72: #{dcgan_generator_forward.13} parent=70 // pred_check
          %p1244 = pneg %p129
        $region73: #{dcgan_generator_forward.13} parent=70 // pred_check_branch
          %1246 = sbr.rel (%p1244) target = $region75
        $region74: #{dcgan_generator_forward.13} parent=70 // pred_region
          %s1247 = smul.u32 16, %s26
          %p1248 = scmp.lt.s32.totalorder %s25, 3
          %s1249 = scalar_select %p1248, %s25, 3
          %p1250 = scmp.lt.s32.totalorder %s1247, 15
          %s1251 = scalar_select %p1250, %s1247, 15
          %p1252 = scmp.lt.s32.totalorder %s27, 0
          %s1253 = scalar_select %p1252, %s27, 0
          %s1254 = sadd.s32 %s1253, %s1251
          %s1255 = smul.addr %s1249, 16
          %s1256 = sadd.s32 %s1254, %s1255
          %s1257 = smul.addr %s1256, 4
          %s1258 = scalar_lea.vmem %s2, %s1257
        $region75: #{dcgan_generator_forward.13} parent=70 // pred_fallthru
          _
        // Predicated region
        $region76: #{dcgan_generator_forward.13} parent=70 // pred_check
          %p1259 = pneg %p159
        $region77: #{dcgan_generator_forward.13} parent=70 // pred_check_branch
          %1261 = sbr.rel (%p1259) target = $region79
        $region78: #{dcgan_generator_forward.13} parent=70 // pred_region
          %p1262 = scmp.lt.s32.totalorder %s25, 3
          %s1263 = scalar_select %p1262, %s25, 3
          %p1264 = scmp.lt.s32.totalorder %s26, 0
          %s1265 = scalar_select %p1264, %s26, 0
          %p1266 = scmp.lt.s32.totalorder %s27, 0
          %s1267 = scalar_select %p1266, %s27, 0
          %s1268 = sadd.s32 %s1267, %s1265
          %s1269 = sadd.s32 %s1268, %s1263
          %s1270 = smul.addr %s1269, 8
          %s1271 = scalar_lea.vmem %s3, %s1270
        $region79: #{dcgan_generator_forward.13} parent=70 // pred_fallthru
          _
      $region71: #{dcgan_generator_forward.13} parent=5 // pred_fallthru
        _
    $region6: #{dcgan_generator_forward.13} parent=1 // loop_footer
      %s14 = sadd.s32 1, %s10
    $region7: #{dcgan_generator_forward.13} parent=1 // loop_footer_branch
      %9 = sbr.rel target = $region3
    $region8: #{dcgan_generator_forward.13} parent=1 // loop_exit
      _

// kernel: dcgan_generator_forward.14
$region0: #{dcgan_generator_forward.14}
  #allocation0 [shape = 'u32[]', space=smem, size = 0x4, offset = 0x4, fixed_abs, tag = 'smem constant byte address 0x4 - core index']
  #allocation1 [shape = 'u32[72,128]{1,0:T(1,128)}', space=vmem, size = 0x9000, scoped, tag = 'internal scratch']
  %s0 = inlined_call_operand.vmem [shape: bf16[512,128], index: 0, kind: input, shape index: {}]
  %s1 = inlined_call_operand.vmem [shape: f32[1,128], index: 1, kind: input, shape index: {}]
  %s2 = inlined_call_operand.vmem [shape: f32[1,128], index: 2, kind: input, shape index: {}]
  %s3 = inlined_call_operand.vmem [shape: bf16[512,128], index: 3, kind: output, shape index: {}]
  %s4 = sld [smem:[#allocation0]]
  $region22: #{dcgan_generator_forward.14} parent=0
    _
  %s6 = ssub.s32 1, %s4
  %s7 = scalar_select 0, %s6, %s4
  // Predicated region
  $region2: #{dcgan_generator_forward.14} parent=0 // pred_check
    _
  $region3: #{dcgan_generator_forward.14} parent=0 // pred_check_branch
    %9 = sbr.rel (0) target = $region5
  $region4: #{dcgan_generator_forward.14} parent=0 // pred_region
    _
  $region5: #{dcgan_generator_forward.14} parent=0 // pred_fallthru
    _
  // Predicated region
  $region6: #{dcgan_generator_forward.14} parent=0 // pred_check
    _
  $region7: #{dcgan_generator_forward.14} parent=0 // pred_check_branch
    %11 = sbr.rel (0) target = $region9
  $region8: #{dcgan_generator_forward.14} parent=0 // pred_region
    _
  $region9: #{dcgan_generator_forward.14} parent=0 // pred_fallthru
    _
  // Predicated region
  $region10: #{dcgan_generator_forward.14} parent=0 // pred_check
    _
  $region11: #{dcgan_generator_forward.14} parent=0 // pred_check_branch
    %13 = sbr.rel (0) target = $region13
  $region12: #{dcgan_generator_forward.14} parent=0 // pred_region
    _
  $region13: #{dcgan_generator_forward.14} parent=0 // pred_fallthru
    _
  %v14 = vld [vmem:[%s0] sm:$0xf]
  %v15 = vld [vmem:[%s0 + $0x4] sm:$0xf]
  %v16 = vld [vmem:[%s0 + $0x8] sm:$0xf]
  %v17 = vld [vmem:[%s0 + $0xc] sm:$0xf]
  %v18 = vld [vmem:[%s0 + $0x10] sm:$0xf]
  %v19 = vld [vmem:[%s0 + $0x14] sm:$0xf]
  %v20 = vld [vmem:[%s0 + $0x18] sm:$0xf]
  %v21 = vld [vmem:[%s0 + $0x1c] sm:$0xf]
  %v22 = vld [vmem:[%s0 + $0x20] sm:$0xf]
  %v23 = vld [vmem:[%s0 + $0x24] sm:$0xf]
  %v24 = vld [vmem:[%s0 + $0x28] sm:$0xf]
  %v25 = vld [vmem:[%s0 + $0x2c] sm:$0xf]
  %v26 = vld [vmem:[%s0 + $0x30] sm:$0xf]
  %v27 = vld [vmem:[%s0 + $0x34] sm:$0xf]
  %v28 = vld [vmem:[%s0 + $0x38] sm:$0xf]
  %v29 = vld [vmem:[%s0 + $0x3c] sm:$0xf]
  %v30 = vld [vmem:[%s0 + $0x40] sm:$0xf]
  %v31 = vld [vmem:[%s0 + $0x44] sm:$0xf]
  %v32 = vld [vmem:[%s0 + $0x48] sm:$0xf]
  %v33 = vld [vmem:[%s0 + $0x4c] sm:$0xf]
  %v34 = vld [vmem:[%s0 + $0x50] sm:$0xf]
  %v35 = vld [vmem:[%s0 + $0x54] sm:$0xf]
  %v36 = vld [vmem:[%s0 + $0x58] sm:$0xf]
  %v37 = vld [vmem:[%s0 + $0x5c] sm:$0xf]
  %v38 = vld [vmem:[%s0 + $0x60] sm:$0xf]
  %v39 = vld [vmem:[%s0 + $0x64] sm:$0xf]
  %v40 = vld [vmem:[%s0 + $0x68] sm:$0xf]
  %v41 = vld [vmem:[%s0 + $0x6c] sm:$0xf]
  %v42 = vld [vmem:[%s0 + $0x70] sm:$0xf]
  %v43 = vld [vmem:[%s0 + $0x74] sm:$0xf]
  %v44 = vld [vmem:[%s0 + $0x78] sm:$0xf]
  %v45 = vld [vmem:[%s0 + $0x7c] sm:$0xf]
  %v46 = vld [vmem:[%s0 + $0x80] sm:$0xf]
  %v47 = vld [vmem:[%s0 + $0x84] sm:$0xf]
  %v48 = vld [vmem:[%s0 + $0x88] sm:$0xf]
  %v49 = vld [vmem:[%s0 + $0x8c] sm:$0xf]
  %v50 = vld [vmem:[%s0 + $0x90] sm:$0xf]
  %v51 = vld [vmem:[%s0 + $0x94] sm:$0xf]
  %v52 = vld [vmem:[%s0 + $0x98] sm:$0xf]
  %v53 = vld [vmem:[%s0 + $0x9c] sm:$0xf]
  %v54 = vld [vmem:[%s0 + $0xa0] sm:$0xf]
  %v55 = vld [vmem:[%s0 + $0xa4] sm:$0xf]
  %v56 = vld [vmem:[%s0 + $0xa8] sm:$0xf]
  %v57 = vld [vmem:[%s0 + $0xac] sm:$0xf]
  %v58 = vld [vmem:[%s0 + $0xb0] sm:$0xf]
  %v59 = vld [vmem:[%s0 + $0xb4] sm:$0xf]
  %v60 = vld [vmem:[%s0 + $0xb8] sm:$0xf]
  %v61 = vld [vmem:[%s0 + $0xbc] sm:$0xf]
  %v62 = vld [vmem:[%s0 + $0xc0] sm:$0xf]
  %v63 = vld [vmem:[%s0 + $0xc4] sm:$0xf]
  %v64 = vld [vmem:[%s0 + $0xc8] sm:$0xf]
  %v65 = vld [vmem:[%s0 + $0xcc] sm:$0xf]
  %v66 = vld [vmem:[%s0 + $0xd0] sm:$0xf]
  %v67 = vld [vmem:[%s0 + $0xd4] sm:$0xf]
  %v68 = vld [vmem:[%s0 + $0xd8] sm:$0xf]
  %v69 = vld [vmem:[%s0 + $0xdc] sm:$0xf]
  %v70 = vld [vmem:[%s0 + $0xe0] sm:$0xf]
  %v71 = vld [vmem:[%s0 + $0xe4] sm:$0xf]
  %v72 = vld [vmem:[%s0 + $0xe8] sm:$0xf]
  %v73 = vld [vmem:[%s0 + $0xec] sm:$0xf]
  %v74 = vld [vmem:[%s0 + $0xf0] sm:$0xf]
  %v75 = vld [vmem:[%s0 + $0xf4] sm:$0xf]
  %v76 = vld [vmem:[%s0 + $0xf8] sm:$0xf]
  %v77 = vld [vmem:[%s0 + $0xfc] sm:$0xf]
  %v78 = vunpack.c.l.bf16 %v14
  %v79 = vunpack.c.l.bf16 %v15
  %v80 = vunpack.c.l.bf16 %v16
  %v81 = vunpack.c.l.bf16 %v17
  %v82 = vunpack.c.l.bf16 %v18
  %v83 = vunpack.c.l.bf16 %v19
  %v84 = vunpack.c.l.bf16 %v20
  %v85 = vunpack.c.l.bf16 %v21
  %v86 = vunpack.c.l.bf16 %v22
  %v87 = vunpack.c.l.bf16 %v23
  %v88 = vunpack.c.l.bf16 %v24
  %v89 = vunpack.c.l.bf16 %v25
  %v90 = vunpack.c.l.bf16 %v26
  %v91 = vunpack.c.l.bf16 %v27
  %v92 = vunpack.c.l.bf16 %v28
  %v93 = vunpack.c.l.bf16 %v29
  %v94 = vunpack.c.l.bf16 %v30
  %v95 = vunpack.c.l.bf16 %v31
  %v96 = vunpack.c.l.bf16 %v32
  %v97 = vunpack.c.l.bf16 %v33
  %v98 = vunpack.c.l.bf16 %v34
  %v99 = vunpack.c.l.bf16 %v35
  %v100 = vunpack.c.l.bf16 %v36
  %v101 = vunpack.c.l.bf16 %v37
  %v102 = vunpack.c.l.bf16 %v38
  %v103 = vunpack.c.l.bf16 %v39
  %v104 = vunpack.c.l.bf16 %v40
  %v105 = vunpack.c.l.bf16 %v41
  %v106 = vunpack.c.l.bf16 %v42
  %v107 = vunpack.c.l.bf16 %v43
  %v108 = vunpack.c.l.bf16 %v44
  %v109 = vunpack.c.l.bf16 %v45
  %v110 = vunpack.c.l.bf16 %v46
  %v111 = vunpack.c.l.bf16 %v47
  %v112 = vunpack.c.l.bf16 %v48
  %v113 = vunpack.c.l.bf16 %v49
  %v114 = vunpack.c.l.bf16 %v50
  %v115 = vunpack.c.l.bf16 %v51
  %v116 = vunpack.c.l.bf16 %v52
  %v117 = vunpack.c.l.bf16 %v53
  %v118 = vunpack.c.l.bf16 %v54
  %v119 = vunpack.c.l.bf16 %v55
  %v120 = vunpack.c.l.bf16 %v56
  %v121 = vunpack.c.l.bf16 %v57
  %v122 = vunpack.c.l.bf16 %v58
  %v123 = vunpack.c.l.bf16 %v59
  %v124 = vunpack.c.l.bf16 %v60
  %v125 = vunpack.c.l.bf16 %v61
  %v126 = vunpack.c.l.bf16 %v62
  %v127 = vunpack.c.l.bf16 %v63
  %v128 = vunpack.c.l.bf16 %v64
  %v129 = vunpack.c.l.bf16 %v65
  %v130 = vunpack.c.l.bf16 %v66
  %v131 = vunpack.c.l.bf16 %v67
  %v132 = vunpack.c.l.bf16 %v68
  %v133 = vunpack.c.l.bf16 %v69
  %v134 = vunpack.c.l.bf16 %v70
  %v135 = vunpack.c.l.bf16 %v71
  %v136 = vunpack.c.l.bf16 %v72
  %v137 = vunpack.c.l.bf16 %v73
  %v138 = vunpack.c.l.bf16 %v74
  %v139 = vunpack.c.l.bf16 %v75
  %v140 = vunpack.c.l.bf16 %v76
  %v141 = vunpack.c.l.bf16 %v77
  %v142 = vld [vmem:[%s1] sm:$0x1]
  %v144 = vperm.slane %v142, 0
  %v146 = vmul.f32 %v78, %v144
  %v147 = vmul.f32 %v79, %v144
  %v148 = vmul.f32 %v80, %v144
  %v149 = vmul.f32 %v81, %v144
  %v150 = vmul.f32 %v82, %v144
  %v151 = vmul.f32 %v83, %v144
  %v152 = vmul.f32 %v84, %v144
  %v153 = vmul.f32 %v85, %v144
  %v154 = vmul.f32 %v86, %v144
  %v155 = vmul.f32 %v87, %v144
  %v156 = vmul.f32 %v88, %v144
  %v157 = vmul.f32 %v89, %v144
  %v158 = vmul.f32 %v90, %v144
  %v159 = vmul.f32 %v91, %v144
  %v160 = vmul.f32 %v92, %v144
  %v161 = vmul.f32 %v93, %v144
  %v162 = vmul.f32 %v94, %v144
  %v163 = vmul.f32 %v95, %v144
  %v164 = vmul.f32 %v96, %v144
  %v165 = vmul.f32 %v97, %v144
  %v166 = vmul.f32 %v98, %v144
  %v167 = vmul.f32 %v99, %v144
  %v168 = vmul.f32 %v100, %v144
  %v169 = vmul.f32 %v101, %v144
  %v170 = vmul.f32 %v102, %v144
  %v171 = vmul.f32 %v103, %v144
  %v172 = vmul.f32 %v104, %v144
  %v173 = vmul.f32 %v105, %v144
  %v174 = vmul.f32 %v106, %v144
  %v175 = vmul.f32 %v107, %v144
  %v176 = vmul.f32 %v108, %v144
  %v177 = vmul.f32 %v109, %v144
  %v178 = vmul.f32 %v110, %v144
  %v179 = vmul.f32 %v111, %v144
  %v180 = vmul.f32 %v112, %v144
  %v181 = vmul.f32 %v113, %v144
  %v182 = vmul.f32 %v114, %v144
  %v183 = vmul.f32 %v115, %v144
  %v184 = vmul.f32 %v116, %v144
  %v185 = vmul.f32 %v117, %v144
  %v186 = vmul.f32 %v118, %v144
  %v187 = vmul.f32 %v119, %v144
  %v188 = vmul.f32 %v120, %v144
  %v189 = vmul.f32 %v121, %v144
  %v190 = vmul.f32 %v122, %v144
  %v191 = vmul.f32 %v123, %v144
  %v192 = vmul.f32 %v124, %v144
  %v193 = vmul.f32 %v125, %v144
  %v194 = vmul.f32 %v126, %v144
  %v195 = vmul.f32 %v127, %v144
  %v196 = vmul.f32 %v128, %v144
  %v197 = vmul.f32 %v129, %v144
  %v198 = vmul.f32 %v130, %v144
  %v199 = vmul.f32 %v131, %v144
  %v200 = vmul.f32 %v132, %v144
  %v201 = vmul.f32 %v133, %v144
  %v202 = vmul.f32 %v134, %v144
  %v203 = vmul.f32 %v135, %v144
  %v204 = vmul.f32 %v136, %v144
  %v205 = vmul.f32 %v137, %v144
  %v206 = vmul.f32 %v138, %v144
  %v207 = vmul.f32 %v139, %v144
  %v208 = vmul.f32 %v140, %v144
  %v209 = vmul.f32 %v141, %v144
  %v210 = vld [vmem:[%s2] sm:$0x1]
  %v212 = vperm.slane %v210, 0
  %v214 = vadd.f32 %v146, %v212
  %v215 = vadd.f32 %v147, %v212
  %v216 = vadd.f32 %v148, %v212
  %v217 = vadd.f32 %v149, %v212
  %v218 = vadd.f32 %v150, %v212
  %v219 = vadd.f32 %v151, %v212
  %v220 = vadd.f32 %v152, %v212
  %v221 = vadd.f32 %v153, %v212
  %v222 = vadd.f32 %v154, %v212
  %v223 = vadd.f32 %v155, %v212
  %v224 = vadd.f32 %v156, %v212
  %v225 = vadd.f32 %v157, %v212
  %v226 = vadd.f32 %v158, %v212
  %v227 = vadd.f32 %v159, %v212
  %v228 = vadd.f32 %v160, %v212
  %v229 = vadd.f32 %v161, %v212
  %v230 = vadd.f32 %v162, %v212
  %v231 = vadd.f32 %v163, %v212
  %v232 = vadd.f32 %v164, %v212
  %v233 = vadd.f32 %v165, %v212
  %v234 = vadd.f32 %v166, %v212
  %v235 = vadd.f32 %v167, %v212
  %v236 = vadd.f32 %v168, %v212
  %v237 = vadd.f32 %v169, %v212
  %v238 = vadd.f32 %v170, %v212
  %v239 = vadd.f32 %v171, %v212
  %v240 = vadd.f32 %v172, %v212
  %v241 = vadd.f32 %v173, %v212
  %v242 = vadd.f32 %v174, %v212
  %v243 = vadd.f32 %v175, %v212
  %v244 = vadd.f32 %v176, %v212
  %v245 = vadd.f32 %v177, %v212
  %v246 = vadd.f32 %v178, %v212
  %v247 = vadd.f32 %v179, %v212
  %v248 = vadd.f32 %v180, %v212
  %v249 = vadd.f32 %v181, %v212
  %v250 = vadd.f32 %v182, %v212
  %v251 = vadd.f32 %v183, %v212
  %v252 = vadd.f32 %v184, %v212
  %v253 = vadd.f32 %v185, %v212
  %v254 = vadd.f32 %v186, %v212
  %v255 = vadd.f32 %v187, %v212
  %v256 = vadd.f32 %v188, %v212
  %v257 = vadd.f32 %v189, %v212
  %v258 = vadd.f32 %v190, %v212
  %v259 = vadd.f32 %v191, %v212
  %v260 = vadd.f32 %v192, %v212
  %v261 = vadd.f32 %v193, %v212
  %v262 = vadd.f32 %v194, %v212
  %v263 = vadd.f32 %v195, %v212
  %v264 = vadd.f32 %v196, %v212
  %v265 = vadd.f32 %v197, %v212
  %v266 = vadd.f32 %v198, %v212
  %v267 = vadd.f32 %v199, %v212
  %v268 = vadd.f32 %v200, %v212
  %v269 = vadd.f32 %v201, %v212
  %v270 = vadd.f32 %v202, %v212
  %v271 = vadd.f32 %v203, %v212
  %v272 = vadd.f32 %v204, %v212
  %v273 = vadd.f32 %v205, %v212
  %v274 = vadd.f32 %v206, %v212
  %v275 = vadd.f32 %v207, %v212
  %v276 = vadd.f32 %v208, %v212
  %v277 = vadd.f32 %v209, %v212
  %v278 = vmax.f32 %v214, 0.0
  %v279 = vmax.f32 %v215, 0.0
  %v280 = vmax.f32 %v216, 0.0
  %v281 = vmax.f32 %v217, 0.0
  %v282 = vmax.f32 %v218, 0.0
  %v283 = vmax.f32 %v219, 0.0
  %v284 = vmax.f32 %v220, 0.0
  %v285 = vmax.f32 %v221, 0.0
  %v286 = vmax.f32 %v222, 0.0
  %v287 = vmax.f32 %v223, 0.0
  %v288 = vmax.f32 %v224, 0.0
  %v289 = vmax.f32 %v225, 0.0
  %v290 = vmax.f32 %v226, 0.0
  %v291 = vmax.f32 %v227, 0.0
  %v292 = vmax.f32 %v228, 0.0
  %v293 = vmax.f32 %v229, 0.0
  %v294 = vmax.f32 %v230, 0.0
  %v295 = vmax.f32 %v231, 0.0
  %v296 = vmax.f32 %v232, 0.0
  %v297 = vmax.f32 %v233, 0.0
  %v298 = vmax.f32 %v234, 0.0
  %v299 = vmax.f32 %v235, 0.0
  %v300 = vmax.f32 %v236, 0.0
  %v301 = vmax.f32 %v237, 0.0
  %v302 = vmax.f32 %v238, 0.0
  %v303 = vmax.f32 %v239, 0.0
  %v304 = vmax.f32 %v240, 0.0
  %v305 = vmax.f32 %v241, 0.0
  %v306 = vmax.f32 %v242, 0.0
  %v307 = vmax.f32 %v243, 0.0
  %v308 = vmax.f32 %v244, 0.0
  %v309 = vmax.f32 %v245, 0.0
  %v310 = vmax.f32 %v246, 0.0
  %v311 = vmax.f32 %v247, 0.0
  %v312 = vmax.f32 %v248, 0.0
  %v313 = vmax.f32 %v249, 0.0
  %v314 = vmax.f32 %v250, 0.0
  %v315 = vmax.f32 %v251, 0.0
  %v316 = vmax.f32 %v252, 0.0
  %v317 = vmax.f32 %v253, 0.0
  %v318 = vmax.f32 %v254, 0.0
  %v319 = vmax.f32 %v255, 0.0
  %v320 = vmax.f32 %v256, 0.0
  %v321 = vmax.f32 %v257, 0.0
  %v322 = vmax.f32 %v258, 0.0
  %v323 = vmax.f32 %v259, 0.0
  %v324 = vmax.f32 %v260, 0.0
  %v325 = vmax.f32 %v261, 0.0
  %v326 = vmax.f32 %v262, 0.0
  %v327 = vmax.f32 %v263, 0.0
  %v328 = vmax.f32 %v264, 0.0
  %v329 = vmax.f32 %v265, 0.0
  %v330 = vmax.f32 %v266, 0.0
  %v331 = vmax.f32 %v267, 0.0
  %v332 = vmax.f32 %v268, 0.0
  %v333 = vmax.f32 %v269, 0.0
  %v334 = vmax.f32 %v270, 0.0
  %v335 = vmax.f32 %v271, 0.0
  %v336 = vmax.f32 %v272, 0.0
  %v337 = vmax.f32 %v273, 0.0
  %v338 = vmax.f32 %v274, 0.0
  %v339 = vmax.f32 %v275, 0.0
  %v340 = vmax.f32 %v276, 0.0
  %v341 = vmax.f32 %v277, 0.0
  %v342 = vpack.c.bf16 %v278, %v278
  %v343 = vpack.c.bf16 %v279, %v279
  %v344 = vpack.c.bf16 %v280, %v280
  %v345 = vpack.c.bf16 %v281, %v281
  %v346 = vpack.c.bf16 %v282, %v282
  %v347 = vpack.c.bf16 %v283, %v283
  %v348 = vpack.c.bf16 %v284, %v284
  %v349 = vpack.c.bf16 %v285, %v285
  %v350 = vpack.c.bf16 %v286, %v286
  %v351 = vpack.c.bf16 %v287, %v287
  %v352 = vpack.c.bf16 %v288, %v288
  %v353 = vpack.c.bf16 %v289, %v289
  %v354 = vpack.c.bf16 %v290, %v290
  %v355 = vpack.c.bf16 %v291, %v291
  %v356 = vpack.c.bf16 %v292, %v292
  %v357 = vpack.c.bf16 %v293, %v293
  %v358 = vpack.c.bf16 %v294, %v294
  %v359 = vpack.c.bf16 %v295, %v295
  %v360 = vpack.c.bf16 %v296, %v296
  %v361 = vpack.c.bf16 %v297, %v297
  %v362 = vpack.c.bf16 %v298, %v298
  %v363 = vpack.c.bf16 %v299, %v299
  %v364 = vpack.c.bf16 %v300, %v300
  %v365 = vpack.c.bf16 %v301, %v301
  %v366 = vpack.c.bf16 %v302, %v302
  %v367 = vpack.c.bf16 %v303, %v303
  %v368 = vpack.c.bf16 %v304, %v304
  %v369 = vpack.c.bf16 %v305, %v305
  %v370 = vpack.c.bf16 %v306, %v306
  %v371 = vpack.c.bf16 %v307, %v307
  %v372 = vpack.c.bf16 %v308, %v308
  %v373 = vpack.c.bf16 %v309, %v309
  %v374 = vpack.c.bf16 %v310, %v310
  %v375 = vpack.c.bf16 %v311, %v311
  %v376 = vpack.c.bf16 %v312, %v312
  %v377 = vpack.c.bf16 %v313, %v313
  %v378 = vpack.c.bf16 %v314, %v314
  %v379 = vpack.c.bf16 %v315, %v315
  %v380 = vpack.c.bf16 %v316, %v316
  %v381 = vpack.c.bf16 %v317, %v317
  %v382 = vpack.c.bf16 %v318, %v318
  %v383 = vpack.c.bf16 %v319, %v319
  %v384 = vpack.c.bf16 %v320, %v320
  %v385 = vpack.c.bf16 %v321, %v321
  %v386 = vpack.c.bf16 %v322, %v322
  %v387 = vpack.c.bf16 %v323, %v323
  %v388 = vpack.c.bf16 %v324, %v324
  %v389 = vpack.c.bf16 %v325, %v325
  %v390 = vpack.c.bf16 %v326, %v326
  %v391 = vpack.c.bf16 %v327, %v327
  %v392 = vpack.c.bf16 %v328, %v328
  %v393 = vpack.c.bf16 %v329, %v329
  %v394 = vpack.c.bf16 %v330, %v330
  %v395 = vpack.c.bf16 %v331, %v331
  %v396 = vpack.c.bf16 %v332, %v332
  %v397 = vpack.c.bf16 %v333, %v333
  %v398 = vpack.c.bf16 %v334, %v334
  %v399 = vpack.c.bf16 %v335, %v335
  %v400 = vpack.c.bf16 %v336, %v336
  %v401 = vpack.c.bf16 %v337, %v337
  %v402 = vpack.c.bf16 %v338, %v338
  %v403 = vpack.c.bf16 %v339, %v339
  %v404 = vpack.c.bf16 %v340, %v340
  %v405 = vpack.c.bf16 %v341, %v341
  %406 = vst [vmem:[%s3] sm:$0xf] %v342
  %407 = vst [vmem:[%s3 + $0x4] sm:$0xf] %v343
  %408 = vst [vmem:[%s3 + $0x8] sm:$0xf] %v344
  %409 = vst [vmem:[%s3 + $0xc] sm:$0xf] %v345
  %410 = vst [vmem:[%s3 + $0x10] sm:$0xf] %v346
  %411 = vst [vmem:[%s3 + $0x14] sm:$0xf] %v347
  %412 = vst [vmem:[%s3 + $0x18] sm:$0xf] %v348
  %413 = vst [vmem:[%s3 + $0x1c] sm:$0xf] %v349
  %414 = vst [vmem:[%s3 + $0x20] sm:$0xf] %v350
  %415 = vst [vmem:[%s3 + $0x24] sm:$0xf] %v351
  %416 = vst [vmem:[%s3 + $0x28] sm:$0xf] %v352
  %417 = vst [vmem:[%s3 + $0x2c] sm:$0xf] %v353
  %418 = vst [vmem:[%s3 + $0x30] sm:$0xf] %v354
  %419 = vst [vmem:[%s3 + $0x34] sm:$0xf] %v355
  %420 = vst [vmem:[%s3 + $0x38] sm:$0xf] %v356
  %421 = vst [vmem:[%s3 + $0x3c] sm:$0xf] %v357
  %422 = vst [vmem:[%s3 + $0x40] sm:$0xf] %v358
  %423 = vst [vmem:[%s3 + $0x44] sm:$0xf] %v359
  %424 = vst [vmem:[%s3 + $0x48] sm:$0xf] %v360
  %425 = vst [vmem:[%s3 + $0x4c] sm:$0xf] %v361
  %426 = vst [vmem:[%s3 + $0x50] sm:$0xf] %v362
  %427 = vst [vmem:[%s3 + $0x54] sm:$0xf] %v363
  %428 = vst [vmem:[%s3 + $0x58] sm:$0xf] %v364
  %429 = vst [vmem:[%s3 + $0x5c] sm:$0xf] %v365
  %430 = vst [vmem:[%s3 + $0x60] sm:$0xf] %v366
  %431 = vst [vmem:[%s3 + $0x64] sm:$0xf] %v367
  %432 = vst [vmem:[%s3 + $0x68] sm:$0xf] %v368
  %433 = vst [vmem:[%s3 + $0x6c] sm:$0xf] %v369
  %434 = vst [vmem:[%s3 + $0x70] sm:$0xf] %v370
  %435 = vst [vmem:[%s3 + $0x74] sm:$0xf] %v371
  %436 = vst [vmem:[%s3 + $0x78] sm:$0xf] %v372
  %437 = vst [vmem:[%s3 + $0x7c] sm:$0xf] %v373
  %438 = vst [vmem:[%s3 + $0x80] sm:$0xf] %v374
  %439 = vst [vmem:[%s3 + $0x84] sm:$0xf] %v375
  %440 = vst [vmem:[%s3 + $0x88] sm:$0xf] %v376
  %441 = vst [vmem:[%s3 + $0x8c] sm:$0xf] %v377
  %442 = vst [vmem:[%s3 + $0x90] sm:$0xf] %v378
  %443 = vst [vmem:[%s3 + $0x94] sm:$0xf] %v379
  %444 = vst [vmem:[%s3 + $0x98] sm:$0xf] %v380
  %445 = vst [vmem:[%s3 + $0x9c] sm:$0xf] %v381
  %446 = vst [vmem:[%s3 + $0xa0] sm:$0xf] %v382
  %447 = vst [vmem:[%s3 + $0xa4] sm:$0xf] %v383
  %448 = vst [vmem:[%s3 + $0xa8] sm:$0xf] %v384
  %449 = vst [vmem:[%s3 + $0xac] sm:$0xf] %v385
  %450 = vst [vmem:[%s3 + $0xb0] sm:$0xf] %v386
  %451 = vst [vmem:[%s3 + $0xb4] sm:$0xf] %v387
  %452 = vst [vmem:[%s3 + $0xb8] sm:$0xf] %v388
  %453 = vst [vmem:[%s3 + $0xbc] sm:$0xf] %v389
  %454 = vst [vmem:[%s3 + $0xc0] sm:$0xf] %v390
  %455 = vst [vmem:[%s3 + $0xc4] sm:$0xf] %v391
  %456 = vst [vmem:[%s3 + $0xc8] sm:$0xf] %v392
  %457 = vst [vmem:[%s3 + $0xcc] sm:$0xf] %v393
  %458 = vst [vmem:[%s3 + $0xd0] sm:$0xf] %v394
  %459 = vst [vmem:[%s3 + $0xd4] sm:$0xf] %v395
  %460 = vst [vmem:[%s3 + $0xd8] sm:$0xf] %v396
  %461 = vst [vmem:[%s3 + $0xdc] sm:$0xf] %v397
  %462 = vst [vmem:[%s3 + $0xe0] sm:$0xf] %v398
  %463 = vst [vmem:[%s3 + $0xe4] sm:$0xf] %v399
  %464 = vst [vmem:[%s3 + $0xe8] sm:$0xf] %v400
  %465 = vst [vmem:[%s3 + $0xec] sm:$0xf] %v401
  %466 = vst [vmem:[%s3 + $0xf0] sm:$0xf] %v402
  %467 = vst [vmem:[%s3 + $0xf4] sm:$0xf] %v403
  %468 = vst [vmem:[%s3 + $0xf8] sm:$0xf] %v404
  %469 = vst [vmem:[%s3 + $0xfc] sm:$0xf] %v405
  // Predicated region
  $region14: #{dcgan_generator_forward.14} parent=0 // pred_check
    _
  $region15: #{dcgan_generator_forward.14} parent=0 // pred_check_branch
    %471 = sbr.rel (0) target = $region17
  $region16: #{dcgan_generator_forward.14} parent=0 // pred_region
    _
  $region17: #{dcgan_generator_forward.14} parent=0 // pred_fallthru
    _
  // Predicated region
  $region18: #{dcgan_generator_forward.14} parent=0 // pred_check
    _
  $region19: #{dcgan_generator_forward.14} parent=0 // pred_check_branch
    %473 = sbr.rel (0) target = $region21
  $region20: #{dcgan_generator_forward.14} parent=0 // pred_region
    _
  $region21: #{dcgan_generator_forward.14} parent=0 // pred_fallthru
    _

// kernel: dcgan_generator_forward.15
$region0: #{dcgan_generator_forward.15}
  #allocation0 [shape = 'u32[]', space=smem, size = 0x4, offset = 0x4, fixed_abs, tag = 'smem constant byte address 0x4 - core index']
  #allocation1 [shape = 'u32[72,128]{1,0:T(1,128)}', space=vmem, size = 0x9000, scoped, tag = 'internal scratch']
  #allocation2 [shape = 'f32[256,128]{1,0:T(8,128)}', space=vmem, size = 0x20000, scoped, tag = 'scratch operand']
  %s0 = inlined_call_operand.vmem [shape: bf16[4,512,512], index: 0, kind: input, shape index: {}]
  %s1 = inlined_call_operand.vmem [shape: bf16[4,512,128], index: 1, kind: input, shape index: {}]
  %s2 = inlined_call_operand.vmem [shape: bf16[4,512,128], index: 2, kind: output, shape index: {0}]
  %s3 = inlined_call_operand.vmem [shape: f32[4,2,8,128], index: 3, kind: output, shape index: {1}]
  %4 = xla_tuple %s2, %s3
  %s5 = sld [smem:[#allocation0]]
  $region57: #{dcgan_generator_forward.15} parent=0
    _
  %s7 = ssub.s32 1, %s5
  %s8 = scalar_select 0, %s7, %s5
  loop: start=0, step=1, limit=10
  $region2: #{dcgan_generator_forward.15} parent=0 // loop_pre_header
    _
  $region3: #{dcgan_generator_forward.15} parent=0 // loop_header
    %s10 = sphi 0, %s14
    %p11 = scmp.ge.s32.totalorder %s10, 10
    %s17 = sphi 0, %s43
    %s18 = sphi 0, %s39
    %s19 = sphi 0, %s35
    %s20 = sphi 0, %s31
    %s21 = sphi 0, %s17
    %s22 = sphi 0, %s18
    %s23 = sphi 0, %s19
    %s24 = sphi 0, %s20
    %s25 = sphi 0, %s21
    %s26 = sphi 0, %s22
    %s27 = sphi 0, %s23
    %s28 = sphi 0, %s24
    %s50 = sphi 0, %s52
    %s53 = sphi 0, %s50
    %s54 = sphi 0, %s53
    %s70 = sphi 0, %s54
    %s80 = sphi 0, %s82
    %s83 = sphi 0, %s80
    %s84 = sphi 0, %s83
    %s100 = sphi 0, %s84
    %s110 = sphi 0, %s112
    %s113 = sphi 0, %s110
    %s114 = sphi 0, %s113
    %s130 = sphi 0, %s114
    %s140 = sphi 0, %s142
    %s143 = sphi 0, %s140
    %s144 = sphi 0, %s143
    %s160 = sphi 0, %s144
  $region4: #{dcgan_generator_forward.15} parent=0 // loop_header_branch
    %13 = sbr.rel (%p11) target = $region8
  $region5: #{dcgan_generator_forward.15} parent=0 // loop_body
    %s15 = ssub.s32 %s10, 1
    %s16 = ssub.s32 %s10, 2
    %s29 = sadd.s32 1, %s20
    %p30 = scmp.ge.s32.totalorder %s29, 1
    %s31 = scalar_select %p30, 0, %s29
    %s32 = sadd.s32 1, %s19
    %s33 = scalar_select %p30, %s32, %s19
    %p34 = scmp.ge.s32.totalorder %s33, 1
    %s35 = scalar_select %p34, 0, %s33
    %s36 = sadd.s32 1, %s18
    %s37 = scalar_select %p34, %s36, %s18
    %p38 = scmp.ge.s32.totalorder %s37, 2
    %s39 = scalar_select %p38, 0, %s37
    %s40 = sadd.s32 1, %s17
    %s41 = scalar_select %p38, %s40, %s17
    %p42 = scmp.ge.s32.totalorder %s41, 4
    %s43 = scalar_select %p42, 0, %s41
    %s44 = ssub.s32 %s17, %s43
    %s45 = ssub.s32 %s18, %s39
    %s46 = sor.u32 %s44, %s45
    %s47 = ssub.s32 %s20, %s31
    %s48 = sor.u32 %s46, %s47
    %p49 = scmp.eq.s32.totalorder %s48, 0
    %s51 = sadd.s32 %s50, 1
    %s52 = scalar_select %p49, %s50, %s51
    %p55 = pneg %p49
    %p56 = scmp.eq.s32.totalorder %s10, 7
    %p57 = por %p55, %p56
    %p58 = scmp.ne.s32.totalorder %s50, %s53
    %p59 = scmp.eq.s32.totalorder %s10, 0
    %p60 = por %p58, %p59
    %p61 = scmp.ne.s32.totalorder %s50, %s53
    %p62 = scmp.eq.s32.totalorder %s15, 7
    %p63 = por %p61, %p62
    %p64 = scmp.ne.s32.totalorder %s53, %s54
    %p65 = scmp.eq.s32.totalorder %s15, 0
    %p66 = por %p64, %p65
    %p67 = scmp.ne.s32.totalorder %s53, %s54
    %p68 = scmp.eq.s32.totalorder %s16, 7
    %p69 = por %p67, %p68
    %p71 = scmp.ne.s32.totalorder %s54, %s70
    %p72 = scmp.eq.s32.totalorder %s16, 0
    %p73 = por %p71, %p72
    %s74 = ssub.s32 %s17, %s43
    %s75 = ssub.s32 %s20, %s31
    %s76 = sor.u32 %s74, %s75
    %s77 = ssub.s32 %s19, %s35
    %s78 = sor.u32 %s76, %s77
    %p79 = scmp.eq.s32.totalorder %s78, 0
    %s81 = sadd.s32 %s80, 1
    %s82 = scalar_select %p79, %s80, %s81
    %p85 = pneg %p79
    %p86 = scmp.eq.s32.totalorder %s10, 7
    %p87 = por %p85, %p86
    %p88 = scmp.ne.s32.totalorder %s80, %s83
    %p89 = scmp.eq.s32.totalorder %s10, 0
    %p90 = por %p88, %p89
    %p91 = scmp.ne.s32.totalorder %s80, %s83
    %p92 = scmp.eq.s32.totalorder %s15, 7
    %p93 = por %p91, %p92
    %p94 = scmp.ne.s32.totalorder %s83, %s84
    %p95 = scmp.eq.s32.totalorder %s15, 0
    %p96 = por %p94, %p95
    %p97 = scmp.ne.s32.totalorder %s83, %s84
    %p98 = scmp.eq.s32.totalorder %s16, 7
    %p99 = por %p97, %p98
    %p101 = scmp.ne.s32.totalorder %s84, %s100
    %p102 = scmp.eq.s32.totalorder %s16, 0
    %p103 = por %p101, %p102
    %s104 = ssub.s32 %s17, %s43
    %s105 = ssub.s32 %s18, %s39
    %s106 = sor.u32 %s104, %s105
    %s107 = ssub.s32 %s19, %s35
    %s108 = sor.u32 %s106, %s107
    %p109 = scmp.eq.s32.totalorder %s108, 0
    %s111 = sadd.s32 %s110, 1
    %s112 = scalar_select %p109, %s110, %s111
    %p115 = pneg %p109
    %p116 = scmp.eq.s32.totalorder %s10, 7
    %p117 = por %p115, %p116
    %p118 = scmp.ne.s32.totalorder %s110, %s113
    %p119 = scmp.eq.s32.totalorder %s10, 0
    %p120 = por %p118, %p119
    %p121 = scmp.ne.s32.totalorder %s110, %s113
    %p122 = scmp.eq.s32.totalorder %s15, 7
    %p123 = por %p121, %p122
    %p124 = scmp.ne.s32.totalorder %s113, %s114
    %p125 = scmp.eq.s32.totalorder %s15, 0
    %p126 = por %p124, %p125
    %p127 = scmp.ne.s32.totalorder %s113, %s114
    %p128 = scmp.eq.s32.totalorder %s16, 7
    %p129 = por %p127, %p128
    %p131 = scmp.ne.s32.totalorder %s114, %s130
    %p132 = scmp.eq.s32.totalorder %s16, 0
    %p133 = por %p131, %p132
    %s134 = ssub.s32 %s17, %s43
    %s135 = ssub.s32 %s18, %s39
    %s136 = sor.u32 %s134, %s135
    %s137 = ssub.s32 %s19, %s35
    %s138 = sor.u32 %s136, %s137
    %p139 = scmp.eq.s32.totalorder %s138, 0
    %s141 = sadd.s32 %s140, 1
    %s142 = scalar_select %p139, %s140, %s141
    %p145 = pneg %p139
    %p146 = scmp.eq.s32.totalorder %s10, 7
    %p147 = por %p145, %p146
    %p148 = scmp.ne.s32.totalorder %s140, %s143
    %p149 = scmp.eq.s32.totalorder %s10, 0
    %p150 = por %p148, %p149
    %p151 = scmp.ne.s32.totalorder %s140, %s143
    %p152 = scmp.eq.s32.totalorder %s15, 7
    %p153 = por %p151, %p152
    %p154 = scmp.ne.s32.totalorder %s143, %s144
    %p155 = scmp.eq.s32.totalorder %s15, 0
    %p156 = por %p154, %p155
    %p157 = scmp.ne.s32.totalorder %s143, %s144
    %p158 = scmp.eq.s32.totalorder %s16, 7
    %p159 = por %p157, %p158
    %p161 = scmp.ne.s32.totalorder %s144, %s160
    %p162 = scmp.eq.s32.totalorder %s16, 0
    %p163 = por %p161, %p162
    %p164 = scmp.le.s32.totalorder 1, %s10
    %p165 = scmp.lt.s32.totalorder %s10, 9
    %p166 = pnand %p164, %p165
    %p167 = pneg %p166
    // Predicated region
    $region9: #{dcgan_generator_forward.15} parent=5 // pred_check
      _
    $region10: #{dcgan_generator_forward.15} parent=5 // pred_check_branch
      %169 = sbr.rel (%p166) target = $region12
    $region11: #{dcgan_generator_forward.15} parent=5 // pred_region
      %s170 = ssub.s32 %s10, 1
    $region12: #{dcgan_generator_forward.15} parent=5 // pred_fallthru
      _
    %p171 = scmp.lt.s32.totalorder %s10, 8
    // Predicated region
    $region13: #{dcgan_generator_forward.15} parent=5 // pred_check
      %p172 = pneg %p171
    $region14: #{dcgan_generator_forward.15} parent=5 // pred_check_branch
      %174 = sbr.rel (%p172) target = $region16
    $region15: #{dcgan_generator_forward.15} parent=5 // pred_region
      // Predicated region
      $region17: #{dcgan_generator_forward.15} parent=15 // pred_check
        %p175 = pneg %p60
      $region18: #{dcgan_generator_forward.15} parent=15 // pred_check_branch
        %177 = sbr.rel (%p175) target = $region20
      $region19: #{dcgan_generator_forward.15} parent=15 // pred_region
        %s178 = smul.u32 32, %s18
        %s179 = smul.u32 4, %s20
        %p180 = scmp.lt.s32.totalorder %s17, 3
        %s181 = scalar_select %p180, %s17, 3
        %p182 = scmp.lt.s32.totalorder %s178, 63
        %s183 = scalar_select %p182, %s178, 63
        %p184 = scmp.lt.s32.totalorder %s179, 3
        %s185 = scalar_select %p184, %s179, 3
        %s186 = smul.addr %s183, 4
        %s187 = sadd.s32 %s185, %s186
        %s188 = smul.addr %s181, 256
        %s189 = sadd.s32 %s187, %s188
        %s190 = smul.addr %s189, 4
        %s191 = scalar_lea.vmem %s0, %s190
        %s192 = smul.u32 32, %s18
        %s193 = smul.u32 4, %s20
      $region20: #{dcgan_generator_forward.15} parent=15 // pred_fallthru
        _
      // Predicated region
      $region21: #{dcgan_generator_forward.15} parent=15 // pred_check
        %p194 = pneg %p90
      $region22: #{dcgan_generator_forward.15} parent=15 // pred_check_branch
        %196 = sbr.rel (%p194) target = $region24
      $region23: #{dcgan_generator_forward.15} parent=15 // pred_region
        %s197 = smul.u32 64, %s20
        %p198 = scmp.lt.s32.totalorder %s17, 3
        %s199 = scalar_select %p198, %s17, 3
        %p200 = scmp.lt.s32.totalorder %s197, 63
        %s201 = scalar_select %p200, %s197, 63
        %p202 = scmp.lt.s32.totalorder %s19, 0
        %s203 = scalar_select %p202, %s19, 0
        %s204 = sadd.s32 %s203, %s201
        %s205 = smul.addr %s199, 64
        %s206 = sadd.s32 %s204, %s205
        %s207 = smul.addr %s206, 4
        %s208 = scalar_lea.vmem %s1, %s207
        %s209 = smul.u32 64, %s20
      $region24: #{dcgan_generator_forward.15} parent=15 // pred_fallthru
        _
    $region16: #{dcgan_generator_forward.15} parent=5 // pred_fallthru
      _
    %p210 = scmp.le.s32.totalorder 1, %s10
    %p211 = scmp.lt.s32.totalorder %s10, 9
    %p212 = pnand %p210, %p211
    %p213 = pneg %p212
    // Predicated region
    $region25: #{dcgan_generator_forward.15} parent=5 // pred_check
      _
    $region26: #{dcgan_generator_forward.15} parent=5 // pred_check_branch
      %215 = sbr.rel (%p212) target = $region28
    $region27: #{dcgan_generator_forward.15} parent=5 // pred_region
      %s216 = ssub.s32 %s10, 1
      %s217 = smul.u32 32, %s22
      %s218 = smul.u32 4, %s24
      %p219 = scmp.lt.s32.totalorder %s21, 3
      %s220 = scalar_select %p219, %s21, 3
      %p221 = scmp.lt.s32.totalorder %s217, 63
      %s222 = scalar_select %p221, %s217, 63
      %p223 = scmp.lt.s32.totalorder %s218, 3
      %s224 = scalar_select %p223, %s218, 3
      %s225 = smul.addr %s222, 4
      %s226 = sadd.s32 %s224, %s225
      %s227 = smul.addr %s220, 256
      %s228 = sadd.s32 %s226, %s227
      %s229 = smul.addr %s228, 4
      %s230 = scalar_lea.vmem %s0, %s229
      %p231 = pneg %p66
      %p232 = pneg %p63
      %s233 = smul.u32 64, %s24
      %p234 = scmp.lt.s32.totalorder %s21, 3
      %s235 = scalar_select %p234, %s21, 3
      %p236 = scmp.lt.s32.totalorder %s233, 63
      %s237 = scalar_select %p236, %s233, 63
      %p238 = scmp.lt.s32.totalorder %s23, 0
      %s239 = scalar_select %p238, %s23, 0
      %s240 = sadd.s32 %s239, %s237
      %s241 = smul.addr %s235, 64
      %s242 = sadd.s32 %s240, %s241
      %s243 = smul.addr %s242, 4
      %s244 = scalar_lea.vmem %s1, %s243
      %p245 = pneg %p96
      %p246 = pneg %p93
      %p247 = pneg %p126
      %p248 = pneg %p123
      %s249 = smul.u32 32, %s22
      %p250 = scmp.lt.s32.totalorder %s21, 3
      %s251 = scalar_select %p250, %s21, 3
      %p252 = scmp.lt.s32.totalorder %s249, 63
      %s253 = scalar_select %p252, %s249, 63
      %p254 = scmp.lt.s32.totalorder %s23, 0
      %s255 = scalar_select %p254, %s23, 0
      %s256 = sadd.s32 %s255, %s253
      %s257 = smul.addr %s251, 64
      %s258 = sadd.s32 %s256, %s257
      %s259 = smul.addr %s258, 4
      %s260 = scalar_lea.vmem %s2, %s259
      %p261 = pneg %p156
      %p262 = pneg %p153
      %p263 = scmp.lt.s32.totalorder %s21, 3
      %s264 = scalar_select %p263, %s21, 3
      %p265 = scmp.lt.s32.totalorder %s22, 1
      %s266 = scalar_select %p265, %s22, 1
      %p267 = scmp.lt.s32.totalorder %s23, 0
      %s268 = scalar_select %p267, %s23, 0
      %s269 = sadd.s32 %s268, %s266
      %s270 = smul.addr %s264, 2
      %s271 = sadd.s32 %s269, %s270
      %s272 = smul.addr %s271, 8
      %s273 = scalar_lea.vmem %s3, %s272
      %s274 = smul.u32 32, %s22
      %s275 = smul.u32 4, %s24
      %p276 = scmp.lt.s32.totalorder %s21, 3
      %s277 = scalar_select %p276, %s21, 3
      %p278 = scmp.lt.s32.totalorder %s274, 63
      %s279 = scalar_select %p278, %s274, 63
      %p280 = scmp.lt.s32.totalorder %s275, 3
      %s281 = scalar_select %p280, %s275, 3
      %s282 = smul.addr %s279, 4
      %s283 = sadd.s32 %s281, %s282
      %s284 = smul.addr %s277, 256
      %s285 = sadd.s32 %s283, %s284
      %s286 = smul.addr %s285, 4
      %s287 = scalar_lea.vmem %s0, %s286
      %s288 = smul.u32 32, %s22
      %s289 = smul.u32 4, %s24
      %s290 = smul.u32 64, %s24
      %p291 = scmp.lt.s32.totalorder %s21, 3
      %s292 = scalar_select %p291, %s21, 3
      %p293 = scmp.lt.s32.totalorder %s290, 63
      %s294 = scalar_select %p293, %s290, 63
      %p295 = scmp.lt.s32.totalorder %s23, 0
      %s296 = scalar_select %p295, %s23, 0
      %s297 = sadd.s32 %s296, %s294
      %s298 = smul.addr %s292, 64
      %s299 = sadd.s32 %s297, %s298
      %s300 = smul.addr %s299, 4
      %s301 = scalar_lea.vmem %s1, %s300
      %s302 = smul.u32 64, %s24
      %s303 = smul.u32 32, %s22
      %p304 = scmp.lt.s32.totalorder %s21, 3
      %s305 = scalar_select %p304, %s21, 3
      %p306 = scmp.lt.s32.totalorder %s303, 63
      %s307 = scalar_select %p306, %s303, 63
      %p308 = scmp.lt.s32.totalorder %s23, 0
      %s309 = scalar_select %p308, %s23, 0
      %s310 = sadd.s32 %s309, %s307
      %s311 = smul.addr %s305, 64
      %s312 = sadd.s32 %s310, %s311
      %s313 = smul.addr %s312, 4
      %s314 = scalar_lea.vmem %s2, %s313
      %s315 = smul.u32 32, %s22
      %p316 = scmp.lt.s32.totalorder %s21, 3
      %s317 = scalar_select %p316, %s21, 3
      %p318 = scmp.lt.s32.totalorder %s22, 1
      %s319 = scalar_select %p318, %s22, 1
      %p320 = scmp.lt.s32.totalorder %s23, 0
      %s321 = scalar_select %p320, %s23, 0
      %s322 = sadd.s32 %s321, %s319
      %s323 = smul.addr %s317, 2
      %s324 = sadd.s32 %s322, %s323
      %s325 = smul.addr %s324, 8
      %s326 = scalar_lea.vmem %s3, %s325
      %p327 = scmp.eq.s32.totalorder %s24, 0
      // Predicated region
      $region29: #{dcgan_generator_forward.15} parent=27 // pred_check
        %p328 = pneg %p327
      $region30: #{dcgan_generator_forward.15} parent=27 // pred_check_branch
        %330 = sbr.rel (%p328) target = $region32
      $region31: #{dcgan_generator_forward.15} parent=27 // pred_region
        %331 = vst [vmem:[#allocation2] sm:$0xff] 0.0
        %332 = vst [vmem:[#allocation2 + $0x8] sm:$0xff] 0.0
        %333 = vst [vmem:[#allocation2 + $0x10] sm:$0xff] 0.0
        %334 = vst [vmem:[#allocation2 + $0x18] sm:$0xff] 0.0
        %335 = vst [vmem:[#allocation2 + $0x20] sm:$0xff] 0.0
        %336 = vst [vmem:[#allocation2 + $0x28] sm:$0xff] 0.0
        %337 = vst [vmem:[#allocation2 + $0x30] sm:$0xff] 0.0
        %338 = vst [vmem:[#allocation2 + $0x38] sm:$0xff] 0.0
        %339 = vst [vmem:[#allocation2 + $0x40] sm:$0xff] 0.0
        %340 = vst [vmem:[#allocation2 + $0x48] sm:$0xff] 0.0
        %341 = vst [vmem:[#allocation2 + $0x50] sm:$0xff] 0.0
        %342 = vst [vmem:[#allocation2 + $0x58] sm:$0xff] 0.0
        %343 = vst [vmem:[#allocation2 + $0x60] sm:$0xff] 0.0
        %344 = vst [vmem:[#allocation2 + $0x68] sm:$0xff] 0.0
        %345 = vst [vmem:[#allocation2 + $0x70] sm:$0xff] 0.0
        %346 = vst [vmem:[#allocation2 + $0x78] sm:$0xff] 0.0
        %347 = vst [vmem:[#allocation2 + $0x80] sm:$0xff] 0.0
        %348 = vst [vmem:[#allocation2 + $0x88] sm:$0xff] 0.0
        %349 = vst [vmem:[#allocation2 + $0x90] sm:$0xff] 0.0
        %350 = vst [vmem:[#allocation2 + $0x98] sm:$0xff] 0.0
        %351 = vst [vmem:[#allocation2 + $0xa0] sm:$0xff] 0.0
        %352 = vst [vmem:[#allocation2 + $0xa8] sm:$0xff] 0.0
        %353 = vst [vmem:[#allocation2 + $0xb0] sm:$0xff] 0.0
        %354 = vst [vmem:[#allocation2 + $0xb8] sm:$0xff] 0.0
        %355 = vst [vmem:[#allocation2 + $0xc0] sm:$0xff] 0.0
        %356 = vst [vmem:[#allocation2 + $0xc8] sm:$0xff] 0.0
        %357 = vst [vmem:[#allocation2 + $0xd0] sm:$0xff] 0.0
        %358 = vst [vmem:[#allocation2 + $0xd8] sm:$0xff] 0.0
        %359 = vst [vmem:[#allocation2 + $0xe0] sm:$0xff] 0.0
        %360 = vst [vmem:[#allocation2 + $0xe8] sm:$0xff] 0.0
        %361 = vst [vmem:[#allocation2 + $0xf0] sm:$0xff] 0.0
        %362 = vst [vmem:[#allocation2 + $0xf8] sm:$0xff] 0.0
      $region32: #{dcgan_generator_forward.15} parent=27 // pred_fallthru
        _
      %v363 = vld [vmem:[#allocation2] sm:$0xff]
      %v364 = vld [vmem:[#allocation2 + $0x8] sm:$0xff]
      %v365 = vld [vmem:[#allocation2 + $0x10] sm:$0xff]
      %v366 = vld [vmem:[#allocation2 + $0x18] sm:$0xff]
      %v367 = vld [vmem:[#allocation2 + $0x20] sm:$0xff]
      %v368 = vld [vmem:[#allocation2 + $0x28] sm:$0xff]
      %v369 = vld [vmem:[#allocation2 + $0x30] sm:$0xff]
      %v370 = vld [vmem:[#allocation2 + $0x38] sm:$0xff]
      %v371 = vld [vmem:[#allocation2 + $0x40] sm:$0xff]
      %v372 = vld [vmem:[#allocation2 + $0x48] sm:$0xff]
      %v373 = vld [vmem:[#allocation2 + $0x50] sm:$0xff]
      %v374 = vld [vmem:[#allocation2 + $0x58] sm:$0xff]
      %v375 = vld [vmem:[#allocation2 + $0x60] sm:$0xff]
      %v376 = vld [vmem:[#allocation2 + $0x68] sm:$0xff]
      %v377 = vld [vmem:[#allocation2 + $0x70] sm:$0xff]
      %v378 = vld [vmem:[#allocation2 + $0x78] sm:$0xff]
      %v379 = vld [vmem:[#allocation2 + $0x80] sm:$0xff]
      %v380 = vld [vmem:[#allocation2 + $0x88] sm:$0xff]
      %v381 = vld [vmem:[#allocation2 + $0x90] sm:$0xff]
      %v382 = vld [vmem:[#allocation2 + $0x98] sm:$0xff]
      %v383 = vld [vmem:[#allocation2 + $0xa0] sm:$0xff]
      %v384 = vld [vmem:[#allocation2 + $0xa8] sm:$0xff]
      %v385 = vld [vmem:[#allocation2 + $0xb0] sm:$0xff]
      %v386 = vld [vmem:[#allocation2 + $0xb8] sm:$0xff]
      %v387 = vld [vmem:[#allocation2 + $0xc0] sm:$0xff]
      %v388 = vld [vmem:[#allocation2 + $0xc8] sm:$0xff]
      %v389 = vld [vmem:[#allocation2 + $0xd0] sm:$0xff]
      %v390 = vld [vmem:[#allocation2 + $0xd8] sm:$0xff]
      %v391 = vld [vmem:[#allocation2 + $0xe0] sm:$0xff]
      %v392 = vld [vmem:[#allocation2 + $0xe8] sm:$0xff]
      %v393 = vld [vmem:[#allocation2 + $0xf0] sm:$0xff]
      %v394 = vld [vmem:[#allocation2 + $0xf8] sm:$0xff]
      %v395 = vld [vmem:[%s287] sm:$0xff]
      %v396 = vld [vmem:[%s287 + $0x8] sm:$0xff]
      %v397 = vld [vmem:[%s287 + $0x10] sm:$0xff]
      %v398 = vld [vmem:[%s287 + $0x18] sm:$0xff]
      %v399 = vld [vmem:[%s287 + $0x20] sm:$0xff]
      %v400 = vld [vmem:[%s287 + $0x28] sm:$0xff]
      %v401 = vld [vmem:[%s287 + $0x30] sm:$0xff]
      %v402 = vld [vmem:[%s287 + $0x38] sm:$0xff]
      %v403 = vld [vmem:[%s287 + $0x40] sm:$0xff]
      %v404 = vld [vmem:[%s287 + $0x48] sm:$0xff]
      %v405 = vld [vmem:[%s287 + $0x50] sm:$0xff]
      %v406 = vld [vmem:[%s287 + $0x58] sm:$0xff]
      %v407 = vld [vmem:[%s287 + $0x60] sm:$0xff]
      %v408 = vld [vmem:[%s287 + $0x68] sm:$0xff]
      %v409 = vld [vmem:[%s287 + $0x70] sm:$0xff]
      %v410 = vld [vmem:[%s287 + $0x78] sm:$0xff]
      %v411 = vld [vmem:[%s287 + $0x80] sm:$0xff]
      %v412 = vld [vmem:[%s287 + $0x88] sm:$0xff]
      %v413 = vld [vmem:[%s287 + $0x90] sm:$0xff]
      %v414 = vld [vmem:[%s287 + $0x98] sm:$0xff]
      %v415 = vld [vmem:[%s287 + $0xa0] sm:$0xff]
      %v416 = vld [vmem:[%s287 + $0xa8] sm:$0xff]
      %v417 = vld [vmem:[%s287 + $0xb0] sm:$0xff]
      %v418 = vld [vmem:[%s287 + $0xb8] sm:$0xff]
      %v419 = vld [vmem:[%s287 + $0xc0] sm:$0xff]
      %v420 = vld [vmem:[%s287 + $0xc8] sm:$0xff]
      %v421 = vld [vmem:[%s287 + $0xd0] sm:$0xff]
      %v422 = vld [vmem:[%s287 + $0xd8] sm:$0xff]
      %v423 = vld [vmem:[%s287 + $0xe0] sm:$0xff]
      %v424 = vld [vmem:[%s287 + $0xe8] sm:$0xff]
      %v425 = vld [vmem:[%s287 + $0xf0] sm:$0xff]
      %v426 = vld [vmem:[%s287 + $0xf8] sm:$0xff]
      %v427 = vld [vmem:[%s287 + $0x100] sm:$0xff]
      %v428 = vld [vmem:[%s287 + $0x108] sm:$0xff]
      %v429 = vld [vmem:[%s287 + $0x110] sm:$0xff]
      %v430 = vld [vmem:[%s287 + $0x118] sm:$0xff]
      %v431 = vld [vmem:[%s287 + $0x120] sm:$0xff]
      %v432 = vld [vmem:[%s287 + $0x128] sm:$0xff]
      %v433 = vld [vmem:[%s287 + $0x130] sm:$0xff]
      %v434 = vld [vmem:[%s287 + $0x138] sm:$0xff]
      %v435 = vld [vmem:[%s287 + $0x140] sm:$0xff]
      %v436 = vld [vmem:[%s287 + $0x148] sm:$0xff]
      %v437 = vld [vmem:[%s287 + $0x150] sm:$0xff]
      %v438 = vld [vmem:[%s287 + $0x158] sm:$0xff]
      %v439 = vld [vmem:[%s287 + $0x160] sm:$0xff]
      %v440 = vld [vmem:[%s287 + $0x168] sm:$0xff]
      %v441 = vld [vmem:[%s287 + $0x170] sm:$0xff]
      %v442 = vld [vmem:[%s287 + $0x178] sm:$0xff]
      %v443 = vld [vmem:[%s287 + $0x180] sm:$0xff]
      %v444 = vld [vmem:[%s287 + $0x188] sm:$0xff]
      %v445 = vld [vmem:[%s287 + $0x190] sm:$0xff]
      %v446 = vld [vmem:[%s287 + $0x198] sm:$0xff]
      %v447 = vld [vmem:[%s287 + $0x1a0] sm:$0xff]
      %v448 = vld [vmem:[%s287 + $0x1a8] sm:$0xff]
      %v449 = vld [vmem:[%s287 + $0x1b0] sm:$0xff]
      %v450 = vld [vmem:[%s287 + $0x1b8] sm:$0xff]
      %v451 = vld [vmem:[%s287 + $0x1c0] sm:$0xff]
      %v452 = vld [vmem:[%s287 + $0x1c8] sm:$0xff]
      %v453 = vld [vmem:[%s287 + $0x1d0] sm:$0xff]
      %v454 = vld [vmem:[%s287 + $0x1d8] sm:$0xff]
      %v455 = vld [vmem:[%s287 + $0x1e0] sm:$0xff]
      %v456 = vld [vmem:[%s287 + $0x1e8] sm:$0xff]
      %v457 = vld [vmem:[%s287 + $0x1f0] sm:$0xff]
      %v458 = vld [vmem:[%s287 + $0x1f8] sm:$0xff]
      %v459 = vld [vmem:[%s301] sm:$0xf]
      %v460 = vld [vmem:[%s301 + $0x4] sm:$0xf]
      %v461 = vld [vmem:[%s301 + $0x8] sm:$0xf]
      %v462 = vld [vmem:[%s301 + $0xc] sm:$0xf]
      %v463 = vld [vmem:[%s301 + $0x10] sm:$0xf]
      %v464 = vld [vmem:[%s301 + $0x14] sm:$0xf]
      %v465 = vld [vmem:[%s301 + $0x18] sm:$0xf]
      %v466 = vld [vmem:[%s301 + $0x1c] sm:$0xf]
      %v467 = vld [vmem:[%s301 + $0x20] sm:$0xf]
      %v468 = vld [vmem:[%s301 + $0x24] sm:$0xf]
      %v469 = vld [vmem:[%s301 + $0x28] sm:$0xf]
      %v470 = vld [vmem:[%s301 + $0x2c] sm:$0xf]
      %v471 = vld [vmem:[%s301 + $0x30] sm:$0xf]
      %v472 = vld [vmem:[%s301 + $0x34] sm:$0xf]
      %v473 = vld [vmem:[%s301 + $0x38] sm:$0xf]
      %v474 = vld [vmem:[%s301 + $0x3c] sm:$0xf]
      %v475 = vld [vmem:[%s301 + $0x40] sm:$0xf]
      %v476 = vld [vmem:[%s301 + $0x44] sm:$0xf]
      %v477 = vld [vmem:[%s301 + $0x48] sm:$0xf]
      %v478 = vld [vmem:[%s301 + $0x4c] sm:$0xf]
      %v479 = vld [vmem:[%s301 + $0x50] sm:$0xf]
      %v480 = vld [vmem:[%s301 + $0x54] sm:$0xf]
      %v481 = vld [vmem:[%s301 + $0x58] sm:$0xf]
      %v482 = vld [vmem:[%s301 + $0x5c] sm:$0xf]
      %v483 = vld [vmem:[%s301 + $0x60] sm:$0xf]
      %v484 = vld [vmem:[%s301 + $0x64] sm:$0xf]
      %v485 = vld [vmem:[%s301 + $0x68] sm:$0xf]
      %v486 = vld [vmem:[%s301 + $0x6c] sm:$0xf]
      %v487 = vld [vmem:[%s301 + $0x70] sm:$0xf]
      %v488 = vld [vmem:[%s301 + $0x74] sm:$0xf]
      %v489 = vld [vmem:[%s301 + $0x78] sm:$0xf]
      %v490 = vld [vmem:[%s301 + $0x7c] sm:$0xf]
      %v491 = vld [vmem:[%s301 + $0x80] sm:$0xf]
      %v492 = vld [vmem:[%s301 + $0x84] sm:$0xf]
      %v493 = vld [vmem:[%s301 + $0x88] sm:$0xf]
      %v494 = vld [vmem:[%s301 + $0x8c] sm:$0xf]
      %v495 = vld [vmem:[%s301 + $0x90] sm:$0xf]
      %v496 = vld [vmem:[%s301 + $0x94] sm:$0xf]
      %v497 = vld [vmem:[%s301 + $0x98] sm:$0xf]
      %v498 = vld [vmem:[%s301 + $0x9c] sm:$0xf]
      %v499 = vld [vmem:[%s301 + $0xa0] sm:$0xf]
      %v500 = vld [vmem:[%s301 + $0xa4] sm:$0xf]
      %v501 = vld [vmem:[%s301 + $0xa8] sm:$0xf]
      %v502 = vld [vmem:[%s301 + $0xac] sm:$0xf]
      %v503 = vld [vmem:[%s301 + $0xb0] sm:$0xf]
      %v504 = vld [vmem:[%s301 + $0xb4] sm:$0xf]
      %v505 = vld [vmem:[%s301 + $0xb8] sm:$0xf]
      %v506 = vld [vmem:[%s301 + $0xbc] sm:$0xf]
      %v507 = vld [vmem:[%s301 + $0xc0] sm:$0xf]
      %v508 = vld [vmem:[%s301 + $0xc4] sm:$0xf]
      %v509 = vld [vmem:[%s301 + $0xc8] sm:$0xf]
      %v510 = vld [vmem:[%s301 + $0xcc] sm:$0xf]
      %v511 = vld [vmem:[%s301 + $0xd0] sm:$0xf]
      %v512 = vld [vmem:[%s301 + $0xd4] sm:$0xf]
      %v513 = vld [vmem:[%s301 + $0xd8] sm:$0xf]
      %v514 = vld [vmem:[%s301 + $0xdc] sm:$0xf]
      %v515 = vld [vmem:[%s301 + $0xe0] sm:$0xf]
      %v516 = vld [vmem:[%s301 + $0xe4] sm:$0xf]
      %v517 = vld [vmem:[%s301 + $0xe8] sm:$0xf]
      %v518 = vld [vmem:[%s301 + $0xec] sm:$0xf]
      %v519 = vld [vmem:[%s301 + $0xf0] sm:$0xf]
      %v520 = vld [vmem:[%s301 + $0xf4] sm:$0xf]
      %v521 = vld [vmem:[%s301 + $0xf8] sm:$0xf]
      %v522 = vld [vmem:[%s301 + $0xfc] sm:$0xf]
      %v587 = vunpack.c.l.b16 %v395
      %v588 = vunpack.c.h.b16 %v395
      %v589 = vunpack.c.l.b16 %v396
      %v590 = vunpack.c.h.b16 %v396
      %v591 = vunpack.c.l.b16 %v397
      %v592 = vunpack.c.h.b16 %v397
      %v593 = vunpack.c.l.b16 %v398
      %v594 = vunpack.c.h.b16 %v398
      %v595 = vunpack.c.l.b16 %v399
      %v596 = vunpack.c.h.b16 %v399
      %v597 = vunpack.c.l.b16 %v400
      %v598 = vunpack.c.h.b16 %v400
      %v599 = vunpack.c.l.b16 %v401
      %v600 = vunpack.c.h.b16 %v401
      %v601 = vunpack.c.l.b16 %v402
      %v602 = vunpack.c.h.b16 %v402
      %v603 = vunpack.c.l.b16 %v403
      %v604 = vunpack.c.h.b16 %v403
      %v605 = vunpack.c.l.b16 %v404
      %v606 = vunpack.c.h.b16 %v404
      %v607 = vunpack.c.l.b16 %v405
      %v608 = vunpack.c.h.b16 %v405
      %v609 = vunpack.c.l.b16 %v406
      %v610 = vunpack.c.h.b16 %v406
      %v611 = vunpack.c.l.b16 %v407
      %v612 = vunpack.c.h.b16 %v407
      %v613 = vunpack.c.l.b16 %v408
      %v614 = vunpack.c.h.b16 %v408
      %v615 = vunpack.c.l.b16 %v409
      %v616 = vunpack.c.h.b16 %v409
      %v617 = vunpack.c.l.b16 %v410
      %v618 = vunpack.c.h.b16 %v410
      %v619 = vunpack.c.l.b16 %v411
      %v620 = vunpack.c.h.b16 %v411
      %v621 = vunpack.c.l.b16 %v412
      %v622 = vunpack.c.h.b16 %v412
      %v623 = vunpack.c.l.b16 %v413
      %v624 = vunpack.c.h.b16 %v413
      %v625 = vunpack.c.l.b16 %v414
      %v626 = vunpack.c.h.b16 %v414
      %v627 = vunpack.c.l.b16 %v415
      %v628 = vunpack.c.h.b16 %v415
      %v629 = vunpack.c.l.b16 %v416
      %v630 = vunpack.c.h.b16 %v416
      %v631 = vunpack.c.l.b16 %v417
      %v632 = vunpack.c.h.b16 %v417
      %v633 = vunpack.c.l.b16 %v418
      %v634 = vunpack.c.h.b16 %v418
      %v635 = vunpack.c.l.b16 %v419
      %v636 = vunpack.c.h.b16 %v419
      %v637 = vunpack.c.l.b16 %v420
      %v638 = vunpack.c.h.b16 %v420
      %v639 = vunpack.c.l.b16 %v421
      %v640 = vunpack.c.h.b16 %v421
      %v641 = vunpack.c.l.b16 %v422
      %v642 = vunpack.c.h.b16 %v422
      %v643 = vunpack.c.l.b16 %v423
      %v644 = vunpack.c.h.b16 %v423
      %v645 = vunpack.c.l.b16 %v424
      %v646 = vunpack.c.h.b16 %v424
      %v647 = vunpack.c.l.b16 %v425
      %v648 = vunpack.c.h.b16 %v425
      %v649 = vunpack.c.l.b16 %v426
      %v650 = vunpack.c.h.b16 %v426
      %v651 = vunpack.c.l.b16 %v427
      %v652 = vunpack.c.h.b16 %v427
      %v653 = vunpack.c.l.b16 %v428
      %v654 = vunpack.c.h.b16 %v428
      %v655 = vunpack.c.l.b16 %v429
      %v656 = vunpack.c.h.b16 %v429
      %v657 = vunpack.c.l.b16 %v430
      %v658 = vunpack.c.h.b16 %v430
      %v659 = vunpack.c.l.b16 %v431
      %v660 = vunpack.c.h.b16 %v431
      %v661 = vunpack.c.l.b16 %v432
      %v662 = vunpack.c.h.b16 %v432
      %v663 = vunpack.c.l.b16 %v433
      %v664 = vunpack.c.h.b16 %v433
      %v665 = vunpack.c.l.b16 %v434
      %v666 = vunpack.c.h.b16 %v434
      %v667 = vunpack.c.l.b16 %v435
      %v668 = vunpack.c.h.b16 %v435
      %v669 = vunpack.c.l.b16 %v436
      %v670 = vunpack.c.h.b16 %v436
      %v671 = vunpack.c.l.b16 %v437
      %v672 = vunpack.c.h.b16 %v437
      %v673 = vunpack.c.l.b16 %v438
      %v674 = vunpack.c.h.b16 %v438
      %v675 = vunpack.c.l.b16 %v439
      %v676 = vunpack.c.h.b16 %v439
      %v677 = vunpack.c.l.b16 %v440
      %v678 = vunpack.c.h.b16 %v440
      %v679 = vunpack.c.l.b16 %v441
      %v680 = vunpack.c.h.b16 %v441
      %v681 = vunpack.c.l.b16 %v442
      %v682 = vunpack.c.h.b16 %v442
      %v683 = vunpack.c.l.b16 %v443
      %v684 = vunpack.c.h.b16 %v443
      %v685 = vunpack.c.l.b16 %v444
      %v686 = vunpack.c.h.b16 %v444
      %v687 = vunpack.c.l.b16 %v445
      %v688 = vunpack.c.h.b16 %v445
      %v689 = vunpack.c.l.b16 %v446
      %v690 = vunpack.c.h.b16 %v446
      %v691 = vunpack.c.l.b16 %v447
      %v692 = vunpack.c.h.b16 %v447
      %v693 = vunpack.c.l.b16 %v448
      %v694 = vunpack.c.h.b16 %v448
      %v695 = vunpack.c.l.b16 %v449
      %v696 = vunpack.c.h.b16 %v449
      %v697 = vunpack.c.l.b16 %v450
      %v698 = vunpack.c.h.b16 %v450
      %v699 = vunpack.c.l.b16 %v451
      %v700 = vunpack.c.h.b16 %v451
      %v701 = vunpack.c.l.b16 %v452
      %v702 = vunpack.c.h.b16 %v452
      %v703 = vunpack.c.l.b16 %v453
      %v704 = vunpack.c.h.b16 %v453
      %v705 = vunpack.c.l.b16 %v454
      %v706 = vunpack.c.h.b16 %v454
      %v707 = vunpack.c.l.b16 %v455
      %v708 = vunpack.c.h.b16 %v455
      %v709 = vunpack.c.l.b16 %v456
      %v710 = vunpack.c.h.b16 %v456
      %v711 = vunpack.c.l.b16 %v457
      %v712 = vunpack.c.h.b16 %v457
      %v713 = vunpack.c.l.b16 %v458
      %v714 = vunpack.c.h.b16 %v458
      %v715 = vpack.c.b16 %v591, %v587
      %v716 = vpack.c.b16 %v592, %v588
      %v717 = vpack.c.b16 %v593, %v589
      %v718 = vpack.c.b16 %v594, %v590
      %v719 = vpack.c.b16 %v599, %v595
      %v720 = vpack.c.b16 %v600, %v596
      %v721 = vpack.c.b16 %v601, %v597
      %v722 = vpack.c.b16 %v602, %v598
      %v723 = vpack.c.b16 %v607, %v603
      %v724 = vpack.c.b16 %v608, %v604
      %v725 = vpack.c.b16 %v609, %v605
      %v726 = vpack.c.b16 %v610, %v606
      %v727 = vpack.c.b16 %v615, %v611
      %v728 = vpack.c.b16 %v616, %v612
      %v729 = vpack.c.b16 %v617, %v613
      %v730 = vpack.c.b16 %v618, %v614
      %v731 = vpack.c.b16 %v623, %v619
      %v732 = vpack.c.b16 %v624, %v620
      %v733 = vpack.c.b16 %v625, %v621
      %v734 = vpack.c.b16 %v626, %v622
      %v735 = vpack.c.b16 %v631, %v627
      %v736 = vpack.c.b16 %v632, %v628
      %v737 = vpack.c.b16 %v633, %v629
      %v738 = vpack.c.b16 %v634, %v630
      %v739 = vpack.c.b16 %v639, %v635
      %v740 = vpack.c.b16 %v640, %v636
      %v741 = vpack.c.b16 %v641, %v637
      %v742 = vpack.c.b16 %v642, %v638
      %v743 = vpack.c.b16 %v647, %v643
      %v744 = vpack.c.b16 %v648, %v644
      %v745 = vpack.c.b16 %v649, %v645
      %v746 = vpack.c.b16 %v650, %v646
      %v747 = vpack.c.b16 %v655, %v651
      %v748 = vpack.c.b16 %v656, %v652
      %v749 = vpack.c.b16 %v657, %v653
      %v750 = vpack.c.b16 %v658, %v654
      %v751 = vpack.c.b16 %v663, %v659
      %v752 = vpack.c.b16 %v664, %v660
      %v753 = vpack.c.b16 %v665, %v661
      %v754 = vpack.c.b16 %v666, %v662
      %v755 = vpack.c.b16 %v671, %v667
      %v756 = vpack.c.b16 %v672, %v668
      %v757 = vpack.c.b16 %v673, %v669
      %v758 = vpack.c.b16 %v674, %v670
      %v759 = vpack.c.b16 %v679, %v675
      %v760 = vpack.c.b16 %v680, %v676
      %v761 = vpack.c.b16 %v681, %v677
      %v762 = vpack.c.b16 %v682, %v678
      %v763 = vpack.c.b16 %v687, %v683
      %v764 = vpack.c.b16 %v688, %v684
      %v765 = vpack.c.b16 %v689, %v685
      %v766 = vpack.c.b16 %v690, %v686
      %v767 = vpack.c.b16 %v695, %v691
      %v768 = vpack.c.b16 %v696, %v692
      %v769 = vpack.c.b16 %v697, %v693
      %v770 = vpack.c.b16 %v698, %v694
      %v771 = vpack.c.b16 %v703, %v699
      %v772 = vpack.c.b16 %v704, %v700
      %v773 = vpack.c.b16 %v705, %v701
      %v774 = vpack.c.b16 %v706, %v702
      %v775 = vpack.c.b16 %v711, %v707
      %v776 = vpack.c.b16 %v712, %v708
      %v777 = vpack.c.b16 %v713, %v709
      %v778 = vpack.c.b16 %v714, %v710
      %v907 = vunpack.c.l.b16 %v459
      %v908 = vunpack.c.l.b16 %v460
      %v909 = vunpack.c.l.b16 %v461
      %v910 = vunpack.c.l.b16 %v462
      %v911 = vunpack.c.l.b16 %v463
      %v912 = vunpack.c.l.b16 %v464
      %v913 = vunpack.c.l.b16 %v465
      %v914 = vunpack.c.l.b16 %v466
      %v915 = vunpack.c.l.b16 %v467
      %v916 = vunpack.c.l.b16 %v468
      %v917 = vunpack.c.l.b16 %v469
      %v918 = vunpack.c.l.b16 %v470
      %v919 = vunpack.c.l.b16 %v471
      %v920 = vunpack.c.l.b16 %v472
      %v921 = vunpack.c.l.b16 %v473
      %v922 = vunpack.c.l.b16 %v474
      %v923 = vunpack.c.l.b16 %v475
      %v924 = vunpack.c.l.b16 %v476
      %v925 = vunpack.c.l.b16 %v477
      %v926 = vunpack.c.l.b16 %v478
      %v927 = vunpack.c.l.b16 %v479
      %v928 = vunpack.c.l.b16 %v480
      %v929 = vunpack.c.l.b16 %v481
      %v930 = vunpack.c.l.b16 %v482
      %v931 = vunpack.c.l.b16 %v483
      %v932 = vunpack.c.l.b16 %v484
      %v933 = vunpack.c.l.b16 %v485
      %v934 = vunpack.c.l.b16 %v486
      %v935 = vunpack.c.l.b16 %v487
      %v936 = vunpack.c.l.b16 %v488
      %v937 = vunpack.c.l.b16 %v489
      %v938 = vunpack.c.l.b16 %v490
      %v939 = vunpack.c.l.b16 %v491
      %v940 = vunpack.c.l.b16 %v492
      %v941 = vunpack.c.l.b16 %v493
      %v942 = vunpack.c.l.b16 %v494
      %v943 = vunpack.c.l.b16 %v495
      %v944 = vunpack.c.l.b16 %v496
      %v945 = vunpack.c.l.b16 %v497
      %v946 = vunpack.c.l.b16 %v498
      %v947 = vunpack.c.l.b16 %v499
      %v948 = vunpack.c.l.b16 %v500
      %v949 = vunpack.c.l.b16 %v501
      %v950 = vunpack.c.l.b16 %v502
      %v951 = vunpack.c.l.b16 %v503
      %v952 = vunpack.c.l.b16 %v504
      %v953 = vunpack.c.l.b16 %v505
      %v954 = vunpack.c.l.b16 %v506
      %v955 = vunpack.c.l.b16 %v507
      %v956 = vunpack.c.l.b16 %v508
      %v957 = vunpack.c.l.b16 %v509
      %v958 = vunpack.c.l.b16 %v510
      %v959 = vunpack.c.l.b16 %v511
      %v960 = vunpack.c.l.b16 %v512
      %v961 = vunpack.c.l.b16 %v513
      %v962 = vunpack.c.l.b16 %v514
      %v963 = vunpack.c.l.b16 %v515
      %v964 = vunpack.c.l.b16 %v516
      %v965 = vunpack.c.l.b16 %v517
      %v966 = vunpack.c.l.b16 %v518
      %v967 = vunpack.c.l.b16 %v519
      %v968 = vunpack.c.l.b16 %v520
      %v969 = vunpack.c.l.b16 %v521
      %v970 = vunpack.c.l.b16 %v522
      %v971 = vpack.c.b16 %v908, %v907
      %v972 = vpack.c.b16 %v910, %v909
      %v973 = vpack.c.b16 %v912, %v911
      %v974 = vpack.c.b16 %v914, %v913
      %v975 = vpack.c.b16 %v916, %v915
      %v976 = vpack.c.b16 %v918, %v917
      %v977 = vpack.c.b16 %v920, %v919
      %v978 = vpack.c.b16 %v922, %v921
      %v979 = vpack.c.b16 %v924, %v923
      %v980 = vpack.c.b16 %v926, %v925
      %v981 = vpack.c.b16 %v928, %v927
      %v982 = vpack.c.b16 %v930, %v929
      %v983 = vpack.c.b16 %v932, %v931
      %v984 = vpack.c.b16 %v934, %v933
      %v985 = vpack.c.b16 %v936, %v935
      %v986 = vpack.c.b16 %v938, %v937
      %v987 = vpack.c.b16 %v940, %v939
      %v988 = vpack.c.b16 %v942, %v941
      %v989 = vpack.c.b16 %v944, %v943
      %v990 = vpack.c.b16 %v946, %v945
      %v991 = vpack.c.b16 %v948, %v947
      %v992 = vpack.c.b16 %v950, %v949
      %v993 = vpack.c.b16 %v952, %v951
      %v994 = vpack.c.b16 %v954, %v953
      %v995 = vpack.c.b16 %v956, %v955
      %v996 = vpack.c.b16 %v958, %v957
      %v997 = vpack.c.b16 %v960, %v959
      %v998 = vpack.c.b16 %v962, %v961
      %v999 = vpack.c.b16 %v964, %v963
      %v1000 = vpack.c.b16 %v966, %v965
      %v1001 = vpack.c.b16 %v968, %v967
      %v1002 = vpack.c.b16 %v970, %v969
      %1035 = vmatpush.bf16.msra.mxu0 %v978
      %1036 = vmatpush.bf16.msra.mxu0 %v977
      %1037 = vmatpush.bf16.msra.mxu0 %v976
      %1038 = vmatpush.bf16.msra.mxu0 %v975
      %1039 = vmatpush.bf16.msra.mxu0 %v974
      %1040 = vmatpush.bf16.msra.mxu0 %v973
      %1041 = vmatpush.bf16.msra.mxu0 %v972
      %1042 = vmatpush.bf16.msra.mxu0 %v971
      %1043 = vmatmul.bf16.gmra.mxu0 %v715
      %v1044 = vpop.f32.mrf.mxu0
      %v1045 = vadd.f32 0.0, %v1044
      %v1046 = vpop.f32.mrf.mxu0
      %v1047 = vadd.f32 0.0, %v1046
      %1048 = vmatmul.bf16.gmra.mxu0 %v719
      %v1049 = vpop.f32.mrf.mxu0
      %v1050 = vadd.f32 0.0, %v1049
      %v1051 = vpop.f32.mrf.mxu0
      %v1052 = vadd.f32 0.0, %v1051
      %1053 = vmatmul.bf16.gmra.mxu0 %v723
      %v1054 = vpop.f32.mrf.mxu0
      %v1055 = vadd.f32 0.0, %v1054
      %v1056 = vpop.f32.mrf.mxu0
      %v1057 = vadd.f32 0.0, %v1056
      %1058 = vmatmul.bf16.gmra.mxu0 %v727
      %v1059 = vpop.f32.mrf.mxu0
      %v1060 = vadd.f32 0.0, %v1059
      %v1061 = vpop.f32.mrf.mxu0
      %v1062 = vadd.f32 0.0, %v1061
      %1063 = vmatmul.bf16.gmra.mxu0 %v731
      %v1064 = vpop.f32.mrf.mxu0
      %v1065 = vadd.f32 0.0, %v1064
      %v1066 = vpop.f32.mrf.mxu0
      %v1067 = vadd.f32 0.0, %v1066
      %1068 = vmatmul.bf16.gmra.mxu0 %v735
      %v1069 = vpop.f32.mrf.mxu0
      %v1070 = vadd.f32 0.0, %v1069
      %v1071 = vpop.f32.mrf.mxu0
      %v1072 = vadd.f32 0.0, %v1071
      %1073 = vmatmul.bf16.gmra.mxu0 %v739
      %v1074 = vpop.f32.mrf.mxu0
      %v1075 = vadd.f32 0.0, %v1074
      %v1076 = vpop.f32.mrf.mxu0
      %v1077 = vadd.f32 0.0, %v1076
      %1078 = vmatmul.bf16.gmra.mxu0 %v743
      %v1079 = vpop.f32.mrf.mxu0
      %v1080 = vadd.f32 0.0, %v1079
      %v1081 = vpop.f32.mrf.mxu0
      %v1082 = vadd.f32 0.0, %v1081
      %1083 = vmatmul.bf16.gmra.mxu0 %v747
      %v1084 = vpop.f32.mrf.mxu0
      %v1085 = vadd.f32 0.0, %v1084
      %v1086 = vpop.f32.mrf.mxu0
      %v1087 = vadd.f32 0.0, %v1086
      %1088 = vmatmul.bf16.gmra.mxu0 %v751
      %v1089 = vpop.f32.mrf.mxu0
      %v1090 = vadd.f32 0.0, %v1089
      %v1091 = vpop.f32.mrf.mxu0
      %v1092 = vadd.f32 0.0, %v1091
      %1093 = vmatmul.bf16.gmra.mxu0 %v755
      %v1094 = vpop.f32.mrf.mxu0
      %v1095 = vadd.f32 0.0, %v1094
      %v1096 = vpop.f32.mrf.mxu0
      %v1097 = vadd.f32 0.0, %v1096
      %1098 = vmatmul.bf16.gmra.mxu0 %v759
      %v1099 = vpop.f32.mrf.mxu0
      %v1100 = vadd.f32 0.0, %v1099
      %v1101 = vpop.f32.mrf.mxu0
      %v1102 = vadd.f32 0.0, %v1101
      %1103 = vmatmul.bf16.gmra.mxu0 %v763
      %v1104 = vpop.f32.mrf.mxu0
      %v1105 = vadd.f32 0.0, %v1104
      %v1106 = vpop.f32.mrf.mxu0
      %v1107 = vadd.f32 0.0, %v1106
      %1108 = vmatmul.bf16.gmra.mxu0 %v767
      %v1109 = vpop.f32.mrf.mxu0
      %v1110 = vadd.f32 0.0, %v1109
      %v1111 = vpop.f32.mrf.mxu0
      %v1112 = vadd.f32 0.0, %v1111
      %1113 = vmatmul.bf16.gmra.mxu0 %v771
      %v1114 = vpop.f32.mrf.mxu0
      %v1115 = vadd.f32 0.0, %v1114
      %v1116 = vpop.f32.mrf.mxu0
      %v1117 = vadd.f32 0.0, %v1116
      %1118 = vmatmul.bf16.gmra.mxu0 %v775
      %v1119 = vpop.f32.mrf.mxu0
      %v1120 = vadd.f32 0.0, %v1119
      %v1121 = vpop.f32.mrf.mxu0
      %v1122 = vadd.f32 0.0, %v1121
      %1123 = vdwg.mxu0
      %1124 = vmatpush.bf16.msra.mxu0 %v986
      %1125 = vmatpush.bf16.msra.mxu0 %v985
      %1126 = vmatpush.bf16.msra.mxu0 %v984
      %1127 = vmatpush.bf16.msra.mxu0 %v983
      %1128 = vmatpush.bf16.msra.mxu0 %v982
      %1129 = vmatpush.bf16.msra.mxu0 %v981
      %1130 = vmatpush.bf16.msra.mxu0 %v980
      %1131 = vmatpush.bf16.msra.mxu0 %v979
      %1132 = vmatmul.bf16.gmra.mxu0 %v716
      %v1133 = vpop.f32.mrf.mxu0
      %v1134 = vadd.f32 %v1045, %v1133
      %v1135 = vpop.f32.mrf.mxu0
      %v1136 = vadd.f32 %v1047, %v1135
      %1137 = vmatmul.bf16.gmra.mxu0 %v720
      %v1138 = vpop.f32.mrf.mxu0
      %v1139 = vadd.f32 %v1050, %v1138
      %v1140 = vpop.f32.mrf.mxu0
      %v1141 = vadd.f32 %v1052, %v1140
      %1142 = vmatmul.bf16.gmra.mxu0 %v724
      %v1143 = vpop.f32.mrf.mxu0
      %v1144 = vadd.f32 %v1055, %v1143
      %v1145 = vpop.f32.mrf.mxu0
      %v1146 = vadd.f32 %v1057, %v1145
      %1147 = vmatmul.bf16.gmra.mxu0 %v728
      %v1148 = vpop.f32.mrf.mxu0
      %v1149 = vadd.f32 %v1060, %v1148
      %v1150 = vpop.f32.mrf.mxu0
      %v1151 = vadd.f32 %v1062, %v1150
      %1152 = vmatmul.bf16.gmra.mxu0 %v732
      %v1153 = vpop.f32.mrf.mxu0
      %v1154 = vadd.f32 %v1065, %v1153
      %v1155 = vpop.f32.mrf.mxu0
      %v1156 = vadd.f32 %v1067, %v1155
      %1157 = vmatmul.bf16.gmra.mxu0 %v736
      %v1158 = vpop.f32.mrf.mxu0
      %v1159 = vadd.f32 %v1070, %v1158
      %v1160 = vpop.f32.mrf.mxu0
      %v1161 = vadd.f32 %v1072, %v1160
      %1162 = vmatmul.bf16.gmra.mxu0 %v740
      %v1163 = vpop.f32.mrf.mxu0
      %v1164 = vadd.f32 %v1075, %v1163
      %v1165 = vpop.f32.mrf.mxu0
      %v1166 = vadd.f32 %v1077, %v1165
      %1167 = vmatmul.bf16.gmra.mxu0 %v744
      %v1168 = vpop.f32.mrf.mxu0
      %v1169 = vadd.f32 %v1080, %v1168
      %v1170 = vpop.f32.mrf.mxu0
      %v1171 = vadd.f32 %v1082, %v1170
      %1172 = vmatmul.bf16.gmra.mxu0 %v748
      %v1173 = vpop.f32.mrf.mxu0
      %v1174 = vadd.f32 %v1085, %v1173
      %v1175 = vpop.f32.mrf.mxu0
      %v1176 = vadd.f32 %v1087, %v1175
      %1177 = vmatmul.bf16.gmra.mxu0 %v752
      %v1178 = vpop.f32.mrf.mxu0
      %v1179 = vadd.f32 %v1090, %v1178
      %v1180 = vpop.f32.mrf.mxu0
      %v1181 = vadd.f32 %v1092, %v1180
      %1182 = vmatmul.bf16.gmra.mxu0 %v756
      %v1183 = vpop.f32.mrf.mxu0
      %v1184 = vadd.f32 %v1095, %v1183
      %v1185 = vpop.f32.mrf.mxu0
      %v1186 = vadd.f32 %v1097, %v1185
      %1187 = vmatmul.bf16.gmra.mxu0 %v760
      %v1188 = vpop.f32.mrf.mxu0
      %v1189 = vadd.f32 %v1100, %v1188
      %v1190 = vpop.f32.mrf.mxu0
      %v1191 = vadd.f32 %v1102, %v1190
      %1192 = vmatmul.bf16.gmra.mxu0 %v764
      %v1193 = vpop.f32.mrf.mxu0
      %v1194 = vadd.f32 %v1105, %v1193
      %v1195 = vpop.f32.mrf.mxu0
      %v1196 = vadd.f32 %v1107, %v1195
      %1197 = vmatmul.bf16.gmra.mxu0 %v768
      %v1198 = vpop.f32.mrf.mxu0
      %v1199 = vadd.f32 %v1110, %v1198
      %v1200 = vpop.f32.mrf.mxu0
      %v1201 = vadd.f32 %v1112, %v1200
      %1202 = vmatmul.bf16.gmra.mxu0 %v772
      %v1203 = vpop.f32.mrf.mxu0
      %v1204 = vadd.f32 %v1115, %v1203
      %v1205 = vpop.f32.mrf.mxu0
      %v1206 = vadd.f32 %v1117, %v1205
      %1207 = vmatmul.bf16.gmra.mxu0 %v776
      %v1208 = vpop.f32.mrf.mxu0
      %v1209 = vadd.f32 %v1120, %v1208
      %v1210 = vpop.f32.mrf.mxu0
      %v1211 = vadd.f32 %v1122, %v1210
      %1212 = vdwg.mxu0
      %1213 = vmatpush.bf16.msra.mxu0 %v994
      %1214 = vmatpush.bf16.msra.mxu0 %v993
      %1215 = vmatpush.bf16.msra.mxu0 %v992
      %1216 = vmatpush.bf16.msra.mxu0 %v991
      %1217 = vmatpush.bf16.msra.mxu0 %v990
      %1218 = vmatpush.bf16.msra.mxu0 %v989
      %1219 = vmatpush.bf16.msra.mxu0 %v988
      %1220 = vmatpush.bf16.msra.mxu0 %v987
      %1221 = vmatmul.bf16.gmra.mxu0 %v717
      %v1222 = vpop.f32.mrf.mxu0
      %v1223 = vadd.f32 %v1134, %v1222
      %v1224 = vpop.f32.mrf.mxu0
      %v1225 = vadd.f32 %v1136, %v1224
      %1226 = vmatmul.bf16.gmra.mxu0 %v721
      %v1227 = vpop.f32.mrf.mxu0
      %v1228 = vadd.f32 %v1139, %v1227
      %v1229 = vpop.f32.mrf.mxu0
      %v1230 = vadd.f32 %v1141, %v1229
      %1231 = vmatmul.bf16.gmra.mxu0 %v725
      %v1232 = vpop.f32.mrf.mxu0
      %v1233 = vadd.f32 %v1144, %v1232
      %v1234 = vpop.f32.mrf.mxu0
      %v1235 = vadd.f32 %v1146, %v1234
      %1236 = vmatmul.bf16.gmra.mxu0 %v729
      %v1237 = vpop.f32.mrf.mxu0
      %v1238 = vadd.f32 %v1149, %v1237
      %v1239 = vpop.f32.mrf.mxu0
      %v1240 = vadd.f32 %v1151, %v1239
      %1241 = vmatmul.bf16.gmra.mxu0 %v733
      %v1242 = vpop.f32.mrf.mxu0
      %v1243 = vadd.f32 %v1154, %v1242
      %v1244 = vpop.f32.mrf.mxu0
      %v1245 = vadd.f32 %v1156, %v1244
      %1246 = vmatmul.bf16.gmra.mxu0 %v737
      %v1247 = vpop.f32.mrf.mxu0
      %v1248 = vadd.f32 %v1159, %v1247
      %v1249 = vpop.f32.mrf.mxu0
      %v1250 = vadd.f32 %v1161, %v1249
      %1251 = vmatmul.bf16.gmra.mxu0 %v741
      %v1252 = vpop.f32.mrf.mxu0
      %v1253 = vadd.f32 %v1164, %v1252
      %v1254 = vpop.f32.mrf.mxu0
      %v1255 = vadd.f32 %v1166, %v1254
      %1256 = vmatmul.bf16.gmra.mxu0 %v745
      %v1257 = vpop.f32.mrf.mxu0
      %v1258 = vadd.f32 %v1169, %v1257
      %v1259 = vpop.f32.mrf.mxu0
      %v1260 = vadd.f32 %v1171, %v1259
      %1261 = vmatmul.bf16.gmra.mxu0 %v749
      %v1262 = vpop.f32.mrf.mxu0
      %v1263 = vadd.f32 %v1174, %v1262
      %v1264 = vpop.f32.mrf.mxu0
      %v1265 = vadd.f32 %v1176, %v1264
      %1266 = vmatmul.bf16.gmra.mxu0 %v753
      %v1267 = vpop.f32.mrf.mxu0
      %v1268 = vadd.f32 %v1179, %v1267
      %v1269 = vpop.f32.mrf.mxu0
      %v1270 = vadd.f32 %v1181, %v1269
      %1271 = vmatmul.bf16.gmra.mxu0 %v757
      %v1272 = vpop.f32.mrf.mxu0
      %v1273 = vadd.f32 %v1184, %v1272
      %v1274 = vpop.f32.mrf.mxu0
      %v1275 = vadd.f32 %v1186, %v1274
      %1276 = vmatmul.bf16.gmra.mxu0 %v761
      %v1277 = vpop.f32.mrf.mxu0
      %v1278 = vadd.f32 %v1189, %v1277
      %v1279 = vpop.f32.mrf.mxu0
      %v1280 = vadd.f32 %v1191, %v1279
      %1281 = vmatmul.bf16.gmra.mxu0 %v765
      %v1282 = vpop.f32.mrf.mxu0
      %v1283 = vadd.f32 %v1194, %v1282
      %v1284 = vpop.f32.mrf.mxu0
      %v1285 = vadd.f32 %v1196, %v1284
      %1286 = vmatmul.bf16.gmra.mxu0 %v769
      %v1287 = vpop.f32.mrf.mxu0
      %v1288 = vadd.f32 %v1199, %v1287
      %v1289 = vpop.f32.mrf.mxu0
      %v1290 = vadd.f32 %v1201, %v1289
      %1291 = vmatmul.bf16.gmra.mxu0 %v773
      %v1292 = vpop.f32.mrf.mxu0
      %v1293 = vadd.f32 %v1204, %v1292
      %v1294 = vpop.f32.mrf.mxu0
      %v1295 = vadd.f32 %v1206, %v1294
      %1296 = vmatmul.bf16.gmra.mxu0 %v777
      %v1297 = vpop.f32.mrf.mxu0
      %v1298 = vadd.f32 %v1209, %v1297
      %v1299 = vpop.f32.mrf.mxu0
      %v1300 = vadd.f32 %v1211, %v1299
      %1301 = vdwg.mxu0
      %1302 = vmatpush.bf16.msra.mxu0 %v1002
      %1303 = vmatpush.bf16.msra.mxu0 %v1001
      %1304 = vmatpush.bf16.msra.mxu0 %v1000
      %1305 = vmatpush.bf16.msra.mxu0 %v999
      %1306 = vmatpush.bf16.msra.mxu0 %v998
      %1307 = vmatpush.bf16.msra.mxu0 %v997
      %1308 = vmatpush.bf16.msra.mxu0 %v996
      %1309 = vmatpush.bf16.msra.mxu0 %v995
      %1310 = vmatmul.bf16.gmra.mxu0 %v718
      %v1311 = vpop.f32.mrf.mxu0
      %v1312 = vadd.f32 %v1223, %v1311
      %v1313 = vpop.f32.mrf.mxu0
      %v1314 = vadd.f32 %v1225, %v1313
      %1315 = vmatmul.bf16.gmra.mxu0 %v722
      %v1316 = vpop.f32.mrf.mxu0
      %v1317 = vadd.f32 %v1228, %v1316
      %v1318 = vpop.f32.mrf.mxu0
      %v1319 = vadd.f32 %v1230, %v1318
      %1320 = vmatmul.bf16.gmra.mxu0 %v726
      %v1321 = vpop.f32.mrf.mxu0
      %v1322 = vadd.f32 %v1233, %v1321
      %v1323 = vpop.f32.mrf.mxu0
      %v1324 = vadd.f32 %v1235, %v1323
      %1325 = vmatmul.bf16.gmra.mxu0 %v730
      %v1326 = vpop.f32.mrf.mxu0
      %v1327 = vadd.f32 %v1238, %v1326
      %v1328 = vpop.f32.mrf.mxu0
      %v1329 = vadd.f32 %v1240, %v1328
      %1330 = vmatmul.bf16.gmra.mxu0 %v734
      %v1331 = vpop.f32.mrf.mxu0
      %v1332 = vadd.f32 %v1243, %v1331
      %v1333 = vpop.f32.mrf.mxu0
      %v1334 = vadd.f32 %v1245, %v1333
      %1335 = vmatmul.bf16.gmra.mxu0 %v738
      %v1336 = vpop.f32.mrf.mxu0
      %v1337 = vadd.f32 %v1248, %v1336
      %v1338 = vpop.f32.mrf.mxu0
      %v1339 = vadd.f32 %v1250, %v1338
      %1340 = vmatmul.bf16.gmra.mxu0 %v742
      %v1341 = vpop.f32.mrf.mxu0
      %v1342 = vadd.f32 %v1253, %v1341
      %v1343 = vpop.f32.mrf.mxu0
      %v1344 = vadd.f32 %v1255, %v1343
      %1345 = vmatmul.bf16.gmra.mxu0 %v746
      %v1346 = vpop.f32.mrf.mxu0
      %v1347 = vadd.f32 %v1258, %v1346
      %v1348 = vpop.f32.mrf.mxu0
      %v1349 = vadd.f32 %v1260, %v1348
      %1350 = vmatmul.bf16.gmra.mxu0 %v750
      %v1351 = vpop.f32.mrf.mxu0
      %v1352 = vadd.f32 %v1263, %v1351
      %v1353 = vpop.f32.mrf.mxu0
      %v1354 = vadd.f32 %v1265, %v1353
      %1355 = vmatmul.bf16.gmra.mxu0 %v754
      %v1356 = vpop.f32.mrf.mxu0
      %v1357 = vadd.f32 %v1268, %v1356
      %v1358 = vpop.f32.mrf.mxu0
      %v1359 = vadd.f32 %v1270, %v1358
      %1360 = vmatmul.bf16.gmra.mxu0 %v758
      %v1361 = vpop.f32.mrf.mxu0
      %v1362 = vadd.f32 %v1273, %v1361
      %v1363 = vpop.f32.mrf.mxu0
      %v1364 = vadd.f32 %v1275, %v1363
      %1365 = vmatmul.bf16.gmra.mxu0 %v762
      %v1366 = vpop.f32.mrf.mxu0
      %v1367 = vadd.f32 %v1278, %v1366
      %v1368 = vpop.f32.mrf.mxu0
      %v1369 = vadd.f32 %v1280, %v1368
      %1370 = vmatmul.bf16.gmra.mxu0 %v766
      %v1371 = vpop.f32.mrf.mxu0
      %v1372 = vadd.f32 %v1283, %v1371
      %v1373 = vpop.f32.mrf.mxu0
      %v1374 = vadd.f32 %v1285, %v1373
      %1375 = vmatmul.bf16.gmra.mxu0 %v770
      %v1376 = vpop.f32.mrf.mxu0
      %v1377 = vadd.f32 %v1288, %v1376
      %v1378 = vpop.f32.mrf.mxu0
      %v1379 = vadd.f32 %v1290, %v1378
      %1380 = vmatmul.bf16.gmra.mxu0 %v774
      %v1381 = vpop.f32.mrf.mxu0
      %v1382 = vadd.f32 %v1293, %v1381
      %v1383 = vpop.f32.mrf.mxu0
      %v1384 = vadd.f32 %v1295, %v1383
      %1385 = vmatmul.bf16.gmra.mxu0 %v778
      %v1386 = vpop.f32.mrf.mxu0
      %v1387 = vadd.f32 %v1298, %v1386
      %v1388 = vpop.f32.mrf.mxu0
      %v1389 = vadd.f32 %v1300, %v1388
      %1390 = vdwg.mxu0
      %v1391 = vadd.f32 %v363, %v1312
      %v1392 = vadd.f32 %v364, %v1314
      %v1393 = vadd.f32 %v365, %v1317
      %v1394 = vadd.f32 %v366, %v1319
      %v1395 = vadd.f32 %v367, %v1322
      %v1396 = vadd.f32 %v368, %v1324
      %v1397 = vadd.f32 %v369, %v1327
      %v1398 = vadd.f32 %v370, %v1329
      %v1399 = vadd.f32 %v371, %v1332
      %v1400 = vadd.f32 %v372, %v1334
      %v1401 = vadd.f32 %v373, %v1337
      %v1402 = vadd.f32 %v374, %v1339
      %v1403 = vadd.f32 %v375, %v1342
      %v1404 = vadd.f32 %v376, %v1344
      %v1405 = vadd.f32 %v377, %v1347
      %v1406 = vadd.f32 %v378, %v1349
      %v1407 = vadd.f32 %v379, %v1352
      %v1408 = vadd.f32 %v380, %v1354
      %v1409 = vadd.f32 %v381, %v1357
      %v1410 = vadd.f32 %v382, %v1359
      %v1411 = vadd.f32 %v383, %v1362
      %v1412 = vadd.f32 %v384, %v1364
      %v1413 = vadd.f32 %v385, %v1367
      %v1414 = vadd.f32 %v386, %v1369
      %v1415 = vadd.f32 %v387, %v1372
      %v1416 = vadd.f32 %v388, %v1374
      %v1417 = vadd.f32 %v389, %v1377
      %v1418 = vadd.f32 %v390, %v1379
      %v1419 = vadd.f32 %v391, %v1382
      %v1420 = vadd.f32 %v392, %v1384
      %v1421 = vadd.f32 %v393, %v1387
      %v1422 = vadd.f32 %v394, %v1389
      %1423 = vst [vmem:[#allocation2] sm:$0xff] %v1391
      %1424 = vst [vmem:[#allocation2 + $0x8] sm:$0xff] %v1392
      %1425 = vst [vmem:[#allocation2 + $0x10] sm:$0xff] %v1393
      %1426 = vst [vmem:[#allocation2 + $0x18] sm:$0xff] %v1394
      %1427 = vst [vmem:[#allocation2 + $0x20] sm:$0xff] %v1395
      %1428 = vst [vmem:[#allocation2 + $0x28] sm:$0xff] %v1396
      %1429 = vst [vmem:[#allocation2 + $0x30] sm:$0xff] %v1397
      %1430 = vst [vmem:[#allocation2 + $0x38] sm:$0xff] %v1398
      %1431 = vst [vmem:[#allocation2 + $0x40] sm:$0xff] %v1399
      %1432 = vst [vmem:[#allocation2 + $0x48] sm:$0xff] %v1400
      %1433 = vst [vmem:[#allocation2 + $0x50] sm:$0xff] %v1401
      %1434 = vst [vmem:[#allocation2 + $0x58] sm:$0xff] %v1402
      %1435 = vst [vmem:[#allocation2 + $0x60] sm:$0xff] %v1403
      %1436 = vst [vmem:[#allocation2 + $0x68] sm:$0xff] %v1404
      %1437 = vst [vmem:[#allocation2 + $0x70] sm:$0xff] %v1405
      %1438 = vst [vmem:[#allocation2 + $0x78] sm:$0xff] %v1406
      %1439 = vst [vmem:[#allocation2 + $0x80] sm:$0xff] %v1407
      %1440 = vst [vmem:[#allocation2 + $0x88] sm:$0xff] %v1408
      %1441 = vst [vmem:[#allocation2 + $0x90] sm:$0xff] %v1409
      %1442 = vst [vmem:[#allocation2 + $0x98] sm:$0xff] %v1410
      %1443 = vst [vmem:[#allocation2 + $0xa0] sm:$0xff] %v1411
      %1444 = vst [vmem:[#allocation2 + $0xa8] sm:$0xff] %v1412
      %1445 = vst [vmem:[#allocation2 + $0xb0] sm:$0xff] %v1413
      %1446 = vst [vmem:[#allocation2 + $0xb8] sm:$0xff] %v1414
      %1447 = vst [vmem:[#allocation2 + $0xc0] sm:$0xff] %v1415
      %1448 = vst [vmem:[#allocation2 + $0xc8] sm:$0xff] %v1416
      %1449 = vst [vmem:[#allocation2 + $0xd0] sm:$0xff] %v1417
      %1450 = vst [vmem:[#allocation2 + $0xd8] sm:$0xff] %v1418
      %1451 = vst [vmem:[#allocation2 + $0xe0] sm:$0xff] %v1419
      %1452 = vst [vmem:[#allocation2 + $0xe8] sm:$0xff] %v1420
      %1453 = vst [vmem:[#allocation2 + $0xf0] sm:$0xff] %v1421
      %1454 = vst [vmem:[#allocation2 + $0xf8] sm:$0xff] %v1422
      // Predicated region
      $region33: #{dcgan_generator_forward.15} parent=27 // pred_check
        %p1455 = pneg %p327
      $region34: #{dcgan_generator_forward.15} parent=27 // pred_check_branch
        %1457 = sbr.rel (%p1455) target = $region36
      $region35: #{dcgan_generator_forward.15} parent=27 // pred_region
        %v1458 = vld [vmem:[#allocation2] sm:$0xff]
        %v1459 = vld [vmem:[#allocation2 + $0x8] sm:$0xff]
        %v1460 = vld [vmem:[#allocation2 + $0x10] sm:$0xff]
        %v1461 = vld [vmem:[#allocation2 + $0x18] sm:$0xff]
        %v1462 = vld [vmem:[#allocation2 + $0x20] sm:$0xff]
        %v1463 = vld [vmem:[#allocation2 + $0x28] sm:$0xff]
        %v1464 = vld [vmem:[#allocation2 + $0x30] sm:$0xff]
        %v1465 = vld [vmem:[#allocation2 + $0x38] sm:$0xff]
        %v1466 = vld [vmem:[#allocation2 + $0x40] sm:$0xff]
        %v1467 = vld [vmem:[#allocation2 + $0x48] sm:$0xff]
        %v1468 = vld [vmem:[#allocation2 + $0x50] sm:$0xff]
        %v1469 = vld [vmem:[#allocation2 + $0x58] sm:$0xff]
        %v1470 = vld [vmem:[#allocation2 + $0x60] sm:$0xff]
        %v1471 = vld [vmem:[#allocation2 + $0x68] sm:$0xff]
        %v1472 = vld [vmem:[#allocation2 + $0x70] sm:$0xff]
        %v1473 = vld [vmem:[#allocation2 + $0x78] sm:$0xff]
        %v1474 = vld [vmem:[#allocation2 + $0x80] sm:$0xff]
        %v1475 = vld [vmem:[#allocation2 + $0x88] sm:$0xff]
        %v1476 = vld [vmem:[#allocation2 + $0x90] sm:$0xff]
        %v1477 = vld [vmem:[#allocation2 + $0x98] sm:$0xff]
        %v1478 = vld [vmem:[#allocation2 + $0xa0] sm:$0xff]
        %v1479 = vld [vmem:[#allocation2 + $0xa8] sm:$0xff]
        %v1480 = vld [vmem:[#allocation2 + $0xb0] sm:$0xff]
        %v1481 = vld [vmem:[#allocation2 + $0xb8] sm:$0xff]
        %v1482 = vld [vmem:[#allocation2 + $0xc0] sm:$0xff]
        %v1483 = vld [vmem:[#allocation2 + $0xc8] sm:$0xff]
        %v1484 = vld [vmem:[#allocation2 + $0xd0] sm:$0xff]
        %v1485 = vld [vmem:[#allocation2 + $0xd8] sm:$0xff]
        %v1486 = vld [vmem:[#allocation2 + $0xe0] sm:$0xff]
        %v1487 = vld [vmem:[#allocation2 + $0xe8] sm:$0xff]
        %v1488 = vld [vmem:[#allocation2 + $0xf0] sm:$0xff]
        %v1489 = vld [vmem:[#allocation2 + $0xf8] sm:$0xff]
        %v1490 = vpack.c.bf16 %v1458, %v1458
        %v1491 = vpack.c.bf16 %v1459, %v1459
        %v1492 = vpack.c.bf16 %v1460, %v1460
        %v1493 = vpack.c.bf16 %v1461, %v1461
        %v1494 = vpack.c.bf16 %v1462, %v1462
        %v1495 = vpack.c.bf16 %v1463, %v1463
        %v1496 = vpack.c.bf16 %v1464, %v1464
        %v1497 = vpack.c.bf16 %v1465, %v1465
        %v1498 = vpack.c.bf16 %v1466, %v1466
        %v1499 = vpack.c.bf16 %v1467, %v1467
        %v1500 = vpack.c.bf16 %v1468, %v1468
        %v1501 = vpack.c.bf16 %v1469, %v1469
        %v1502 = vpack.c.bf16 %v1470, %v1470
        %v1503 = vpack.c.bf16 %v1471, %v1471
        %v1504 = vpack.c.bf16 %v1472, %v1472
        %v1505 = vpack.c.bf16 %v1473, %v1473
        %v1506 = vpack.c.bf16 %v1474, %v1474
        %v1507 = vpack.c.bf16 %v1475, %v1475
        %v1508 = vpack.c.bf16 %v1476, %v1476
        %v1509 = vpack.c.bf16 %v1477, %v1477
        %v1510 = vpack.c.bf16 %v1478, %v1478
        %v1511 = vpack.c.bf16 %v1479, %v1479
        %v1512 = vpack.c.bf16 %v1480, %v1480
        %v1513 = vpack.c.bf16 %v1481, %v1481
        %v1514 = vpack.c.bf16 %v1482, %v1482
        %v1515 = vpack.c.bf16 %v1483, %v1483
        %v1516 = vpack.c.bf16 %v1484, %v1484
        %v1517 = vpack.c.bf16 %v1485, %v1485
        %v1518 = vpack.c.bf16 %v1486, %v1486
        %v1519 = vpack.c.bf16 %v1487, %v1487
        %v1520 = vpack.c.bf16 %v1488, %v1488
        %v1521 = vpack.c.bf16 %v1489, %v1489
        %1522 = vst [vmem:[%s314] sm:$0xf] %v1490
        %1523 = vst [vmem:[%s314 + $0x4] sm:$0xf] %v1491
        %1524 = vst [vmem:[%s314 + $0x8] sm:$0xf] %v1492
        %1525 = vst [vmem:[%s314 + $0xc] sm:$0xf] %v1493
        %1526 = vst [vmem:[%s314 + $0x10] sm:$0xf] %v1494
        %1527 = vst [vmem:[%s314 + $0x14] sm:$0xf] %v1495
        %1528 = vst [vmem:[%s314 + $0x18] sm:$0xf] %v1496
        %1529 = vst [vmem:[%s314 + $0x1c] sm:$0xf] %v1497
        %1530 = vst [vmem:[%s314 + $0x20] sm:$0xf] %v1498
        %1531 = vst [vmem:[%s314 + $0x24] sm:$0xf] %v1499
        %1532 = vst [vmem:[%s314 + $0x28] sm:$0xf] %v1500
        %1533 = vst [vmem:[%s314 + $0x2c] sm:$0xf] %v1501
        %1534 = vst [vmem:[%s314 + $0x30] sm:$0xf] %v1502
        %1535 = vst [vmem:[%s314 + $0x34] sm:$0xf] %v1503
        %1536 = vst [vmem:[%s314 + $0x38] sm:$0xf] %v1504
        %1537 = vst [vmem:[%s314 + $0x3c] sm:$0xf] %v1505
        %1538 = vst [vmem:[%s314 + $0x40] sm:$0xf] %v1506
        %1539 = vst [vmem:[%s314 + $0x44] sm:$0xf] %v1507
        %1540 = vst [vmem:[%s314 + $0x48] sm:$0xf] %v1508
        %1541 = vst [vmem:[%s314 + $0x4c] sm:$0xf] %v1509
        %1542 = vst [vmem:[%s314 + $0x50] sm:$0xf] %v1510
        %1543 = vst [vmem:[%s314 + $0x54] sm:$0xf] %v1511
        %1544 = vst [vmem:[%s314 + $0x58] sm:$0xf] %v1512
        %1545 = vst [vmem:[%s314 + $0x5c] sm:$0xf] %v1513
        %1546 = vst [vmem:[%s314 + $0x60] sm:$0xf] %v1514
        %1547 = vst [vmem:[%s314 + $0x64] sm:$0xf] %v1515
        %1548 = vst [vmem:[%s314 + $0x68] sm:$0xf] %v1516
        %1549 = vst [vmem:[%s314 + $0x6c] sm:$0xf] %v1517
        %1550 = vst [vmem:[%s314 + $0x70] sm:$0xf] %v1518
        %1551 = vst [vmem:[%s314 + $0x74] sm:$0xf] %v1519
        %1552 = vst [vmem:[%s314 + $0x78] sm:$0xf] %v1520
        %1553 = vst [vmem:[%s314 + $0x7c] sm:$0xf] %v1521
        %v1554 = vadd.f32 %v1458, %v1459
        %v1555 = vadd.f32 %v1554, %v1460
        %v1556 = vadd.f32 %v1555, %v1461
        %v1557 = vadd.f32 %v1556, %v1462
        %v1558 = vadd.f32 %v1557, %v1463
        %v1559 = vadd.f32 %v1558, %v1464
        %v1560 = vadd.f32 %v1559, %v1465
        %v1561 = vadd.f32 %v1560, %v1466
        %v1562 = vadd.f32 %v1561, %v1467
        %v1563 = vadd.f32 %v1562, %v1468
        %v1564 = vadd.f32 %v1563, %v1469
        %v1565 = vadd.f32 %v1564, %v1470
        %v1566 = vadd.f32 %v1565, %v1471
        %v1567 = vadd.f32 %v1566, %v1472
        %v1568 = vadd.f32 %v1567, %v1473
        %v1569 = vadd.f32 %v1568, %v1474
        %v1570 = vadd.f32 %v1569, %v1475
        %v1571 = vadd.f32 %v1570, %v1476
        %v1572 = vadd.f32 %v1571, %v1477
        %v1573 = vadd.f32 %v1572, %v1478
        %v1574 = vadd.f32 %v1573, %v1479
        %v1575 = vadd.f32 %v1574, %v1480
        %v1576 = vadd.f32 %v1575, %v1481
        %v1577 = vadd.f32 %v1576, %v1482
        %v1578 = vadd.f32 %v1577, %v1483
        %v1579 = vadd.f32 %v1578, %v1484
        %v1580 = vadd.f32 %v1579, %v1485
        %v1581 = vadd.f32 %v1580, %v1486
        %v1582 = vadd.f32 %v1581, %v1487
        %v1583 = vadd.f32 %v1582, %v1488
        %v1584 = vadd.f32 %v1583, %v1489
        %v1585 = vrot.slane %v1584, 4
        %v1586 = vadd.f32 %v1584, %v1585
        %v1587 = vrot.slane %v1586, 2
        %v1588 = vadd.f32 %v1586, %v1587
        %v1589 = vrot.slane %v1588, 1
        %v1590 = vadd.f32 %v1588, %v1589
        %v1591 = vmul.f32 %v1458, %v1458
        %v1592 = vmul.f32 %v1459, %v1459
        %v1593 = vmul.f32 %v1460, %v1460
        %v1594 = vmul.f32 %v1461, %v1461
        %v1595 = vmul.f32 %v1462, %v1462
        %v1596 = vmul.f32 %v1463, %v1463
        %v1597 = vmul.f32 %v1464, %v1464
        %v1598 = vmul.f32 %v1465, %v1465
        %v1599 = vmul.f32 %v1466, %v1466
        %v1600 = vmul.f32 %v1467, %v1467
        %v1601 = vmul.f32 %v1468, %v1468
        %v1602 = vmul.f32 %v1469, %v1469
        %v1603 = vmul.f32 %v1470, %v1470
        %v1604 = vmul.f32 %v1471, %v1471
        %v1605 = vmul.f32 %v1472, %v1472
        %v1606 = vmul.f32 %v1473, %v1473
        %v1607 = vmul.f32 %v1474, %v1474
        %v1608 = vmul.f32 %v1475, %v1475
        %v1609 = vmul.f32 %v1476, %v1476
        %v1610 = vmul.f32 %v1477, %v1477
        %v1611 = vmul.f32 %v1478, %v1478
        %v1612 = vmul.f32 %v1479, %v1479
        %v1613 = vmul.f32 %v1480, %v1480
        %v1614 = vmul.f32 %v1481, %v1481
        %v1615 = vmul.f32 %v1482, %v1482
        %v1616 = vmul.f32 %v1483, %v1483
        %v1617 = vmul.f32 %v1484, %v1484
        %v1618 = vmul.f32 %v1485, %v1485
        %v1619 = vmul.f32 %v1486, %v1486
        %v1620 = vmul.f32 %v1487, %v1487
        %v1621 = vmul.f32 %v1488, %v1488
        %v1622 = vmul.f32 %v1489, %v1489
        %v1623 = vadd.f32 %v1591, %v1592
        %v1624 = vadd.f32 %v1623, %v1593
        %v1625 = vadd.f32 %v1624, %v1594
        %v1626 = vadd.f32 %v1625, %v1595
        %v1627 = vadd.f32 %v1626, %v1596
        %v1628 = vadd.f32 %v1627, %v1597
        %v1629 = vadd.f32 %v1628, %v1598
        %v1630 = vadd.f32 %v1629, %v1599
        %v1631 = vadd.f32 %v1630, %v1600
        %v1632 = vadd.f32 %v1631, %v1601
        %v1633 = vadd.f32 %v1632, %v1602
        %v1634 = vadd.f32 %v1633, %v1603
        %v1635 = vadd.f32 %v1634, %v1604
        %v1636 = vadd.f32 %v1635, %v1605
        %v1637 = vadd.f32 %v1636, %v1606
        %v1638 = vadd.f32 %v1637, %v1607
        %v1639 = vadd.f32 %v1638, %v1608
        %v1640 = vadd.f32 %v1639, %v1609
        %v1641 = vadd.f32 %v1640, %v1610
        %v1642 = vadd.f32 %v1641, %v1611
        %v1643 = vadd.f32 %v1642, %v1612
        %v1644 = vadd.f32 %v1643, %v1613
        %v1645 = vadd.f32 %v1644, %v1614
        %v1646 = vadd.f32 %v1645, %v1615
        %v1647 = vadd.f32 %v1646, %v1616
        %v1648 = vadd.f32 %v1647, %v1617
        %v1649 = vadd.f32 %v1648, %v1618
        %v1650 = vadd.f32 %v1649, %v1619
        %v1651 = vadd.f32 %v1650, %v1620
        %v1652 = vadd.f32 %v1651, %v1621
        %v1653 = vadd.f32 %v1652, %v1622
        %v1654 = vrot.slane %v1653, 4
        %v1655 = vadd.f32 %v1653, %v1654
        %v1656 = vrot.slane %v1655, 2
        %v1657 = vadd.f32 %v1655, %v1656
        %v1658 = vrot.slane %v1657, 1
        %v1659 = vadd.f32 %v1657, %v1658
        %vm1660 = vcmask 1040384
        %v1661 = vsel %vm1660, %v1590, %v1659
        %vm1662 = vcmask 1041408
        %v1663 = vsel %vm1662, %v1661, 0.0
        %1664 = vst [vmem:[%s326] sm:$0xff] %v1663
      $region36: #{dcgan_generator_forward.15} parent=27 // pred_fallthru
        _
      %s1665 = smul.u32 32, %s22
      %p1666 = scmp.lt.s32.totalorder %s21, 3
      %s1667 = scalar_select %p1666, %s21, 3
      %p1668 = scmp.lt.s32.totalorder %s1665, 63
      %s1669 = scalar_select %p1668, %s1665, 63
      %p1670 = scmp.lt.s32.totalorder %s23, 0
      %s1671 = scalar_select %p1670, %s23, 0
      %s1672 = sadd.s32 %s1671, %s1669
      %s1673 = smul.addr %s1667, 64
      %s1674 = sadd.s32 %s1672, %s1673
      %s1675 = smul.addr %s1674, 4
      %s1676 = scalar_lea.vmem %s2, %s1675
      %p1677 = scmp.lt.s32.totalorder %s21, 3
      %s1678 = scalar_select %p1677, %s21, 3
      %p1679 = scmp.lt.s32.totalorder %s22, 1
      %s1680 = scalar_select %p1679, %s22, 1
      %p1681 = scmp.lt.s32.totalorder %s23, 0
      %s1682 = scalar_select %p1681, %s23, 0
      %s1683 = sadd.s32 %s1682, %s1680
      %s1684 = smul.addr %s1678, 2
      %s1685 = sadd.s32 %s1683, %s1684
      %s1686 = smul.addr %s1685, 8
      %s1687 = scalar_lea.vmem %s3, %s1686
      // Predicated region
      $region37: #{dcgan_generator_forward.15} parent=27 // pred_check
        %p1688 = pneg %p123
      $region38: #{dcgan_generator_forward.15} parent=27 // pred_check_branch
        %1690 = sbr.rel (%p1688) target = $region40
      $region39: #{dcgan_generator_forward.15} parent=27 // pred_region
        %s1691 = smul.u32 32, %s22
      $region40: #{dcgan_generator_forward.15} parent=27 // pred_fallthru
        _
      // Predicated region
      $region41: #{dcgan_generator_forward.15} parent=27 // pred_check
        %p1692 = pneg %p153
      $region42: #{dcgan_generator_forward.15} parent=27 // pred_check_branch
        %1694 = sbr.rel (%p1692) target = $region44
      $region43: #{dcgan_generator_forward.15} parent=27 // pred_region
        _
      $region44: #{dcgan_generator_forward.15} parent=27 // pred_fallthru
        _
    $region28: #{dcgan_generator_forward.15} parent=5 // pred_fallthru
      _
    %p1695 = scmp.le.s32.totalorder 2, %s10
    // Predicated region
    $region45: #{dcgan_generator_forward.15} parent=5 // pred_check
      %p1696 = pneg %p1695
    $region46: #{dcgan_generator_forward.15} parent=5 // pred_check_branch
      %1698 = sbr.rel (%p1696) target = $region48
    $region47: #{dcgan_generator_forward.15} parent=5 // pred_region
      %s1699 = ssub.s32 %s10, 2
      // Predicated region
      $region49: #{dcgan_generator_forward.15} parent=47 // pred_check
        %p1700 = pneg %p129
      $region50: #{dcgan_generator_forward.15} parent=47 // pred_check_branch
        %1702 = sbr.rel (%p1700) target = $region52
      $region51: #{dcgan_generator_forward.15} parent=47 // pred_region
        %s1703 = smul.u32 32, %s26
        %p1704 = scmp.lt.s32.totalorder %s25, 3
        %s1705 = scalar_select %p1704, %s25, 3
        %p1706 = scmp.lt.s32.totalorder %s1703, 63
        %s1707 = scalar_select %p1706, %s1703, 63
        %p1708 = scmp.lt.s32.totalorder %s27, 0
        %s1709 = scalar_select %p1708, %s27, 0
        %s1710 = sadd.s32 %s1709, %s1707
        %s1711 = smul.addr %s1705, 64
        %s1712 = sadd.s32 %s1710, %s1711
        %s1713 = smul.addr %s1712, 4
        %s1714 = scalar_lea.vmem %s2, %s1713
      $region52: #{dcgan_generator_forward.15} parent=47 // pred_fallthru
        _
      // Predicated region
      $region53: #{dcgan_generator_forward.15} parent=47 // pred_check
        %p1715 = pneg %p159
      $region54: #{dcgan_generator_forward.15} parent=47 // pred_check_branch
        %1717 = sbr.rel (%p1715) target = $region56
      $region55: #{dcgan_generator_forward.15} parent=47 // pred_region
        %p1718 = scmp.lt.s32.totalorder %s25, 3
        %s1719 = scalar_select %p1718, %s25, 3
        %p1720 = scmp.lt.s32.totalorder %s26, 1
        %s1721 = scalar_select %p1720, %s26, 1
        %p1722 = scmp.lt.s32.totalorder %s27, 0
        %s1723 = scalar_select %p1722, %s27, 0
        %s1724 = sadd.s32 %s1723, %s1721
        %s1725 = smul.addr %s1719, 2
        %s1726 = sadd.s32 %s1724, %s1725
        %s1727 = smul.addr %s1726, 8
        %s1728 = scalar_lea.vmem %s3, %s1727
      $region56: #{dcgan_generator_forward.15} parent=47 // pred_fallthru
        _
    $region48: #{dcgan_generator_forward.15} parent=5 // pred_fallthru
      _
  $region6: #{dcgan_generator_forward.15} parent=0 // loop_footer
    %s14 = sadd.s32 1, %s10
  $region7: #{dcgan_generator_forward.15} parent=0 // loop_footer_branch
    %9 = sbr.rel target = $region3
  $region8: #{dcgan_generator_forward.15} parent=0 // loop_exit
    _

// kernel: dcgan_generator_forward.16
$region0: #{dcgan_generator_forward.16}
  #allocation0 [shape = 'u32[]', space=smem, size = 0x4, offset = 0x4, fixed_abs, tag = 'smem constant byte address 0x4 - core index']
  #allocation1 [shape = 'u32[72,128]{1,0:T(1,128)}', space=vmem, size = 0x9000, scoped, tag = 'internal scratch']
  %s0 = inlined_call_operand.vmem [shape: bf16[2048,128], index: 0, kind: input, shape index: {}]
  %s1 = inlined_call_operand.vmem [shape: f32[1,128], index: 1, kind: input, shape index: {}]
  %s2 = inlined_call_operand.vmem [shape: f32[1,128], index: 2, kind: input, shape index: {}]
  %s3 = inlined_call_operand.vmem [shape: bf16[2048,128], index: 3, kind: output, shape index: {}]
  %s4 = sld [smem:[#allocation0]]
  $region45: #{dcgan_generator_forward.16} parent=0
    _
  %s6 = ssub.s32 1, %s4
  %s7 = scalar_select 0, %s6, %s4
  loop: start=0, step=1, limit=6
  $region2: #{dcgan_generator_forward.16} parent=0 // loop_pre_header
    _
  $region3: #{dcgan_generator_forward.16} parent=0 // loop_header
    %s9 = sphi 0, %s13
    %p10 = scmp.ge.s32.totalorder %s9, 6
    %s19 = sphi 0, %s21
    %s22 = sphi 0, %s19
    %s23 = sphi 0, %s22
    %s39 = sphi 0, %s23
    %s43 = sphi 0, %s43
    %s45 = sphi 0, %s43
    %s46 = sphi 0, %s45
    %s60 = sphi 0, %s46
    %s64 = sphi 0, %s64
    %s66 = sphi 0, %s64
    %s67 = sphi 0, %s66
    %s81 = sphi 0, %s67
    %s87 = sphi 0, %s89
    %s90 = sphi 0, %s87
    %s91 = sphi 0, %s90
    %s107 = sphi 0, %s91
  $region4: #{dcgan_generator_forward.16} parent=0 // loop_header_branch
    %12 = sbr.rel (%p10) target = $region8
  $region5: #{dcgan_generator_forward.16} parent=0 // loop_body
    %s14 = ssub.s32 %s9, 1
    %s15 = ssub.s32 %s9, 2
    %s16 = sadd.s32 %s9, 1
    %s17 = ssub.s32 %s9, %s16
    %p18 = scmp.eq.s32.totalorder %s17, 0
    %s20 = sadd.s32 %s19, 1
    %s21 = scalar_select %p18, %s19, %s20
    %p24 = pneg %p18
    %p25 = scmp.eq.s32.totalorder %s9, 3
    %p26 = por %p24, %p25
    %p27 = scmp.ne.s32.totalorder %s19, %s22
    %p28 = scmp.eq.s32.totalorder %s9, 0
    %p29 = por %p27, %p28
    %p30 = scmp.ne.s32.totalorder %s19, %s22
    %p31 = scmp.eq.s32.totalorder %s14, 3
    %p32 = por %p30, %p31
    %p33 = scmp.ne.s32.totalorder %s22, %s23
    %p34 = scmp.eq.s32.totalorder %s14, 0
    %p35 = por %p33, %p34
    %p36 = scmp.ne.s32.totalorder %s22, %s23
    %p37 = scmp.eq.s32.totalorder %s15, 3
    %p38 = por %p36, %p37
    %p40 = scmp.ne.s32.totalorder %s23, %s39
    %p41 = scmp.eq.s32.totalorder %s15, 0
    %p42 = por %p40, %p41
    %s44 = sadd.s32 %s43, 1
    %p47 = scmp.eq.s32.totalorder %s9, 3
    %p48 = scmp.ne.s32.totalorder %s43, %s45
    %p49 = scmp.eq.s32.totalorder %s9, 0
    %p50 = por %p48, %p49
    %p51 = scmp.ne.s32.totalorder %s43, %s45
    %p52 = scmp.eq.s32.totalorder %s14, 3
    %p53 = por %p51, %p52
    %p54 = scmp.ne.s32.totalorder %s45, %s46
    %p55 = scmp.eq.s32.totalorder %s14, 0
    %p56 = por %p54, %p55
    %p57 = scmp.ne.s32.totalorder %s45, %s46
    %p58 = scmp.eq.s32.totalorder %s15, 3
    %p59 = por %p57, %p58
    %p61 = scmp.ne.s32.totalorder %s46, %s60
    %p62 = scmp.eq.s32.totalorder %s15, 0
    %p63 = por %p61, %p62
    %s65 = sadd.s32 %s64, 1
    %p68 = scmp.eq.s32.totalorder %s9, 3
    %p69 = scmp.ne.s32.totalorder %s64, %s66
    %p70 = scmp.eq.s32.totalorder %s9, 0
    %p71 = por %p69, %p70
    %p72 = scmp.ne.s32.totalorder %s64, %s66
    %p73 = scmp.eq.s32.totalorder %s14, 3
    %p74 = por %p72, %p73
    %p75 = scmp.ne.s32.totalorder %s66, %s67
    %p76 = scmp.eq.s32.totalorder %s14, 0
    %p77 = por %p75, %p76
    %p78 = scmp.ne.s32.totalorder %s66, %s67
    %p79 = scmp.eq.s32.totalorder %s15, 3
    %p80 = por %p78, %p79
    %p82 = scmp.ne.s32.totalorder %s67, %s81
    %p83 = scmp.eq.s32.totalorder %s15, 0
    %p84 = por %p82, %p83
    %s85 = ssub.s32 %s9, %s16
    %p86 = scmp.eq.s32.totalorder %s85, 0
    %s88 = sadd.s32 %s87, 1
    %s89 = scalar_select %p86, %s87, %s88
    %p92 = pneg %p86
    %p93 = scmp.eq.s32.totalorder %s9, 3
    %p94 = por %p92, %p93
    %p95 = scmp.ne.s32.totalorder %s87, %s90
    %p96 = scmp.eq.s32.totalorder %s9, 0
    %p97 = por %p95, %p96
    %p98 = scmp.ne.s32.totalorder %s87, %s90
    %p99 = scmp.eq.s32.totalorder %s14, 3
    %p100 = por %p98, %p99
    %p101 = scmp.ne.s32.totalorder %s90, %s91
    %p102 = scmp.eq.s32.totalorder %s14, 0
    %p103 = por %p101, %p102
    %p104 = scmp.ne.s32.totalorder %s90, %s91
    %p105 = scmp.eq.s32.totalorder %s15, 3
    %p106 = por %p104, %p105
    %p108 = scmp.ne.s32.totalorder %s91, %s107
    %p109 = scmp.eq.s32.totalorder %s15, 0
    %p110 = por %p108, %p109
    %p111 = scmp.le.s32.totalorder 1, %s9
    %p112 = scmp.lt.s32.totalorder %s9, 5
    %p113 = pnand %p111, %p112
    %p114 = pneg %p113
    // Predicated region
    $region9: #{dcgan_generator_forward.16} parent=5 // pred_check
      _
    $region10: #{dcgan_generator_forward.16} parent=5 // pred_check_branch
      %116 = sbr.rel (%p113) target = $region12
    $region11: #{dcgan_generator_forward.16} parent=5 // pred_region
      %s117 = ssub.s32 %s9, 1
      // Predicated region
      $region13: #{dcgan_generator_forward.16} parent=11 // pred_check
        %p118 = pneg %p56
      $region14: #{dcgan_generator_forward.16} parent=11 // pred_check_branch
        %120 = sbr.rel (%p118) target = $region16
      $region15: #{dcgan_generator_forward.16} parent=11 // pred_region
        _
      $region16: #{dcgan_generator_forward.16} parent=11 // pred_fallthru
        _
      // Predicated region
      $region17: #{dcgan_generator_forward.16} parent=11 // pred_check
        %p121 = pneg %p77
      $region18: #{dcgan_generator_forward.16} parent=11 // pred_check_branch
        %123 = sbr.rel (%p121) target = $region20
      $region19: #{dcgan_generator_forward.16} parent=11 // pred_region
        _
      $region20: #{dcgan_generator_forward.16} parent=11 // pred_fallthru
        _
    $region12: #{dcgan_generator_forward.16} parent=5 // pred_fallthru
      _
    %p124 = scmp.lt.s32.totalorder %s9, 4
    // Predicated region
    $region21: #{dcgan_generator_forward.16} parent=5 // pred_check
      %p125 = pneg %p124
    $region22: #{dcgan_generator_forward.16} parent=5 // pred_check_branch
      %127 = sbr.rel (%p125) target = $region24
    $region23: #{dcgan_generator_forward.16} parent=5 // pred_region
      // Predicated region
      $region25: #{dcgan_generator_forward.16} parent=23 // pred_check
        %p128 = pneg %p29
      $region26: #{dcgan_generator_forward.16} parent=23 // pred_check_branch
        %130 = sbr.rel (%p128) target = $region28
      $region27: #{dcgan_generator_forward.16} parent=23 // pred_region
        %s131 = smul.u32 64, %s9
        %p132 = scmp.lt.s32.totalorder %s131, 255
        %s133 = scalar_select %p132, %s131, 255
        %s134 = smul.addr %s133, 4
        %s135 = scalar_lea.vmem %s0, %s134
        %s136 = smul.u32 64, %s9
      $region28: #{dcgan_generator_forward.16} parent=23 // pred_fallthru
        _
    $region24: #{dcgan_generator_forward.16} parent=5 // pred_fallthru
      _
    %p137 = scmp.le.s32.totalorder 1, %s9
    %p138 = scmp.lt.s32.totalorder %s9, 5
    %p139 = pnand %p137, %p138
    %p140 = pneg %p139
    // Predicated region
    $region29: #{dcgan_generator_forward.16} parent=5 // pred_check
      _
    $region30: #{dcgan_generator_forward.16} parent=5 // pred_check_branch
      %142 = sbr.rel (%p139) target = $region32
    $region31: #{dcgan_generator_forward.16} parent=5 // pred_region
      %s143 = ssub.s32 %s9, 1
      %s144 = smul.u32 64, %s14
      %p145 = scmp.lt.s32.totalorder %s144, 255
      %s146 = scalar_select %p145, %s144, 255
      %s147 = smul.addr %s146, 4
      %s148 = scalar_lea.vmem %s0, %s147
      %p149 = pneg %p35
      %p150 = pneg %p32
      %p151 = pneg %p56
      %p152 = pneg %p53
      %p153 = pneg %p77
      %p154 = pneg %p74
      %p155 = pneg %p103
      %p156 = pneg %p100
      %s157 = smul.u32 64, %s14
      %p158 = scmp.lt.s32.totalorder %s157, 255
      %s159 = scalar_select %p158, %s157, 255
      %s160 = smul.addr %s159, 4
      %s161 = scalar_lea.vmem %s3, %s160
      %s162 = smul.u32 64, %s14
      %p163 = scmp.lt.s32.totalorder %s162, 255
      %s164 = scalar_select %p163, %s162, 255
      %s165 = smul.addr %s164, 4
      %s166 = scalar_lea.vmem %s0, %s165
      %s167 = smul.u32 64, %s14
      %s168 = smul.u32 64, %s14
      %p169 = scmp.lt.s32.totalorder %s168, 255
      %s170 = scalar_select %p169, %s168, 255
      %s171 = smul.addr %s170, 4
      %s172 = scalar_lea.vmem %s3, %s171
      %s173 = smul.u32 64, %s14
      %v174 = vld [vmem:[%s166] sm:$0xf]
      %v175 = vld [vmem:[%s166 + $0x4] sm:$0xf]
      %v176 = vld [vmem:[%s166 + $0x8] sm:$0xf]
      %v177 = vld [vmem:[%s166 + $0xc] sm:$0xf]
      %v178 = vld [vmem:[%s166 + $0x10] sm:$0xf]
      %v179 = vld [vmem:[%s166 + $0x14] sm:$0xf]
      %v180 = vld [vmem:[%s166 + $0x18] sm:$0xf]
      %v181 = vld [vmem:[%s166 + $0x1c] sm:$0xf]
      %v182 = vld [vmem:[%s166 + $0x20] sm:$0xf]
      %v183 = vld [vmem:[%s166 + $0x24] sm:$0xf]
      %v184 = vld [vmem:[%s166 + $0x28] sm:$0xf]
      %v185 = vld [vmem:[%s166 + $0x2c] sm:$0xf]
      %v186 = vld [vmem:[%s166 + $0x30] sm:$0xf]
      %v187 = vld [vmem:[%s166 + $0x34] sm:$0xf]
      %v188 = vld [vmem:[%s166 + $0x38] sm:$0xf]
      %v189 = vld [vmem:[%s166 + $0x3c] sm:$0xf]
      %v190 = vld [vmem:[%s166 + $0x40] sm:$0xf]
      %v191 = vld [vmem:[%s166 + $0x44] sm:$0xf]
      %v192 = vld [vmem:[%s166 + $0x48] sm:$0xf]
      %v193 = vld [vmem:[%s166 + $0x4c] sm:$0xf]
      %v194 = vld [vmem:[%s166 + $0x50] sm:$0xf]
      %v195 = vld [vmem:[%s166 + $0x54] sm:$0xf]
      %v196 = vld [vmem:[%s166 + $0x58] sm:$0xf]
      %v197 = vld [vmem:[%s166 + $0x5c] sm:$0xf]
      %v198 = vld [vmem:[%s166 + $0x60] sm:$0xf]
      %v199 = vld [vmem:[%s166 + $0x64] sm:$0xf]
      %v200 = vld [vmem:[%s166 + $0x68] sm:$0xf]
      %v201 = vld [vmem:[%s166 + $0x6c] sm:$0xf]
      %v202 = vld [vmem:[%s166 + $0x70] sm:$0xf]
      %v203 = vld [vmem:[%s166 + $0x74] sm:$0xf]
      %v204 = vld [vmem:[%s166 + $0x78] sm:$0xf]
      %v205 = vld [vmem:[%s166 + $0x7c] sm:$0xf]
      %v206 = vld [vmem:[%s166 + $0x80] sm:$0xf]
      %v207 = vld [vmem:[%s166 + $0x84] sm:$0xf]
      %v208 = vld [vmem:[%s166 + $0x88] sm:$0xf]
      %v209 = vld [vmem:[%s166 + $0x8c] sm:$0xf]
      %v210 = vld [vmem:[%s166 + $0x90] sm:$0xf]
      %v211 = vld [vmem:[%s166 + $0x94] sm:$0xf]
      %v212 = vld [vmem:[%s166 + $0x98] sm:$0xf]
      %v213 = vld [vmem:[%s166 + $0x9c] sm:$0xf]
      %v214 = vld [vmem:[%s166 + $0xa0] sm:$0xf]
      %v215 = vld [vmem:[%s166 + $0xa4] sm:$0xf]
      %v216 = vld [vmem:[%s166 + $0xa8] sm:$0xf]
      %v217 = vld [vmem:[%s166 + $0xac] sm:$0xf]
      %v218 = vld [vmem:[%s166 + $0xb0] sm:$0xf]
      %v219 = vld [vmem:[%s166 + $0xb4] sm:$0xf]
      %v220 = vld [vmem:[%s166 + $0xb8] sm:$0xf]
      %v221 = vld [vmem:[%s166 + $0xbc] sm:$0xf]
      %v222 = vld [vmem:[%s166 + $0xc0] sm:$0xf]
      %v223 = vld [vmem:[%s166 + $0xc4] sm:$0xf]
      %v224 = vld [vmem:[%s166 + $0xc8] sm:$0xf]
      %v225 = vld [vmem:[%s166 + $0xcc] sm:$0xf]
      %v226 = vld [vmem:[%s166 + $0xd0] sm:$0xf]
      %v227 = vld [vmem:[%s166 + $0xd4] sm:$0xf]
      %v228 = vld [vmem:[%s166 + $0xd8] sm:$0xf]
      %v229 = vld [vmem:[%s166 + $0xdc] sm:$0xf]
      %v230 = vld [vmem:[%s166 + $0xe0] sm:$0xf]
      %v231 = vld [vmem:[%s166 + $0xe4] sm:$0xf]
      %v232 = vld [vmem:[%s166 + $0xe8] sm:$0xf]
      %v233 = vld [vmem:[%s166 + $0xec] sm:$0xf]
      %v234 = vld [vmem:[%s166 + $0xf0] sm:$0xf]
      %v235 = vld [vmem:[%s166 + $0xf4] sm:$0xf]
      %v236 = vld [vmem:[%s166 + $0xf8] sm:$0xf]
      %v237 = vld [vmem:[%s166 + $0xfc] sm:$0xf]
      %v238 = vunpack.c.l.bf16 %v174
      %v239 = vunpack.c.l.bf16 %v175
      %v240 = vunpack.c.l.bf16 %v176
      %v241 = vunpack.c.l.bf16 %v177
      %v242 = vunpack.c.l.bf16 %v178
      %v243 = vunpack.c.l.bf16 %v179
      %v244 = vunpack.c.l.bf16 %v180
      %v245 = vunpack.c.l.bf16 %v181
      %v246 = vunpack.c.l.bf16 %v182
      %v247 = vunpack.c.l.bf16 %v183
      %v248 = vunpack.c.l.bf16 %v184
      %v249 = vunpack.c.l.bf16 %v185
      %v250 = vunpack.c.l.bf16 %v186
      %v251 = vunpack.c.l.bf16 %v187
      %v252 = vunpack.c.l.bf16 %v188
      %v253 = vunpack.c.l.bf16 %v189
      %v254 = vunpack.c.l.bf16 %v190
      %v255 = vunpack.c.l.bf16 %v191
      %v256 = vunpack.c.l.bf16 %v192
      %v257 = vunpack.c.l.bf16 %v193
      %v258 = vunpack.c.l.bf16 %v194
      %v259 = vunpack.c.l.bf16 %v195
      %v260 = vunpack.c.l.bf16 %v196
      %v261 = vunpack.c.l.bf16 %v197
      %v262 = vunpack.c.l.bf16 %v198
      %v263 = vunpack.c.l.bf16 %v199
      %v264 = vunpack.c.l.bf16 %v200
      %v265 = vunpack.c.l.bf16 %v201
      %v266 = vunpack.c.l.bf16 %v202
      %v267 = vunpack.c.l.bf16 %v203
      %v268 = vunpack.c.l.bf16 %v204
      %v269 = vunpack.c.l.bf16 %v205
      %v270 = vunpack.c.l.bf16 %v206
      %v271 = vunpack.c.l.bf16 %v207
      %v272 = vunpack.c.l.bf16 %v208
      %v273 = vunpack.c.l.bf16 %v209
      %v274 = vunpack.c.l.bf16 %v210
      %v275 = vunpack.c.l.bf16 %v211
      %v276 = vunpack.c.l.bf16 %v212
      %v277 = vunpack.c.l.bf16 %v213
      %v278 = vunpack.c.l.bf16 %v214
      %v279 = vunpack.c.l.bf16 %v215
      %v280 = vunpack.c.l.bf16 %v216
      %v281 = vunpack.c.l.bf16 %v217
      %v282 = vunpack.c.l.bf16 %v218
      %v283 = vunpack.c.l.bf16 %v219
      %v284 = vunpack.c.l.bf16 %v220
      %v285 = vunpack.c.l.bf16 %v221
      %v286 = vunpack.c.l.bf16 %v222
      %v287 = vunpack.c.l.bf16 %v223
      %v288 = vunpack.c.l.bf16 %v224
      %v289 = vunpack.c.l.bf16 %v225
      %v290 = vunpack.c.l.bf16 %v226
      %v291 = vunpack.c.l.bf16 %v227
      %v292 = vunpack.c.l.bf16 %v228
      %v293 = vunpack.c.l.bf16 %v229
      %v294 = vunpack.c.l.bf16 %v230
      %v295 = vunpack.c.l.bf16 %v231
      %v296 = vunpack.c.l.bf16 %v232
      %v297 = vunpack.c.l.bf16 %v233
      %v298 = vunpack.c.l.bf16 %v234
      %v299 = vunpack.c.l.bf16 %v235
      %v300 = vunpack.c.l.bf16 %v236
      %v301 = vunpack.c.l.bf16 %v237
      %v302 = vld [vmem:[%s1] sm:$0x1]
      %v304 = vperm.slane %v302, 0
      %v306 = vmul.f32 %v238, %v304
      %v307 = vmul.f32 %v239, %v304
      %v308 = vmul.f32 %v240, %v304
      %v309 = vmul.f32 %v241, %v304
      %v310 = vmul.f32 %v242, %v304
      %v311 = vmul.f32 %v243, %v304
      %v312 = vmul.f32 %v244, %v304
      %v313 = vmul.f32 %v245, %v304
      %v314 = vmul.f32 %v246, %v304
      %v315 = vmul.f32 %v247, %v304
      %v316 = vmul.f32 %v248, %v304
      %v317 = vmul.f32 %v249, %v304
      %v318 = vmul.f32 %v250, %v304
      %v319 = vmul.f32 %v251, %v304
      %v320 = vmul.f32 %v252, %v304
      %v321 = vmul.f32 %v253, %v304
      %v322 = vmul.f32 %v254, %v304
      %v323 = vmul.f32 %v255, %v304
      %v324 = vmul.f32 %v256, %v304
      %v325 = vmul.f32 %v257, %v304
      %v326 = vmul.f32 %v258, %v304
      %v327 = vmul.f32 %v259, %v304
      %v328 = vmul.f32 %v260, %v304
      %v329 = vmul.f32 %v261, %v304
      %v330 = vmul.f32 %v262, %v304
      %v331 = vmul.f32 %v263, %v304
      %v332 = vmul.f32 %v264, %v304
      %v333 = vmul.f32 %v265, %v304
      %v334 = vmul.f32 %v266, %v304
      %v335 = vmul.f32 %v267, %v304
      %v336 = vmul.f32 %v268, %v304
      %v337 = vmul.f32 %v269, %v304
      %v338 = vmul.f32 %v270, %v304
      %v339 = vmul.f32 %v271, %v304
      %v340 = vmul.f32 %v272, %v304
      %v341 = vmul.f32 %v273, %v304
      %v342 = vmul.f32 %v274, %v304
      %v343 = vmul.f32 %v275, %v304
      %v344 = vmul.f32 %v276, %v304
      %v345 = vmul.f32 %v277, %v304
      %v346 = vmul.f32 %v278, %v304
      %v347 = vmul.f32 %v279, %v304
      %v348 = vmul.f32 %v280, %v304
      %v349 = vmul.f32 %v281, %v304
      %v350 = vmul.f32 %v282, %v304
      %v351 = vmul.f32 %v283, %v304
      %v352 = vmul.f32 %v284, %v304
      %v353 = vmul.f32 %v285, %v304
      %v354 = vmul.f32 %v286, %v304
      %v355 = vmul.f32 %v287, %v304
      %v356 = vmul.f32 %v288, %v304
      %v357 = vmul.f32 %v289, %v304
      %v358 = vmul.f32 %v290, %v304
      %v359 = vmul.f32 %v291, %v304
      %v360 = vmul.f32 %v292, %v304
      %v361 = vmul.f32 %v293, %v304
      %v362 = vmul.f32 %v294, %v304
      %v363 = vmul.f32 %v295, %v304
      %v364 = vmul.f32 %v296, %v304
      %v365 = vmul.f32 %v297, %v304
      %v366 = vmul.f32 %v298, %v304
      %v367 = vmul.f32 %v299, %v304
      %v368 = vmul.f32 %v300, %v304
      %v369 = vmul.f32 %v301, %v304
      %v370 = vld [vmem:[%s2] sm:$0x1]
      %v372 = vperm.slane %v370, 0
      %v374 = vadd.f32 %v306, %v372
      %v375 = vadd.f32 %v307, %v372
      %v376 = vadd.f32 %v308, %v372
      %v377 = vadd.f32 %v309, %v372
      %v378 = vadd.f32 %v310, %v372
      %v379 = vadd.f32 %v311, %v372
      %v380 = vadd.f32 %v312, %v372
      %v381 = vadd.f32 %v313, %v372
      %v382 = vadd.f32 %v314, %v372
      %v383 = vadd.f32 %v315, %v372
      %v384 = vadd.f32 %v316, %v372
      %v385 = vadd.f32 %v317, %v372
      %v386 = vadd.f32 %v318, %v372
      %v387 = vadd.f32 %v319, %v372
      %v388 = vadd.f32 %v320, %v372
      %v389 = vadd.f32 %v321, %v372
      %v390 = vadd.f32 %v322, %v372
      %v391 = vadd.f32 %v323, %v372
      %v392 = vadd.f32 %v324, %v372
      %v393 = vadd.f32 %v325, %v372
      %v394 = vadd.f32 %v326, %v372
      %v395 = vadd.f32 %v327, %v372
      %v396 = vadd.f32 %v328, %v372
      %v397 = vadd.f32 %v329, %v372
      %v398 = vadd.f32 %v330, %v372
      %v399 = vadd.f32 %v331, %v372
      %v400 = vadd.f32 %v332, %v372
      %v401 = vadd.f32 %v333, %v372
      %v402 = vadd.f32 %v334, %v372
      %v403 = vadd.f32 %v335, %v372
      %v404 = vadd.f32 %v336, %v372
      %v405 = vadd.f32 %v337, %v372
      %v406 = vadd.f32 %v338, %v372
      %v407 = vadd.f32 %v339, %v372
      %v408 = vadd.f32 %v340, %v372
      %v409 = vadd.f32 %v341, %v372
      %v410 = vadd.f32 %v342, %v372
      %v411 = vadd.f32 %v343, %v372
      %v412 = vadd.f32 %v344, %v372
      %v413 = vadd.f32 %v345, %v372
      %v414 = vadd.f32 %v346, %v372
      %v415 = vadd.f32 %v347, %v372
      %v416 = vadd.f32 %v348, %v372
      %v417 = vadd.f32 %v349, %v372
      %v418 = vadd.f32 %v350, %v372
      %v419 = vadd.f32 %v351, %v372
      %v420 = vadd.f32 %v352, %v372
      %v421 = vadd.f32 %v353, %v372
      %v422 = vadd.f32 %v354, %v372
      %v423 = vadd.f32 %v355, %v372
      %v424 = vadd.f32 %v356, %v372
      %v425 = vadd.f32 %v357, %v372
      %v426 = vadd.f32 %v358, %v372
      %v427 = vadd.f32 %v359, %v372
      %v428 = vadd.f32 %v360, %v372
      %v429 = vadd.f32 %v361, %v372
      %v430 = vadd.f32 %v362, %v372
      %v431 = vadd.f32 %v363, %v372
      %v432 = vadd.f32 %v364, %v372
      %v433 = vadd.f32 %v365, %v372
      %v434 = vadd.f32 %v366, %v372
      %v435 = vadd.f32 %v367, %v372
      %v436 = vadd.f32 %v368, %v372
      %v437 = vadd.f32 %v369, %v372
      %v438 = vmax.f32 %v374, 0.0
      %v439 = vmax.f32 %v375, 0.0
      %v440 = vmax.f32 %v376, 0.0
      %v441 = vmax.f32 %v377, 0.0
      %v442 = vmax.f32 %v378, 0.0
      %v443 = vmax.f32 %v379, 0.0
      %v444 = vmax.f32 %v380, 0.0
      %v445 = vmax.f32 %v381, 0.0
      %v446 = vmax.f32 %v382, 0.0
      %v447 = vmax.f32 %v383, 0.0
      %v448 = vmax.f32 %v384, 0.0
      %v449 = vmax.f32 %v385, 0.0
      %v450 = vmax.f32 %v386, 0.0
      %v451 = vmax.f32 %v387, 0.0
      %v452 = vmax.f32 %v388, 0.0
      %v453 = vmax.f32 %v389, 0.0
      %v454 = vmax.f32 %v390, 0.0
      %v455 = vmax.f32 %v391, 0.0
      %v456 = vmax.f32 %v392, 0.0
      %v457 = vmax.f32 %v393, 0.0
      %v458 = vmax.f32 %v394, 0.0
      %v459 = vmax.f32 %v395, 0.0
      %v460 = vmax.f32 %v396, 0.0
      %v461 = vmax.f32 %v397, 0.0
      %v462 = vmax.f32 %v398, 0.0
      %v463 = vmax.f32 %v399, 0.0
      %v464 = vmax.f32 %v400, 0.0
      %v465 = vmax.f32 %v401, 0.0
      %v466 = vmax.f32 %v402, 0.0
      %v467 = vmax.f32 %v403, 0.0
      %v468 = vmax.f32 %v404, 0.0
      %v469 = vmax.f32 %v405, 0.0
      %v470 = vmax.f32 %v406, 0.0
      %v471 = vmax.f32 %v407, 0.0
      %v472 = vmax.f32 %v408, 0.0
      %v473 = vmax.f32 %v409, 0.0
      %v474 = vmax.f32 %v410, 0.0
      %v475 = vmax.f32 %v411, 0.0
      %v476 = vmax.f32 %v412, 0.0
      %v477 = vmax.f32 %v413, 0.0
      %v478 = vmax.f32 %v414, 0.0
      %v479 = vmax.f32 %v415, 0.0
      %v480 = vmax.f32 %v416, 0.0
      %v481 = vmax.f32 %v417, 0.0
      %v482 = vmax.f32 %v418, 0.0
      %v483 = vmax.f32 %v419, 0.0
      %v484 = vmax.f32 %v420, 0.0
      %v485 = vmax.f32 %v421, 0.0
      %v486 = vmax.f32 %v422, 0.0
      %v487 = vmax.f32 %v423, 0.0
      %v488 = vmax.f32 %v424, 0.0
      %v489 = vmax.f32 %v425, 0.0
      %v490 = vmax.f32 %v426, 0.0
      %v491 = vmax.f32 %v427, 0.0
      %v492 = vmax.f32 %v428, 0.0
      %v493 = vmax.f32 %v429, 0.0
      %v494 = vmax.f32 %v430, 0.0
      %v495 = vmax.f32 %v431, 0.0
      %v496 = vmax.f32 %v432, 0.0
      %v497 = vmax.f32 %v433, 0.0
      %v498 = vmax.f32 %v434, 0.0
      %v499 = vmax.f32 %v435, 0.0
      %v500 = vmax.f32 %v436, 0.0
      %v501 = vmax.f32 %v437, 0.0
      %v502 = vpack.c.bf16 %v438, %v438
      %v503 = vpack.c.bf16 %v439, %v439
      %v504 = vpack.c.bf16 %v440, %v440
      %v505 = vpack.c.bf16 %v441, %v441
      %v506 = vpack.c.bf16 %v442, %v442
      %v507 = vpack.c.bf16 %v443, %v443
      %v508 = vpack.c.bf16 %v444, %v444
      %v509 = vpack.c.bf16 %v445, %v445
      %v510 = vpack.c.bf16 %v446, %v446
      %v511 = vpack.c.bf16 %v447, %v447
      %v512 = vpack.c.bf16 %v448, %v448
      %v513 = vpack.c.bf16 %v449, %v449
      %v514 = vpack.c.bf16 %v450, %v450
      %v515 = vpack.c.bf16 %v451, %v451
      %v516 = vpack.c.bf16 %v452, %v452
      %v517 = vpack.c.bf16 %v453, %v453
      %v518 = vpack.c.bf16 %v454, %v454
      %v519 = vpack.c.bf16 %v455, %v455
      %v520 = vpack.c.bf16 %v456, %v456
      %v521 = vpack.c.bf16 %v457, %v457
      %v522 = vpack.c.bf16 %v458, %v458
      %v523 = vpack.c.bf16 %v459, %v459
      %v524 = vpack.c.bf16 %v460, %v460
      %v525 = vpack.c.bf16 %v461, %v461
      %v526 = vpack.c.bf16 %v462, %v462
      %v527 = vpack.c.bf16 %v463, %v463
      %v528 = vpack.c.bf16 %v464, %v464
      %v529 = vpack.c.bf16 %v465, %v465
      %v530 = vpack.c.bf16 %v466, %v466
      %v531 = vpack.c.bf16 %v467, %v467
      %v532 = vpack.c.bf16 %v468, %v468
      %v533 = vpack.c.bf16 %v469, %v469
      %v534 = vpack.c.bf16 %v470, %v470
      %v535 = vpack.c.bf16 %v471, %v471
      %v536 = vpack.c.bf16 %v472, %v472
      %v537 = vpack.c.bf16 %v473, %v473
      %v538 = vpack.c.bf16 %v474, %v474
      %v539 = vpack.c.bf16 %v475, %v475
      %v540 = vpack.c.bf16 %v476, %v476
      %v541 = vpack.c.bf16 %v477, %v477
      %v542 = vpack.c.bf16 %v478, %v478
      %v543 = vpack.c.bf16 %v479, %v479
      %v544 = vpack.c.bf16 %v480, %v480
      %v545 = vpack.c.bf16 %v481, %v481
      %v546 = vpack.c.bf16 %v482, %v482
      %v547 = vpack.c.bf16 %v483, %v483
      %v548 = vpack.c.bf16 %v484, %v484
      %v549 = vpack.c.bf16 %v485, %v485
      %v550 = vpack.c.bf16 %v486, %v486
      %v551 = vpack.c.bf16 %v487, %v487
      %v552 = vpack.c.bf16 %v488, %v488
      %v553 = vpack.c.bf16 %v489, %v489
      %v554 = vpack.c.bf16 %v490, %v490
      %v555 = vpack.c.bf16 %v491, %v491
      %v556 = vpack.c.bf16 %v492, %v492
      %v557 = vpack.c.bf16 %v493, %v493
      %v558 = vpack.c.bf16 %v494, %v494
      %v559 = vpack.c.bf16 %v495, %v495
      %v560 = vpack.c.bf16 %v496, %v496
      %v561 = vpack.c.bf16 %v497, %v497
      %v562 = vpack.c.bf16 %v498, %v498
      %v563 = vpack.c.bf16 %v499, %v499
      %v564 = vpack.c.bf16 %v500, %v500
      %v565 = vpack.c.bf16 %v501, %v501
      %566 = vst [vmem:[%s172] sm:$0xf] %v502
      %567 = vst [vmem:[%s172 + $0x4] sm:$0xf] %v503
      %568 = vst [vmem:[%s172 + $0x8] sm:$0xf] %v504
      %569 = vst [vmem:[%s172 + $0xc] sm:$0xf] %v505
      %570 = vst [vmem:[%s172 + $0x10] sm:$0xf] %v506
      %571 = vst [vmem:[%s172 + $0x14] sm:$0xf] %v507
      %572 = vst [vmem:[%s172 + $0x18] sm:$0xf] %v508
      %573 = vst [vmem:[%s172 + $0x1c] sm:$0xf] %v509
      %574 = vst [vmem:[%s172 + $0x20] sm:$0xf] %v510
      %575 = vst [vmem:[%s172 + $0x24] sm:$0xf] %v511
      %576 = vst [vmem:[%s172 + $0x28] sm:$0xf] %v512
      %577 = vst [vmem:[%s172 + $0x2c] sm:$0xf] %v513
      %578 = vst [vmem:[%s172 + $0x30] sm:$0xf] %v514
      %579 = vst [vmem:[%s172 + $0x34] sm:$0xf] %v515
      %580 = vst [vmem:[%s172 + $0x38] sm:$0xf] %v516
      %581 = vst [vmem:[%s172 + $0x3c] sm:$0xf] %v517
      %582 = vst [vmem:[%s172 + $0x40] sm:$0xf] %v518
      %583 = vst [vmem:[%s172 + $0x44] sm:$0xf] %v519
      %584 = vst [vmem:[%s172 + $0x48] sm:$0xf] %v520
      %585 = vst [vmem:[%s172 + $0x4c] sm:$0xf] %v521
      %586 = vst [vmem:[%s172 + $0x50] sm:$0xf] %v522
      %587 = vst [vmem:[%s172 + $0x54] sm:$0xf] %v523
      %588 = vst [vmem:[%s172 + $0x58] sm:$0xf] %v524
      %589 = vst [vmem:[%s172 + $0x5c] sm:$0xf] %v525
      %590 = vst [vmem:[%s172 + $0x60] sm:$0xf] %v526
      %591 = vst [vmem:[%s172 + $0x64] sm:$0xf] %v527
      %592 = vst [vmem:[%s172 + $0x68] sm:$0xf] %v528
      %593 = vst [vmem:[%s172 + $0x6c] sm:$0xf] %v529
      %594 = vst [vmem:[%s172 + $0x70] sm:$0xf] %v530
      %595 = vst [vmem:[%s172 + $0x74] sm:$0xf] %v531
      %596 = vst [vmem:[%s172 + $0x78] sm:$0xf] %v532
      %597 = vst [vmem:[%s172 + $0x7c] sm:$0xf] %v533
      %598 = vst [vmem:[%s172 + $0x80] sm:$0xf] %v534
      %599 = vst [vmem:[%s172 + $0x84] sm:$0xf] %v535
      %600 = vst [vmem:[%s172 + $0x88] sm:$0xf] %v536
      %601 = vst [vmem:[%s172 + $0x8c] sm:$0xf] %v537
      %602 = vst [vmem:[%s172 + $0x90] sm:$0xf] %v538
      %603 = vst [vmem:[%s172 + $0x94] sm:$0xf] %v539
      %604 = vst [vmem:[%s172 + $0x98] sm:$0xf] %v540
      %605 = vst [vmem:[%s172 + $0x9c] sm:$0xf] %v541
      %606 = vst [vmem:[%s172 + $0xa0] sm:$0xf] %v542
      %607 = vst [vmem:[%s172 + $0xa4] sm:$0xf] %v543
      %608 = vst [vmem:[%s172 + $0xa8] sm:$0xf] %v544
      %609 = vst [vmem:[%s172 + $0xac] sm:$0xf] %v545
      %610 = vst [vmem:[%s172 + $0xb0] sm:$0xf] %v546
      %611 = vst [vmem:[%s172 + $0xb4] sm:$0xf] %v547
      %612 = vst [vmem:[%s172 + $0xb8] sm:$0xf] %v548
      %613 = vst [vmem:[%s172 + $0xbc] sm:$0xf] %v549
      %614 = vst [vmem:[%s172 + $0xc0] sm:$0xf] %v550
      %615 = vst [vmem:[%s172 + $0xc4] sm:$0xf] %v551
      %616 = vst [vmem:[%s172 + $0xc8] sm:$0xf] %v552
      %617 = vst [vmem:[%s172 + $0xcc] sm:$0xf] %v553
      %618 = vst [vmem:[%s172 + $0xd0] sm:$0xf] %v554
      %619 = vst [vmem:[%s172 + $0xd4] sm:$0xf] %v555
      %620 = vst [vmem:[%s172 + $0xd8] sm:$0xf] %v556
      %621 = vst [vmem:[%s172 + $0xdc] sm:$0xf] %v557
      %622 = vst [vmem:[%s172 + $0xe0] sm:$0xf] %v558
      %623 = vst [vmem:[%s172 + $0xe4] sm:$0xf] %v559
      %624 = vst [vmem:[%s172 + $0xe8] sm:$0xf] %v560
      %625 = vst [vmem:[%s172 + $0xec] sm:$0xf] %v561
      %626 = vst [vmem:[%s172 + $0xf0] sm:$0xf] %v562
      %627 = vst [vmem:[%s172 + $0xf4] sm:$0xf] %v563
      %628 = vst [vmem:[%s172 + $0xf8] sm:$0xf] %v564
      %629 = vst [vmem:[%s172 + $0xfc] sm:$0xf] %v565
      %s630 = smul.u32 64, %s14
      %p631 = scmp.lt.s32.totalorder %s630, 255
      %s632 = scalar_select %p631, %s630, 255
      %s633 = smul.addr %s632, 4
      %s634 = scalar_lea.vmem %s3, %s633
      // Predicated region
      $region33: #{dcgan_generator_forward.16} parent=31 // pred_check
        %p635 = pneg %p100
      $region34: #{dcgan_generator_forward.16} parent=31 // pred_check_branch
        %637 = sbr.rel (%p635) target = $region36
      $region35: #{dcgan_generator_forward.16} parent=31 // pred_region
        %s638 = smul.u32 64, %s14
      $region36: #{dcgan_generator_forward.16} parent=31 // pred_fallthru
        _
    $region32: #{dcgan_generator_forward.16} parent=5 // pred_fallthru
      _
    %p639 = scmp.le.s32.totalorder 2, %s9
    // Predicated region
    $region37: #{dcgan_generator_forward.16} parent=5 // pred_check
      %p640 = pneg %p639
    $region38: #{dcgan_generator_forward.16} parent=5 // pred_check_branch
      %642 = sbr.rel (%p640) target = $region40
    $region39: #{dcgan_generator_forward.16} parent=5 // pred_region
      %s643 = ssub.s32 %s9, 2
      // Predicated region
      $region41: #{dcgan_generator_forward.16} parent=39 // pred_check
        %p644 = pneg %p106
      $region42: #{dcgan_generator_forward.16} parent=39 // pred_check_branch
        %646 = sbr.rel (%p644) target = $region44
      $region43: #{dcgan_generator_forward.16} parent=39 // pred_region
        %s647 = smul.u32 64, %s15
        %p648 = scmp.lt.s32.totalorder %s647, 255
        %s649 = scalar_select %p648, %s647, 255
        %s650 = smul.addr %s649, 4
        %s651 = scalar_lea.vmem %s3, %s650
      $region44: #{dcgan_generator_forward.16} parent=39 // pred_fallthru
        _
    $region40: #{dcgan_generator_forward.16} parent=5 // pred_fallthru
      _
  $region6: #{dcgan_generator_forward.16} parent=0 // loop_footer
    %s13 = sadd.s32 1, %s9
  $region7: #{dcgan_generator_forward.16} parent=0 // loop_footer_branch
    %8 = sbr.rel target = $region3
  $region8: #{dcgan_generator_forward.16} parent=0 // loop_exit
    _

// kernel: dcgan_generator_forward.17
$region0: #{dcgan_generator_forward.17}
  #allocation0 [shape = 'u32[]', space=smem, size = 0x4, offset = 0x4, fixed_abs, tag = 'smem constant byte address 0x4 - core index']
  #allocation1 [shape = 'u32[72,128]{1,0:T(1,128)}', space=vmem, size = 0x9000, scoped, tag = 'internal scratch']
  #allocation2 [shape = 'f32[256,128]{1,0:T(8,128)}', space=vmem, size = 0x20000, scoped, tag = 'scratch operand']
  %s0 = inlined_call_operand.vmem [shape: bf16[4,2048,512], index: 0, kind: input, shape index: {}]
  %s1 = inlined_call_operand.vmem [shape: bf16[4,512,128], index: 1, kind: input, shape index: {}]
  %s2 = inlined_call_operand.vmem [shape: bf16[4,2048,128], index: 2, kind: output, shape index: {0}]
  %s3 = inlined_call_operand.hbm [shape: f32[4,8,8,128], index: 3, kind: output, shape index: {1}]
  %4 = xla_tuple %s2, %s3
  %s5 = sld [smem:[#allocation0]]
  $region57: #{dcgan_generator_forward.17} parent=0
    _
  %s7 = ssub.s32 1, %s5
  %s8 = scalar_select 0, %s7, %s5
  $region1: #{dcgan_generator_forward.17} parent=0
    #allocation3 [shape = 'u8[8192]{0}', space=vmem, size = 0x2000, scoped, tag = 'output window, operand 1']
    #allocation4 [shape = 's32[2]{0}', space=sflag, size = 0x8, scoped, tag = 'scoped memory for dcgan_generator_forward.17']
    %9 = vsyncpa [#allocation4], 0
    %s10 = scalar_lea.sflag [#allocation4], 1
    %11 = vsyncpa %s10, 0
    loop: start=0, step=1, limit=34
    $region2: #{dcgan_generator_forward.17} parent=1 // loop_pre_header
      _
    $region3: #{dcgan_generator_forward.17} parent=1 // loop_header
      %s13 = sphi 0, %s17
      %p14 = scmp.ge.s32.totalorder %s13, 34
      %s20 = sphi 0, %s46
      %s21 = sphi 0, %s42
      %s22 = sphi 0, %s38
      %s23 = sphi 0, %s34
      %s24 = sphi 0, %s20
      %s25 = sphi 0, %s21
      %s26 = sphi 0, %s22
      %s27 = sphi 0, %s23
      %s28 = sphi 0, %s24
      %s29 = sphi 0, %s25
      %s30 = sphi 0, %s26
      %s31 = sphi 0, %s27
      %s53 = sphi 0, %s55
      %s56 = sphi 0, %s53
      %s57 = sphi 0, %s56
      %s73 = sphi 0, %s57
      %s83 = sphi 0, %s85
      %s86 = sphi 0, %s83
      %s87 = sphi 0, %s86
      %s103 = sphi 0, %s87
      %s113 = sphi 0, %s115
      %s116 = sphi 0, %s113
      %s117 = sphi 0, %s116
      %s133 = sphi 0, %s117
      %s143 = sphi 0, %s145
      %s146 = sphi 0, %s143
      %s147 = sphi 0, %s146
      %s163 = sphi 0, %s147
    $region4: #{dcgan_generator_forward.17} parent=1 // loop_header_branch
      %16 = sbr.rel (%p14) target = $region8
    $region5: #{dcgan_generator_forward.17} parent=1 // loop_body
      %s18 = ssub.s32 %s13, 1
      %s19 = ssub.s32 %s13, 2
      %s32 = sadd.s32 1, %s23
      %p33 = scmp.ge.s32.totalorder %s32, 1
      %s34 = scalar_select %p33, 0, %s32
      %s35 = sadd.s32 1, %s22
      %s36 = scalar_select %p33, %s35, %s22
      %p37 = scmp.ge.s32.totalorder %s36, 1
      %s38 = scalar_select %p37, 0, %s36
      %s39 = sadd.s32 1, %s21
      %s40 = scalar_select %p37, %s39, %s21
      %p41 = scmp.ge.s32.totalorder %s40, 8
      %s42 = scalar_select %p41, 0, %s40
      %s43 = sadd.s32 1, %s20
      %s44 = scalar_select %p41, %s43, %s20
      %p45 = scmp.ge.s32.totalorder %s44, 4
      %s46 = scalar_select %p45, 0, %s44
      %s47 = ssub.s32 %s20, %s46
      %s48 = ssub.s32 %s21, %s42
      %s49 = sor.u32 %s47, %s48
      %s50 = ssub.s32 %s23, %s34
      %s51 = sor.u32 %s49, %s50
      %p52 = scmp.eq.s32.totalorder %s51, 0
      %s54 = sadd.s32 %s53, 1
      %s55 = scalar_select %p52, %s53, %s54
      %p58 = pneg %p52
      %p59 = scmp.eq.s32.totalorder %s13, 31
      %p60 = por %p58, %p59
      %p61 = scmp.ne.s32.totalorder %s53, %s56
      %p62 = scmp.eq.s32.totalorder %s13, 0
      %p63 = por %p61, %p62
      %p64 = scmp.ne.s32.totalorder %s53, %s56
      %p65 = scmp.eq.s32.totalorder %s18, 31
      %p66 = por %p64, %p65
      %p67 = scmp.ne.s32.totalorder %s56, %s57
      %p68 = scmp.eq.s32.totalorder %s18, 0
      %p69 = por %p67, %p68
      %p70 = scmp.ne.s32.totalorder %s56, %s57
      %p71 = scmp.eq.s32.totalorder %s19, 31
      %p72 = por %p70, %p71
      %p74 = scmp.ne.s32.totalorder %s57, %s73
      %p75 = scmp.eq.s32.totalorder %s19, 0
      %p76 = por %p74, %p75
      %s77 = ssub.s32 %s20, %s46
      %s78 = ssub.s32 %s23, %s34
      %s79 = sor.u32 %s77, %s78
      %s80 = ssub.s32 %s22, %s38
      %s81 = sor.u32 %s79, %s80
      %p82 = scmp.eq.s32.totalorder %s81, 0
      %s84 = sadd.s32 %s83, 1
      %s85 = scalar_select %p82, %s83, %s84
      %p88 = pneg %p82
      %p89 = scmp.eq.s32.totalorder %s13, 31
      %p90 = por %p88, %p89
      %p91 = scmp.ne.s32.totalorder %s83, %s86
      %p92 = scmp.eq.s32.totalorder %s13, 0
      %p93 = por %p91, %p92
      %p94 = scmp.ne.s32.totalorder %s83, %s86
      %p95 = scmp.eq.s32.totalorder %s18, 31
      %p96 = por %p94, %p95
      %p97 = scmp.ne.s32.totalorder %s86, %s87
      %p98 = scmp.eq.s32.totalorder %s18, 0
      %p99 = por %p97, %p98
      %p100 = scmp.ne.s32.totalorder %s86, %s87
      %p101 = scmp.eq.s32.totalorder %s19, 31
      %p102 = por %p100, %p101
      %p104 = scmp.ne.s32.totalorder %s87, %s103
      %p105 = scmp.eq.s32.totalorder %s19, 0
      %p106 = por %p104, %p105
      %s107 = ssub.s32 %s20, %s46
      %s108 = ssub.s32 %s21, %s42
      %s109 = sor.u32 %s107, %s108
      %s110 = ssub.s32 %s22, %s38
      %s111 = sor.u32 %s109, %s110
      %p112 = scmp.eq.s32.totalorder %s111, 0
      %s114 = sadd.s32 %s113, 1
      %s115 = scalar_select %p112, %s113, %s114
      %p118 = pneg %p112
      %p119 = scmp.eq.s32.totalorder %s13, 31
      %p120 = por %p118, %p119
      %p121 = scmp.ne.s32.totalorder %s113, %s116
      %p122 = scmp.eq.s32.totalorder %s13, 0
      %p123 = por %p121, %p122
      %p124 = scmp.ne.s32.totalorder %s113, %s116
      %p125 = scmp.eq.s32.totalorder %s18, 31
      %p126 = por %p124, %p125
      %p127 = scmp.ne.s32.totalorder %s116, %s117
      %p128 = scmp.eq.s32.totalorder %s18, 0
      %p129 = por %p127, %p128
      %p130 = scmp.ne.s32.totalorder %s116, %s117
      %p131 = scmp.eq.s32.totalorder %s19, 31
      %p132 = por %p130, %p131
      %p134 = scmp.ne.s32.totalorder %s117, %s133
      %p135 = scmp.eq.s32.totalorder %s19, 0
      %p136 = por %p134, %p135
      %s137 = ssub.s32 %s20, %s46
      %s138 = ssub.s32 %s21, %s42
      %s139 = sor.u32 %s137, %s138
      %s140 = ssub.s32 %s22, %s38
      %s141 = sor.u32 %s139, %s140
      %p142 = scmp.eq.s32.totalorder %s141, 0
      %s144 = sadd.s32 %s143, 1
      %s145 = scalar_select %p142, %s143, %s144
      %p148 = pneg %p142
      %p149 = scmp.eq.s32.totalorder %s13, 31
      %p150 = por %p148, %p149
      %p151 = scmp.ne.s32.totalorder %s143, %s146
      %p152 = scmp.eq.s32.totalorder %s13, 0
      %p153 = por %p151, %p152
      %p154 = scmp.ne.s32.totalorder %s143, %s146
      %p155 = scmp.eq.s32.totalorder %s18, 31
      %p156 = por %p154, %p155
      %p157 = scmp.ne.s32.totalorder %s146, %s147
      %p158 = scmp.eq.s32.totalorder %s18, 0
      %p159 = por %p157, %p158
      %p160 = scmp.ne.s32.totalorder %s146, %s147
      %p161 = scmp.eq.s32.totalorder %s19, 31
      %p162 = por %p160, %p161
      %p164 = scmp.ne.s32.totalorder %s147, %s163
      %p165 = scmp.eq.s32.totalorder %s19, 0
      %p166 = por %p164, %p165
      %p167 = scmp.le.s32.totalorder 1, %s13
      %p168 = scmp.lt.s32.totalorder %s13, 33
      %p169 = pnand %p167, %p168
      %p170 = pneg %p169
      // Predicated region
      $region9: #{dcgan_generator_forward.17} parent=5 // pred_check
        _
      $region10: #{dcgan_generator_forward.17} parent=5 // pred_check_branch
        %172 = sbr.rel (%p169) target = $region12
      $region11: #{dcgan_generator_forward.17} parent=5 // pred_region
        %s173 = ssub.s32 %s13, 1
      $region12: #{dcgan_generator_forward.17} parent=5 // pred_fallthru
        _
      %p174 = scmp.lt.s32.totalorder %s13, 32
      // Predicated region
      $region13: #{dcgan_generator_forward.17} parent=5 // pred_check
        %p175 = pneg %p174
      $region14: #{dcgan_generator_forward.17} parent=5 // pred_check_branch
        %177 = sbr.rel (%p175) target = $region16
      $region15: #{dcgan_generator_forward.17} parent=5 // pred_region
        // Predicated region
        $region17: #{dcgan_generator_forward.17} parent=15 // pred_check
          %p178 = pneg %p63
        $region18: #{dcgan_generator_forward.17} parent=15 // pred_check_branch
          %180 = sbr.rel (%p178) target = $region20
        $region19: #{dcgan_generator_forward.17} parent=15 // pred_region
          %s181 = smul.u32 32, %s21
          %s182 = smul.u32 4, %s23
          %p183 = scmp.lt.s32.totalorder %s20, 3
          %s184 = scalar_select %p183, %s20, 3
          %p185 = scmp.lt.s32.totalorder %s181, 255
          %s186 = scalar_select %p185, %s181, 255
          %p187 = scmp.lt.s32.totalorder %s182, 3
          %s188 = scalar_select %p187, %s182, 3
          %s189 = smul.addr %s186, 4
          %s190 = sadd.s32 %s188, %s189
          %s191 = smul.addr %s184, 1024
          %s192 = sadd.s32 %s190, %s191
          %s193 = smul.addr %s192, 4
          %s194 = scalar_lea.vmem %s0, %s193
          %s195 = smul.u32 32, %s21
          %s196 = smul.u32 4, %s23
        $region20: #{dcgan_generator_forward.17} parent=15 // pred_fallthru
          _
        // Predicated region
        $region21: #{dcgan_generator_forward.17} parent=15 // pred_check
          %p197 = pneg %p93
        $region22: #{dcgan_generator_forward.17} parent=15 // pred_check_branch
          %199 = sbr.rel (%p197) target = $region24
        $region23: #{dcgan_generator_forward.17} parent=15 // pred_region
          %s200 = smul.u32 64, %s23
          %p201 = scmp.lt.s32.totalorder %s20, 3
          %s202 = scalar_select %p201, %s20, 3
          %p203 = scmp.lt.s32.totalorder %s200, 63
          %s204 = scalar_select %p203, %s200, 63
          %p205 = scmp.lt.s32.totalorder %s22, 0
          %s206 = scalar_select %p205, %s22, 0
          %s207 = sadd.s32 %s206, %s204
          %s208 = smul.addr %s202, 64
          %s209 = sadd.s32 %s207, %s208
          %s210 = smul.addr %s209, 4
          %s211 = scalar_lea.vmem %s1, %s210
          %s212 = smul.u32 64, %s23
        $region24: #{dcgan_generator_forward.17} parent=15 // pred_fallthru
          _
      $region16: #{dcgan_generator_forward.17} parent=5 // pred_fallthru
        _
      %p213 = scmp.le.s32.totalorder 1, %s13
      %p214 = scmp.lt.s32.totalorder %s13, 33
      %p215 = pnand %p213, %p214
      %p216 = pneg %p215
      // Predicated region
      $region25: #{dcgan_generator_forward.17} parent=5 // pred_check
        _
      $region26: #{dcgan_generator_forward.17} parent=5 // pred_check_branch
        %218 = sbr.rel (%p215) target = $region28
      $region27: #{dcgan_generator_forward.17} parent=5 // pred_region
        %s219 = ssub.s32 %s13, 1
        %s220 = smul.u32 32, %s25
        %s221 = smul.u32 4, %s27
        %p222 = scmp.lt.s32.totalorder %s24, 3
        %s223 = scalar_select %p222, %s24, 3
        %p224 = scmp.lt.s32.totalorder %s220, 255
        %s225 = scalar_select %p224, %s220, 255
        %p226 = scmp.lt.s32.totalorder %s221, 3
        %s227 = scalar_select %p226, %s221, 3
        %s228 = smul.addr %s225, 4
        %s229 = sadd.s32 %s227, %s228
        %s230 = smul.addr %s223, 1024
        %s231 = sadd.s32 %s229, %s230
        %s232 = smul.addr %s231, 4
        %s233 = scalar_lea.vmem %s0, %s232
        %p234 = pneg %p69
        %p235 = pneg %p66
        %s236 = smul.u32 64, %s27
        %p237 = scmp.lt.s32.totalorder %s24, 3
        %s238 = scalar_select %p237, %s24, 3
        %p239 = scmp.lt.s32.totalorder %s236, 63
        %s240 = scalar_select %p239, %s236, 63
        %p241 = scmp.lt.s32.totalorder %s26, 0
        %s242 = scalar_select %p241, %s26, 0
        %s243 = sadd.s32 %s242, %s240
        %s244 = smul.addr %s238, 64
        %s245 = sadd.s32 %s243, %s244
        %s246 = smul.addr %s245, 4
        %s247 = scalar_lea.vmem %s1, %s246
        %p248 = pneg %p99
        %p249 = pneg %p96
        %p250 = pneg %p129
        %p251 = pneg %p126
        %s252 = smul.u32 32, %s25
        %p253 = scmp.lt.s32.totalorder %s24, 3
        %s254 = scalar_select %p253, %s24, 3
        %p255 = scmp.lt.s32.totalorder %s252, 255
        %s256 = scalar_select %p255, %s252, 255
        %p257 = scmp.lt.s32.totalorder %s26, 0
        %s258 = scalar_select %p257, %s26, 0
        %s259 = sadd.s32 %s258, %s256
        %s260 = smul.addr %s254, 256
        %s261 = sadd.s32 %s259, %s260
        %s262 = smul.addr %s261, 4
        %s263 = scalar_lea.vmem %s2, %s262
        %p264 = pneg %p159
        %p265 = pneg %p156
        %s266 = sand.u32 %s146, 1
        %s267 = scalar_lea.sflag [#allocation4], %s266
        %s268 = sand.u32 %s146, 1
        %s269 = smul.addr %s268, 8
        %s270 = scalar_lea.vmem [#allocation3], %s269
        %s271 = smul.u32 32, %s25
        %s272 = smul.u32 4, %s27
        %p273 = scmp.lt.s32.totalorder %s24, 3
        %s274 = scalar_select %p273, %s24, 3
        %p275 = scmp.lt.s32.totalorder %s271, 255
        %s276 = scalar_select %p275, %s271, 255
        %p277 = scmp.lt.s32.totalorder %s272, 3
        %s278 = scalar_select %p277, %s272, 3
        %s279 = smul.addr %s276, 4
        %s280 = sadd.s32 %s278, %s279
        %s281 = smul.addr %s274, 1024
        %s282 = sadd.s32 %s280, %s281
        %s283 = smul.addr %s282, 4
        %s284 = scalar_lea.vmem %s0, %s283
        %s285 = smul.u32 32, %s25
        %s286 = smul.u32 4, %s27
        %s287 = smul.u32 64, %s27
        %p288 = scmp.lt.s32.totalorder %s24, 3
        %s289 = scalar_select %p288, %s24, 3
        %p290 = scmp.lt.s32.totalorder %s287, 63
        %s291 = scalar_select %p290, %s287, 63
        %p292 = scmp.lt.s32.totalorder %s26, 0
        %s293 = scalar_select %p292, %s26, 0
        %s294 = sadd.s32 %s293, %s291
        %s295 = smul.addr %s289, 64
        %s296 = sadd.s32 %s294, %s295
        %s297 = smul.addr %s296, 4
        %s298 = scalar_lea.vmem %s1, %s297
        %s299 = smul.u32 64, %s27
        %s300 = smul.u32 32, %s25
        %p301 = scmp.lt.s32.totalorder %s24, 3
        %s302 = scalar_select %p301, %s24, 3
        %p303 = scmp.lt.s32.totalorder %s300, 255
        %s304 = scalar_select %p303, %s300, 255
        %p305 = scmp.lt.s32.totalorder %s26, 0
        %s306 = scalar_select %p305, %s26, 0
        %s307 = sadd.s32 %s306, %s304
        %s308 = smul.addr %s302, 256
        %s309 = sadd.s32 %s307, %s308
        %s310 = smul.addr %s309, 4
        %s311 = scalar_lea.vmem %s2, %s310
        %s312 = smul.u32 32, %s25
        %p313 = scmp.eq.s32.totalorder %s27, 0
        // Predicated region
        $region29: #{dcgan_generator_forward.17} parent=27 // pred_check
          %p314 = pneg %p313
        $region30: #{dcgan_generator_forward.17} parent=27 // pred_check_branch
          %316 = sbr.rel (%p314) target = $region32
        $region31: #{dcgan_generator_forward.17} parent=27 // pred_region
          %317 = vst [vmem:[#allocation2] sm:$0xff] 0.0
          %318 = vst [vmem:[#allocation2 + $0x8] sm:$0xff] 0.0
          %319 = vst [vmem:[#allocation2 + $0x10] sm:$0xff] 0.0
          %320 = vst [vmem:[#allocation2 + $0x18] sm:$0xff] 0.0
          %321 = vst [vmem:[#allocation2 + $0x20] sm:$0xff] 0.0
          %322 = vst [vmem:[#allocation2 + $0x28] sm:$0xff] 0.0
          %323 = vst [vmem:[#allocation2 + $0x30] sm:$0xff] 0.0
          %324 = vst [vmem:[#allocation2 + $0x38] sm:$0xff] 0.0
          %325 = vst [vmem:[#allocation2 + $0x40] sm:$0xff] 0.0
          %326 = vst [vmem:[#allocation2 + $0x48] sm:$0xff] 0.0
          %327 = vst [vmem:[#allocation2 + $0x50] sm:$0xff] 0.0
          %328 = vst [vmem:[#allocation2 + $0x58] sm:$0xff] 0.0
          %329 = vst [vmem:[#allocation2 + $0x60] sm:$0xff] 0.0
          %330 = vst [vmem:[#allocation2 + $0x68] sm:$0xff] 0.0
          %331 = vst [vmem:[#allocation2 + $0x70] sm:$0xff] 0.0
          %332 = vst [vmem:[#allocation2 + $0x78] sm:$0xff] 0.0
          %333 = vst [vmem:[#allocation2 + $0x80] sm:$0xff] 0.0
          %334 = vst [vmem:[#allocation2 + $0x88] sm:$0xff] 0.0
          %335 = vst [vmem:[#allocation2 + $0x90] sm:$0xff] 0.0
          %336 = vst [vmem:[#allocation2 + $0x98] sm:$0xff] 0.0
          %337 = vst [vmem:[#allocation2 + $0xa0] sm:$0xff] 0.0
          %338 = vst [vmem:[#allocation2 + $0xa8] sm:$0xff] 0.0
          %339 = vst [vmem:[#allocation2 + $0xb0] sm:$0xff] 0.0
          %340 = vst [vmem:[#allocation2 + $0xb8] sm:$0xff] 0.0
          %341 = vst [vmem:[#allocation2 + $0xc0] sm:$0xff] 0.0
          %342 = vst [vmem:[#allocation2 + $0xc8] sm:$0xff] 0.0
          %343 = vst [vmem:[#allocation2 + $0xd0] sm:$0xff] 0.0
          %344 = vst [vmem:[#allocation2 + $0xd8] sm:$0xff] 0.0
          %345 = vst [vmem:[#allocation2 + $0xe0] sm:$0xff] 0.0
          %346 = vst [vmem:[#allocation2 + $0xe8] sm:$0xff] 0.0
          %347 = vst [vmem:[#allocation2 + $0xf0] sm:$0xff] 0.0
          %348 = vst [vmem:[#allocation2 + $0xf8] sm:$0xff] 0.0
        $region32: #{dcgan_generator_forward.17} parent=27 // pred_fallthru
          _
        %v349 = vld [vmem:[#allocation2] sm:$0xff]
        %v350 = vld [vmem:[#allocation2 + $0x8] sm:$0xff]
        %v351 = vld [vmem:[#allocation2 + $0x10] sm:$0xff]
        %v352 = vld [vmem:[#allocation2 + $0x18] sm:$0xff]
        %v353 = vld [vmem:[#allocation2 + $0x20] sm:$0xff]
        %v354 = vld [vmem:[#allocation2 + $0x28] sm:$0xff]
        %v355 = vld [vmem:[#allocation2 + $0x30] sm:$0xff]
        %v356 = vld [vmem:[#allocation2 + $0x38] sm:$0xff]
        %v357 = vld [vmem:[#allocation2 + $0x40] sm:$0xff]
        %v358 = vld [vmem:[#allocation2 + $0x48] sm:$0xff]
        %v359 = vld [vmem:[#allocation2 + $0x50] sm:$0xff]
        %v360 = vld [vmem:[#allocation2 + $0x58] sm:$0xff]
        %v361 = vld [vmem:[#allocation2 + $0x60] sm:$0xff]
        %v362 = vld [vmem:[#allocation2 + $0x68] sm:$0xff]
        %v363 = vld [vmem:[#allocation2 + $0x70] sm:$0xff]
        %v364 = vld [vmem:[#allocation2 + $0x78] sm:$0xff]
        %v365 = vld [vmem:[#allocation2 + $0x80] sm:$0xff]
        %v366 = vld [vmem:[#allocation2 + $0x88] sm:$0xff]
        %v367 = vld [vmem:[#allocation2 + $0x90] sm:$0xff]
        %v368 = vld [vmem:[#allocation2 + $0x98] sm:$0xff]
        %v369 = vld [vmem:[#allocation2 + $0xa0] sm:$0xff]
        %v370 = vld [vmem:[#allocation2 + $0xa8] sm:$0xff]
        %v371 = vld [vmem:[#allocation2 + $0xb0] sm:$0xff]
        %v372 = vld [vmem:[#allocation2 + $0xb8] sm:$0xff]
        %v373 = vld [vmem:[#allocation2 + $0xc0] sm:$0xff]
        %v374 = vld [vmem:[#allocation2 + $0xc8] sm:$0xff]
        %v375 = vld [vmem:[#allocation2 + $0xd0] sm:$0xff]
        %v376 = vld [vmem:[#allocation2 + $0xd8] sm:$0xff]
        %v377 = vld [vmem:[#allocation2 + $0xe0] sm:$0xff]
        %v378 = vld [vmem:[#allocation2 + $0xe8] sm:$0xff]
        %v379 = vld [vmem:[#allocation2 + $0xf0] sm:$0xff]
        %v380 = vld [vmem:[#allocation2 + $0xf8] sm:$0xff]
        %v381 = vld [vmem:[%s284] sm:$0xff]
        %v382 = vld [vmem:[%s284 + $0x8] sm:$0xff]
        %v383 = vld [vmem:[%s284 + $0x10] sm:$0xff]
        %v384 = vld [vmem:[%s284 + $0x18] sm:$0xff]
        %v385 = vld [vmem:[%s284 + $0x20] sm:$0xff]
        %v386 = vld [vmem:[%s284 + $0x28] sm:$0xff]
        %v387 = vld [vmem:[%s284 + $0x30] sm:$0xff]
        %v388 = vld [vmem:[%s284 + $0x38] sm:$0xff]
        %v389 = vld [vmem:[%s284 + $0x40] sm:$0xff]
        %v390 = vld [vmem:[%s284 + $0x48] sm:$0xff]
        %v391 = vld [vmem:[%s284 + $0x50] sm:$0xff]
        %v392 = vld [vmem:[%s284 + $0x58] sm:$0xff]
        %v393 = vld [vmem:[%s284 + $0x60] sm:$0xff]
        %v394 = vld [vmem:[%s284 + $0x68] sm:$0xff]
        %v395 = vld [vmem:[%s284 + $0x70] sm:$0xff]
        %v396 = vld [vmem:[%s284 + $0x78] sm:$0xff]
        %v397 = vld [vmem:[%s284 + $0x80] sm:$0xff]
        %v398 = vld [vmem:[%s284 + $0x88] sm:$0xff]
        %v399 = vld [vmem:[%s284 + $0x90] sm:$0xff]
        %v400 = vld [vmem:[%s284 + $0x98] sm:$0xff]
        %v401 = vld [vmem:[%s284 + $0xa0] sm:$0xff]
        %v402 = vld [vmem:[%s284 + $0xa8] sm:$0xff]
        %v403 = vld [vmem:[%s284 + $0xb0] sm:$0xff]
        %v404 = vld [vmem:[%s284 + $0xb8] sm:$0xff]
        %v405 = vld [vmem:[%s284 + $0xc0] sm:$0xff]
        %v406 = vld [vmem:[%s284 + $0xc8] sm:$0xff]
        %v407 = vld [vmem:[%s284 + $0xd0] sm:$0xff]
        %v408 = vld [vmem:[%s284 + $0xd8] sm:$0xff]
        %v409 = vld [vmem:[%s284 + $0xe0] sm:$0xff]
        %v410 = vld [vmem:[%s284 + $0xe8] sm:$0xff]
        %v411 = vld [vmem:[%s284 + $0xf0] sm:$0xff]
        %v412 = vld [vmem:[%s284 + $0xf8] sm:$0xff]
        %v413 = vld [vmem:[%s284 + $0x100] sm:$0xff]
        %v414 = vld [vmem:[%s284 + $0x108] sm:$0xff]
        %v415 = vld [vmem:[%s284 + $0x110] sm:$0xff]
        %v416 = vld [vmem:[%s284 + $0x118] sm:$0xff]
        %v417 = vld [vmem:[%s284 + $0x120] sm:$0xff]
        %v418 = vld [vmem:[%s284 + $0x128] sm:$0xff]
        %v419 = vld [vmem:[%s284 + $0x130] sm:$0xff]
        %v420 = vld [vmem:[%s284 + $0x138] sm:$0xff]
        %v421 = vld [vmem:[%s284 + $0x140] sm:$0xff]
        %v422 = vld [vmem:[%s284 + $0x148] sm:$0xff]
        %v423 = vld [vmem:[%s284 + $0x150] sm:$0xff]
        %v424 = vld [vmem:[%s284 + $0x158] sm:$0xff]
        %v425 = vld [vmem:[%s284 + $0x160] sm:$0xff]
        %v426 = vld [vmem:[%s284 + $0x168] sm:$0xff]
        %v427 = vld [vmem:[%s284 + $0x170] sm:$0xff]
        %v428 = vld [vmem:[%s284 + $0x178] sm:$0xff]
        %v429 = vld [vmem:[%s284 + $0x180] sm:$0xff]
        %v430 = vld [vmem:[%s284 + $0x188] sm:$0xff]
        %v431 = vld [vmem:[%s284 + $0x190] sm:$0xff]
        %v432 = vld [vmem:[%s284 + $0x198] sm:$0xff]
        %v433 = vld [vmem:[%s284 + $0x1a0] sm:$0xff]
        %v434 = vld [vmem:[%s284 + $0x1a8] sm:$0xff]
        %v435 = vld [vmem:[%s284 + $0x1b0] sm:$0xff]
        %v436 = vld [vmem:[%s284 + $0x1b8] sm:$0xff]
        %v437 = vld [vmem:[%s284 + $0x1c0] sm:$0xff]
        %v438 = vld [vmem:[%s284 + $0x1c8] sm:$0xff]
        %v439 = vld [vmem:[%s284 + $0x1d0] sm:$0xff]
        %v440 = vld [vmem:[%s284 + $0x1d8] sm:$0xff]
        %v441 = vld [vmem:[%s284 + $0x1e0] sm:$0xff]
        %v442 = vld [vmem:[%s284 + $0x1e8] sm:$0xff]
        %v443 = vld [vmem:[%s284 + $0x1f0] sm:$0xff]
        %v444 = vld [vmem:[%s284 + $0x1f8] sm:$0xff]
        %v445 = vld [vmem:[%s298] sm:$0xf]
        %v446 = vld [vmem:[%s298 + $0x4] sm:$0xf]
        %v447 = vld [vmem:[%s298 + $0x8] sm:$0xf]
        %v448 = vld [vmem:[%s298 + $0xc] sm:$0xf]
        %v449 = vld [vmem:[%s298 + $0x10] sm:$0xf]
        %v450 = vld [vmem:[%s298 + $0x14] sm:$0xf]
        %v451 = vld [vmem:[%s298 + $0x18] sm:$0xf]
        %v452 = vld [vmem:[%s298 + $0x1c] sm:$0xf]
        %v453 = vld [vmem:[%s298 + $0x20] sm:$0xf]
        %v454 = vld [vmem:[%s298 + $0x24] sm:$0xf]
        %v455 = vld [vmem:[%s298 + $0x28] sm:$0xf]
        %v456 = vld [vmem:[%s298 + $0x2c] sm:$0xf]
        %v457 = vld [vmem:[%s298 + $0x30] sm:$0xf]
        %v458 = vld [vmem:[%s298 + $0x34] sm:$0xf]
        %v459 = vld [vmem:[%s298 + $0x38] sm:$0xf]
        %v460 = vld [vmem:[%s298 + $0x3c] sm:$0xf]
        %v461 = vld [vmem:[%s298 + $0x40] sm:$0xf]
        %v462 = vld [vmem:[%s298 + $0x44] sm:$0xf]
        %v463 = vld [vmem:[%s298 + $0x48] sm:$0xf]
        %v464 = vld [vmem:[%s298 + $0x4c] sm:$0xf]
        %v465 = vld [vmem:[%s298 + $0x50] sm:$0xf]
        %v466 = vld [vmem:[%s298 + $0x54] sm:$0xf]
        %v467 = vld [vmem:[%s298 + $0x58] sm:$0xf]
        %v468 = vld [vmem:[%s298 + $0x5c] sm:$0xf]
        %v469 = vld [vmem:[%s298 + $0x60] sm:$0xf]
        %v470 = vld [vmem:[%s298 + $0x64] sm:$0xf]
        %v471 = vld [vmem:[%s298 + $0x68] sm:$0xf]
        %v472 = vld [vmem:[%s298 + $0x6c] sm:$0xf]
        %v473 = vld [vmem:[%s298 + $0x70] sm:$0xf]
        %v474 = vld [vmem:[%s298 + $0x74] sm:$0xf]
        %v475 = vld [vmem:[%s298 + $0x78] sm:$0xf]
        %v476 = vld [vmem:[%s298 + $0x7c] sm:$0xf]
        %v477 = vld [vmem:[%s298 + $0x80] sm:$0xf]
        %v478 = vld [vmem:[%s298 + $0x84] sm:$0xf]
        %v479 = vld [vmem:[%s298 + $0x88] sm:$0xf]
        %v480 = vld [vmem:[%s298 + $0x8c] sm:$0xf]
        %v481 = vld [vmem:[%s298 + $0x90] sm:$0xf]
        %v482 = vld [vmem:[%s298 + $0x94] sm:$0xf]
        %v483 = vld [vmem:[%s298 + $0x98] sm:$0xf]
        %v484 = vld [vmem:[%s298 + $0x9c] sm:$0xf]
        %v485 = vld [vmem:[%s298 + $0xa0] sm:$0xf]
        %v486 = vld [vmem:[%s298 + $0xa4] sm:$0xf]
        %v487 = vld [vmem:[%s298 + $0xa8] sm:$0xf]
        %v488 = vld [vmem:[%s298 + $0xac] sm:$0xf]
        %v489 = vld [vmem:[%s298 + $0xb0] sm:$0xf]
        %v490 = vld [vmem:[%s298 + $0xb4] sm:$0xf]
        %v491 = vld [vmem:[%s298 + $0xb8] sm:$0xf]
        %v492 = vld [vmem:[%s298 + $0xbc] sm:$0xf]
        %v493 = vld [vmem:[%s298 + $0xc0] sm:$0xf]
        %v494 = vld [vmem:[%s298 + $0xc4] sm:$0xf]
        %v495 = vld [vmem:[%s298 + $0xc8] sm:$0xf]
        %v496 = vld [vmem:[%s298 + $0xcc] sm:$0xf]
        %v497 = vld [vmem:[%s298 + $0xd0] sm:$0xf]
        %v498 = vld [vmem:[%s298 + $0xd4] sm:$0xf]
        %v499 = vld [vmem:[%s298 + $0xd8] sm:$0xf]
        %v500 = vld [vmem:[%s298 + $0xdc] sm:$0xf]
        %v501 = vld [vmem:[%s298 + $0xe0] sm:$0xf]
        %v502 = vld [vmem:[%s298 + $0xe4] sm:$0xf]
        %v503 = vld [vmem:[%s298 + $0xe8] sm:$0xf]
        %v504 = vld [vmem:[%s298 + $0xec] sm:$0xf]
        %v505 = vld [vmem:[%s298 + $0xf0] sm:$0xf]
        %v506 = vld [vmem:[%s298 + $0xf4] sm:$0xf]
        %v507 = vld [vmem:[%s298 + $0xf8] sm:$0xf]
        %v508 = vld [vmem:[%s298 + $0xfc] sm:$0xf]
        %v573 = vunpack.c.l.b16 %v381
        %v574 = vunpack.c.h.b16 %v381
        %v575 = vunpack.c.l.b16 %v382
        %v576 = vunpack.c.h.b16 %v382
        %v577 = vunpack.c.l.b16 %v383
        %v578 = vunpack.c.h.b16 %v383
        %v579 = vunpack.c.l.b16 %v384
        %v580 = vunpack.c.h.b16 %v384
        %v581 = vunpack.c.l.b16 %v385
        %v582 = vunpack.c.h.b16 %v385
        %v583 = vunpack.c.l.b16 %v386
        %v584 = vunpack.c.h.b16 %v386
        %v585 = vunpack.c.l.b16 %v387
        %v586 = vunpack.c.h.b16 %v387
        %v587 = vunpack.c.l.b16 %v388
        %v588 = vunpack.c.h.b16 %v388
        %v589 = vunpack.c.l.b16 %v389
        %v590 = vunpack.c.h.b16 %v389
        %v591 = vunpack.c.l.b16 %v390
        %v592 = vunpack.c.h.b16 %v390
        %v593 = vunpack.c.l.b16 %v391
        %v594 = vunpack.c.h.b16 %v391
        %v595 = vunpack.c.l.b16 %v392
        %v596 = vunpack.c.h.b16 %v392
        %v597 = vunpack.c.l.b16 %v393
        %v598 = vunpack.c.h.b16 %v393
        %v599 = vunpack.c.l.b16 %v394
        %v600 = vunpack.c.h.b16 %v394
        %v601 = vunpack.c.l.b16 %v395
        %v602 = vunpack.c.h.b16 %v395
        %v603 = vunpack.c.l.b16 %v396
        %v604 = vunpack.c.h.b16 %v396
        %v605 = vunpack.c.l.b16 %v397
        %v606 = vunpack.c.h.b16 %v397
        %v607 = vunpack.c.l.b16 %v398
        %v608 = vunpack.c.h.b16 %v398
        %v609 = vunpack.c.l.b16 %v399
        %v610 = vunpack.c.h.b16 %v399
        %v611 = vunpack.c.l.b16 %v400
        %v612 = vunpack.c.h.b16 %v400
        %v613 = vunpack.c.l.b16 %v401
        %v614 = vunpack.c.h.b16 %v401
        %v615 = vunpack.c.l.b16 %v402
        %v616 = vunpack.c.h.b16 %v402
        %v617 = vunpack.c.l.b16 %v403
        %v618 = vunpack.c.h.b16 %v403
        %v619 = vunpack.c.l.b16 %v404
        %v620 = vunpack.c.h.b16 %v404
        %v621 = vunpack.c.l.b16 %v405
        %v622 = vunpack.c.h.b16 %v405
        %v623 = vunpack.c.l.b16 %v406
        %v624 = vunpack.c.h.b16 %v406
        %v625 = vunpack.c.l.b16 %v407
        %v626 = vunpack.c.h.b16 %v407
        %v627 = vunpack.c.l.b16 %v408
        %v628 = vunpack.c.h.b16 %v408
        %v629 = vunpack.c.l.b16 %v409
        %v630 = vunpack.c.h.b16 %v409
        %v631 = vunpack.c.l.b16 %v410
        %v632 = vunpack.c.h.b16 %v410
        %v633 = vunpack.c.l.b16 %v411
        %v634 = vunpack.c.h.b16 %v411
        %v635 = vunpack.c.l.b16 %v412
        %v636 = vunpack.c.h.b16 %v412
        %v637 = vunpack.c.l.b16 %v413
        %v638 = vunpack.c.h.b16 %v413
        %v639 = vunpack.c.l.b16 %v414
        %v640 = vunpack.c.h.b16 %v414
        %v641 = vunpack.c.l.b16 %v415
        %v642 = vunpack.c.h.b16 %v415
        %v643 = vunpack.c.l.b16 %v416
        %v644 = vunpack.c.h.b16 %v416
        %v645 = vunpack.c.l.b16 %v417
        %v646 = vunpack.c.h.b16 %v417
        %v647 = vunpack.c.l.b16 %v418
        %v648 = vunpack.c.h.b16 %v418
        %v649 = vunpack.c.l.b16 %v419
        %v650 = vunpack.c.h.b16 %v419
        %v651 = vunpack.c.l.b16 %v420
        %v652 = vunpack.c.h.b16 %v420
        %v653 = vunpack.c.l.b16 %v421
        %v654 = vunpack.c.h.b16 %v421
        %v655 = vunpack.c.l.b16 %v422
        %v656 = vunpack.c.h.b16 %v422
        %v657 = vunpack.c.l.b16 %v423
        %v658 = vunpack.c.h.b16 %v423
        %v659 = vunpack.c.l.b16 %v424
        %v660 = vunpack.c.h.b16 %v424
        %v661 = vunpack.c.l.b16 %v425
        %v662 = vunpack.c.h.b16 %v425
        %v663 = vunpack.c.l.b16 %v426
        %v664 = vunpack.c.h.b16 %v426
        %v665 = vunpack.c.l.b16 %v427
        %v666 = vunpack.c.h.b16 %v427
        %v667 = vunpack.c.l.b16 %v428
        %v668 = vunpack.c.h.b16 %v428
        %v669 = vunpack.c.l.b16 %v429
        %v670 = vunpack.c.h.b16 %v429
        %v671 = vunpack.c.l.b16 %v430
        %v672 = vunpack.c.h.b16 %v430
        %v673 = vunpack.c.l.b16 %v431
        %v674 = vunpack.c.h.b16 %v431
        %v675 = vunpack.c.l.b16 %v432
        %v676 = vunpack.c.h.b16 %v432
        %v677 = vunpack.c.l.b16 %v433
        %v678 = vunpack.c.h.b16 %v433
        %v679 = vunpack.c.l.b16 %v434
        %v680 = vunpack.c.h.b16 %v434
        %v681 = vunpack.c.l.b16 %v435
        %v682 = vunpack.c.h.b16 %v435
        %v683 = vunpack.c.l.b16 %v436
        %v684 = vunpack.c.h.b16 %v436
        %v685 = vunpack.c.l.b16 %v437
        %v686 = vunpack.c.h.b16 %v437
        %v687 = vunpack.c.l.b16 %v438
        %v688 = vunpack.c.h.b16 %v438
        %v689 = vunpack.c.l.b16 %v439
        %v690 = vunpack.c.h.b16 %v439
        %v691 = vunpack.c.l.b16 %v440
        %v692 = vunpack.c.h.b16 %v440
        %v693 = vunpack.c.l.b16 %v441
        %v694 = vunpack.c.h.b16 %v441
        %v695 = vunpack.c.l.b16 %v442
        %v696 = vunpack.c.h.b16 %v442
        %v697 = vunpack.c.l.b16 %v443
        %v698 = vunpack.c.h.b16 %v443
        %v699 = vunpack.c.l.b16 %v444
        %v700 = vunpack.c.h.b16 %v444
        %v701 = vpack.c.b16 %v577, %v573
        %v702 = vpack.c.b16 %v578, %v574
        %v703 = vpack.c.b16 %v579, %v575
        %v704 = vpack.c.b16 %v580, %v576
        %v705 = vpack.c.b16 %v585, %v581
        %v706 = vpack.c.b16 %v586, %v582
        %v707 = vpack.c.b16 %v587, %v583
        %v708 = vpack.c.b16 %v588, %v584
        %v709 = vpack.c.b16 %v593, %v589
        %v710 = vpack.c.b16 %v594, %v590
        %v711 = vpack.c.b16 %v595, %v591
        %v712 = vpack.c.b16 %v596, %v592
        %v713 = vpack.c.b16 %v601, %v597
        %v714 = vpack.c.b16 %v602, %v598
        %v715 = vpack.c.b16 %v603, %v599
        %v716 = vpack.c.b16 %v604, %v600
        %v717 = vpack.c.b16 %v609, %v605
        %v718 = vpack.c.b16 %v610, %v606
        %v719 = vpack.c.b16 %v611, %v607
        %v720 = vpack.c.b16 %v612, %v608
        %v721 = vpack.c.b16 %v617, %v613
        %v722 = vpack.c.b16 %v618, %v614
        %v723 = vpack.c.b16 %v619, %v615
        %v724 = vpack.c.b16 %v620, %v616
        %v725 = vpack.c.b16 %v625, %v621
        %v726 = vpack.c.b16 %v626, %v622
        %v727 = vpack.c.b16 %v627, %v623
        %v728 = vpack.c.b16 %v628, %v624
        %v729 = vpack.c.b16 %v633, %v629
        %v730 = vpack.c.b16 %v634, %v630
        %v731 = vpack.c.b16 %v635, %v631
        %v732 = vpack.c.b16 %v636, %v632
        %v733 = vpack.c.b16 %v641, %v637
        %v734 = vpack.c.b16 %v642, %v638
        %v735 = vpack.c.b16 %v643, %v639
        %v736 = vpack.c.b16 %v644, %v640
        %v737 = vpack.c.b16 %v649, %v645
        %v738 = vpack.c.b16 %v650, %v646
        %v739 = vpack.c.b16 %v651, %v647
        %v740 = vpack.c.b16 %v652, %v648
        %v741 = vpack.c.b16 %v657, %v653
        %v742 = vpack.c.b16 %v658, %v654
        %v743 = vpack.c.b16 %v659, %v655
        %v744 = vpack.c.b16 %v660, %v656
        %v745 = vpack.c.b16 %v665, %v661
        %v746 = vpack.c.b16 %v666, %v662
        %v747 = vpack.c.b16 %v667, %v663
        %v748 = vpack.c.b16 %v668, %v664
        %v749 = vpack.c.b16 %v673, %v669
        %v750 = vpack.c.b16 %v674, %v670
        %v751 = vpack.c.b16 %v675, %v671
        %v752 = vpack.c.b16 %v676, %v672
        %v753 = vpack.c.b16 %v681, %v677
        %v754 = vpack.c.b16 %v682, %v678
        %v755 = vpack.c.b16 %v683, %v679
        %v756 = vpack.c.b16 %v684, %v680
        %v757 = vpack.c.b16 %v689, %v685
        %v758 = vpack.c.b16 %v690, %v686
        %v759 = vpack.c.b16 %v691, %v687
        %v760 = vpack.c.b16 %v692, %v688
        %v761 = vpack.c.b16 %v697, %v693
        %v762 = vpack.c.b16 %v698, %v694
        %v763 = vpack.c.b16 %v699, %v695
        %v764 = vpack.c.b16 %v700, %v696
        %v893 = vunpack.c.l.b16 %v445
        %v894 = vunpack.c.l.b16 %v446
        %v895 = vunpack.c.l.b16 %v447
        %v896 = vunpack.c.l.b16 %v448
        %v897 = vunpack.c.l.b16 %v449
        %v898 = vunpack.c.l.b16 %v450
        %v899 = vunpack.c.l.b16 %v451
        %v900 = vunpack.c.l.b16 %v452
        %v901 = vunpack.c.l.b16 %v453
        %v902 = vunpack.c.l.b16 %v454
        %v903 = vunpack.c.l.b16 %v455
        %v904 = vunpack.c.l.b16 %v456
        %v905 = vunpack.c.l.b16 %v457
        %v906 = vunpack.c.l.b16 %v458
        %v907 = vunpack.c.l.b16 %v459
        %v908 = vunpack.c.l.b16 %v460
        %v909 = vunpack.c.l.b16 %v461
        %v910 = vunpack.c.l.b16 %v462
        %v911 = vunpack.c.l.b16 %v463
        %v912 = vunpack.c.l.b16 %v464
        %v913 = vunpack.c.l.b16 %v465
        %v914 = vunpack.c.l.b16 %v466
        %v915 = vunpack.c.l.b16 %v467
        %v916 = vunpack.c.l.b16 %v468
        %v917 = vunpack.c.l.b16 %v469
        %v918 = vunpack.c.l.b16 %v470
        %v919 = vunpack.c.l.b16 %v471
        %v920 = vunpack.c.l.b16 %v472
        %v921 = vunpack.c.l.b16 %v473
        %v922 = vunpack.c.l.b16 %v474
        %v923 = vunpack.c.l.b16 %v475
        %v924 = vunpack.c.l.b16 %v476
        %v925 = vunpack.c.l.b16 %v477
        %v926 = vunpack.c.l.b16 %v478
        %v927 = vunpack.c.l.b16 %v479
        %v928 = vunpack.c.l.b16 %v480
        %v929 = vunpack.c.l.b16 %v481
        %v930 = vunpack.c.l.b16 %v482
        %v931 = vunpack.c.l.b16 %v483
        %v932 = vunpack.c.l.b16 %v484
        %v933 = vunpack.c.l.b16 %v485
        %v934 = vunpack.c.l.b16 %v486
        %v935 = vunpack.c.l.b16 %v487
        %v936 = vunpack.c.l.b16 %v488
        %v937 = vunpack.c.l.b16 %v489
        %v938 = vunpack.c.l.b16 %v490
        %v939 = vunpack.c.l.b16 %v491
        %v940 = vunpack.c.l.b16 %v492
        %v941 = vunpack.c.l.b16 %v493
        %v942 = vunpack.c.l.b16 %v494
        %v943 = vunpack.c.l.b16 %v495
        %v944 = vunpack.c.l.b16 %v496
        %v945 = vunpack.c.l.b16 %v497
        %v946 = vunpack.c.l.b16 %v498
        %v947 = vunpack.c.l.b16 %v499
        %v948 = vunpack.c.l.b16 %v500
        %v949 = vunpack.c.l.b16 %v501
        %v950 = vunpack.c.l.b16 %v502
        %v951 = vunpack.c.l.b16 %v503
        %v952 = vunpack.c.l.b16 %v504
        %v953 = vunpack.c.l.b16 %v505
        %v954 = vunpack.c.l.b16 %v506
        %v955 = vunpack.c.l.b16 %v507
        %v956 = vunpack.c.l.b16 %v508
        %v957 = vpack.c.b16 %v894, %v893
        %v958 = vpack.c.b16 %v896, %v895
        %v959 = vpack.c.b16 %v898, %v897
        %v960 = vpack.c.b16 %v900, %v899
        %v961 = vpack.c.b16 %v902, %v901
        %v962 = vpack.c.b16 %v904, %v903
        %v963 = vpack.c.b16 %v906, %v905
        %v964 = vpack.c.b16 %v908, %v907
        %v965 = vpack.c.b16 %v910, %v909
        %v966 = vpack.c.b16 %v912, %v911
        %v967 = vpack.c.b16 %v914, %v913
        %v968 = vpack.c.b16 %v916, %v915
        %v969 = vpack.c.b16 %v918, %v917
        %v970 = vpack.c.b16 %v920, %v919
        %v971 = vpack.c.b16 %v922, %v921
        %v972 = vpack.c.b16 %v924, %v923
        %v973 = vpack.c.b16 %v926, %v925
        %v974 = vpack.c.b16 %v928, %v927
        %v975 = vpack.c.b16 %v930, %v929
        %v976 = vpack.c.b16 %v932, %v931
        %v977 = vpack.c.b16 %v934, %v933
        %v978 = vpack.c.b16 %v936, %v935
        %v979 = vpack.c.b16 %v938, %v937
        %v980 = vpack.c.b16 %v940, %v939
        %v981 = vpack.c.b16 %v942, %v941
        %v982 = vpack.c.b16 %v944, %v943
        %v983 = vpack.c.b16 %v946, %v945
        %v984 = vpack.c.b16 %v948, %v947
        %v985 = vpack.c.b16 %v950, %v949
        %v986 = vpack.c.b16 %v952, %v951
        %v987 = vpack.c.b16 %v954, %v953
        %v988 = vpack.c.b16 %v956, %v955
        %1021 = vmatpush.bf16.msra.mxu0 %v964
        %1022 = vmatpush.bf16.msra.mxu0 %v963
        %1023 = vmatpush.bf16.msra.mxu0 %v962
        %1024 = vmatpush.bf16.msra.mxu0 %v961
        %1025 = vmatpush.bf16.msra.mxu0 %v960
        %1026 = vmatpush.bf16.msra.mxu0 %v959
        %1027 = vmatpush.bf16.msra.mxu0 %v958
        %1028 = vmatpush.bf16.msra.mxu0 %v957
        %1029 = vmatmul.bf16.gmra.mxu0 %v701
        %v1030 = vpop.f32.mrf.mxu0
        %v1031 = vadd.f32 0.0, %v1030
        %v1032 = vpop.f32.mrf.mxu0
        %v1033 = vadd.f32 0.0, %v1032
        %1034 = vmatmul.bf16.gmra.mxu0 %v705
        %v1035 = vpop.f32.mrf.mxu0
        %v1036 = vadd.f32 0.0, %v1035
        %v1037 = vpop.f32.mrf.mxu0
        %v1038 = vadd.f32 0.0, %v1037
        %1039 = vmatmul.bf16.gmra.mxu0 %v709
        %v1040 = vpop.f32.mrf.mxu0
        %v1041 = vadd.f32 0.0, %v1040
        %v1042 = vpop.f32.mrf.mxu0
        %v1043 = vadd.f32 0.0, %v1042
        %1044 = vmatmul.bf16.gmra.mxu0 %v713
        %v1045 = vpop.f32.mrf.mxu0
        %v1046 = vadd.f32 0.0, %v1045
        %v1047 = vpop.f32.mrf.mxu0
        %v1048 = vadd.f32 0.0, %v1047
        %1049 = vmatmul.bf16.gmra.mxu0 %v717
        %v1050 = vpop.f32.mrf.mxu0
        %v1051 = vadd.f32 0.0, %v1050
        %v1052 = vpop.f32.mrf.mxu0
        %v1053 = vadd.f32 0.0, %v1052
        %1054 = vmatmul.bf16.gmra.mxu0 %v721
        %v1055 = vpop.f32.mrf.mxu0
        %v1056 = vadd.f32 0.0, %v1055
        %v1057 = vpop.f32.mrf.mxu0
        %v1058 = vadd.f32 0.0, %v1057
        %1059 = vmatmul.bf16.gmra.mxu0 %v725
        %v1060 = vpop.f32.mrf.mxu0
        %v1061 = vadd.f32 0.0, %v1060
        %v1062 = vpop.f32.mrf.mxu0
        %v1063 = vadd.f32 0.0, %v1062
        %1064 = vmatmul.bf16.gmra.mxu0 %v729
        %v1065 = vpop.f32.mrf.mxu0
        %v1066 = vadd.f32 0.0, %v1065
        %v1067 = vpop.f32.mrf.mxu0
        %v1068 = vadd.f32 0.0, %v1067
        %1069 = vmatmul.bf16.gmra.mxu0 %v733
        %v1070 = vpop.f32.mrf.mxu0
        %v1071 = vadd.f32 0.0, %v1070
        %v1072 = vpop.f32.mrf.mxu0
        %v1073 = vadd.f32 0.0, %v1072
        %1074 = vmatmul.bf16.gmra.mxu0 %v737
        %v1075 = vpop.f32.mrf.mxu0
        %v1076 = vadd.f32 0.0, %v1075
        %v1077 = vpop.f32.mrf.mxu0
        %v1078 = vadd.f32 0.0, %v1077
        %1079 = vmatmul.bf16.gmra.mxu0 %v741
        %v1080 = vpop.f32.mrf.mxu0
        %v1081 = vadd.f32 0.0, %v1080
        %v1082 = vpop.f32.mrf.mxu0
        %v1083 = vadd.f32 0.0, %v1082
        %1084 = vmatmul.bf16.gmra.mxu0 %v745
        %v1085 = vpop.f32.mrf.mxu0
        %v1086 = vadd.f32 0.0, %v1085
        %v1087 = vpop.f32.mrf.mxu0
        %v1088 = vadd.f32 0.0, %v1087
        %1089 = vmatmul.bf16.gmra.mxu0 %v749
        %v1090 = vpop.f32.mrf.mxu0
        %v1091 = vadd.f32 0.0, %v1090
        %v1092 = vpop.f32.mrf.mxu0
        %v1093 = vadd.f32 0.0, %v1092
        %1094 = vmatmul.bf16.gmra.mxu0 %v753
        %v1095 = vpop.f32.mrf.mxu0
        %v1096 = vadd.f32 0.0, %v1095
        %v1097 = vpop.f32.mrf.mxu0
        %v1098 = vadd.f32 0.0, %v1097
        %1099 = vmatmul.bf16.gmra.mxu0 %v757
        %v1100 = vpop.f32.mrf.mxu0
        %v1101 = vadd.f32 0.0, %v1100
        %v1102 = vpop.f32.mrf.mxu0
        %v1103 = vadd.f32 0.0, %v1102
        %1104 = vmatmul.bf16.gmra.mxu0 %v761
        %v1105 = vpop.f32.mrf.mxu0
        %v1106 = vadd.f32 0.0, %v1105
        %v1107 = vpop.f32.mrf.mxu0
        %v1108 = vadd.f32 0.0, %v1107
        %1109 = vdwg.mxu0
        %1110 = vmatpush.bf16.msra.mxu0 %v972
        %1111 = vmatpush.bf16.msra.mxu0 %v971
        %1112 = vmatpush.bf16.msra.mxu0 %v970
        %1113 = vmatpush.bf16.msra.mxu0 %v969
        %1114 = vmatpush.bf16.msra.mxu0 %v968
        %1115 = vmatpush.bf16.msra.mxu0 %v967
        %1116 = vmatpush.bf16.msra.mxu0 %v966
        %1117 = vmatpush.bf16.msra.mxu0 %v965
        %1118 = vmatmul.bf16.gmra.mxu0 %v702
        %v1119 = vpop.f32.mrf.mxu0
        %v1120 = vadd.f32 %v1031, %v1119
        %v1121 = vpop.f32.mrf.mxu0
        %v1122 = vadd.f32 %v1033, %v1121
        %1123 = vmatmul.bf16.gmra.mxu0 %v706
        %v1124 = vpop.f32.mrf.mxu0
        %v1125 = vadd.f32 %v1036, %v1124
        %v1126 = vpop.f32.mrf.mxu0
        %v1127 = vadd.f32 %v1038, %v1126
        %1128 = vmatmul.bf16.gmra.mxu0 %v710
        %v1129 = vpop.f32.mrf.mxu0
        %v1130 = vadd.f32 %v1041, %v1129
        %v1131 = vpop.f32.mrf.mxu0
        %v1132 = vadd.f32 %v1043, %v1131
        %1133 = vmatmul.bf16.gmra.mxu0 %v714
        %v1134 = vpop.f32.mrf.mxu0
        %v1135 = vadd.f32 %v1046, %v1134
        %v1136 = vpop.f32.mrf.mxu0
        %v1137 = vadd.f32 %v1048, %v1136
        %1138 = vmatmul.bf16.gmra.mxu0 %v718
        %v1139 = vpop.f32.mrf.mxu0
        %v1140 = vadd.f32 %v1051, %v1139
        %v1141 = vpop.f32.mrf.mxu0
        %v1142 = vadd.f32 %v1053, %v1141
        %1143 = vmatmul.bf16.gmra.mxu0 %v722
        %v1144 = vpop.f32.mrf.mxu0
        %v1145 = vadd.f32 %v1056, %v1144
        %v1146 = vpop.f32.mrf.mxu0
        %v1147 = vadd.f32 %v1058, %v1146
        %1148 = vmatmul.bf16.gmra.mxu0 %v726
        %v1149 = vpop.f32.mrf.mxu0
        %v1150 = vadd.f32 %v1061, %v1149
        %v1151 = vpop.f32.mrf.mxu0
        %v1152 = vadd.f32 %v1063, %v1151
        %1153 = vmatmul.bf16.gmra.mxu0 %v730
        %v1154 = vpop.f32.mrf.mxu0
        %v1155 = vadd.f32 %v1066, %v1154
        %v1156 = vpop.f32.mrf.mxu0
        %v1157 = vadd.f32 %v1068, %v1156
        %1158 = vmatmul.bf16.gmra.mxu0 %v734
        %v1159 = vpop.f32.mrf.mxu0
        %v1160 = vadd.f32 %v1071, %v1159
        %v1161 = vpop.f32.mrf.mxu0
        %v1162 = vadd.f32 %v1073, %v1161
        %1163 = vmatmul.bf16.gmra.mxu0 %v738
        %v1164 = vpop.f32.mrf.mxu0
        %v1165 = vadd.f32 %v1076, %v1164
        %v1166 = vpop.f32.mrf.mxu0
        %v1167 = vadd.f32 %v1078, %v1166
        %1168 = vmatmul.bf16.gmra.mxu0 %v742
        %v1169 = vpop.f32.mrf.mxu0
        %v1170 = vadd.f32 %v1081, %v1169
        %v1171 = vpop.f32.mrf.mxu0
        %v1172 = vadd.f32 %v1083, %v1171
        %1173 = vmatmul.bf16.gmra.mxu0 %v746
        %v1174 = vpop.f32.mrf.mxu0
        %v1175 = vadd.f32 %v1086, %v1174
        %v1176 = vpop.f32.mrf.mxu0
        %v1177 = vadd.f32 %v1088, %v1176
        %1178 = vmatmul.bf16.gmra.mxu0 %v750
        %v1179 = vpop.f32.mrf.mxu0
        %v1180 = vadd.f32 %v1091, %v1179
        %v1181 = vpop.f32.mrf.mxu0
        %v1182 = vadd.f32 %v1093, %v1181
        %1183 = vmatmul.bf16.gmra.mxu0 %v754
        %v1184 = vpop.f32.mrf.mxu0
        %v1185 = vadd.f32 %v1096, %v1184
        %v1186 = vpop.f32.mrf.mxu0
        %v1187 = vadd.f32 %v1098, %v1186
        %1188 = vmatmul.bf16.gmra.mxu0 %v758
        %v1189 = vpop.f32.mrf.mxu0
        %v1190 = vadd.f32 %v1101, %v1189
        %v1191 = vpop.f32.mrf.mxu0
        %v1192 = vadd.f32 %v1103, %v1191
        %1193 = vmatmul.bf16.gmra.mxu0 %v762
        %v1194 = vpop.f32.mrf.mxu0
        %v1195 = vadd.f32 %v1106, %v1194
        %v1196 = vpop.f32.mrf.mxu0
        %v1197 = vadd.f32 %v1108, %v1196
        %1198 = vdwg.mxu0
        %1199 = vmatpush.bf16.msra.mxu0 %v980
        %1200 = vmatpush.bf16.msra.mxu0 %v979
        %1201 = vmatpush.bf16.msra.mxu0 %v978
        %1202 = vmatpush.bf16.msra.mxu0 %v977
        %1203 = vmatpush.bf16.msra.mxu0 %v976
        %1204 = vmatpush.bf16.msra.mxu0 %v975
        %1205 = vmatpush.bf16.msra.mxu0 %v974
        %1206 = vmatpush.bf16.msra.mxu0 %v973
        %1207 = vmatmul.bf16.gmra.mxu0 %v703
        %v1208 = vpop.f32.mrf.mxu0
        %v1209 = vadd.f32 %v1120, %v1208
        %v1210 = vpop.f32.mrf.mxu0
        %v1211 = vadd.f32 %v1122, %v1210
        %1212 = vmatmul.bf16.gmra.mxu0 %v707
        %v1213 = vpop.f32.mrf.mxu0
        %v1214 = vadd.f32 %v1125, %v1213
        %v1215 = vpop.f32.mrf.mxu0
        %v1216 = vadd.f32 %v1127, %v1215
        %1217 = vmatmul.bf16.gmra.mxu0 %v711
        %v1218 = vpop.f32.mrf.mxu0
        %v1219 = vadd.f32 %v1130, %v1218
        %v1220 = vpop.f32.mrf.mxu0
        %v1221 = vadd.f32 %v1132, %v1220
        %1222 = vmatmul.bf16.gmra.mxu0 %v715
        %v1223 = vpop.f32.mrf.mxu0
        %v1224 = vadd.f32 %v1135, %v1223
        %v1225 = vpop.f32.mrf.mxu0
        %v1226 = vadd.f32 %v1137, %v1225
        %1227 = vmatmul.bf16.gmra.mxu0 %v719
        %v1228 = vpop.f32.mrf.mxu0
        %v1229 = vadd.f32 %v1140, %v1228
        %v1230 = vpop.f32.mrf.mxu0
        %v1231 = vadd.f32 %v1142, %v1230
        %1232 = vmatmul.bf16.gmra.mxu0 %v723
        %v1233 = vpop.f32.mrf.mxu0
        %v1234 = vadd.f32 %v1145, %v1233
        %v1235 = vpop.f32.mrf.mxu0
        %v1236 = vadd.f32 %v1147, %v1235
        %1237 = vmatmul.bf16.gmra.mxu0 %v727
        %v1238 = vpop.f32.mrf.mxu0
        %v1239 = vadd.f32 %v1150, %v1238
        %v1240 = vpop.f32.mrf.mxu0
        %v1241 = vadd.f32 %v1152, %v1240
        %1242 = vmatmul.bf16.gmra.mxu0 %v731
        %v1243 = vpop.f32.mrf.mxu0
        %v1244 = vadd.f32 %v1155, %v1243
        %v1245 = vpop.f32.mrf.mxu0
        %v1246 = vadd.f32 %v1157, %v1245
        %1247 = vmatmul.bf16.gmra.mxu0 %v735
        %v1248 = vpop.f32.mrf.mxu0
        %v1249 = vadd.f32 %v1160, %v1248
        %v1250 = vpop.f32.mrf.mxu0
        %v1251 = vadd.f32 %v1162, %v1250
        %1252 = vmatmul.bf16.gmra.mxu0 %v739
        %v1253 = vpop.f32.mrf.mxu0
        %v1254 = vadd.f32 %v1165, %v1253
        %v1255 = vpop.f32.mrf.mxu0
        %v1256 = vadd.f32 %v1167, %v1255
        %1257 = vmatmul.bf16.gmra.mxu0 %v743
        %v1258 = vpop.f32.mrf.mxu0
        %v1259 = vadd.f32 %v1170, %v1258
        %v1260 = vpop.f32.mrf.mxu0
        %v1261 = vadd.f32 %v1172, %v1260
        %1262 = vmatmul.bf16.gmra.mxu0 %v747
        %v1263 = vpop.f32.mrf.mxu0
        %v1264 = vadd.f32 %v1175, %v1263
        %v1265 = vpop.f32.mrf.mxu0
        %v1266 = vadd.f32 %v1177, %v1265
        %1267 = vmatmul.bf16.gmra.mxu0 %v751
        %v1268 = vpop.f32.mrf.mxu0
        %v1269 = vadd.f32 %v1180, %v1268
        %v1270 = vpop.f32.mrf.mxu0
        %v1271 = vadd.f32 %v1182, %v1270
        %1272 = vmatmul.bf16.gmra.mxu0 %v755
        %v1273 = vpop.f32.mrf.mxu0
        %v1274 = vadd.f32 %v1185, %v1273
        %v1275 = vpop.f32.mrf.mxu0
        %v1276 = vadd.f32 %v1187, %v1275
        %1277 = vmatmul.bf16.gmra.mxu0 %v759
        %v1278 = vpop.f32.mrf.mxu0
        %v1279 = vadd.f32 %v1190, %v1278
        %v1280 = vpop.f32.mrf.mxu0
        %v1281 = vadd.f32 %v1192, %v1280
        %1282 = vmatmul.bf16.gmra.mxu0 %v763
        %v1283 = vpop.f32.mrf.mxu0
        %v1284 = vadd.f32 %v1195, %v1283
        %v1285 = vpop.f32.mrf.mxu0
        %v1286 = vadd.f32 %v1197, %v1285
        %1287 = vdwg.mxu0
        %1288 = vmatpush.bf16.msra.mxu0 %v988
        %1289 = vmatpush.bf16.msra.mxu0 %v987
        %1290 = vmatpush.bf16.msra.mxu0 %v986
        %1291 = vmatpush.bf16.msra.mxu0 %v985
        %1292 = vmatpush.bf16.msra.mxu0 %v984
        %1293 = vmatpush.bf16.msra.mxu0 %v983
        %1294 = vmatpush.bf16.msra.mxu0 %v982
        %1295 = vmatpush.bf16.msra.mxu0 %v981
        %1296 = vmatmul.bf16.gmra.mxu0 %v704
        %v1297 = vpop.f32.mrf.mxu0
        %v1298 = vadd.f32 %v1209, %v1297
        %v1299 = vpop.f32.mrf.mxu0
        %v1300 = vadd.f32 %v1211, %v1299
        %1301 = vmatmul.bf16.gmra.mxu0 %v708
        %v1302 = vpop.f32.mrf.mxu0
        %v1303 = vadd.f32 %v1214, %v1302
        %v1304 = vpop.f32.mrf.mxu0
        %v1305 = vadd.f32 %v1216, %v1304
        %1306 = vmatmul.bf16.gmra.mxu0 %v712
        %v1307 = vpop.f32.mrf.mxu0
        %v1308 = vadd.f32 %v1219, %v1307
        %v1309 = vpop.f32.mrf.mxu0
        %v1310 = vadd.f32 %v1221, %v1309
        %1311 = vmatmul.bf16.gmra.mxu0 %v716
        %v1312 = vpop.f32.mrf.mxu0
        %v1313 = vadd.f32 %v1224, %v1312
        %v1314 = vpop.f32.mrf.mxu0
        %v1315 = vadd.f32 %v1226, %v1314
        %1316 = vmatmul.bf16.gmra.mxu0 %v720
        %v1317 = vpop.f32.mrf.mxu0
        %v1318 = vadd.f32 %v1229, %v1317
        %v1319 = vpop.f32.mrf.mxu0
        %v1320 = vadd.f32 %v1231, %v1319
        %1321 = vmatmul.bf16.gmra.mxu0 %v724
        %v1322 = vpop.f32.mrf.mxu0
        %v1323 = vadd.f32 %v1234, %v1322
        %v1324 = vpop.f32.mrf.mxu0
        %v1325 = vadd.f32 %v1236, %v1324
        %1326 = vmatmul.bf16.gmra.mxu0 %v728
        %v1327 = vpop.f32.mrf.mxu0
        %v1328 = vadd.f32 %v1239, %v1327
        %v1329 = vpop.f32.mrf.mxu0
        %v1330 = vadd.f32 %v1241, %v1329
        %1331 = vmatmul.bf16.gmra.mxu0 %v732
        %v1332 = vpop.f32.mrf.mxu0
        %v1333 = vadd.f32 %v1244, %v1332
        %v1334 = vpop.f32.mrf.mxu0
        %v1335 = vadd.f32 %v1246, %v1334
        %1336 = vmatmul.bf16.gmra.mxu0 %v736
        %v1337 = vpop.f32.mrf.mxu0
        %v1338 = vadd.f32 %v1249, %v1337
        %v1339 = vpop.f32.mrf.mxu0
        %v1340 = vadd.f32 %v1251, %v1339
        %1341 = vmatmul.bf16.gmra.mxu0 %v740
        %v1342 = vpop.f32.mrf.mxu0
        %v1343 = vadd.f32 %v1254, %v1342
        %v1344 = vpop.f32.mrf.mxu0
        %v1345 = vadd.f32 %v1256, %v1344
        %1346 = vmatmul.bf16.gmra.mxu0 %v744
        %v1347 = vpop.f32.mrf.mxu0
        %v1348 = vadd.f32 %v1259, %v1347
        %v1349 = vpop.f32.mrf.mxu0
        %v1350 = vadd.f32 %v1261, %v1349
        %1351 = vmatmul.bf16.gmra.mxu0 %v748
        %v1352 = vpop.f32.mrf.mxu0
        %v1353 = vadd.f32 %v1264, %v1352
        %v1354 = vpop.f32.mrf.mxu0
        %v1355 = vadd.f32 %v1266, %v1354
        %1356 = vmatmul.bf16.gmra.mxu0 %v752
        %v1357 = vpop.f32.mrf.mxu0
        %v1358 = vadd.f32 %v1269, %v1357
        %v1359 = vpop.f32.mrf.mxu0
        %v1360 = vadd.f32 %v1271, %v1359
        %1361 = vmatmul.bf16.gmra.mxu0 %v756
        %v1362 = vpop.f32.mrf.mxu0
        %v1363 = vadd.f32 %v1274, %v1362
        %v1364 = vpop.f32.mrf.mxu0
        %v1365 = vadd.f32 %v1276, %v1364
        %1366 = vmatmul.bf16.gmra.mxu0 %v760
        %v1367 = vpop.f32.mrf.mxu0
        %v1368 = vadd.f32 %v1279, %v1367
        %v1369 = vpop.f32.mrf.mxu0
        %v1370 = vadd.f32 %v1281, %v1369
        %1371 = vmatmul.bf16.gmra.mxu0 %v764
        %v1372 = vpop.f32.mrf.mxu0
        %v1373 = vadd.f32 %v1284, %v1372
        %v1374 = vpop.f32.mrf.mxu0
        %v1375 = vadd.f32 %v1286, %v1374
        %1376 = vdwg.mxu0
        %v1377 = vadd.f32 %v349, %v1298
        %v1378 = vadd.f32 %v350, %v1300
        %v1379 = vadd.f32 %v351, %v1303
        %v1380 = vadd.f32 %v352, %v1305
        %v1381 = vadd.f32 %v353, %v1308
        %v1382 = vadd.f32 %v354, %v1310
        %v1383 = vadd.f32 %v355, %v1313
        %v1384 = vadd.f32 %v356, %v1315
        %v1385 = vadd.f32 %v357, %v1318
        %v1386 = vadd.f32 %v358, %v1320
        %v1387 = vadd.f32 %v359, %v1323
        %v1388 = vadd.f32 %v360, %v1325
        %v1389 = vadd.f32 %v361, %v1328
        %v1390 = vadd.f32 %v362, %v1330
        %v1391 = vadd.f32 %v363, %v1333
        %v1392 = vadd.f32 %v364, %v1335
        %v1393 = vadd.f32 %v365, %v1338
        %v1394 = vadd.f32 %v366, %v1340
        %v1395 = vadd.f32 %v367, %v1343
        %v1396 = vadd.f32 %v368, %v1345
        %v1397 = vadd.f32 %v369, %v1348
        %v1398 = vadd.f32 %v370, %v1350
        %v1399 = vadd.f32 %v371, %v1353
        %v1400 = vadd.f32 %v372, %v1355
        %v1401 = vadd.f32 %v373, %v1358
        %v1402 = vadd.f32 %v374, %v1360
        %v1403 = vadd.f32 %v375, %v1363
        %v1404 = vadd.f32 %v376, %v1365
        %v1405 = vadd.f32 %v377, %v1368
        %v1406 = vadd.f32 %v378, %v1370
        %v1407 = vadd.f32 %v379, %v1373
        %v1408 = vadd.f32 %v380, %v1375
        %1409 = vst [vmem:[#allocation2] sm:$0xff] %v1377
        %1410 = vst [vmem:[#allocation2 + $0x8] sm:$0xff] %v1378
        %1411 = vst [vmem:[#allocation2 + $0x10] sm:$0xff] %v1379
        %1412 = vst [vmem:[#allocation2 + $0x18] sm:$0xff] %v1380
        %1413 = vst [vmem:[#allocation2 + $0x20] sm:$0xff] %v1381
        %1414 = vst [vmem:[#allocation2 + $0x28] sm:$0xff] %v1382
        %1415 = vst [vmem:[#allocation2 + $0x30] sm:$0xff] %v1383
        %1416 = vst [vmem:[#allocation2 + $0x38] sm:$0xff] %v1384
        %1417 = vst [vmem:[#allocation2 + $0x40] sm:$0xff] %v1385
        %1418 = vst [vmem:[#allocation2 + $0x48] sm:$0xff] %v1386
        %1419 = vst [vmem:[#allocation2 + $0x50] sm:$0xff] %v1387
        %1420 = vst [vmem:[#allocation2 + $0x58] sm:$0xff] %v1388
        %1421 = vst [vmem:[#allocation2 + $0x60] sm:$0xff] %v1389
        %1422 = vst [vmem:[#allocation2 + $0x68] sm:$0xff] %v1390
        %1423 = vst [vmem:[#allocation2 + $0x70] sm:$0xff] %v1391
        %1424 = vst [vmem:[#allocation2 + $0x78] sm:$0xff] %v1392
        %1425 = vst [vmem:[#allocation2 + $0x80] sm:$0xff] %v1393
        %1426 = vst [vmem:[#allocation2 + $0x88] sm:$0xff] %v1394
        %1427 = vst [vmem:[#allocation2 + $0x90] sm:$0xff] %v1395
        %1428 = vst [vmem:[#allocation2 + $0x98] sm:$0xff] %v1396
        %1429 = vst [vmem:[#allocation2 + $0xa0] sm:$0xff] %v1397
        %1430 = vst [vmem:[#allocation2 + $0xa8] sm:$0xff] %v1398
        %1431 = vst [vmem:[#allocation2 + $0xb0] sm:$0xff] %v1399
        %1432 = vst [vmem:[#allocation2 + $0xb8] sm:$0xff] %v1400
        %1433 = vst [vmem:[#allocation2 + $0xc0] sm:$0xff] %v1401
        %1434 = vst [vmem:[#allocation2 + $0xc8] sm:$0xff] %v1402
        %1435 = vst [vmem:[#allocation2 + $0xd0] sm:$0xff] %v1403
        %1436 = vst [vmem:[#allocation2 + $0xd8] sm:$0xff] %v1404
        %1437 = vst [vmem:[#allocation2 + $0xe0] sm:$0xff] %v1405
        %1438 = vst [vmem:[#allocation2 + $0xe8] sm:$0xff] %v1406
        %1439 = vst [vmem:[#allocation2 + $0xf0] sm:$0xff] %v1407
        %1440 = vst [vmem:[#allocation2 + $0xf8] sm:$0xff] %v1408
        // Predicated region
        $region33: #{dcgan_generator_forward.17} parent=27 // pred_check
          %p1441 = pneg %p313
        $region34: #{dcgan_generator_forward.17} parent=27 // pred_check_branch
          %1443 = sbr.rel (%p1441) target = $region36
        $region35: #{dcgan_generator_forward.17} parent=27 // pred_region
          %v1444 = vld [vmem:[#allocation2] sm:$0xff]
          %v1445 = vld [vmem:[#allocation2 + $0x8] sm:$0xff]
          %v1446 = vld [vmem:[#allocation2 + $0x10] sm:$0xff]
          %v1447 = vld [vmem:[#allocation2 + $0x18] sm:$0xff]
          %v1448 = vld [vmem:[#allocation2 + $0x20] sm:$0xff]
          %v1449 = vld [vmem:[#allocation2 + $0x28] sm:$0xff]
          %v1450 = vld [vmem:[#allocation2 + $0x30] sm:$0xff]
          %v1451 = vld [vmem:[#allocation2 + $0x38] sm:$0xff]
          %v1452 = vld [vmem:[#allocation2 + $0x40] sm:$0xff]
          %v1453 = vld [vmem:[#allocation2 + $0x48] sm:$0xff]
          %v1454 = vld [vmem:[#allocation2 + $0x50] sm:$0xff]
          %v1455 = vld [vmem:[#allocation2 + $0x58] sm:$0xff]
          %v1456 = vld [vmem:[#allocation2 + $0x60] sm:$0xff]
          %v1457 = vld [vmem:[#allocation2 + $0x68] sm:$0xff]
          %v1458 = vld [vmem:[#allocation2 + $0x70] sm:$0xff]
          %v1459 = vld [vmem:[#allocation2 + $0x78] sm:$0xff]
          %v1460 = vld [vmem:[#allocation2 + $0x80] sm:$0xff]
          %v1461 = vld [vmem:[#allocation2 + $0x88] sm:$0xff]
          %v1462 = vld [vmem:[#allocation2 + $0x90] sm:$0xff]
          %v1463 = vld [vmem:[#allocation2 + $0x98] sm:$0xff]
          %v1464 = vld [vmem:[#allocation2 + $0xa0] sm:$0xff]
          %v1465 = vld [vmem:[#allocation2 + $0xa8] sm:$0xff]
          %v1466 = vld [vmem:[#allocation2 + $0xb0] sm:$0xff]
          %v1467 = vld [vmem:[#allocation2 + $0xb8] sm:$0xff]
          %v1468 = vld [vmem:[#allocation2 + $0xc0] sm:$0xff]
          %v1469 = vld [vmem:[#allocation2 + $0xc8] sm:$0xff]
          %v1470 = vld [vmem:[#allocation2 + $0xd0] sm:$0xff]
          %v1471 = vld [vmem:[#allocation2 + $0xd8] sm:$0xff]
          %v1472 = vld [vmem:[#allocation2 + $0xe0] sm:$0xff]
          %v1473 = vld [vmem:[#allocation2 + $0xe8] sm:$0xff]
          %v1474 = vld [vmem:[#allocation2 + $0xf0] sm:$0xff]
          %v1475 = vld [vmem:[#allocation2 + $0xf8] sm:$0xff]
          %v1476 = vtanh.pop %v1444
          %v1477 = vtanh.pop %v1445
          %v1478 = vtanh.pop %v1446
          %v1479 = vtanh.pop %v1447
          %v1480 = vtanh.pop %v1448
          %v1481 = vtanh.pop %v1449
          %v1482 = vtanh.pop %v1450
          %v1483 = vtanh.pop %v1451
          %v1484 = vtanh.pop %v1452
          %v1485 = vtanh.pop %v1453
          %v1486 = vtanh.pop %v1454
          %v1487 = vtanh.pop %v1455
          %v1488 = vtanh.pop %v1456
          %v1489 = vtanh.pop %v1457
          %v1490 = vtanh.pop %v1458
          %v1491 = vtanh.pop %v1459
          %v1492 = vtanh.pop %v1460
          %v1493 = vtanh.pop %v1461
          %v1494 = vtanh.pop %v1462
          %v1495 = vtanh.pop %v1463
          %v1496 = vtanh.pop %v1464
          %v1497 = vtanh.pop %v1465
          %v1498 = vtanh.pop %v1466
          %v1499 = vtanh.pop %v1467
          %v1500 = vtanh.pop %v1468
          %v1501 = vtanh.pop %v1469
          %v1502 = vtanh.pop %v1470
          %v1503 = vtanh.pop %v1471
          %v1504 = vtanh.pop %v1472
          %v1505 = vtanh.pop %v1473
          %v1506 = vtanh.pop %v1474
          %v1507 = vtanh.pop %v1475
          %v1508 = vpack.c.bf16 %v1476, %v1476
          %v1509 = vpack.c.bf16 %v1477, %v1477
          %v1510 = vpack.c.bf16 %v1478, %v1478
          %v1511 = vpack.c.bf16 %v1479, %v1479
          %v1512 = vpack.c.bf16 %v1480, %v1480
          %v1513 = vpack.c.bf16 %v1481, %v1481
          %v1514 = vpack.c.bf16 %v1482, %v1482
          %v1515 = vpack.c.bf16 %v1483, %v1483
          %v1516 = vpack.c.bf16 %v1484, %v1484
          %v1517 = vpack.c.bf16 %v1485, %v1485
          %v1518 = vpack.c.bf16 %v1486, %v1486
          %v1519 = vpack.c.bf16 %v1487, %v1487
          %v1520 = vpack.c.bf16 %v1488, %v1488
          %v1521 = vpack.c.bf16 %v1489, %v1489
          %v1522 = vpack.c.bf16 %v1490, %v1490
          %v1523 = vpack.c.bf16 %v1491, %v1491
          %v1524 = vpack.c.bf16 %v1492, %v1492
          %v1525 = vpack.c.bf16 %v1493, %v1493
          %v1526 = vpack.c.bf16 %v1494, %v1494
          %v1527 = vpack.c.bf16 %v1495, %v1495
          %v1528 = vpack.c.bf16 %v1496, %v1496
          %v1529 = vpack.c.bf16 %v1497, %v1497
          %v1530 = vpack.c.bf16 %v1498, %v1498
          %v1531 = vpack.c.bf16 %v1499, %v1499
          %v1532 = vpack.c.bf16 %v1500, %v1500
          %v1533 = vpack.c.bf16 %v1501, %v1501
          %v1534 = vpack.c.bf16 %v1502, %v1502
          %v1535 = vpack.c.bf16 %v1503, %v1503
          %v1536 = vpack.c.bf16 %v1504, %v1504
          %v1537 = vpack.c.bf16 %v1505, %v1505
          %v1538 = vpack.c.bf16 %v1506, %v1506
          %v1539 = vpack.c.bf16 %v1507, %v1507
          %1540 = vst [vmem:[%s311] sm:$0xf] %v1508
          %1541 = vst [vmem:[%s311 + $0x4] sm:$0xf] %v1509
          %1542 = vst [vmem:[%s311 + $0x8] sm:$0xf] %v1510
          %1543 = vst [vmem:[%s311 + $0xc] sm:$0xf] %v1511
          %1544 = vst [vmem:[%s311 + $0x10] sm:$0xf] %v1512
          %1545 = vst [vmem:[%s311 + $0x14] sm:$0xf] %v1513
          %1546 = vst [vmem:[%s311 + $0x18] sm:$0xf] %v1514
          %1547 = vst [vmem:[%s311 + $0x1c] sm:$0xf] %v1515
          %1548 = vst [vmem:[%s311 + $0x20] sm:$0xf] %v1516
          %1549 = vst [vmem:[%s311 + $0x24] sm:$0xf] %v1517
          %1550 = vst [vmem:[%s311 + $0x28] sm:$0xf] %v1518
          %1551 = vst [vmem:[%s311 + $0x2c] sm:$0xf] %v1519
          %1552 = vst [vmem:[%s311 + $0x30] sm:$0xf] %v1520
          %1553 = vst [vmem:[%s311 + $0x34] sm:$0xf] %v1521
          %1554 = vst [vmem:[%s311 + $0x38] sm:$0xf] %v1522
          %1555 = vst [vmem:[%s311 + $0x3c] sm:$0xf] %v1523
          %1556 = vst [vmem:[%s311 + $0x40] sm:$0xf] %v1524
          %1557 = vst [vmem:[%s311 + $0x44] sm:$0xf] %v1525
          %1558 = vst [vmem:[%s311 + $0x48] sm:$0xf] %v1526
          %1559 = vst [vmem:[%s311 + $0x4c] sm:$0xf] %v1527
          %1560 = vst [vmem:[%s311 + $0x50] sm:$0xf] %v1528
          %1561 = vst [vmem:[%s311 + $0x54] sm:$0xf] %v1529
          %1562 = vst [vmem:[%s311 + $0x58] sm:$0xf] %v1530
          %1563 = vst [vmem:[%s311 + $0x5c] sm:$0xf] %v1531
          %1564 = vst [vmem:[%s311 + $0x60] sm:$0xf] %v1532
          %1565 = vst [vmem:[%s311 + $0x64] sm:$0xf] %v1533
          %1566 = vst [vmem:[%s311 + $0x68] sm:$0xf] %v1534
          %1567 = vst [vmem:[%s311 + $0x6c] sm:$0xf] %v1535
          %1568 = vst [vmem:[%s311 + $0x70] sm:$0xf] %v1536
          %1569 = vst [vmem:[%s311 + $0x74] sm:$0xf] %v1537
          %1570 = vst [vmem:[%s311 + $0x78] sm:$0xf] %v1538
          %1571 = vst [vmem:[%s311 + $0x7c] sm:$0xf] %v1539
          %v1572 = vadd.f32 %v1444, %v1445
          %v1573 = vadd.f32 %v1572, %v1446
          %v1574 = vadd.f32 %v1573, %v1447
          %v1575 = vadd.f32 %v1574, %v1448
          %v1576 = vadd.f32 %v1575, %v1449
          %v1577 = vadd.f32 %v1576, %v1450
          %v1578 = vadd.f32 %v1577, %v1451
          %v1579 = vadd.f32 %v1578, %v1452
          %v1580 = vadd.f32 %v1579, %v1453
          %v1581 = vadd.f32 %v1580, %v1454
          %v1582 = vadd.f32 %v1581, %v1455
          %v1583 = vadd.f32 %v1582, %v1456
          %v1584 = vadd.f32 %v1583, %v1457
          %v1585 = vadd.f32 %v1584, %v1458
          %v1586 = vadd.f32 %v1585, %v1459
          %v1587 = vadd.f32 %v1586, %v1460
          %v1588 = vadd.f32 %v1587, %v1461
          %v1589 = vadd.f32 %v1588, %v1462
          %v1590 = vadd.f32 %v1589, %v1463
          %v1591 = vadd.f32 %v1590, %v1464
          %v1592 = vadd.f32 %v1591, %v1465
          %v1593 = vadd.f32 %v1592, %v1466
          %v1594 = vadd.f32 %v1593, %v1467
          %v1595 = vadd.f32 %v1594, %v1468
          %v1596 = vadd.f32 %v1595, %v1469
          %v1597 = vadd.f32 %v1596, %v1470
          %v1598 = vadd.f32 %v1597, %v1471
          %v1599 = vadd.f32 %v1598, %v1472
          %v1600 = vadd.f32 %v1599, %v1473
          %v1601 = vadd.f32 %v1600, %v1474
          %v1602 = vadd.f32 %v1601, %v1475
          %v1603 = vrot.slane %v1602, 4
          %v1604 = vadd.f32 %v1602, %v1603
          %v1605 = vrot.slane %v1604, 2
          %v1606 = vadd.f32 %v1604, %v1605
          %v1607 = vrot.slane %v1606, 1
          %v1608 = vadd.f32 %v1606, %v1607
          %v1609 = vmul.f32 %v1444, %v1444
          %v1610 = vmul.f32 %v1445, %v1445
          %v1611 = vmul.f32 %v1446, %v1446
          %v1612 = vmul.f32 %v1447, %v1447
          %v1613 = vmul.f32 %v1448, %v1448
          %v1614 = vmul.f32 %v1449, %v1449
          %v1615 = vmul.f32 %v1450, %v1450
          %v1616 = vmul.f32 %v1451, %v1451
          %v1617 = vmul.f32 %v1452, %v1452
          %v1618 = vmul.f32 %v1453, %v1453
          %v1619 = vmul.f32 %v1454, %v1454
          %v1620 = vmul.f32 %v1455, %v1455
          %v1621 = vmul.f32 %v1456, %v1456
          %v1622 = vmul.f32 %v1457, %v1457
          %v1623 = vmul.f32 %v1458, %v1458
          %v1624 = vmul.f32 %v1459, %v1459
          %v1625 = vmul.f32 %v1460, %v1460
          %v1626 = vmul.f32 %v1461, %v1461
          %v1627 = vmul.f32 %v1462, %v1462
          %v1628 = vmul.f32 %v1463, %v1463
          %v1629 = vmul.f32 %v1464, %v1464
          %v1630 = vmul.f32 %v1465, %v1465
          %v1631 = vmul.f32 %v1466, %v1466
          %v1632 = vmul.f32 %v1467, %v1467
          %v1633 = vmul.f32 %v1468, %v1468
          %v1634 = vmul.f32 %v1469, %v1469
          %v1635 = vmul.f32 %v1470, %v1470
          %v1636 = vmul.f32 %v1471, %v1471
          %v1637 = vmul.f32 %v1472, %v1472
          %v1638 = vmul.f32 %v1473, %v1473
          %v1639 = vmul.f32 %v1474, %v1474
          %v1640 = vmul.f32 %v1475, %v1475
          %v1641 = vadd.f32 %v1609, %v1610
          %v1642 = vadd.f32 %v1641, %v1611
          %v1643 = vadd.f32 %v1642, %v1612
          %v1644 = vadd.f32 %v1643, %v1613
          %v1645 = vadd.f32 %v1644, %v1614
          %v1646 = vadd.f32 %v1645, %v1615
          %v1647 = vadd.f32 %v1646, %v1616
          %v1648 = vadd.f32 %v1647, %v1617
          %v1649 = vadd.f32 %v1648, %v1618
          %v1650 = vadd.f32 %v1649, %v1619
          %v1651 = vadd.f32 %v1650, %v1620
          %v1652 = vadd.f32 %v1651, %v1621
          %v1653 = vadd.f32 %v1652, %v1622
          %v1654 = vadd.f32 %v1653, %v1623
          %v1655 = vadd.f32 %v1654, %v1624
          %v1656 = vadd.f32 %v1655, %v1625
          %v1657 = vadd.f32 %v1656, %v1626
          %v1658 = vadd.f32 %v1657, %v1627
          %v1659 = vadd.f32 %v1658, %v1628
          %v1660 = vadd.f32 %v1659, %v1629
          %v1661 = vadd.f32 %v1660, %v1630
          %v1662 = vadd.f32 %v1661, %v1631
          %v1663 = vadd.f32 %v1662, %v1632
          %v1664 = vadd.f32 %v1663, %v1633
          %v1665 = vadd.f32 %v1664, %v1634
          %v1666 = vadd.f32 %v1665, %v1635
          %v1667 = vadd.f32 %v1666, %v1636
          %v1668 = vadd.f32 %v1667, %v1637
          %v1669 = vadd.f32 %v1668, %v1638
          %v1670 = vadd.f32 %v1669, %v1639
          %v1671 = vadd.f32 %v1670, %v1640
          %v1672 = vrot.slane %v1671, 4
          %v1673 = vadd.f32 %v1671, %v1672
          %v1674 = vrot.slane %v1673, 2
          %v1675 = vadd.f32 %v1673, %v1674
          %v1676 = vrot.slane %v1675, 1
          %v1677 = vadd.f32 %v1675, %v1676
          %vm1678 = vcmask 1040384
          %v1679 = vsel %vm1678, %v1608, %v1677
          %vm1680 = vcmask 1041408
          %v1681 = vsel %vm1680, %v1679, 0.0
          %1682 = vst [vmem:[%s270] sm:$0xff] %v1681
        $region36: #{dcgan_generator_forward.17} parent=27 // pred_fallthru
          _
        %s1683 = smul.u32 32, %s25
        %p1684 = scmp.lt.s32.totalorder %s24, 3
        %s1685 = scalar_select %p1684, %s24, 3
        %p1686 = scmp.lt.s32.totalorder %s1683, 255
        %s1687 = scalar_select %p1686, %s1683, 255
        %p1688 = scmp.lt.s32.totalorder %s26, 0
        %s1689 = scalar_select %p1688, %s26, 0
        %s1690 = sadd.s32 %s1689, %s1687
        %s1691 = smul.addr %s1685, 256
        %s1692 = sadd.s32 %s1690, %s1691
        %s1693 = smul.addr %s1692, 4
        %s1694 = scalar_lea.vmem %s2, %s1693
        %s1695 = sand.u32 %s146, 1
        %s1696 = scalar_lea.sflag [#allocation4], %s1695
        %s1697 = sand.u32 %s146, 1
        %s1698 = smul.addr %s1697, 8
        %s1699 = scalar_lea.vmem [#allocation3], %s1698
        // Predicated region
        $region37: #{dcgan_generator_forward.17} parent=27 // pred_check
          %p1700 = pneg %p126
        $region38: #{dcgan_generator_forward.17} parent=27 // pred_check_branch
          %1702 = sbr.rel (%p1700) target = $region40
        $region39: #{dcgan_generator_forward.17} parent=27 // pred_region
          %s1703 = smul.u32 32, %s25
        $region40: #{dcgan_generator_forward.17} parent=27 // pred_fallthru
          _
        // Predicated region
        $region41: #{dcgan_generator_forward.17} parent=27 // pred_check
          %p1704 = pneg %p156
        $region42: #{dcgan_generator_forward.17} parent=27 // pred_check_branch
          %1706 = sbr.rel (%p1704) target = $region44
        $region43: #{dcgan_generator_forward.17} parent=27 // pred_region
          %1708 = vsyncadd %s1696, 0
          %s1709 = sadd.s32 %s26, %s25
          %s1710 = smul.addr %s24, 8
          %s1711 = sadd.s32 %s1709, %s1710
          %s1712 = smul.addr %s1711, 8
          %s1713 = scalar_lea.hbm %s3, %s1712
          %s1715 = sshll.u32 %s1699, 4
          %s1716 = int_to_ptr.vmem [resolvable:$true] %s1715
          %s1717 = sshll.u32 %s1713, 4
          %s1718 = int_to_ptr.hbm [resolvable:$true] %s1717
          %1720 = dma.vmem_to_hbm [thread:$0]  %s1716, 128, %s1718, %s1696
        $region44: #{dcgan_generator_forward.17} parent=27 // pred_fallthru
          _
      $region28: #{dcgan_generator_forward.17} parent=5 // pred_fallthru
        _
      %p1721 = scmp.le.s32.totalorder 2, %s13
      // Predicated region
      $region45: #{dcgan_generator_forward.17} parent=5 // pred_check
        %p1722 = pneg %p1721
      $region46: #{dcgan_generator_forward.17} parent=5 // pred_check_branch
        %1724 = sbr.rel (%p1722) target = $region48
      $region47: #{dcgan_generator_forward.17} parent=5 // pred_region
        %s1725 = ssub.s32 %s13, 2
        // Predicated region
        $region49: #{dcgan_generator_forward.17} parent=47 // pred_check
          %p1726 = pneg %p132
        $region50: #{dcgan_generator_forward.17} parent=47 // pred_check_branch
          %1728 = sbr.rel (%p1726) target = $region52
        $region51: #{dcgan_generator_forward.17} parent=47 // pred_region
          %s1729 = smul.u32 32, %s29
          %p1730 = scmp.lt.s32.totalorder %s28, 3
          %s1731 = scalar_select %p1730, %s28, 3
          %p1732 = scmp.lt.s32.totalorder %s1729, 255
          %s1733 = scalar_select %p1732, %s1729, 255
          %p1734 = scmp.lt.s32.totalorder %s30, 0
          %s1735 = scalar_select %p1734, %s30, 0
          %s1736 = sadd.s32 %s1735, %s1733
          %s1737 = smul.addr %s1731, 256
          %s1738 = sadd.s32 %s1736, %s1737
          %s1739 = smul.addr %s1738, 4
          %s1740 = scalar_lea.vmem %s2, %s1739
        $region52: #{dcgan_generator_forward.17} parent=47 // pred_fallthru
          _
        // Predicated region
        $region53: #{dcgan_generator_forward.17} parent=47 // pred_check
          %p1741 = pneg %p162
        $region54: #{dcgan_generator_forward.17} parent=47 // pred_check_branch
          %1743 = sbr.rel (%p1741) target = $region56
        $region55: #{dcgan_generator_forward.17} parent=47 // pred_region
          %s1744 = sand.u32 %s147, 1
          %s1745 = scalar_lea.sflag [#allocation4], %s1744
          %s1746 = sand.u32 %s147, 1
          %s1747 = smul.addr %s1746, 8
          %s1748 = scalar_lea.vmem [#allocation3], %s1747
          %1750 = dma.done %s1745, 128
        $region56: #{dcgan_generator_forward.17} parent=47 // pred_fallthru
          _
      $region48: #{dcgan_generator_forward.17} parent=5 // pred_fallthru
        _
    $region6: #{dcgan_generator_forward.17} parent=1 // loop_footer
      %s17 = sadd.s32 1, %s13
    $region7: #{dcgan_generator_forward.17} parent=1 // loop_footer_branch
      %12 = sbr.rel target = $region3
    $region8: #{dcgan_generator_forward.17} parent=1 // loop_exit
      _
    %1751 = vsyncpa [#allocation4], 1
    %s1752 = scalar_lea.sflag [#allocation4], 1
    %1753 = vsyncpa %s1752, 1

</llo_original>
